<compile_context>
chip_gen: v6e
topology: v6e:2x2x1
jax: 0.10.0
libtpu: 0.0.40
codegen_flags: <defaults>
</compile_context>

<pallas_src>
import numpy as np

import jax
import jax.numpy as jnp
from jax.experimental import pallas as pl
from jax.experimental.pallas import tpu as pltpu


# ----------------------------------------------------------------------------
# Static model configuration (the Densenucy instantiation used previously)
# ----------------------------------------------------------------------------
BATCH = 2
CIN = 4                      # input channels
GROWTH = 8                   # channels added by each dense conv layer
SPATIAL = 8                  # D = H = W
HIDDEN = 64                  # regressor hidden width

D = H = W = SPATIAL
DP = HP = WP = SPATIAL + 2   # zero-padded spatial extents (conv pad = 1)
C_CAT = CIN + 2 * GROWTH     # 20 channels after the dense block
PD = PH = PW = SPATIAL // 2  # pooled spatial extents (4)
FLAT = C_CAT * PD * PH * PW  # 1280 regressor input features

ROWS = BATCH * DP * HP       # 200 "padded spatial rows"  (n, d_pad, h_pad)
MARGIN = 16                  # >= DP + 1, so every (kd, kh) row shift stays in-bounds
ROWS_ALLOC = ROWS + 2 * MARGIN   # 232
L_IN = WP * CIN              # 40 lanes  (w_pad, c)  for the input slab
L_G = WP * GROWTH            # 80 lanes  for each conv-output slab
POOL_ROWS = BATCH * PD * PH  # 32 rows   (d2, h2, n)  after the pooling gather
POOL_LANES = PW * C_CAT      # 80 lanes  (group, w2, c)  of pooled features


# ----------------------------------------------------------------------------
# The fused forward-pass kernel (single grid step; everything VMEM-resident)
# ----------------------------------------------------------------------------
def _densenucy_kernel(a_ref, w1t_ref, w2xt_ref, w2ct_ref, b1_ref, b2_ref,
                      c1mask_ref, sel_ref, w1p_ref, bfc1_ref, wfc2_ref, bfc2_ref,
                      out_ref, c1pad_ref, c2pad_ref, pooled_ref):
    f32 = jnp.float32
    taps = [(kd, kh) for kd in range(3) for kh in range(3)]

    # ---- conv1 (CIN->G) and the x-channel half of conv2, fused over the same loads ----
    acc1 = jnp.zeros((ROWS, L_G), f32)
    acc2 = jnp.zeros((ROWS, L_G), f32)
    for t, (kd, kh) in enumerate(taps):
        shift = (kd - 1) * HP + (kh - 1)
        xs = a_ref[pl.ds(MARGIN + shift, ROWS), :]                     # (ROWS, L_IN)
        acc1 = acc1 + jnp.dot(xs, w1t_ref[t], preferred_element_type=f32)
        acc2 = acc2 + jnp.dot(xs, w2xt_ref[t], preferred_element_type=f32)

    # bias + ReLU; zero the halo (rows/lanes that are conv padding) so c1 can feed conv2
    c1 = jnp.maximum(acc1 + b1_ref[...], 0.0) * c1mask_ref[...]        # (ROWS, L_G)
    c1pad_ref[...] = jnp.zeros((ROWS_ALLOC, L_G), f32)
    c1pad_ref[pl.ds(MARGIN, ROWS), :] = c1

    # ---- c1-channel half of conv2 (dense connectivity) ----
    for t, (kd, kh) in enumerate(taps):
        shift = (kd - 1) * HP + (kh - 1)
        cs = c1pad_ref[pl.ds(MARGIN + shift, ROWS), :]                 # (ROWS, L_G)
        acc2 = acc2 + jnp.dot(cs, w2ct_ref[t], preferred_element_type=f32)

    c2 = jnp.maximum(acc2 + b2_ref[...], 0.0)                          # halo garbage is finite, discarded
    c2pad_ref[...] = jnp.zeros((ROWS_ALLOC, L_G), f32)
    c2pad_ref[pl.ds(MARGIN, ROWS), :] = c2

    # ---- 2x2x2 max-pool + flatten (NCDHW flatten folded into the fc1 weight) ----
    sel = sel_ref[...]                                                 # (POOL_ROWS, ROWS) 0/1 gather
    groups = (
        (a_ref,     CIN,    0),                    # the x channels pass through the dense block
        (c1pad_ref, GROWTH, PW * CIN),
        (c2pad_ref, GROWTH, PW * CIN + PW * GROWTH),
    )
    for src_ref, cg, lane_off in groups:
        # pool over (d, h): max of the 4 row-shifted views of the padded slab
        rp = jnp.maximum(
            jnp.maximum(src_ref[pl.ds(MARGIN + 0, ROWS), :],
                        src_ref[pl.ds(MARGIN + 1, ROWS), :]),
            jnp.maximum(src_ref[pl.ds(MARGIN + HP, ROWS), :],
                        src_ref[pl.ds(MARGIN + HP + 1, ROWS), :]))
        # gather the (n, d2, h2) anchor rows with a 0/1 selection matmul
        g = jnp.dot(sel, rp, preferred_element_type=f32)               # (POOL_ROWS, WP*cg)
        # pool over w (adjacent lane blocks) and scatter into the pooled feature slab
        for w2 in range(PW):
            lo0 = (2 * w2 + 1) * cg
            piece = jnp.maximum(g[:, lo0:lo0 + cg], g[:, lo0 + cg:lo0 + 2 * cg])
            pooled_ref[:, pl.ds(lane_off + w2 * cg, cg)] = piece

    # ---- regressor: Linear(FLAT->HIDDEN) + ReLU, Linear(HIDDEN->1), fused ----
    hacc = jnp.zeros((BATCH, HIDDEN), f32)
    for j in range(PD * PH):                                           # 16 (d2, h2) blocks
        hacc = hacc + jnp.dot(pooled_ref[pl.ds(2 * j, BATCH), :],
                              w1p_ref[pl.ds(j * POOL_LANES, POOL_LANES), :],
                              preferred_element_type=f32)
    hidden = jnp.maximum(hacc + bfc1_ref[...], 0.0)                    # (BATCH, HIDDEN)
    out = jnp.sum(hidden * wfc2_ref[...], axis=-1, keepdims=True) + bfc2_ref[...]
    out_ref[...] = out.astype(out_ref.dtype)


def _full_spec(shape):
    return pl.BlockSpec(shape, lambda i, _n=len(shape): (0,) * _n)


@jax.jit
def densenucy_forward(x_ncdhw, kp):
    """x_ncdhw: (BATCH, CIN, D, H, W) float32; kp: packed kernel params."""
    assert x_ncdhw.shape == (BATCH, CIN, D, H, W)
    # NCDHW -> channels-last, zero-pad spatially (conv pad=1), flatten to the slab layout
    x = jnp.transpose(x_ncdhw, (0, 2, 3, 4, 1)).astype(jnp.float32)    # (N, D, H, W, C)
    xp = jnp.pad(x, ((0, 0), (1, 1), (1, 1), (1, 1), (0, 0)))          # (N, DP, HP, WP, C)
    a = xp.reshape(ROWS, L_IN)                                          # rows=(n,dp,hp), lanes=(wp,c)
    a = jnp.pad(a, ((MARGIN, MARGIN), (0, 0)))                          # (ROWS_ALLOC, L_IN)

    operands = (a, kp["w1t"], kp["w2xt"], kp["w2ct"], kp["b1big"], kp["b2big"],
                kp["c1mask"], kp["sel"], kp["w1p"], kp["bfc1"], kp["wfc2"], kp["bfc2"])

    out = pl.pallas_call(
        _densenucy_kernel,
        out_shape=jax.ShapeDtypeStruct((BATCH, 1), jnp.float32),
        grid=(1,),
        in_specs=[_full_spec(o.shape) for o in operands],
        out_specs=_full_spec((BATCH, 1)),
        scratch_shapes=[
            pltpu.VMEM((ROWS_ALLOC, L_G), jnp.float32),        # zero-padded conv1 output slab
            pltpu.VMEM((ROWS_ALLOC, L_G), jnp.float32),        # zero-padded conv2 output slab
            pltpu.VMEM((POOL_ROWS, POOL_LANES), jnp.float32),  # pooled + flattened features
        ],
        compiler_params=pltpu.CompilerParams(
            dimension_semantics=("arbitrary",),
        ),
        cost_estimate=pl.CostEstimate(
            flops=49_000_000, transcendentals=0, bytes_accessed=950_000),
    )(*operands)

    return jnp.squeeze(out)                                            # matches x.squeeze()


# ----------------------------------------------------------------------------
# Parameter init (torch layouts, kaiming fan_in/relu, const biases) + packing
# ----------------------------------------------------------------------------
def init_params(key):
    k1, k2, k3, k4 = jax.random.split(key, 4)

    def kaiming(k, shape, fan_in):
        return ((2.0 / fan_in) ** 0.5) * jax.random.normal(k, shape, dtype=jnp.float32)

    return {
        # Conv3d weights: (Cout, Cin, kd, kh, kw)
        "w1": kaiming(k1, (GROWTH, CIN, 3, 3, 3), CIN * 27),
        "b1": jnp.full((GROWTH,), 0.1, jnp.float32),
        "w2": kaiming(k2, (GROWTH, CIN + GROWTH, 3, 3, 3), (CIN + GROWTH) * 27),
        "b2": jnp.full((GROWTH,), 0.1, jnp.float32),
        # Linear weights: torch (out, in) layout
        "fc1_w": kaiming(k3, (HIDDEN, FLAT), FLAT),
        "fc1_b": jnp.full((HIDDEN,), 1.0, jnp.float32),
        "fc2_w": kaiming(k4, (1, HIDDEN), HIDDEN),
        "fc2_b": jnp.full((1,), 1.0, jnp.float32),
    }


def _conv_tap_weights(w_conv):
    """(Cout, Cin, 3,3,3) torch Conv3d weight -> (9, WP*Cin, WP*Cout) banded block-Toeplitz
    tap matrices (one per (kd, kh)); the kw taps are folded into the band structure."""
    cout, cin = int(w_conv.shape[0]), int(w_conv.shape[1])
    t = np.zeros((3, WP, WP), np.float32)
    for kw in range(3):
        for wo in range(WP):
            wi = wo + kw - 1
            if 0 <= wi < WP:
                t[kw, wi, wo] = 1.0
    big = jnp.einsum("ocdhk,kiw->dhicwo", w_conv.astype(jnp.float32), jnp.asarray(t))
    return big.reshape(9, WP * cin, WP * cout)


def _halo_mask():
    """1 at valid (non-padding) rows/lanes of a conv-output slab, 0 at the halo."""
    m = np.zeros((ROWS, L_G), np.float32)
    for r in range(ROWS):
        dp = (r % (DP * HP)) // HP
        hp = r % HP
        if 1 <= dp <= D and 1 <= hp <= H:
            for lane in range(L_G):
                if 1 <= lane // GROWTH <= W:
                    m[r, lane] = 1.0
    return jnp.asarray(m)


def _pool_select_matrix():
    """0/1 matrix gathering the pooling anchor rows; output rows ordered (d2, h2, n)."""
    s = np.zeros((POOL_ROWS, ROWS), np.float32)
    for n in range(BATCH):
        for d2 in range(PD):
            for h2 in range(PH):
                row = (d2 * PH + h2) * BATCH + n
                col = n * (DP * HP) + (2 * d2 + 1) * HP + (2 * h2 + 1)
                s[row, col] = 1.0
    return jnp.asarray(s)


def _permute_fc1(fc1_w):
    """Reorder fc1 input features from torch NCDHW-flatten order to the kernel's
    (d2, h2)-block x (group, w2, c)-lane order."""
    r = fc1_w.reshape(HIDDEN, C_CAT, PD, PH, PW)                  # (o, c_glob, d2, h2, w2)
    pieces = []
    for c_off, cg in ((0, CIN), (CIN, GROWTH), (CIN + GROWTH, GROWTH)):
        blk = r[:, c_off:c_off + cg]                              # (o, cg, d2, h2, w2)
        blk = jnp.transpose(blk, (2, 3, 4, 1, 0))                 # (d2, h2, w2, c, o)
        pieces.append(blk.reshape(PD, PH, PW * cg, HIDDEN))
    w = jnp.concatenate(pieces, axis=2)                           # (d2, h2, POOL_LANES, o)
    return w.reshape(FLAT, HIDDEN)


def pack_params(p):
    """One-time transform of torch-layout weights into kernel-ready operands."""
    return {
        "w1t": _conv_tap_weights(p["w1"]),
        "w2xt": _conv_tap_weights(p["w2"][:, :CIN]),
        "w2ct": _conv_tap_weights(p["w2"][:, CIN:]),
        "b1big": jnp.tile(p["b1"], WP).reshape(1, L_G).astype(jnp.float32),
        "b2big": jnp.tile(p["b2"], WP).reshape(1, L_G).astype(jnp.float32),
        "c1mask": _halo_mask(),
        "sel": _pool_select_matrix(),
        "w1p": _permute_fc1(p["fc1_w"]).astype(jnp.float32),
        "bfc1": p["fc1_b"].reshape(1, HIDDEN).astype(jnp.float32),
        "wfc2": p["fc2_w"].reshape(1, HIDDEN).astype(jnp.float32),
        "bfc2": p["fc2_b"].reshape(1, 1).astype(jnp.float32),
    }


# ----------------------------------------------------------------------------
# Pure-JAX reference (same math as the PyTorch module) for a correctness guard
# ----------------------------------------------------------------------------
def reference_forward(x_ncdhw, p):
    x = jnp.transpose(x_ncdhw, (0, 2, 3, 4, 1)).astype(jnp.float32)

    def conv(v, w, b):
        out = jax.lax.conv_general_dilated(
            v, jnp.transpose(w, (2, 3, 4, 1, 0)),
            window_strides=(1, 1, 1), padding="SAME",
            dimension_numbers=("NDHWC", "DHWIO", "NDHWC"))
        return jnp.maximum(out + b, 0.0)

    c1 = conv(x, p["w1"], p["b1"])
    x1 = jnp.concatenate([x, c1], axis=-1)
    c2 = conv(x1, p["w2"], p["b2"])
    x2 = jnp.concatenate([x1, c2], axis=-1)
    n_, d_, h_, w_, c_ = x2.shape
    pooled = x2.reshape(n_, d_ // 2, 2, h_ // 2, 2, w_ // 2, 2, c_).max(axis=(2, 4, 6))
    feat = jnp.transpose(pooled, (0, 4, 1, 2, 3)).reshape(n_, -1)       # torch.flatten(x, 1)
    hdn = jnp.maximum(feat @ p["fc1_w"].T + p["fc1_b"], 0.0)
    out = hdn @ p["fc2_w"].T + p["fc2_b"]
    return jnp.squeeze(out)


if __name__ == "__main__":
    key = jax.random.PRNGKey(0)
    pkey, xkey = jax.random.split(key)

    params = init_params(pkey)
    packed = pack_params(params)
    x = jax.random.normal(xkey, (BATCH, CIN, D, H, W), dtype=jnp.float32)   # NCDHW

    y = densenucy_forward(x, packed)
    y = jax.block_until_ready(y)

    assert y.shape == (BATCH,), y.shape
    assert bool(jnp.all(jnp.isfinite(y)))

    # correctness guard against the plain-JAX reference (tolerance covers MXU rounding)
    y_ref = reference_forward(x, params)
    assert jnp.allclose(y, y_ref, rtol=5e-2, atol=5e-2), (y, y_ref)

    print("KERNEL_OK")
</pallas_src>

<mosaic_0001>
module attributes {stable_mosaic.version = 11 : i64} {
  func.func @_densenucy_kernel(%arg0: i32, %arg1: memref<232x40xf32, #tpu.memory_space<vmem>>, %arg2: memref<9x40x80xf32, #tpu.memory_space<vmem>>, %arg3: memref<9x40x80xf32, #tpu.memory_space<vmem>>, %arg4: memref<9x80x80xf32, #tpu.memory_space<vmem>>, %arg5: memref<1x80xf32, #tpu.memory_space<vmem>>, %arg6: memref<1x80xf32, #tpu.memory_space<vmem>>, %arg7: memref<200x80xf32, #tpu.memory_space<vmem>>, %arg8: memref<32x200xf32, #tpu.memory_space<vmem>>, %arg9: memref<1280x64xf32, #tpu.memory_space<vmem>>, %arg10: memref<1x64xf32, #tpu.memory_space<vmem>>, %arg11: memref<1x64xf32, #tpu.memory_space<vmem>>, %arg12: memref<1x1xf32, #tpu.memory_space<vmem>>, %arg13: memref<2x1xf32, #tpu.memory_space<vmem>>, %arg14: memref<232x80xf32, #tpu.memory_space<vmem>>, %arg15: memref<232x80xf32, #tpu.memory_space<vmem>>, %arg16: memref<32x80xf32, #tpu.memory_space<vmem>>) attributes {dimension_semantics = [#tpu.dimension_semantics<arbitrary>], iteration_bounds = array<i64: 1>, scalar_prefetch = 0 : i64, scratch_operands = 3 : i64, tpu.core_type = #tpu.core_type<tc>, window_params = [{pipeline_mode = #tpu.pipeline_mode<synchronous>, transform_indices = @transform_0, window_bounds = array<i64: 232, 40>}, {pipeline_mode = #tpu.pipeline_mode<synchronous>, transform_indices = @transform_1, window_bounds = array<i64: 9, 40, 80>}, {pipeline_mode = #tpu.pipeline_mode<synchronous>, transform_indices = @transform_2, window_bounds = array<i64: 9, 40, 80>}, {pipeline_mode = #tpu.pipeline_mode<synchronous>, transform_indices = @transform_3, window_bounds = array<i64: 9, 80, 80>}, {pipeline_mode = #tpu.pipeline_mode<synchronous>, transform_indices = @transform_4, window_bounds = array<i64: 1, 80>}, {pipeline_mode = #tpu.pipeline_mode<synchronous>, transform_indices = @transform_5, window_bounds = array<i64: 1, 80>}, {pipeline_mode = #tpu.pipeline_mode<synchronous>, transform_indices = @transform_6, window_bounds = array<i64: 200, 80>}, {pipeline_mode = #tpu.pipeline_mode<synchronous>, transform_indices = @transform_7, window_bounds = array<i64: 32, 200>}, {pipeline_mode = #tpu.pipeline_mode<synchronous>, transform_indices = @transform_8, window_bounds = array<i64: 1280, 64>}, {pipeline_mode = #tpu.pipeline_mode<synchronous>, transform_indices = @transform_9, window_bounds = array<i64: 1, 64>}, {pipeline_mode = #tpu.pipeline_mode<synchronous>, transform_indices = @transform_10, window_bounds = array<i64: 1, 64>}, {pipeline_mode = #tpu.pipeline_mode<synchronous>, transform_indices = @transform_11, window_bounds = array<i64: 1, 1>}, {pipeline_mode = #tpu.pipeline_mode<synchronous>, transform_indices = @transform_12, window_bounds = array<i64: 2, 1>}]} {
    %cst = arith.constant 0.000000e+00 : f32
    %0 = vector.broadcast %cst : f32 to vector<200x80xf32>
    %cst_0 = arith.constant 0.000000e+00 : f32
    %1 = vector.broadcast %cst_0 : f32 to vector<200x80xf32>
    %c5 = arith.constant 5 : index
    %c0 = arith.constant 0 : index
    %2 = vector.load %arg1[%c5, %c0] : memref<232x40xf32, #tpu.memory_space<vmem>>, vector<200x40xf32>
    %c0_1 = arith.constant 0 : index
    %c0_2 = arith.constant 0 : index
    %c0_3 = arith.constant 0 : index
    %3 = vector.load %arg2[%c0_1, %c0_2, %c0_3] : memref<9x40x80xf32, #tpu.memory_space<vmem>>, vector<1x40x80xf32>
    %4 = vector.shape_cast %3 : vector<1x40x80xf32> to vector<40x80xf32>
    %cst_4 = arith.constant dense<0.000000e+00> : vector<200x80xf32>
    %5 = tpu.matmul %2, %4, %cst_4 {dimension_numbers = #tpu.dot_dimension_numbers<[1], [0], [0], [1], [0, 0, 1, 1], [], []>} : vector<200x40xf32>, vector<40x80xf32>, vector<200x80xf32> -> vector<200x80xf32>
    %6 = arith.addf %0, %5 : vector<200x80xf32>
    %c0_5 = arith.constant 0 : index
    %c0_6 = arith.constant 0 : index
    %c0_7 = arith.constant 0 : index
    %7 = vector.load %arg3[%c0_5, %c0_6, %c0_7] : memref<9x40x80xf32, #tpu.memory_space<vmem>>, vector<1x40x80xf32>
    %8 = vector.shape_cast %7 : vector<1x40x80xf32> to vector<40x80xf32>
    %cst_8 = arith.constant dense<0.000000e+00> : vector<200x80xf32>
    %9 = tpu.matmul %2, %8, %cst_8 {dimension_numbers = #tpu.dot_dimension_numbers<[1], [0], [0], [1], [0, 0, 1, 1], [], []>} : vector<200x40xf32>, vector<40x80xf32>, vector<200x80xf32> -> vector<200x80xf32>
    %10 = arith.addf %1, %9 : vector<200x80xf32>
    %c6 = arith.constant 6 : index
    %c0_9 = arith.constant 0 : index
    %11 = vector.load %arg1[%c6, %c0_9] : memref<232x40xf32, #tpu.memory_space<vmem>>, vector<200x40xf32>
    %c1 = arith.constant 1 : index
    %c0_10 = arith.constant 0 : index
    %c0_11 = arith.constant 0 : index
    %12 = vector.load %arg2[%c1, %c0_10, %c0_11] : memref<9x40x80xf32, #tpu.memory_space<vmem>>, vector<1x40x80xf32>
    %13 = vector.shape_cast %12 : vector<1x40x80xf32> to vector<40x80xf32>
    %cst_12 = arith.constant dense<0.000000e+00> : vector<200x80xf32>
    %14 = tpu.matmul %11, %13, %cst_12 {dimension_numbers = #tpu.dot_dimension_numbers<[1], [0], [0], [1], [0, 0, 1, 1], [], []>} : vector<200x40xf32>, vector<40x80xf32>, vector<200x80xf32> -> vector<200x80xf32>
    %15 = arith.addf %6, %14 : vector<200x80xf32>
    %c1_13 = arith.constant 1 : index
    %c0_14 = arith.constant 0 : index
    %c0_15 = arith.constant 0 : index
    %16 = vector.load %arg3[%c1_13, %c0_14, %c0_15] : memref<9x40x80xf32, #tpu.memory_space<vmem>>, vector<1x40x80xf32>
    %17 = vector.shape_cast %16 : vector<1x40x80xf32> to vector<40x80xf32>
    %cst_16 = arith.constant dense<0.000000e+00> : vector<200x80xf32>
    %18 = tpu.matmul %11, %17, %cst_16 {dimension_numbers = #tpu.dot_dimension_numbers<[1], [0], [0], [1], [0, 0, 1, 1], [], []>} : vector<200x40xf32>, vector<40x80xf32>, vector<200x80xf32> -> vector<200x80xf32>
    %19 = arith.addf %10, %18 : vector<200x80xf32>
    %c7 = arith.constant 7 : index
    %c0_17 = arith.constant 0 : index
    %20 = vector.load %arg1[%c7, %c0_17] : memref<232x40xf32, #tpu.memory_space<vmem>>, vector<200x40xf32>
    %c2 = arith.constant 2 : index
    %c0_18 = arith.constant 0 : index
    %c0_19 = arith.constant 0 : index
    %21 = vector.load %arg2[%c2, %c0_18, %c0_19] : memref<9x40x80xf32, #tpu.memory_space<vmem>>, vector<1x40x80xf32>
    %22 = vector.shape_cast %21 : vector<1x40x80xf32> to vector<40x80xf32>
    %cst_20 = arith.constant dense<0.000000e+00> : vector<200x80xf32>
    %23 = tpu.matmul %20, %22, %cst_20 {dimension_numbers = #tpu.dot_dimension_numbers<[1], [0], [0], [1], [0, 0, 1, 1], [], []>} : vector<200x40xf32>, vector<40x80xf32>, vector<200x80xf32> -> vector<200x80xf32>
    %24 = arith.addf %15, %23 : vector<200x80xf32>
    %c2_21 = arith.constant 2 : index
    %c0_22 = arith.constant 0 : index
    %c0_23 = arith.constant 0 : index
    %25 = vector.load %arg3[%c2_21, %c0_22, %c0_23] : memref<9x40x80xf32, #tpu.memory_space<vmem>>, vector<1x40x80xf32>
    %26 = vector.shape_cast %25 : vector<1x40x80xf32> to vector<40x80xf32>
    %cst_24 = arith.constant dense<0.000000e+00> : vector<200x80xf32>
    %27 = tpu.matmul %20, %26, %cst_24 {dimension_numbers = #tpu.dot_dimension_numbers<[1], [0], [0], [1], [0, 0, 1, 1], [], []>} : vector<200x40xf32>, vector<40x80xf32>, vector<200x80xf32> -> vector<200x80xf32>
    %28 = arith.addf %19, %27 : vector<200x80xf32>
    %c15 = arith.constant 15 : index
    %c0_25 = arith.constant 0 : index
    %29 = vector.load %arg1[%c15, %c0_25] : memref<232x40xf32, #tpu.memory_space<vmem>>, vector<200x40xf32>
    %c3 = arith.constant 3 : index
    %c0_26 = arith.constant 0 : index
    %c0_27 = arith.constant 0 : index
    %30 = vector.load %arg2[%c3, %c0_26, %c0_27] : memref<9x40x80xf32, #tpu.memory_space<vmem>>, vector<1x40x80xf32>
    %31 = vector.shape_cast %30 : vector<1x40x80xf32> to vector<40x80xf32>
    %cst_28 = arith.constant dense<0.000000e+00> : vector<200x80xf32>
    %32 = tpu.matmul %29, %31, %cst_28 {dimension_numbers = #tpu.dot_dimension_numbers<[1], [0], [0], [1], [0, 0, 1, 1], [], []>} : vector<200x40xf32>, vector<40x80xf32>, vector<200x80xf32> -> vector<200x80xf32>
    %33 = arith.addf %24, %32 : vector<200x80xf32>
    %c3_29 = arith.constant 3 : index
    %c0_30 = arith.constant 0 : index
    %c0_31 = arith.constant 0 : index
    %34 = vector.load %arg3[%c3_29, %c0_30, %c0_31] : memref<9x40x80xf32, #tpu.memory_space<vmem>>, vector<1x40x80xf32>
    %35 = vector.shape_cast %34 : vector<1x40x80xf32> to vector<40x80xf32>
    %cst_32 = arith.constant dense<0.000000e+00> : vector<200x80xf32>
    %36 = tpu.matmul %29, %35, %cst_32 {dimension_numbers = #tpu.dot_dimension_numbers<[1], [0], [0], [1], [0, 0, 1, 1], [], []>} : vector<200x40xf32>, vector<40x80xf32>, vector<200x80xf32> -> vector<200x80xf32>
    %37 = arith.addf %28, %36 : vector<200x80xf32>
    %c16 = arith.constant 16 : index
    %c0_33 = arith.constant 0 : index
    %38 = vector.load %arg1[%c16, %c0_33] : memref<232x40xf32, #tpu.memory_space<vmem>>, vector<200x40xf32>
    %c4 = arith.constant 4 : index
    %c0_34 = arith.constant 0 : index
    %c0_35 = arith.constant 0 : index
    %39 = vector.load %arg2[%c4, %c0_34, %c0_35] : memref<9x40x80xf32, #tpu.memory_space<vmem>>, vector<1x40x80xf32>
    %40 = vector.shape_cast %39 : vector<1x40x80xf32> to vector<40x80xf32>
    %cst_36 = arith.constant dense<0.000000e+00> : vector<200x80xf32>
    %41 = tpu.matmul %38, %40, %cst_36 {dimension_numbers = #tpu.dot_dimension_numbers<[1], [0], [0], [1], [0, 0, 1, 1], [], []>} : vector<200x40xf32>, vector<40x80xf32>, vector<200x80xf32> -> vector<200x80xf32>
    %42 = arith.addf %33, %41 : vector<200x80xf32>
    %c4_37 = arith.constant 4 : index
    %c0_38 = arith.constant 0 : index
    %c0_39 = arith.constant 0 : index
    %43 = vector.load %arg3[%c4_37, %c0_38, %c0_39] : memref<9x40x80xf32, #tpu.memory_space<vmem>>, vector<1x40x80xf32>
    %44 = vector.shape_cast %43 : vector<1x40x80xf32> to vector<40x80xf32>
    %cst_40 = arith.constant dense<0.000000e+00> : vector<200x80xf32>
    %45 = tpu.matmul %38, %44, %cst_40 {dimension_numbers = #tpu.dot_dimension_numbers<[1], [0], [0], [1], [0, 0, 1, 1], [], []>} : vector<200x40xf32>, vector<40x80xf32>, vector<200x80xf32> -> vector<200x80xf32>
    %46 = arith.addf %37, %45 : vector<200x80xf32>
    %c17 = arith.constant 17 : index
    %c0_41 = arith.constant 0 : index
    %47 = vector.load %arg1[%c17, %c0_41] : memref<232x40xf32, #tpu.memory_space<vmem>>, vector<200x40xf32>
    %c5_42 = arith.constant 5 : index
    %c0_43 = arith.constant 0 : index
    %c0_44 = arith.constant 0 : index
    %48 = vector.load %arg2[%c5_42, %c0_43, %c0_44] : memref<9x40x80xf32, #tpu.memory_space<vmem>>, vector<1x40x80xf32>
    %49 = vector.shape_cast %48 : vector<1x40x80xf32> to vector<40x80xf32>
    %cst_45 = arith.constant dense<0.000000e+00> : vector<200x80xf32>
    %50 = tpu.matmul %47, %49, %cst_45 {dimension_numbers = #tpu.dot_dimension_numbers<[1], [0], [0], [1], [0, 0, 1, 1], [], []>} : vector<200x40xf32>, vector<40x80xf32>, vector<200x80xf32> -> vector<200x80xf32>
    %51 = arith.addf %42, %50 : vector<200x80xf32>
    %c5_46 = arith.constant 5 : index
    %c0_47 = arith.constant 0 : index
    %c0_48 = arith.constant 0 : index
    %52 = vector.load %arg3[%c5_46, %c0_47, %c0_48] : memref<9x40x80xf32, #tpu.memory_space<vmem>>, vector<1x40x80xf32>
    %53 = vector.shape_cast %52 : vector<1x40x80xf32> to vector<40x80xf32>
    %cst_49 = arith.constant dense<0.000000e+00> : vector<200x80xf32>
    %54 = tpu.matmul %47, %53, %cst_49 {dimension_numbers = #tpu.dot_dimension_numbers<[1], [0], [0], [1], [0, 0, 1, 1], [], []>} : vector<200x40xf32>, vector<40x80xf32>, vector<200x80xf32> -> vector<200x80xf32>
    %55 = arith.addf %46, %54 : vector<200x80xf32>
    %c25 = arith.constant 25 : index
    %c0_50 = arith.constant 0 : index
    %56 = vector.load %arg1[%c25, %c0_50] : memref<232x40xf32, #tpu.memory_space<vmem>>, vector<200x40xf32>
    %c6_51 = arith.constant 6 : index
    %c0_52 = arith.constant 0 : index
    %c0_53 = arith.constant 0 : index
    %57 = vector.load %arg2[%c6_51, %c0_52, %c0_53] : memref<9x40x80xf32, #tpu.memory_space<vmem>>, vector<1x40x80xf32>
    %58 = vector.shape_cast %57 : vector<1x40x80xf32> to vector<40x80xf32>
    %cst_54 = arith.constant dense<0.000000e+00> : vector<200x80xf32>
    %59 = tpu.matmul %56, %58, %cst_54 {dimension_numbers = #tpu.dot_dimension_numbers<[1], [0], [0], [1], [0, 0, 1, 1], [], []>} : vector<200x40xf32>, vector<40x80xf32>, vector<200x80xf32> -> vector<200x80xf32>
    %60 = arith.addf %51, %59 : vector<200x80xf32>
    %c6_55 = arith.constant 6 : index
    %c0_56 = arith.constant 0 : index
    %c0_57 = arith.constant 0 : index
    %61 = vector.load %arg3[%c6_55, %c0_56, %c0_57] : memref<9x40x80xf32, #tpu.memory_space<vmem>>, vector<1x40x80xf32>
    %62 = vector.shape_cast %61 : vector<1x40x80xf32> to vector<40x80xf32>
    %cst_58 = arith.constant dense<0.000000e+00> : vector<200x80xf32>
    %63 = tpu.matmul %56, %62, %cst_58 {dimension_numbers = #tpu.dot_dimension_numbers<[1], [0], [0], [1], [0, 0, 1, 1], [], []>} : vector<200x40xf32>, vector<40x80xf32>, vector<200x80xf32> -> vector<200x80xf32>
    %64 = arith.addf %55, %63 : vector<200x80xf32>
    %c26 = arith.constant 26 : index
    %c0_59 = arith.constant 0 : index
    %65 = vector.load %arg1[%c26, %c0_59] : memref<232x40xf32, #tpu.memory_space<vmem>>, vector<200x40xf32>
    %c7_60 = arith.constant 7 : index
    %c0_61 = arith.constant 0 : index
    %c0_62 = arith.constant 0 : index
    %66 = vector.load %arg2[%c7_60, %c0_61, %c0_62] : memref<9x40x80xf32, #tpu.memory_space<vmem>>, vector<1x40x80xf32>
    %67 = vector.shape_cast %66 : vector<1x40x80xf32> to vector<40x80xf32>
    %cst_63 = arith.constant dense<0.000000e+00> : vector<200x80xf32>
    %68 = tpu.matmul %65, %67, %cst_63 {dimension_numbers = #tpu.dot_dimension_numbers<[1], [0], [0], [1], [0, 0, 1, 1], [], []>} : vector<200x40xf32>, vector<40x80xf32>, vector<200x80xf32> -> vector<200x80xf32>
    %69 = arith.addf %60, %68 : vector<200x80xf32>
    %c7_64 = arith.constant 7 : index
    %c0_65 = arith.constant 0 : index
    %c0_66 = arith.constant 0 : index
    %70 = vector.load %arg3[%c7_64, %c0_65, %c0_66] : memref<9x40x80xf32, #tpu.memory_space<vmem>>, vector<1x40x80xf32>
    %71 = vector.shape_cast %70 : vector<1x40x80xf32> to vector<40x80xf32>
    %cst_67 = arith.constant dense<0.000000e+00> : vector<200x80xf32>
    %72 = tpu.matmul %65, %71, %cst_67 {dimension_numbers = #tpu.dot_dimension_numbers<[1], [0], [0], [1], [0, 0, 1, 1], [], []>} : vector<200x40xf32>, vector<40x80xf32>, vector<200x80xf32> -> vector<200x80xf32>
    %73 = arith.addf %64, %72 : vector<200x80xf32>
    %c27 = arith.constant 27 : index
    %c0_68 = arith.constant 0 : index
    %74 = vector.load %arg1[%c27, %c0_68] : memref<232x40xf32, #tpu.memory_space<vmem>>, vector<200x40xf32>
    %c8 = arith.constant 8 : index
    %c0_69 = arith.constant 0 : index
    %c0_70 = arith.constant 0 : index
    %75 = vector.load %arg2[%c8, %c0_69, %c0_70] : memref<9x40x80xf32, #tpu.memory_space<vmem>>, vector<1x40x80xf32>
    %76 = vector.shape_cast %75 : vector<1x40x80xf32> to vector<40x80xf32>
    %cst_71 = arith.constant dense<0.000000e+00> : vector<200x80xf32>
    %77 = tpu.matmul %74, %76, %cst_71 {dimension_numbers = #tpu.dot_dimension_numbers<[1], [0], [0], [1], [0, 0, 1, 1], [], []>} : vector<200x40xf32>, vector<40x80xf32>, vector<200x80xf32> -> vector<200x80xf32>
    %78 = arith.addf %69, %77 : vector<200x80xf32>
    %c8_72 = arith.constant 8 : index
    %c0_73 = arith.constant 0 : index
    %c0_74 = arith.constant 0 : index
    %79 = vector.load %arg3[%c8_72, %c0_73, %c0_74] : memref<9x40x80xf32, #tpu.memory_space<vmem>>, vector<1x40x80xf32>
    %80 = vector.shape_cast %79 : vector<1x40x80xf32> to vector<40x80xf32>
    %cst_75 = arith.constant dense<0.000000e+00> : vector<200x80xf32>
    %81 = tpu.matmul %74, %80, %cst_75 {dimension_numbers = #tpu.dot_dimension_numbers<[1], [0], [0], [1], [0, 0, 1, 1], [], []>} : vector<200x40xf32>, vector<40x80xf32>, vector<200x80xf32> -> vector<200x80xf32>
    %82 = arith.addf %73, %81 : vector<200x80xf32>
    %c0_76 = arith.constant 0 : index
    %c0_77 = arith.constant 0 : index
    %83 = vector.load %arg5[%c0_76, %c0_77] : memref<1x80xf32, #tpu.memory_space<vmem>>, vector<1x80xf32>
    %84 = vector.broadcast %83 : vector<1x80xf32> to vector<200x80xf32>
    %85 = arith.addf %78, %84 : vector<200x80xf32>
    %cst_78 = arith.constant 0.000000e+00 : f32
    %86 = vector.broadcast %cst_78 : f32 to vector<200x80xf32>
    %87 = arith.maximumf %85, %86 : vector<200x80xf32>
    %c0_79 = arith.constant 0 : index
    %c0_80 = arith.constant 0 : index
    %88 = vector.load %arg7[%c0_79, %c0_80] : memref<200x80xf32, #tpu.memory_space<vmem>>, vector<200x80xf32>
    %89 = arith.mulf %87, %88 : vector<200x80xf32>
    %cst_81 = arith.constant 0.000000e+00 : f32
    %90 = vector.broadcast %cst_81 : f32 to vector<232x80xf32>
    %c0_82 = arith.constant 0 : index
    %c0_83 = arith.constant 0 : index
    %91 = vector.load %arg14[%c0_82, %c0_83] : memref<232x80xf32, #tpu.memory_space<vmem>>, vector<232x80xf32>
    tpu.vector_store %arg14[%c0_82, %c0_83], %90 {strides = array<i32>} : memref<232x80xf32, #tpu.memory_space<vmem>>, vector<232x80xf32>,
    %c16_84 = arith.constant 16 : index
    %c0_85 = arith.constant 0 : index
    %92 = vector.load %arg14[%c16_84, %c0_85] : memref<232x80xf32, #tpu.memory_space<vmem>>, vector<200x80xf32>
    tpu.vector_store %arg14[%c16_84, %c0_85], %89 {strides = array<i32>} : memref<232x80xf32, #tpu.memory_space<vmem>>, vector<200x80xf32>,
    %c5_86 = arith.constant 5 : index
    %c0_87 = arith.constant 0 : index
    %93 = vector.load %arg14[%c5_86, %c0_87] : memref<232x80xf32, #tpu.memory_space<vmem>>, vector<200x80xf32>
    %c0_88 = arith.constant 0 : index
    %c0_89 = arith.constant 0 : index
    %c0_90 = arith.constant 0 : index
    %94 = vector.load %arg4[%c0_88, %c0_89, %c0_90] : memref<9x80x80xf32, #tpu.memory_space<vmem>>, vector<1x80x80xf32>
    %95 = vector.shape_cast %94 : vector<1x80x80xf32> to vector<80x80xf32>
    %cst_91 = arith.constant dense<0.000000e+00> : vector<200x80xf32>
    %96 = tpu.matmul %93, %95, %cst_91 {dimension_numbers = #tpu.dot_dimension_numbers<[1], [0], [0], [1], [0, 0, 1, 1], [], []>} : vector<200x80xf32>, vector<80x80xf32>, vector<200x80xf32> -> vector<200x80xf32>
    %97 = arith.addf %82, %96 : vector<200x80xf32>
    %c6_92 = arith.constant 6 : index
    %c0_93 = arith.constant 0 : index
    %98 = vector.load %arg14[%c6_92, %c0_93] : memref<232x80xf32, #tpu.memory_space<vmem>>, vector<200x80xf32>
    %c1_94 = arith.constant 1 : index
    %c0_95 = arith.constant 0 : index
    %c0_96 = arith.constant 0 : index
    %99 = vector.load %arg4[%c1_94, %c0_95, %c0_96] : memref<9x80x80xf32, #tpu.memory_space<vmem>>, vector<1x80x80xf32>
    %100 = vector.shape_cast %99 : vector<1x80x80xf32> to vector<80x80xf32>
    %cst_97 = arith.constant dense<0.000000e+00> : vector<200x80xf32>
    %101 = tpu.matmul %98, %100, %cst_97 {dimension_numbers = #tpu.dot_dimension_numbers<[1], [0], [0], [1], [0, 0, 1, 1], [], []>} : vector<200x80xf32>, vector<80x80xf32>, vector<200x80xf32> -> vector<200x80xf32>
    %102 = arith.addf %97, %101 : vector<200x80xf32>
    %c7_98 = arith.constant 7 : index
    %c0_99 = arith.constant 0 : index
    %103 = vector.load %arg14[%c7_98, %c0_99] : memref<232x80xf32, #tpu.memory_space<vmem>>, vector<200x80xf32>
    %c2_100 = arith.constant 2 : index
    %c0_101 = arith.constant 0 : index
    %c0_102 = arith.constant 0 : index
    %104 = vector.load %arg4[%c2_100, %c0_101, %c0_102] : memref<9x80x80xf32, #tpu.memory_space<vmem>>, vector<1x80x80xf32>
    %105 = vector.shape_cast %104 : vector<1x80x80xf32> to vector<80x80xf32>
    %cst_103 = arith.constant dense<0.000000e+00> : vector<200x80xf32>
    %106 = tpu.matmul %103, %105, %cst_103 {dimension_numbers = #tpu.dot_dimension_numbers<[1], [0], [0], [1], [0, 0, 1, 1], [], []>} : vector<200x80xf32>, vector<80x80xf32>, vector<200x80xf32> -> vector<200x80xf32>
    %107 = arith.addf %102, %106 : vector<200x80xf32>
    %c15_104 = arith.constant 15 : index
    %c0_105 = arith.constant 0 : index
    %108 = vector.load %arg14[%c15_104, %c0_105] : memref<232x80xf32, #tpu.memory_space<vmem>>, vector<200x80xf32>
    %c3_106 = arith.constant 3 : index
    %c0_107 = arith.constant 0 : index
    %c0_108 = arith.constant 0 : index
    %109 = vector.load %arg4[%c3_106, %c0_107, %c0_108] : memref<9x80x80xf32, #tpu.memory_space<vmem>>, vector<1x80x80xf32>
    %110 = vector.shape_cast %109 : vector<1x80x80xf32> to vector<80x80xf32>
    %cst_109 = arith.constant dense<0.000000e+00> : vector<200x80xf32>
    %111 = tpu.matmul %108, %110, %cst_109 {dimension_numbers = #tpu.dot_dimension_numbers<[1], [0], [0], [1], [0, 0, 1, 1], [], []>} : vector<200x80xf32>, vector<80x80xf32>, vector<200x80xf32> -> vector<200x80xf32>
    %112 = arith.addf %107, %111 : vector<200x80xf32>
    %c16_110 = arith.constant 16 : index
    %c0_111 = arith.constant 0 : index
    %113 = vector.load %arg14[%c16_110, %c0_111] : memref<232x80xf32, #tpu.memory_space<vmem>>, vector<200x80xf32>
    %c4_112 = arith.constant 4 : index
    %c0_113 = arith.constant 0 : index
    %c0_114 = arith.constant 0 : index
    %114 = vector.load %arg4[%c4_112, %c0_113, %c0_114] : memref<9x80x80xf32, #tpu.memory_space<vmem>>, vector<1x80x80xf32>
    %115 = vector.shape_cast %114 : vector<1x80x80xf32> to vector<80x80xf32>
    %cst_115 = arith.constant dense<0.000000e+00> : vector<200x80xf32>
    %116 = tpu.matmul %113, %115, %cst_115 {dimension_numbers = #tpu.dot_dimension_numbers<[1], [0], [0], [1], [0, 0, 1, 1], [], []>} : vector<200x80xf32>, vector<80x80xf32>, vector<200x80xf32> -> vector<200x80xf32>
    %117 = arith.addf %112, %116 : vector<200x80xf32>
    %c17_116 = arith.constant 17 : index
    %c0_117 = arith.constant 0 : index
    %118 = vector.load %arg14[%c17_116, %c0_117] : memref<232x80xf32, #tpu.memory_space<vmem>>, vector<200x80xf32>
    %c5_118 = arith.constant 5 : index
    %c0_119 = arith.constant 0 : index
    %c0_120 = arith.constant 0 : index
    %119 = vector.load %arg4[%c5_118, %c0_119, %c0_120] : memref<9x80x80xf32, #tpu.memory_space<vmem>>, vector<1x80x80xf32>
    %120 = vector.shape_cast %119 : vector<1x80x80xf32> to vector<80x80xf32>
    %cst_121 = arith.constant dense<0.000000e+00> : vector<200x80xf32>
    %121 = tpu.matmul %118, %120, %cst_121 {dimension_numbers = #tpu.dot_dimension_numbers<[1], [0], [0], [1], [0, 0, 1, 1], [], []>} : vector<200x80xf32>, vector<80x80xf32>, vector<200x80xf32> -> vector<200x80xf32>
    %122 = arith.addf %117, %121 : vector<200x80xf32>
    %c25_122 = arith.constant 25 : index
    %c0_123 = arith.constant 0 : index
    %123 = vector.load %arg14[%c25_122, %c0_123] : memref<232x80xf32, #tpu.memory_space<vmem>>, vector<200x80xf32>
    %c6_124 = arith.constant 6 : index
    %c0_125 = arith.constant 0 : index
    %c0_126 = arith.constant 0 : index
    %124 = vector.load %arg4[%c6_124, %c0_125, %c0_126] : memref<9x80x80xf32, #tpu.memory_space<vmem>>, vector<1x80x80xf32>
    %125 = vector.shape_cast %124 : vector<1x80x80xf32> to vector<80x80xf32>
    %cst_127 = arith.constant dense<0.000000e+00> : vector<200x80xf32>
    %126 = tpu.matmul %123, %125, %cst_127 {dimension_numbers = #tpu.dot_dimension_numbers<[1], [0], [0], [1], [0, 0, 1, 1], [], []>} : vector<200x80xf32>, vector<80x80xf32>, vector<200x80xf32> -> vector<200x80xf32>
    %127 = arith.addf %122, %126 : vector<200x80xf32>
    %c26_128 = arith.constant 26 : index
    %c0_129 = arith.constant 0 : index
    %128 = vector.load %arg14[%c26_128, %c0_129] : memref<232x80xf32, #tpu.memory_space<vmem>>, vector<200x80xf32>
    %c7_130 = arith.constant 7 : index
    %c0_131 = arith.constant 0 : index
    %c0_132 = arith.constant 0 : index
    %129 = vector.load %arg4[%c7_130, %c0_131, %c0_132] : memref<9x80x80xf32, #tpu.memory_space<vmem>>, vector<1x80x80xf32>
    %130 = vector.shape_cast %129 : vector<1x80x80xf32> to vector<80x80xf32>
    %cst_133 = arith.constant dense<0.000000e+00> : vector<200x80xf32>
    %131 = tpu.matmul %128, %130, %cst_133 {dimension_numbers = #tpu.dot_dimension_numbers<[1], [0], [0], [1], [0, 0, 1, 1], [], []>} : vector<200x80xf32>, vector<80x80xf32>, vector<200x80xf32> -> vector<200x80xf32>
    %132 = arith.addf %127, %131 : vector<200x80xf32>
    %c27_134 = arith.constant 27 : index
    %c0_135 = arith.constant 0 : index
    %133 = vector.load %arg14[%c27_134, %c0_135] : memref<232x80xf32, #tpu.memory_space<vmem>>, vector<200x80xf32>
    %c8_136 = arith.constant 8 : index
    %c0_137 = arith.constant 0 : index
    %c0_138 = arith.constant 0 : index
    %134 = vector.load %arg4[%c8_136, %c0_137, %c0_138] : memref<9x80x80xf32, #tpu.memory_space<vmem>>, vector<1x80x80xf32>
    %135 = vector.shape_cast %134 : vector<1x80x80xf32> to vector<80x80xf32>
    %cst_139 = arith.constant dense<0.000000e+00> : vector<200x80xf32>
    %136 = tpu.matmul %133, %135, %cst_139 {dimension_numbers = #tpu.dot_dimension_numbers<[1], [0], [0], [1], [0, 0, 1, 1], [], []>} : vector<200x80xf32>, vector<80x80xf32>, vector<200x80xf32> -> vector<200x80xf32>
    %137 = arith.addf %132, %136 : vector<200x80xf32>
    %c0_140 = arith.constant 0 : index
    %c0_141 = arith.constant 0 : index
    %138 = vector.load %arg6[%c0_140, %c0_141] : memref<1x80xf32, #tpu.memory_space<vmem>>, vector<1x80xf32>
    %139 = vector.broadcast %138 : vector<1x80xf32> to vector<200x80xf32>
    %140 = arith.addf %137, %139 : vector<200x80xf32>
    %cst_142 = arith.constant 0.000000e+00 : f32
    %141 = vector.broadcast %cst_142 : f32 to vector<200x80xf32>
    %142 = arith.maximumf %140, %141 : vector<200x80xf32>
    %cst_143 = arith.constant 0.000000e+00 : f32
    %143 = vector.broadcast %cst_143 : f32 to vector<232x80xf32>
    %c0_144 = arith.constant 0 : index
    %c0_145 = arith.constant 0 : index
    %144 = vector.load %arg15[%c0_144, %c0_145] : memref<232x80xf32, #tpu.memory_space<vmem>>, vector<232x80xf32>
    tpu.vector_store %arg15[%c0_144, %c0_145], %143 {strides = array<i32>} : memref<232x80xf32, #tpu.memory_space<vmem>>, vector<232x80xf32>,
    %c16_146 = arith.constant 16 : index
    %c0_147 = arith.constant 0 : index
    %145 = vector.load %arg15[%c16_146, %c0_147] : memref<232x80xf32, #tpu.memory_space<vmem>>, vector<200x80xf32>
    tpu.vector_store %arg15[%c16_146, %c0_147], %142 {strides = array<i32>} : memref<232x80xf32, #tpu.memory_space<vmem>>, vector<200x80xf32>,
    %c0_148 = arith.constant 0 : index
    %c0_149 = arith.constant 0 : index
    %146 = vector.load %arg8[%c0_148, %c0_149] : memref<32x200xf32, #tpu.memory_space<vmem>>, vector<32x200xf32>
    %c16_150 = arith.constant 16 : index
    %c0_151 = arith.constant 0 : index
    %147 = vector.load %arg1[%c16_150, %c0_151] : memref<232x40xf32, #tpu.memory_space<vmem>>, vector<200x40xf32>
    %c17_152 = arith.constant 17 : index
    %c0_153 = arith.constant 0 : index
    %148 = vector.load %arg1[%c17_152, %c0_153] : memref<232x40xf32, #tpu.memory_space<vmem>>, vector<200x40xf32>
    %149 = arith.maximumf %147, %148 : vector<200x40xf32>
    %c26_154 = arith.constant 26 : index
    %c0_155 = arith.constant 0 : index
    %150 = vector.load %arg1[%c26_154, %c0_155] : memref<232x40xf32, #tpu.memory_space<vmem>>, vector<200x40xf32>
    %c27_156 = arith.constant 27 : index
    %c0_157 = arith.constant 0 : index
    %151 = vector.load %arg1[%c27_156, %c0_157] : memref<232x40xf32, #tpu.memory_space<vmem>>, vector<200x40xf32>
    %152 = arith.maximumf %150, %151 : vector<200x40xf32>
    %153 = arith.maximumf %149, %152 : vector<200x40xf32>
    %cst_158 = arith.constant dense<0.000000e+00> : vector<32x40xf32>
    %154 = tpu.matmul %146, %153, %cst_158 {dimension_numbers = #tpu.dot_dimension_numbers<[1], [0], [0], [1], [0, 0, 1, 1], [], []>} : vector<32x200xf32>, vector<200x40xf32>, vector<32x40xf32> -> vector<32x40xf32>
    %155 = vector.extract_strided_slice %154 {offsets = [0, 4], sizes = [32, 4], strides = [1, 1]} : vector<32x40xf32> to vector<32x4xf32>
    %156 = vector.extract_strided_slice %154 {offsets = [0, 8], sizes = [32, 4], strides = [1, 1]} : vector<32x40xf32> to vector<32x4xf32>
    %157 = arith.maximumf %155, %156 : vector<32x4xf32>
    %c0_159 = arith.constant 0 : index
    %c0_160 = arith.constant 0 : index
    %158 = vector.load %arg16[%c0_159, %c0_160] : memref<32x80xf32, #tpu.memory_space<vmem>>, vector<32x4xf32>
    tpu.vector_store %arg16[%c0_159, %c0_160], %157 {strides = array<i32>} : memref<32x80xf32, #tpu.memory_space<vmem>>, vector<32x4xf32>,
    %159 = vector.extract_strided_slice %154 {offsets = [0, 12], sizes = [32, 4], strides = [1, 1]} : vector<32x40xf32> to vector<32x4xf32>
    %160 = vector.extract_strided_slice %154 {offsets = [0, 16], sizes = [32, 4], strides = [1, 1]} : vector<32x40xf32> to vector<32x4xf32>
    %161 = arith.maximumf %159, %160 : vector<32x4xf32>
    %c0_161 = arith.constant 0 : index
    %c4_162 = arith.constant 4 : index
    %162 = vector.load %arg16[%c0_161, %c4_162] : memref<32x80xf32, #tpu.memory_space<vmem>>, vector<32x4xf32>
    tpu.vector_store %arg16[%c0_161, %c4_162], %161 {strides = array<i32>} : memref<32x80xf32, #tpu.memory_space<vmem>>, vector<32x4xf32>,
    %163 = vector.extract_strided_slice %154 {offsets = [0, 20], sizes = [32, 4], strides = [1, 1]} : vector<32x40xf32> to vector<32x4xf32>
    %164 = vector.extract_strided_slice %154 {offsets = [0, 24], sizes = [32, 4], strides = [1, 1]} : vector<32x40xf32> to vector<32x4xf32>
    %165 = arith.maximumf %163, %164 : vector<32x4xf32>
    %c0_163 = arith.constant 0 : index
    %c8_164 = arith.constant 8 : index
    %166 = vector.load %arg16[%c0_163, %c8_164] : memref<32x80xf32, #tpu.memory_space<vmem>>, vector<32x4xf32>
    tpu.vector_store %arg16[%c0_163, %c8_164], %165 {strides = array<i32>} : memref<32x80xf32, #tpu.memory_space<vmem>>, vector<32x4xf32>,
    %167 = vector.extract_strided_slice %154 {offsets = [0, 28], sizes = [32, 4], strides = [1, 1]} : vector<32x40xf32> to vector<32x4xf32>
    %168 = vector.extract_strided_slice %154 {offsets = [0, 32], sizes = [32, 4], strides = [1, 1]} : vector<32x40xf32> to vector<32x4xf32>
    %169 = arith.maximumf %167, %168 : vector<32x4xf32>
    %c0_165 = arith.constant 0 : index
    %c12 = arith.constant 12 : index
    %170 = vector.load %arg16[%c0_165, %c12] : memref<32x80xf32, #tpu.memory_space<vmem>>, vector<32x4xf32>
    tpu.vector_store %arg16[%c0_165, %c12], %169 {strides = array<i32>} : memref<32x80xf32, #tpu.memory_space<vmem>>, vector<32x4xf32>,
    %c16_166 = arith.constant 16 : index
    %c0_167 = arith.constant 0 : index
    %171 = vector.load %arg14[%c16_166, %c0_167] : memref<232x80xf32, #tpu.memory_space<vmem>>, vector<200x80xf32>
    %c17_168 = arith.constant 17 : index
    %c0_169 = arith.constant 0 : index
    %172 = vector.load %arg14[%c17_168, %c0_169] : memref<232x80xf32, #tpu.memory_space<vmem>>, vector<200x80xf32>
    %173 = arith.maximumf %171, %172 : vector<200x80xf32>
    %c26_170 = arith.constant 26 : index
    %c0_171 = arith.constant 0 : index
    %174 = vector.load %arg14[%c26_170, %c0_171] : memref<232x80xf32, #tpu.memory_space<vmem>>, vector<200x80xf32>
    %c27_172 = arith.constant 27 : index
    %c0_173 = arith.constant 0 : index
    %175 = vector.load %arg14[%c27_172, %c0_173] : memref<232x80xf32, #tpu.memory_space<vmem>>, vector<200x80xf32>
    %176 = arith.maximumf %174, %175 : vector<200x80xf32>
    %177 = arith.maximumf %173, %176 : vector<200x80xf32>
    %cst_174 = arith.constant dense<0.000000e+00> : vector<32x80xf32>
    %178 = tpu.matmul %146, %177, %cst_174 {dimension_numbers = #tpu.dot_dimension_numbers<[1], [0], [0], [1], [0, 0, 1, 1], [], []>} : vector<32x200xf32>, vector<200x80xf32>, vector<32x80xf32> -> vector<32x80xf32>
    %179 = vector.extract_strided_slice %178 {offsets = [0, 8], sizes = [32, 8], strides = [1, 1]} : vector<32x80xf32> to vector<32x8xf32>
    %180 = vector.extract_strided_slice %178 {offsets = [0, 16], sizes = [32, 8], strides = [1, 1]} : vector<32x80xf32> to vector<32x8xf32>
    %181 = arith.maximumf %179, %180 : vector<32x8xf32>
    %c0_175 = arith.constant 0 : index
    %c16_176 = arith.constant 16 : index
    %182 = vector.load %arg16[%c0_175, %c16_176] : memref<32x80xf32, #tpu.memory_space<vmem>>, vector<32x8xf32>
    tpu.vector_store %arg16[%c0_175, %c16_176], %181 {strides = array<i32>} : memref<32x80xf32, #tpu.memory_space<vmem>>, vector<32x8xf32>,
    %183 = vector.extract_strided_slice %178 {offsets = [0, 24], sizes = [32, 8], strides = [1, 1]} : vector<32x80xf32> to vector<32x8xf32>
    %184 = vector.extract_strided_slice %178 {offsets = [0, 32], sizes = [32, 8], strides = [1, 1]} : vector<32x80xf32> to vector<32x8xf32>
    %185 = arith.maximumf %183, %184 : vector<32x8xf32>
    %c0_177 = arith.constant 0 : index
    %c24 = arith.constant 24 : index
    %186 = vector.load %arg16[%c0_177, %c24] : memref<32x80xf32, #tpu.memory_space<vmem>>, vector<32x8xf32>
    tpu.vector_store %arg16[%c0_177, %c24], %185 {strides = array<i32>} : memref<32x80xf32, #tpu.memory_space<vmem>>, vector<32x8xf32>,
    %187 = vector.extract_strided_slice %178 {offsets = [0, 40], sizes = [32, 8], strides = [1, 1]} : vector<32x80xf32> to vector<32x8xf32>
    %188 = vector.extract_strided_slice %178 {offsets = [0, 48], sizes = [32, 8], strides = [1, 1]} : vector<32x80xf32> to vector<32x8xf32>
    %189 = arith.maximumf %187, %188 : vector<32x8xf32>
    %c0_178 = arith.constant 0 : index
    %c32 = arith.constant 32 : index
    %190 = vector.load %arg16[%c0_178, %c32] : memref<32x80xf32, #tpu.memory_space<vmem>>, vector<32x8xf32>
    tpu.vector_store %arg16[%c0_178, %c32], %189 {strides = array<i32>} : memref<32x80xf32, #tpu.memory_space<vmem>>, vector<32x8xf32>,
    %191 = vector.extract_strided_slice %178 {offsets = [0, 56], sizes = [32, 8], strides = [1, 1]} : vector<32x80xf32> to vector<32x8xf32>
    %192 = vector.extract_strided_slice %178 {offsets = [0, 64], sizes = [32, 8], strides = [1, 1]} : vector<32x80xf32> to vector<32x8xf32>
    %193 = arith.maximumf %191, %192 : vector<32x8xf32>
    %c0_179 = arith.constant 0 : index
    %c40 = arith.constant 40 : index
    %194 = vector.load %arg16[%c0_179, %c40] : memref<32x80xf32, #tpu.memory_space<vmem>>, vector<32x8xf32>
    tpu.vector_store %arg16[%c0_179, %c40], %193 {strides = array<i32>} : memref<32x80xf32, #tpu.memory_space<vmem>>, vector<32x8xf32>,
    %c16_180 = arith.constant 16 : index
    %c0_181 = arith.constant 0 : index
    %195 = vector.load %arg15[%c16_180, %c0_181] : memref<232x80xf32, #tpu.memory_space<vmem>>, vector<200x80xf32>
    %c17_182 = arith.constant 17 : index
    %c0_183 = arith.constant 0 : index
    %196 = vector.load %arg15[%c17_182, %c0_183] : memref<232x80xf32, #tpu.memory_space<vmem>>, vector<200x80xf32>
    %197 = arith.maximumf %195, %196 : vector<200x80xf32>
    %c26_184 = arith.constant 26 : index
    %c0_185 = arith.constant 0 : index
    %198 = vector.load %arg15[%c26_184, %c0_185] : memref<232x80xf32, #tpu.memory_space<vmem>>, vector<200x80xf32>
    %c27_186 = arith.constant 27 : index
    %c0_187 = arith.constant 0 : index
    %199 = vector.load %arg15[%c27_186, %c0_187] : memref<232x80xf32, #tpu.memory_space<vmem>>, vector<200x80xf32>
    %200 = arith.maximumf %198, %199 : vector<200x80xf32>
    %201 = arith.maximumf %197, %200 : vector<200x80xf32>
    %cst_188 = arith.constant dense<0.000000e+00> : vector<32x80xf32>
    %202 = tpu.matmul %146, %201, %cst_188 {dimension_numbers = #tpu.dot_dimension_numbers<[1], [0], [0], [1], [0, 0, 1, 1], [], []>} : vector<32x200xf32>, vector<200x80xf32>, vector<32x80xf32> -> vector<32x80xf32>
    %203 = vector.extract_strided_slice %202 {offsets = [0, 8], sizes = [32, 8], strides = [1, 1]} : vector<32x80xf32> to vector<32x8xf32>
    %204 = vector.extract_strided_slice %202 {offsets = [0, 16], sizes = [32, 8], strides = [1, 1]} : vector<32x80xf32> to vector<32x8xf32>
    %205 = arith.maximumf %203, %204 : vector<32x8xf32>
    %c0_189 = arith.constant 0 : index
    %c48 = arith.constant 48 : index
    %206 = vector.load %arg16[%c0_189, %c48] : memref<32x80xf32, #tpu.memory_space<vmem>>, vector<32x8xf32>
    tpu.vector_store %arg16[%c0_189, %c48], %205 {strides = array<i32>} : memref<32x80xf32, #tpu.memory_space<vmem>>, vector<32x8xf32>,
    %207 = vector.extract_strided_slice %202 {offsets = [0, 24], sizes = [32, 8], strides = [1, 1]} : vector<32x80xf32> to vector<32x8xf32>
    %208 = vector.extract_strided_slice %202 {offsets = [0, 32], sizes = [32, 8], strides = [1, 1]} : vector<32x80xf32> to vector<32x8xf32>
    %209 = arith.maximumf %207, %208 : vector<32x8xf32>
    %c0_190 = arith.constant 0 : index
    %c56 = arith.constant 56 : index
    %210 = vector.load %arg16[%c0_190, %c56] : memref<32x80xf32, #tpu.memory_space<vmem>>, vector<32x8xf32>
    tpu.vector_store %arg16[%c0_190, %c56], %209 {strides = array<i32>} : memref<32x80xf32, #tpu.memory_space<vmem>>, vector<32x8xf32>,
    %211 = vector.extract_strided_slice %202 {offsets = [0, 40], sizes = [32, 8], strides = [1, 1]} : vector<32x80xf32> to vector<32x8xf32>
    %212 = vector.extract_strided_slice %202 {offsets = [0, 48], sizes = [32, 8], strides = [1, 1]} : vector<32x80xf32> to vector<32x8xf32>
    %213 = arith.maximumf %211, %212 : vector<32x8xf32>
    %c0_191 = arith.constant 0 : index
    %c64 = arith.constant 64 : index
    %214 = vector.load %arg16[%c0_191, %c64] : memref<32x80xf32, #tpu.memory_space<vmem>>, vector<32x8xf32>
    tpu.vector_store %arg16[%c0_191, %c64], %213 {strides = array<i32>} : memref<32x80xf32, #tpu.memory_space<vmem>>, vector<32x8xf32>,
    %215 = vector.extract_strided_slice %202 {offsets = [0, 56], sizes = [32, 8], strides = [1, 1]} : vector<32x80xf32> to vector<32x8xf32>
    %216 = vector.extract_strided_slice %202 {offsets = [0, 64], sizes = [32, 8], strides = [1, 1]} : vector<32x80xf32> to vector<32x8xf32>
    %217 = arith.maximumf %215, %216 : vector<32x8xf32>
    %c0_192 = arith.constant 0 : index
    %c72 = arith.constant 72 : index
    %218 = vector.load %arg16[%c0_192, %c72] : memref<32x80xf32, #tpu.memory_space<vmem>>, vector<32x8xf32>
    tpu.vector_store %arg16[%c0_192, %c72], %217 {strides = array<i32>} : memref<32x80xf32, #tpu.memory_space<vmem>>, vector<32x8xf32>,
    %cst_193 = arith.constant 0.000000e+00 : f32
    %219 = vector.broadcast %cst_193 : f32 to vector<2x64xf32>
    %c0_194 = arith.constant 0 : index
    %c0_195 = arith.constant 0 : index
    %220 = vector.load %arg16[%c0_194, %c0_195] : memref<32x80xf32, #tpu.memory_space<vmem>>, vector<2x80xf32>
    %c0_196 = arith.constant 0 : index
    %c0_197 = arith.constant 0 : index
    %221 = vector.load %arg9[%c0_196, %c0_197] : memref<1280x64xf32, #tpu.memory_space<vmem>>, vector<80x64xf32>
    %cst_198 = arith.constant dense<0.000000e+00> : vector<2x64xf32>
    %222 = tpu.matmul %220, %221, %cst_198 {dimension_numbers = #tpu.dot_dimension_numbers<[1], [0], [0], [1], [0, 0, 1, 1], [], []>} : vector<2x80xf32>, vector<80x64xf32>, vector<2x64xf32> -> vector<2x64xf32>
    %223 = arith.addf %219, %222 : vector<2x64xf32>
    %c2_199 = arith.constant 2 : index
    %c0_200 = arith.constant 0 : index
    %224 = vector.load %arg16[%c2_199, %c0_200] : memref<32x80xf32, #tpu.memory_space<vmem>>, vector<2x80xf32>
    %c80 = arith.constant 80 : index
    %c0_201 = arith.constant 0 : index
    %225 = vector.load %arg9[%c80, %c0_201] : memref<1280x64xf32, #tpu.memory_space<vmem>>, vector<80x64xf32>
    %cst_202 = arith.constant dense<0.000000e+00> : vector<2x64xf32>
    %226 = tpu.matmul %224, %225, %cst_202 {dimension_numbers = #tpu.dot_dimension_numbers<[1], [0], [0], [1], [0, 0, 1, 1], [], []>} : vector<2x80xf32>, vector<80x64xf32>, vector<2x64xf32> -> vector<2x64xf32>
    %227 = arith.addf %223, %226 : vector<2x64xf32>
    %c4_203 = arith.constant 4 : index
    %c0_204 = arith.constant 0 : index
    %228 = vector.load %arg16[%c4_203, %c0_204] : memref<32x80xf32, #tpu.memory_space<vmem>>, vector<2x80xf32>
    %c160 = arith.constant 160 : index
    %c0_205 = arith.constant 0 : index
    %229 = vector.load %arg9[%c160, %c0_205] : memref<1280x64xf32, #tpu.memory_space<vmem>>, vector<80x64xf32>
    %cst_206 = arith.constant dense<0.000000e+00> : vector<2x64xf32>
    %230 = tpu.matmul %228, %229, %cst_206 {dimension_numbers = #tpu.dot_dimension_numbers<[1], [0], [0], [1], [0, 0, 1, 1], [], []>} : vector<2x80xf32>, vector<80x64xf32>, vector<2x64xf32> -> vector<2x64xf32>
    %231 = arith.addf %227, %230 : vector<2x64xf32>
    %c6_207 = arith.constant 6 : index
    %c0_208 = arith.constant 0 : index
    %232 = vector.load %arg16[%c6_207, %c0_208] : memref<32x80xf32, #tpu.memory_space<vmem>>, vector<2x80xf32>
    %c240 = arith.constant 240 : index
    %c0_209 = arith.constant 0 : index
    %233 = vector.load %arg9[%c240, %c0_209] : memref<1280x64xf32, #tpu.memory_space<vmem>>, vector<80x64xf32>
    %cst_210 = arith.constant dense<0.000000e+00> : vector<2x64xf32>
    %234 = tpu.matmul %232, %233, %cst_210 {dimension_numbers = #tpu.dot_dimension_numbers<[1], [0], [0], [1], [0, 0, 1, 1], [], []>} : vector<2x80xf32>, vector<80x64xf32>, vector<2x64xf32> -> vector<2x64xf32>
    %235 = arith.addf %231, %234 : vector<2x64xf32>
    %c8_211 = arith.constant 8 : index
    %c0_212 = arith.constant 0 : index
    %236 = vector.load %arg16[%c8_211, %c0_212] : memref<32x80xf32, #tpu.memory_space<vmem>>, vector<2x80xf32>
    %c320 = arith.constant 320 : index
    %c0_213 = arith.constant 0 : index
    %237 = vector.load %arg9[%c320, %c0_213] : memref<1280x64xf32, #tpu.memory_space<vmem>>, vector<80x64xf32>
    %cst_214 = arith.constant dense<0.000000e+00> : vector<2x64xf32>
    %238 = tpu.matmul %236, %237, %cst_214 {dimension_numbers = #tpu.dot_dimension_numbers<[1], [0], [0], [1], [0, 0, 1, 1], [], []>} : vector<2x80xf32>, vector<80x64xf32>, vector<2x64xf32> -> vector<2x64xf32>
    %239 = arith.addf %235, %238 : vector<2x64xf32>
    %c10 = arith.constant 10 : index
    %c0_215 = arith.constant 0 : index
    %240 = vector.load %arg16[%c10, %c0_215] : memref<32x80xf32, #tpu.memory_space<vmem>>, vector<2x80xf32>
    %c400 = arith.constant 400 : index
    %c0_216 = arith.constant 0 : index
    %241 = vector.load %arg9[%c400, %c0_216] : memref<1280x64xf32, #tpu.memory_space<vmem>>, vector<80x64xf32>
    %cst_217 = arith.constant dense<0.000000e+00> : vector<2x64xf32>
    %242 = tpu.matmul %240, %241, %cst_217 {dimension_numbers = #tpu.dot_dimension_numbers<[1], [0], [0], [1], [0, 0, 1, 1], [], []>} : vector<2x80xf32>, vector<80x64xf32>, vector<2x64xf32> -> vector<2x64xf32>
    %243 = arith.addf %239, %242 : vector<2x64xf32>
    %c12_218 = arith.constant 12 : index
    %c0_219 = arith.constant 0 : index
    %244 = vector.load %arg16[%c12_218, %c0_219] : memref<32x80xf32, #tpu.memory_space<vmem>>, vector<2x80xf32>
    %c480 = arith.constant 480 : index
    %c0_220 = arith.constant 0 : index
    %245 = vector.load %arg9[%c480, %c0_220] : memref<1280x64xf32, #tpu.memory_space<vmem>>, vector<80x64xf32>
    %cst_221 = arith.constant dense<0.000000e+00> : vector<2x64xf32>
    %246 = tpu.matmul %244, %245, %cst_221 {dimension_numbers = #tpu.dot_dimension_numbers<[1], [0], [0], [1], [0, 0, 1, 1], [], []>} : vector<2x80xf32>, vector<80x64xf32>, vector<2x64xf32> -> vector<2x64xf32>
    %247 = arith.addf %243, %246 : vector<2x64xf32>
    %c14 = arith.constant 14 : index
    %c0_222 = arith.constant 0 : index
    %248 = vector.load %arg16[%c14, %c0_222] : memref<32x80xf32, #tpu.memory_space<vmem>>, vector<2x80xf32>
    %c560 = arith.constant 560 : index
    %c0_223 = arith.constant 0 : index
    %249 = vector.load %arg9[%c560, %c0_223] : memref<1280x64xf32, #tpu.memory_space<vmem>>, vector<80x64xf32>
    %cst_224 = arith.constant dense<0.000000e+00> : vector<2x64xf32>
    %250 = tpu.matmul %248, %249, %cst_224 {dimension_numbers = #tpu.dot_dimension_numbers<[1], [0], [0], [1], [0, 0, 1, 1], [], []>} : vector<2x80xf32>, vector<80x64xf32>, vector<2x64xf32> -> vector<2x64xf32>
    %251 = arith.addf %247, %250 : vector<2x64xf32>
    %c16_225 = arith.constant 16 : index
    %c0_226 = arith.constant 0 : index
    %252 = vector.load %arg16[%c16_225, %c0_226] : memref<32x80xf32, #tpu.memory_space<vmem>>, vector<2x80xf32>
    %c640 = arith.constant 640 : index
    %c0_227 = arith.constant 0 : index
    %253 = vector.load %arg9[%c640, %c0_227] : memref<1280x64xf32, #tpu.memory_space<vmem>>, vector<80x64xf32>
    %cst_228 = arith.constant dense<0.000000e+00> : vector<2x64xf32>
    %254 = tpu.matmul %252, %253, %cst_228 {dimension_numbers = #tpu.dot_dimension_numbers<[1], [0], [0], [1], [0, 0, 1, 1], [], []>} : vector<2x80xf32>, vector<80x64xf32>, vector<2x64xf32> -> vector<2x64xf32>
    %255 = arith.addf %251, %254 : vector<2x64xf32>
    %c18 = arith.constant 18 : index
    %c0_229 = arith.constant 0 : index
    %256 = vector.load %arg16[%c18, %c0_229] : memref<32x80xf32, #tpu.memory_space<vmem>>, vector<2x80xf32>
    %c720 = arith.constant 720 : index
    %c0_230 = arith.constant 0 : index
    %257 = vector.load %arg9[%c720, %c0_230] : memref<1280x64xf32, #tpu.memory_space<vmem>>, vector<80x64xf32>
    %cst_231 = arith.constant dense<0.000000e+00> : vector<2x64xf32>
    %258 = tpu.matmul %256, %257, %cst_231 {dimension_numbers = #tpu.dot_dimension_numbers<[1], [0], [0], [1], [0, 0, 1, 1], [], []>} : vector<2x80xf32>, vector<80x64xf32>, vector<2x64xf32> -> vector<2x64xf32>
    %259 = arith.addf %255, %258 : vector<2x64xf32>
    %c20 = arith.constant 20 : index
    %c0_232 = arith.constant 0 : index
    %260 = vector.load %arg16[%c20, %c0_232] : memref<32x80xf32, #tpu.memory_space<vmem>>, vector<2x80xf32>
    %c800 = arith.constant 800 : index
    %c0_233 = arith.constant 0 : index
    %261 = vector.load %arg9[%c800, %c0_233] : memref<1280x64xf32, #tpu.memory_space<vmem>>, vector<80x64xf32>
    %cst_234 = arith.constant dense<0.000000e+00> : vector<2x64xf32>
    %262 = tpu.matmul %260, %261, %cst_234 {dimension_numbers = #tpu.dot_dimension_numbers<[1], [0], [0], [1], [0, 0, 1, 1], [], []>} : vector<2x80xf32>, vector<80x64xf32>, vector<2x64xf32> -> vector<2x64xf32>
    %263 = arith.addf %259, %262 : vector<2x64xf32>
    %c22 = arith.constant 22 : index
    %c0_235 = arith.constant 0 : index
    %264 = vector.load %arg16[%c22, %c0_235] : memref<32x80xf32, #tpu.memory_space<vmem>>, vector<2x80xf32>
    %c880 = arith.constant 880 : index
    %c0_236 = arith.constant 0 : index
    %265 = vector.load %arg9[%c880, %c0_236] : memref<1280x64xf32, #tpu.memory_space<vmem>>, vector<80x64xf32>
    %cst_237 = arith.constant dense<0.000000e+00> : vector<2x64xf32>
    %266 = tpu.matmul %264, %265, %cst_237 {dimension_numbers = #tpu.dot_dimension_numbers<[1], [0], [0], [1], [0, 0, 1, 1], [], []>} : vector<2x80xf32>, vector<80x64xf32>, vector<2x64xf32> -> vector<2x64xf32>
    %267 = arith.addf %263, %266 : vector<2x64xf32>
    %c24_238 = arith.constant 24 : index
    %c0_239 = arith.constant 0 : index
    %268 = vector.load %arg16[%c24_238, %c0_239] : memref<32x80xf32, #tpu.memory_space<vmem>>, vector<2x80xf32>
    %c960 = arith.constant 960 : index
    %c0_240 = arith.constant 0 : index
    %269 = vector.load %arg9[%c960, %c0_240] : memref<1280x64xf32, #tpu.memory_space<vmem>>, vector<80x64xf32>
    %cst_241 = arith.constant dense<0.000000e+00> : vector<2x64xf32>
    %270 = tpu.matmul %268, %269, %cst_241 {dimension_numbers = #tpu.dot_dimension_numbers<[1], [0], [0], [1], [0, 0, 1, 1], [], []>} : vector<2x80xf32>, vector<80x64xf32>, vector<2x64xf32> -> vector<2x64xf32>
    %271 = arith.addf %267, %270 : vector<2x64xf32>
    %c26_242 = arith.constant 26 : index
    %c0_243 = arith.constant 0 : index
    %272 = vector.load %arg16[%c26_242, %c0_243] : memref<32x80xf32, #tpu.memory_space<vmem>>, vector<2x80xf32>
    %c1040 = arith.constant 1040 : index
    %c0_244 = arith.constant 0 : index
    %273 = vector.load %arg9[%c1040, %c0_244] : memref<1280x64xf32, #tpu.memory_space<vmem>>, vector<80x64xf32>
    %cst_245 = arith.constant dense<0.000000e+00> : vector<2x64xf32>
    %274 = tpu.matmul %272, %273, %cst_245 {dimension_numbers = #tpu.dot_dimension_numbers<[1], [0], [0], [1], [0, 0, 1, 1], [], []>} : vector<2x80xf32>, vector<80x64xf32>, vector<2x64xf32> -> vector<2x64xf32>
    %275 = arith.addf %271, %274 : vector<2x64xf32>
    %c28 = arith.constant 28 : index
    %c0_246 = arith.constant 0 : index
    %276 = vector.load %arg16[%c28, %c0_246] : memref<32x80xf32, #tpu.memory_space<vmem>>, vector<2x80xf32>
    %c1120 = arith.constant 1120 : index
    %c0_247 = arith.constant 0 : index
    %277 = vector.load %arg9[%c1120, %c0_247] : memref<1280x64xf32, #tpu.memory_space<vmem>>, vector<80x64xf32>
    %cst_248 = arith.constant dense<0.000000e+00> : vector<2x64xf32>
    %278 = tpu.matmul %276, %277, %cst_248 {dimension_numbers = #tpu.dot_dimension_numbers<[1], [0], [0], [1], [0, 0, 1, 1], [], []>} : vector<2x80xf32>, vector<80x64xf32>, vector<2x64xf32> -> vector<2x64xf32>
    %279 = arith.addf %275, %278 : vector<2x64xf32>
    %c30 = arith.constant 30 : index
    %c0_249 = arith.constant 0 : index
    %280 = vector.load %arg16[%c30, %c0_249] : memref<32x80xf32, #tpu.memory_space<vmem>>, vector<2x80xf32>
    %c1200 = arith.constant 1200 : index
    %c0_250 = arith.constant 0 : index
    %281 = vector.load %arg9[%c1200, %c0_250] : memref<1280x64xf32, #tpu.memory_space<vmem>>, vector<80x64xf32>
    %cst_251 = arith.constant dense<0.000000e+00> : vector<2x64xf32>
    %282 = tpu.matmul %280, %281, %cst_251 {dimension_numbers = #tpu.dot_dimension_numbers<[1], [0], [0], [1], [0, 0, 1, 1], [], []>} : vector<2x80xf32>, vector<80x64xf32>, vector<2x64xf32> -> vector<2x64xf32>
    %283 = arith.addf %279, %282 : vector<2x64xf32>
    %c0_252 = arith.constant 0 : index
    %c0_253 = arith.constant 0 : index
    %284 = vector.load %arg10[%c0_252, %c0_253] : memref<1x64xf32, #tpu.memory_space<vmem>>, vector<1x64xf32>
    %285 = vector.broadcast %284 : vector<1x64xf32> to vector<2x64xf32>
    %286 = arith.addf %283, %285 : vector<2x64xf32>
    %cst_254 = arith.constant 0.000000e+00 : f32
    %287 = vector.broadcast %cst_254 : f32 to vector<2x64xf32>
    %288 = arith.maximumf %286, %287 : vector<2x64xf32>
    %c0_255 = arith.constant 0 : index
    %c0_256 = arith.constant 0 : index
    %289 = vector.load %arg11[%c0_255, %c0_256] : memref<1x64xf32, #tpu.memory_space<vmem>>, vector<1x64xf32>
    %290 = vector.broadcast %289 : vector<1x64xf32> to vector<2x64xf32>
    %291 = arith.mulf %288, %290 : vector<2x64xf32>
    %cst_257 = arith.constant dense<0.000000e+00> : vector<2xf32>
    %292 = vector.multi_reduction <add>, %291, %cst_257 [1] : vector<2x64xf32> to vector<2xf32>
    %293 = vector.shape_cast %292 : vector<2xf32> to vector<2x1xf32>
    %c0_258 = arith.constant 0 : index
    %c0_259 = arith.constant 0 : index
    %294 = vector.load %arg12[%c0_258, %c0_259] : memref<1x1xf32, #tpu.memory_space<vmem>>, vector<1x1xf32>
    %295 = vector.broadcast %294 : vector<1x1xf32> to vector<2x1xf32>
    %296 = arith.addf %293, %295 : vector<2x1xf32>
    %c0_260 = arith.constant 0 : index
    %c0_261 = arith.constant 0 : index
    %297 = vector.load %arg13[%c0_260, %c0_261] : memref<2x1xf32, #tpu.memory_space<vmem>>, vector<2x1xf32>
    tpu.vector_store %arg13[%c0_260, %c0_261], %296 {strides = array<i32>} : memref<2x1xf32, #tpu.memory_space<vmem>>, vector<2x1xf32>,
    return
  }
  func.func @transform_0(%arg0: i32) -> (i32, i32) {
    %c0_i32 = arith.constant 0 : i32
    %c0_i32_0 = arith.constant 0 : i32
    %c0_i32_1 = arith.constant 0 : i32
    return %c0_i32, %c0_i32_0 : i32, i32
  }
  func.func @transform_1(%arg0: i32) -> (i32, i32, i32) {
    %c0_i32 = arith.constant 0 : i32
    %c0_i32_0 = arith.constant 0 : i32
    %c0_i32_1 = arith.constant 0 : i32
    %c0_i32_2 = arith.constant 0 : i32
    return %c0_i32, %c0_i32_0, %c0_i32_1 : i32, i32, i32
  }
  func.func @transform_2(%arg0: i32) -> (i32, i32, i32) {
    %c0_i32 = arith.constant 0 : i32
    %c0_i32_0 = arith.constant 0 : i32
    %c0_i32_1 = arith.constant 0 : i32
    %c0_i32_2 = arith.constant 0 : i32
    return %c0_i32, %c0_i32_0, %c0_i32_1 : i32, i32, i32
  }
  func.func @transform_3(%arg0: i32) -> (i32, i32, i32) {
    %c0_i32 = arith.constant 0 : i32
    %c0_i32_0 = arith.constant 0 : i32
    %c0_i32_1 = arith.constant 0 : i32
    %c0_i32_2 = arith.constant 0 : i32
    return %c0_i32, %c0_i32_0, %c0_i32_1 : i32, i32, i32
  }
  func.func @transform_4(%arg0: i32) -> (i32, i32) {
    %c0_i32 = arith.constant 0 : i32
    %c0_i32_0 = arith.constant 0 : i32
    %c0_i32_1 = arith.constant 0 : i32
    return %c0_i32, %c0_i32_0 : i32, i32
  }
  func.func @transform_5(%arg0: i32) -> (i32, i32) {
    %c0_i32 = arith.constant 0 : i32
    %c0_i32_0 = arith.constant 0 : i32
    %c0_i32_1 = arith.constant 0 : i32
    return %c0_i32, %c0_i32_0 : i32, i32
  }
  func.func @transform_6(%arg0: i32) -> (i32, i32) {
    %c0_i32 = arith.constant 0 : i32
    %c0_i32_0 = arith.constant 0 : i32
    %c0_i32_1 = arith.constant 0 : i32
    return %c0_i32, %c0_i32_0 : i32, i32
  }
  func.func @transform_7(%arg0: i32) -> (i32, i32) {
    %c0_i32 = arith.constant 0 : i32
    %c0_i32_0 = arith.constant 0 : i32
    %c0_i32_1 = arith.constant 0 : i32
    return %c0_i32, %c0_i32_0 : i32, i32
  }
  func.func @transform_8(%arg0: i32) -> (i32, i32) {
    %c0_i32 = arith.constant 0 : i32
    %c0_i32_0 = arith.constant 0 : i32
    %c0_i32_1 = arith.constant 0 : i32
    return %c0_i32, %c0_i32_0 : i32, i32
  }
  func.func @transform_9(%arg0: i32) -> (i32, i32) {
    %c0_i32 = arith.constant 0 : i32
    %c0_i32_0 = arith.constant 0 : i32
    %c0_i32_1 = arith.constant 0 : i32
    return %c0_i32, %c0_i32_0 : i32, i32
  }
  func.func @transform_10(%arg0: i32) -> (i32, i32) {
    %c0_i32 = arith.constant 0 : i32
    %c0_i32_0 = arith.constant 0 : i32
    %c0_i32_1 = arith.constant 0 : i32
    return %c0_i32, %c0_i32_0 : i32, i32
  }
  func.func @transform_11(%arg0: i32) -> (i32, i32) {
    %c0_i32 = arith.constant 0 : i32
    %c0_i32_0 = arith.constant 0 : i32
    %c0_i32_1 = arith.constant 0 : i32
    return %c0_i32, %c0_i32_0 : i32, i32
  }
  func.func @transform_12(%arg0: i32) -> (i32, i32) {
    %c0_i32 = arith.constant 0 : i32
    %c0_i32_0 = arith.constant 0 : i32
    %c0_i32_1 = arith.constant 0 : i32
    return %c0_i32, %c0_i32_0 : i32, i32
  }
}

</mosaic_0001>

<llo_original>
// kernel: densenucy_forward.1
$region0: #{densenucy_forward.1}
  #allocation0 [shape = 'u32[]', space=smem, size = 0x4, offset = 0x4, fixed_abs, tag = 'smem constant byte address 0x4 - core index']
  #allocation1 [shape = 'u32[144,128]{1,0:T(1,128)}', space=vmem, size = 0x12000, scoped, tag = 'internal scratch']
  #allocation2 [shape = 'f32[232,80]{1,0:T(8,128)}', space=vmem, size = 0x1d000, scoped, tag = 'scratch operand']
  #allocation3 [shape = 'f32[232,80]{1,0:T(8,128)}', space=vmem, size = 0x1d000, scoped, tag = 'scratch operand']
  #allocation4 [shape = 'f32[32,80]{1,0:T(8,128)}', space=vmem, size = 0x4000, scoped, tag = 'scratch operand']
  #allocation5 [shape = 'f32[1,1]{1,0:T(1,128)S(1)}', space=vmem, size = 0x200, scoped, tag = 'scoped memory for densenucy_forward.1']
  %s0 = inlined_call_operand.vmem [shape: f32[232,40], index: 0, kind: input, shape index: {}]
  %s1 = inlined_call_operand.vmem [shape: f32[9,40,80], index: 1, kind: input, shape index: {}]
  %s2 = inlined_call_operand.vmem [shape: f32[9,40,80], index: 2, kind: input, shape index: {}]
  %s3 = inlined_call_operand.vmem [shape: f32[9,80,80], index: 3, kind: input, shape index: {}]
  %s4 = inlined_call_operand.vmem [shape: f32[1,80], index: 4, kind: input, shape index: {}]
  %s5 = inlined_call_operand.vmem [shape: f32[1,80], index: 5, kind: input, shape index: {}]
  %s6 = inlined_call_operand.vmem [shape: f32[200,80], index: 6, kind: input, shape index: {}]
  %s7 = inlined_call_operand.vmem [shape: f32[32,200], index: 7, kind: input, shape index: {}]
  %s8 = inlined_call_operand.vmem [shape: f32[1280,64], index: 8, kind: input, shape index: {}]
  %s9 = inlined_call_operand.vmem [shape: f32[1,64], index: 9, kind: input, shape index: {}]
  %s10 = inlined_call_operand.vmem [shape: f32[1,64], index: 10, kind: input, shape index: {}]
  %s11 = inlined_call_operand.<no memory space> [shape: f32[1,1], index: 11, kind: input, shape index: {}]
  %s12 = inlined_call_operand.vmem [shape: f32[2,1], index: 12, kind: output, shape index: {}]
  %s13 = sld [smem:[#allocation0]]
  $region58: #{densenucy_forward.1} parent=0
    _
  %s15 = ssub.s32 1, %s13
  %s16 = scalar_select 0, %s15, %s13
  %v17 = vstv %s11
  %18 = vst [vmem:[#allocation5] sm:$0x1] %v17
  // Predicated region
  $region2: #{densenucy_forward.1} parent=0 // pred_check
    _
  $region3: #{densenucy_forward.1} parent=0 // pred_check_branch
    %20 = sbr.rel (0) target = $region5
  $region4: #{densenucy_forward.1} parent=0 // pred_region
    _
  $region5: #{densenucy_forward.1} parent=0 // pred_fallthru
    _
  // Predicated region
  $region6: #{densenucy_forward.1} parent=0 // pred_check
    _
  $region7: #{densenucy_forward.1} parent=0 // pred_check_branch
    %22 = sbr.rel (0) target = $region9
  $region8: #{densenucy_forward.1} parent=0 // pred_region
    _
  $region9: #{densenucy_forward.1} parent=0 // pred_fallthru
    _
  // Predicated region
  $region10: #{densenucy_forward.1} parent=0 // pred_check
    _
  $region11: #{densenucy_forward.1} parent=0 // pred_check_branch
    %24 = sbr.rel (0) target = $region13
  $region12: #{densenucy_forward.1} parent=0 // pred_region
    _
  $region13: #{densenucy_forward.1} parent=0 // pred_fallthru
    _
  // Predicated region
  $region14: #{densenucy_forward.1} parent=0 // pred_check
    _
  $region15: #{densenucy_forward.1} parent=0 // pred_check_branch
    %26 = sbr.rel (0) target = $region17
  $region16: #{densenucy_forward.1} parent=0 // pred_region
    _
  $region17: #{densenucy_forward.1} parent=0 // pred_fallthru
    _
  // Predicated region
  $region18: #{densenucy_forward.1} parent=0 // pred_check
    _
  $region19: #{densenucy_forward.1} parent=0 // pred_check_branch
    %28 = sbr.rel (0) target = $region21
  $region20: #{densenucy_forward.1} parent=0 // pred_region
    _
  $region21: #{densenucy_forward.1} parent=0 // pred_fallthru
    _
  // Predicated region
  $region22: #{densenucy_forward.1} parent=0 // pred_check
    _
  $region23: #{densenucy_forward.1} parent=0 // pred_check_branch
    %30 = sbr.rel (0) target = $region25
  $region24: #{densenucy_forward.1} parent=0 // pred_region
    _
  $region25: #{densenucy_forward.1} parent=0 // pred_fallthru
    _
  // Predicated region
  $region26: #{densenucy_forward.1} parent=0 // pred_check
    _
  $region27: #{densenucy_forward.1} parent=0 // pred_check_branch
    %32 = sbr.rel (0) target = $region29
  $region28: #{densenucy_forward.1} parent=0 // pred_region
    _
  $region29: #{densenucy_forward.1} parent=0 // pred_fallthru
    _
  // Predicated region
  $region30: #{densenucy_forward.1} parent=0 // pred_check
    _
  $region31: #{densenucy_forward.1} parent=0 // pred_check_branch
    %34 = sbr.rel (0) target = $region33
  $region32: #{densenucy_forward.1} parent=0 // pred_region
    _
  $region33: #{densenucy_forward.1} parent=0 // pred_fallthru
    _
  // Predicated region
  $region34: #{densenucy_forward.1} parent=0 // pred_check
    _
  $region35: #{densenucy_forward.1} parent=0 // pred_check_branch
    %36 = sbr.rel (0) target = $region37
  $region36: #{densenucy_forward.1} parent=0 // pred_region
    _
  $region37: #{densenucy_forward.1} parent=0 // pred_fallthru
    _
  // Predicated region
  $region38: #{densenucy_forward.1} parent=0 // pred_check
    _
  $region39: #{densenucy_forward.1} parent=0 // pred_check_branch
    %38 = sbr.rel (0) target = $region41
  $region40: #{densenucy_forward.1} parent=0 // pred_region
    _
  $region41: #{densenucy_forward.1} parent=0 // pred_fallthru
    _
  // Predicated region
  $region42: #{densenucy_forward.1} parent=0 // pred_check
    _
  $region43: #{densenucy_forward.1} parent=0 // pred_check_branch
    %40 = sbr.rel (0) target = $region45
  $region44: #{densenucy_forward.1} parent=0 // pred_region
    _
  $region45: #{densenucy_forward.1} parent=0 // pred_fallthru
    _
  // Predicated region
  $region46: #{densenucy_forward.1} parent=0 // pred_check
    _
  $region47: #{densenucy_forward.1} parent=0 // pred_check_branch
    %42 = sbr.rel (0) target = $region49
  $region48: #{densenucy_forward.1} parent=0 // pred_region
    _
  $region49: #{densenucy_forward.1} parent=0 // pred_fallthru
    _
  %v43 = vld [vmem:[%s0 + $0x5] sm:$0xff]
  %v44 = vld [vmem:[%s0 + $0xd] sm:$0xff]
  %v45 = vld [vmem:[%s0 + $0x15] sm:$0xff]
  %v46 = vld [vmem:[%s0 + $0x1d] sm:$0xff]
  %v47 = vld [vmem:[%s0 + $0x25] sm:$0xff]
  %v48 = vld [vmem:[%s0 + $0x2d] sm:$0xff]
  %v49 = vld [vmem:[%s0 + $0x35] sm:$0xff]
  %v50 = vld [vmem:[%s0 + $0x3d] sm:$0xff]
  %v51 = vld [vmem:[%s0 + $0x45] sm:$0xff]
  %v52 = vld [vmem:[%s0 + $0x4d] sm:$0xff]
  %v53 = vld [vmem:[%s0 + $0x55] sm:$0xff]
  %v54 = vld [vmem:[%s0 + $0x5d] sm:$0xff]
  %v55 = vld [vmem:[%s0 + $0x65] sm:$0xff]
  %v56 = vld [vmem:[%s0 + $0x6d] sm:$0xff]
  %v57 = vld [vmem:[%s0 + $0x75] sm:$0xff]
  %v58 = vld [vmem:[%s0 + $0x7d] sm:$0xff]
  %v59 = vld [vmem:[%s0 + $0x85] sm:$0xff]
  %v60 = vld [vmem:[%s0 + $0x8d] sm:$0xff]
  %v61 = vld [vmem:[%s0 + $0x95] sm:$0xff]
  %v62 = vld [vmem:[%s0 + $0x9d] sm:$0xff]
  %v63 = vld [vmem:[%s0 + $0xa5] sm:$0xff]
  %v64 = vld [vmem:[%s0 + $0xad] sm:$0xff]
  %v65 = vld [vmem:[%s0 + $0xb5] sm:$0xff]
  %v66 = vld [vmem:[%s0 + $0xbd] sm:$0xff]
  %v67 = vld [vmem:[%s0 + $0xc5] sm:$0xff]
  %v68 = vld [vmem:[%s1] sm:$0xff]
  %v69 = vld [vmem:[%s1 + $0x8] sm:$0xff]
  %v70 = vld [vmem:[%s1 + $0x10] sm:$0xff]
  %v71 = vld [vmem:[%s1 + $0x18] sm:$0xff]
  %v72 = vld [vmem:[%s1 + $0x20] sm:$0xff]
  %v73 = vld [vmem:[%s2] sm:$0xff]
  %v74 = vld [vmem:[%s2 + $0x8] sm:$0xff]
  %v75 = vld [vmem:[%s2 + $0x10] sm:$0xff]
  %v76 = vld [vmem:[%s2 + $0x18] sm:$0xff]
  %v77 = vld [vmem:[%s2 + $0x20] sm:$0xff]
  %v78 = vld [vmem:[%s0 + $0x6] sm:$0xff]
  %v79 = vld [vmem:[%s0 + $0xe] sm:$0xff]
  %v80 = vld [vmem:[%s0 + $0x16] sm:$0xff]
  %v81 = vld [vmem:[%s0 + $0x1e] sm:$0xff]
  %v82 = vld [vmem:[%s0 + $0x26] sm:$0xff]
  %v83 = vld [vmem:[%s0 + $0x2e] sm:$0xff]
  %v84 = vld [vmem:[%s0 + $0x36] sm:$0xff]
  %v85 = vld [vmem:[%s0 + $0x3e] sm:$0xff]
  %v86 = vld [vmem:[%s0 + $0x46] sm:$0xff]
  %v87 = vld [vmem:[%s0 + $0x4e] sm:$0xff]
  %v88 = vld [vmem:[%s0 + $0x56] sm:$0xff]
  %v89 = vld [vmem:[%s0 + $0x5e] sm:$0xff]
  %v90 = vld [vmem:[%s0 + $0x66] sm:$0xff]
  %v91 = vld [vmem:[%s0 + $0x6e] sm:$0xff]
  %v92 = vld [vmem:[%s0 + $0x76] sm:$0xff]
  %v93 = vld [vmem:[%s0 + $0x7e] sm:$0xff]
  %v94 = vld [vmem:[%s0 + $0x86] sm:$0xff]
  %v95 = vld [vmem:[%s0 + $0x8e] sm:$0xff]
  %v96 = vld [vmem:[%s0 + $0x96] sm:$0xff]
  %v97 = vld [vmem:[%s0 + $0x9e] sm:$0xff]
  %v98 = vld [vmem:[%s0 + $0xa6] sm:$0xff]
  %v99 = vld [vmem:[%s0 + $0xae] sm:$0xff]
  %v100 = vld [vmem:[%s0 + $0xb6] sm:$0xff]
  %v101 = vld [vmem:[%s0 + $0xbe] sm:$0xff]
  %v102 = vld [vmem:[%s0 + $0xc6] sm:$0xff]
  %s103 = scalar_lea.vmem %s1, 40
  %v104 = vld [vmem:[%s103] sm:$0xff]
  %v105 = vld [vmem:[%s103 + $0x8] sm:$0xff]
  %v106 = vld [vmem:[%s103 + $0x10] sm:$0xff]
  %v107 = vld [vmem:[%s103 + $0x18] sm:$0xff]
  %v108 = vld [vmem:[%s103 + $0x20] sm:$0xff]
  %vm109 = vcmask 326656
  %v111 = vsel %vm109, %v78, 0
  %v114 = vsel %vm109, %v79, 0
  %v117 = vsel %vm109, %v80, 0
  %v120 = vsel %vm109, %v81, 0
  %v123 = vsel %vm109, %v82, 0
  %v126 = vsel %vm109, %v83, 0
  %v129 = vsel %vm109, %v84, 0
  %v132 = vsel %vm109, %v85, 0
  %v135 = vsel %vm109, %v86, 0
  %v138 = vsel %vm109, %v87, 0
  %v141 = vsel %vm109, %v88, 0
  %v144 = vsel %vm109, %v89, 0
  %v147 = vsel %vm109, %v90, 0
  %v150 = vsel %vm109, %v91, 0
  %v153 = vsel %vm109, %v92, 0
  %v156 = vsel %vm109, %v93, 0
  %v159 = vsel %vm109, %v94, 0
  %v162 = vsel %vm109, %v95, 0
  %v165 = vsel %vm109, %v96, 0
  %v168 = vsel %vm109, %v97, 0
  %v171 = vsel %vm109, %v98, 0
  %v174 = vsel %vm109, %v99, 0
  %v177 = vsel %vm109, %v100, 0
  %v180 = vsel %vm109, %v101, 0
  %v183 = vsel %vm109, %v102, 0
  %185 = vmatprep.subr.mxu0 0.0
  %186 = vmatpush1.msra.mxu0 0.0
  %187 = vmatprep.subr.mxu0 0.0
  %188 = vmatpush1.msra.mxu0 0.0
  %189 = vmatprep.subr.mxu0 0.0
  %190 = vmatpush1.msra.mxu0 0.0
  %191 = vmatprep.subr.mxu0 0.0
  %192 = vmatpush1.msra.mxu0 0.0
  %193 = vmatprep.subr.mxu0 0.0
  %194 = vmatpush1.msra.mxu0 0.0
  %195 = vmatprep.subr.mxu0 0.0
  %196 = vmatpush1.msra.mxu0 0.0
  %197 = vmatprep.subr.mxu0 0.0
  %198 = vmatpush1.msra.mxu0 0.0
  %199 = vmatprep.subr.mxu0 0.0
  %200 = vmatpush1.msra.mxu0 0.0
  %201 = vmatprep.subr.mxu0 0.0
  %202 = vmatpush1.msra.mxu0 0.0
  %203 = vmatprep.subr.mxu0 0.0
  %204 = vmatpush1.msra.mxu0 0.0
  %205 = vmatprep.subr.mxu0 0.0
  %206 = vmatpush1.msra.mxu0 0.0
  %207 = vmatprep.subr.mxu0 0.0
  %208 = vmatpush1.msra.mxu0 %v108
  %209 = vmatprep.subr.mxu0 0.0
  %210 = vmatpush1.msra.mxu0 %v107
  %211 = vmatprep.subr.mxu0 0.0
  %212 = vmatpush1.msra.mxu0 %v106
  %213 = vmatprep.subr.mxu0 0.0
  %214 = vmatpush1.msra.mxu0 %v105
  %215 = vmatprep.subr.mxu0 0.0
  %216 = vmatpush1.msra.mxu0 %v104
  %217 = vmatprep.subr.mxu0 0.0
  %218 = vmatpush2.msra.mxu0 0.0
  %219 = vmatprep.subr.mxu0 0.0
  %220 = vmatpush2.msra.mxu0 0.0
  %221 = vmatprep.subr.mxu0 0.0
  %222 = vmatpush2.msra.mxu0 0.0
  %223 = vmatprep.subr.mxu0 0.0
  %224 = vmatpush2.msra.mxu0 0.0
  %225 = vmatprep.subr.mxu0 0.0
  %226 = vmatpush2.msra.mxu0 0.0
  %227 = vmatprep.subr.mxu0 0.0
  %228 = vmatpush2.msra.mxu0 0.0
  %229 = vmatprep.subr.mxu0 0.0
  %230 = vmatpush2.msra.mxu0 0.0
  %231 = vmatprep.subr.mxu0 0.0
  %232 = vmatpush2.msra.mxu0 0.0
  %233 = vmatprep.subr.mxu0 0.0
  %234 = vmatpush2.msra.mxu0 0.0
  %235 = vmatprep.subr.mxu0 0.0
  %236 = vmatpush2.msra.mxu0 0.0
  %237 = vmatprep.subr.mxu0 0.0
  %238 = vmatpush2.msra.mxu0 0.0
  %239 = vmatprep.subr.mxu0 0.0
  %240 = vmatpush2.msra.mxu0 0.0
  %241 = vmatprep.subr.mxu0 0.0
  %242 = vmatpush2.msra.mxu0 0.0
  %243 = vmatprep.subr.mxu0 0.0
  %244 = vmatpush2.msra.mxu0 0.0
  %245 = vmatprep.subr.mxu0 0.0
  %246 = vmatpush2.msra.mxu0 0.0
  %247 = vmatprep.subr.mxu0 0.0
  %248 = vmatpush2.msra.mxu0 0.0
  %249 = vmatprep.mubr.f32.mxu0 0.0
  %250 = vmatmul.mubr.f32.gmra.mxu0 %v111
  %v251 = vpop.f32.mrf.mxu0
  %v252 = vadd.f32 0.0, %v251
  %v253 = vpop.f32.mrf.mxu0
  %254 = vmatprep.mubr.f32.mxu0 0.0
  %255 = vmatmul.mubr.f32.gmra.mxu0 %v114
  %v256 = vpop.f32.mrf.mxu0
  %v257 = vadd.f32 0.0, %v256
  %v258 = vpop.f32.mrf.mxu0
  %259 = vmatprep.mubr.f32.mxu0 0.0
  %260 = vmatmul.mubr.f32.gmra.mxu0 %v117
  %v261 = vpop.f32.mrf.mxu0
  %v262 = vadd.f32 0.0, %v261
  %v263 = vpop.f32.mrf.mxu0
  %264 = vmatprep.mubr.f32.mxu0 0.0
  %265 = vmatmul.mubr.f32.gmra.mxu0 %v120
  %v266 = vpop.f32.mrf.mxu0
  %v267 = vadd.f32 0.0, %v266
  %v268 = vpop.f32.mrf.mxu0
  %269 = vmatprep.mubr.f32.mxu0 0.0
  %270 = vmatmul.mubr.f32.gmra.mxu0 %v123
  %v271 = vpop.f32.mrf.mxu0
  %v272 = vadd.f32 0.0, %v271
  %v273 = vpop.f32.mrf.mxu0
  %274 = vmatprep.mubr.f32.mxu0 0.0
  %275 = vmatmul.mubr.f32.gmra.mxu0 %v126
  %v276 = vpop.f32.mrf.mxu0
  %v277 = vadd.f32 0.0, %v276
  %v278 = vpop.f32.mrf.mxu0
  %279 = vmatprep.mubr.f32.mxu0 0.0
  %280 = vmatmul.mubr.f32.gmra.mxu0 %v129
  %v281 = vpop.f32.mrf.mxu0
  %v282 = vadd.f32 0.0, %v281
  %v283 = vpop.f32.mrf.mxu0
  %284 = vmatprep.mubr.f32.mxu0 0.0
  %285 = vmatmul.mubr.f32.gmra.mxu0 %v132
  %v286 = vpop.f32.mrf.mxu0
  %v287 = vadd.f32 0.0, %v286
  %v288 = vpop.f32.mrf.mxu0
  %289 = vmatprep.mubr.f32.mxu0 0.0
  %290 = vmatmul.mubr.f32.gmra.mxu0 %v135
  %v291 = vpop.f32.mrf.mxu0
  %v292 = vadd.f32 0.0, %v291
  %v293 = vpop.f32.mrf.mxu0
  %294 = vmatprep.mubr.f32.mxu0 0.0
  %295 = vmatmul.mubr.f32.gmra.mxu0 %v138
  %v296 = vpop.f32.mrf.mxu0
  %v297 = vadd.f32 0.0, %v296
  %v298 = vpop.f32.mrf.mxu0
  %299 = vmatprep.mubr.f32.mxu0 0.0
  %300 = vmatmul.mubr.f32.gmra.mxu0 %v141
  %v301 = vpop.f32.mrf.mxu0
  %v302 = vadd.f32 0.0, %v301
  %v303 = vpop.f32.mrf.mxu0
  %304 = vmatprep.mubr.f32.mxu0 0.0
  %305 = vmatmul.mubr.f32.gmra.mxu0 %v144
  %v306 = vpop.f32.mrf.mxu0
  %v307 = vadd.f32 0.0, %v306
  %v308 = vpop.f32.mrf.mxu0
  %309 = vmatprep.mubr.f32.mxu0 0.0
  %310 = vmatmul.mubr.f32.gmra.mxu0 %v147
  %v311 = vpop.f32.mrf.mxu0
  %v312 = vadd.f32 0.0, %v311
  %v313 = vpop.f32.mrf.mxu0
  %314 = vmatprep.mubr.f32.mxu0 0.0
  %315 = vmatmul.mubr.f32.gmra.mxu0 %v150
  %v316 = vpop.f32.mrf.mxu0
  %v317 = vadd.f32 0.0, %v316
  %v318 = vpop.f32.mrf.mxu0
  %319 = vmatprep.mubr.f32.mxu0 0.0
  %320 = vmatmul.mubr.f32.gmra.mxu0 %v153
  %v321 = vpop.f32.mrf.mxu0
  %v322 = vadd.f32 0.0, %v321
  %v323 = vpop.f32.mrf.mxu0
  %324 = vmatprep.mubr.f32.mxu0 0.0
  %325 = vmatmul.mubr.f32.gmra.mxu0 %v156
  %v326 = vpop.f32.mrf.mxu0
  %v327 = vadd.f32 0.0, %v326
  %v328 = vpop.f32.mrf.mxu0
  %329 = vmatprep.mubr.f32.mxu0 0.0
  %330 = vmatmul.mubr.f32.gmra.mxu0 %v159
  %v331 = vpop.f32.mrf.mxu0
  %v332 = vadd.f32 0.0, %v331
  %v333 = vpop.f32.mrf.mxu0
  %334 = vmatprep.mubr.f32.mxu0 0.0
  %335 = vmatmul.mubr.f32.gmra.mxu0 %v162
  %v336 = vpop.f32.mrf.mxu0
  %v337 = vadd.f32 0.0, %v336
  %v338 = vpop.f32.mrf.mxu0
  %339 = vmatprep.mubr.f32.mxu0 0.0
  %340 = vmatmul.mubr.f32.gmra.mxu0 %v165
  %v341 = vpop.f32.mrf.mxu0
  %v342 = vadd.f32 0.0, %v341
  %v343 = vpop.f32.mrf.mxu0
  %344 = vmatprep.mubr.f32.mxu0 0.0
  %345 = vmatmul.mubr.f32.gmra.mxu0 %v168
  %v346 = vpop.f32.mrf.mxu0
  %v347 = vadd.f32 0.0, %v346
  %v348 = vpop.f32.mrf.mxu0
  %349 = vmatprep.mubr.f32.mxu0 0.0
  %350 = vmatmul.mubr.f32.gmra.mxu0 %v171
  %v351 = vpop.f32.mrf.mxu0
  %v352 = vadd.f32 0.0, %v351
  %v353 = vpop.f32.mrf.mxu0
  %354 = vmatprep.mubr.f32.mxu0 0.0
  %355 = vmatmul.mubr.f32.gmra.mxu0 %v174
  %v356 = vpop.f32.mrf.mxu0
  %v357 = vadd.f32 0.0, %v356
  %v358 = vpop.f32.mrf.mxu0
  %359 = vmatprep.mubr.f32.mxu0 0.0
  %360 = vmatmul.mubr.f32.gmra.mxu0 %v177
  %v361 = vpop.f32.mrf.mxu0
  %v362 = vadd.f32 0.0, %v361
  %v363 = vpop.f32.mrf.mxu0
  %364 = vmatprep.mubr.f32.mxu0 0.0
  %365 = vmatmul.mubr.f32.gmra.mxu0 %v180
  %v366 = vpop.f32.mrf.mxu0
  %v367 = vadd.f32 0.0, %v366
  %v368 = vpop.f32.mrf.mxu0
  %369 = vmatprep.mubr.f32.mxu0 0.0
  %370 = vmatmul.mubr.f32.gmra.mxu0 %v183
  %v371 = vpop.f32.mrf.mxu0
  %v372 = vadd.f32 0.0, %v371
  %v373 = vpop.f32.mrf.mxu0
  %374 = vdwg.mxu0
  %v376 = vsel %vm109, %v43, 0
  %v379 = vsel %vm109, %v44, 0
  %v382 = vsel %vm109, %v45, 0
  %v385 = vsel %vm109, %v46, 0
  %v388 = vsel %vm109, %v47, 0
  %v391 = vsel %vm109, %v48, 0
  %v394 = vsel %vm109, %v49, 0
  %v397 = vsel %vm109, %v50, 0
  %v400 = vsel %vm109, %v51, 0
  %v403 = vsel %vm109, %v52, 0
  %v406 = vsel %vm109, %v53, 0
  %v409 = vsel %vm109, %v54, 0
  %v412 = vsel %vm109, %v55, 0
  %v415 = vsel %vm109, %v56, 0
  %v418 = vsel %vm109, %v57, 0
  %v421 = vsel %vm109, %v58, 0
  %v424 = vsel %vm109, %v59, 0
  %v427 = vsel %vm109, %v60, 0
  %v430 = vsel %vm109, %v61, 0
  %v433 = vsel %vm109, %v62, 0
  %v436 = vsel %vm109, %v63, 0
  %v439 = vsel %vm109, %v64, 0
  %v442 = vsel %vm109, %v65, 0
  %v445 = vsel %vm109, %v66, 0
  %v448 = vsel %vm109, %v67, 0
  %450 = vmatprep.subr.mxu0 0.0
  %451 = vmatpush1.msra.mxu0 0.0
  %452 = vmatprep.subr.mxu0 0.0
  %453 = vmatpush1.msra.mxu0 0.0
  %454 = vmatprep.subr.mxu0 0.0
  %455 = vmatpush1.msra.mxu0 0.0
  %456 = vmatprep.subr.mxu0 0.0
  %457 = vmatpush1.msra.mxu0 0.0
  %458 = vmatprep.subr.mxu0 0.0
  %459 = vmatpush1.msra.mxu0 0.0
  %460 = vmatprep.subr.mxu0 0.0
  %461 = vmatpush1.msra.mxu0 0.0
  %462 = vmatprep.subr.mxu0 0.0
  %463 = vmatpush1.msra.mxu0 0.0
  %464 = vmatprep.subr.mxu0 0.0
  %465 = vmatpush1.msra.mxu0 0.0
  %466 = vmatprep.subr.mxu0 0.0
  %467 = vmatpush1.msra.mxu0 0.0
  %468 = vmatprep.subr.mxu0 0.0
  %469 = vmatpush1.msra.mxu0 0.0
  %470 = vmatprep.subr.mxu0 0.0
  %471 = vmatpush1.msra.mxu0 0.0
  %472 = vmatprep.subr.mxu0 0.0
  %473 = vmatpush1.msra.mxu0 %v72
  %474 = vmatprep.subr.mxu0 0.0
  %475 = vmatpush1.msra.mxu0 %v71
  %476 = vmatprep.subr.mxu0 0.0
  %477 = vmatpush1.msra.mxu0 %v70
  %478 = vmatprep.subr.mxu0 0.0
  %479 = vmatpush1.msra.mxu0 %v69
  %480 = vmatprep.subr.mxu0 0.0
  %481 = vmatpush1.msra.mxu0 %v68
  %482 = vmatprep.subr.mxu0 0.0
  %483 = vmatpush2.msra.mxu0 0.0
  %484 = vmatprep.subr.mxu0 0.0
  %485 = vmatpush2.msra.mxu0 0.0
  %486 = vmatprep.subr.mxu0 0.0
  %487 = vmatpush2.msra.mxu0 0.0
  %488 = vmatprep.subr.mxu0 0.0
  %489 = vmatpush2.msra.mxu0 0.0
  %490 = vmatprep.subr.mxu0 0.0
  %491 = vmatpush2.msra.mxu0 0.0
  %492 = vmatprep.subr.mxu0 0.0
  %493 = vmatpush2.msra.mxu0 0.0
  %494 = vmatprep.subr.mxu0 0.0
  %495 = vmatpush2.msra.mxu0 0.0
  %496 = vmatprep.subr.mxu0 0.0
  %497 = vmatpush2.msra.mxu0 0.0
  %498 = vmatprep.subr.mxu0 0.0
  %499 = vmatpush2.msra.mxu0 0.0
  %500 = vmatprep.subr.mxu0 0.0
  %501 = vmatpush2.msra.mxu0 0.0
  %502 = vmatprep.subr.mxu0 0.0
  %503 = vmatpush2.msra.mxu0 0.0
  %504 = vmatprep.subr.mxu0 0.0
  %505 = vmatpush2.msra.mxu0 0.0
  %506 = vmatprep.subr.mxu0 0.0
  %507 = vmatpush2.msra.mxu0 0.0
  %508 = vmatprep.subr.mxu0 0.0
  %509 = vmatpush2.msra.mxu0 0.0
  %510 = vmatprep.subr.mxu0 0.0
  %511 = vmatpush2.msra.mxu0 0.0
  %512 = vmatprep.subr.mxu0 0.0
  %513 = vmatpush2.msra.mxu0 0.0
  %514 = vmatprep.mubr.f32.mxu0 0.0
  %515 = vmatmul.mubr.f32.gmra.mxu0 %v376
  %v516 = vpop.f32.mrf.mxu0
  %v517 = vadd.f32 %v252, %v516
  %v518 = vpop.f32.mrf.mxu0
  %519 = vmatprep.mubr.f32.mxu0 0.0
  %520 = vmatmul.mubr.f32.gmra.mxu0 %v379
  %v521 = vpop.f32.mrf.mxu0
  %v522 = vadd.f32 %v257, %v521
  %v523 = vpop.f32.mrf.mxu0
  %524 = vmatprep.mubr.f32.mxu0 0.0
  %525 = vmatmul.mubr.f32.gmra.mxu0 %v382
  %v526 = vpop.f32.mrf.mxu0
  %v527 = vadd.f32 %v262, %v526
  %v528 = vpop.f32.mrf.mxu0
  %529 = vmatprep.mubr.f32.mxu0 0.0
  %530 = vmatmul.mubr.f32.gmra.mxu0 %v385
  %v531 = vpop.f32.mrf.mxu0
  %v532 = vadd.f32 %v267, %v531
  %v533 = vpop.f32.mrf.mxu0
  %534 = vmatprep.mubr.f32.mxu0 0.0
  %535 = vmatmul.mubr.f32.gmra.mxu0 %v388
  %v536 = vpop.f32.mrf.mxu0
  %v537 = vadd.f32 %v272, %v536
  %v538 = vpop.f32.mrf.mxu0
  %539 = vmatprep.mubr.f32.mxu0 0.0
  %540 = vmatmul.mubr.f32.gmra.mxu0 %v391
  %v541 = vpop.f32.mrf.mxu0
  %v542 = vadd.f32 %v277, %v541
  %v543 = vpop.f32.mrf.mxu0
  %544 = vmatprep.mubr.f32.mxu0 0.0
  %545 = vmatmul.mubr.f32.gmra.mxu0 %v394
  %v546 = vpop.f32.mrf.mxu0
  %v547 = vadd.f32 %v282, %v546
  %v548 = vpop.f32.mrf.mxu0
  %549 = vmatprep.mubr.f32.mxu0 0.0
  %550 = vmatmul.mubr.f32.gmra.mxu0 %v397
  %v551 = vpop.f32.mrf.mxu0
  %v552 = vadd.f32 %v287, %v551
  %v553 = vpop.f32.mrf.mxu0
  %554 = vmatprep.mubr.f32.mxu0 0.0
  %555 = vmatmul.mubr.f32.gmra.mxu0 %v400
  %v556 = vpop.f32.mrf.mxu0
  %v557 = vadd.f32 %v292, %v556
  %v558 = vpop.f32.mrf.mxu0
  %559 = vmatprep.mubr.f32.mxu0 0.0
  %560 = vmatmul.mubr.f32.gmra.mxu0 %v403
  %v561 = vpop.f32.mrf.mxu0
  %v562 = vadd.f32 %v297, %v561
  %v563 = vpop.f32.mrf.mxu0
  %564 = vmatprep.mubr.f32.mxu0 0.0
  %565 = vmatmul.mubr.f32.gmra.mxu0 %v406
  %v566 = vpop.f32.mrf.mxu0
  %v567 = vadd.f32 %v302, %v566
  %v568 = vpop.f32.mrf.mxu0
  %569 = vmatprep.mubr.f32.mxu0 0.0
  %570 = vmatmul.mubr.f32.gmra.mxu0 %v409
  %v571 = vpop.f32.mrf.mxu0
  %v572 = vadd.f32 %v307, %v571
  %v573 = vpop.f32.mrf.mxu0
  %574 = vmatprep.mubr.f32.mxu0 0.0
  %575 = vmatmul.mubr.f32.gmra.mxu0 %v412
  %v576 = vpop.f32.mrf.mxu0
  %v577 = vadd.f32 %v312, %v576
  %v578 = vpop.f32.mrf.mxu0
  %579 = vmatprep.mubr.f32.mxu0 0.0
  %580 = vmatmul.mubr.f32.gmra.mxu0 %v415
  %v581 = vpop.f32.mrf.mxu0
  %v582 = vadd.f32 %v317, %v581
  %v583 = vpop.f32.mrf.mxu0
  %584 = vmatprep.mubr.f32.mxu0 0.0
  %585 = vmatmul.mubr.f32.gmra.mxu0 %v418
  %v586 = vpop.f32.mrf.mxu0
  %v587 = vadd.f32 %v322, %v586
  %v588 = vpop.f32.mrf.mxu0
  %589 = vmatprep.mubr.f32.mxu0 0.0
  %590 = vmatmul.mubr.f32.gmra.mxu0 %v421
  %v591 = vpop.f32.mrf.mxu0
  %v592 = vadd.f32 %v327, %v591
  %v593 = vpop.f32.mrf.mxu0
  %594 = vmatprep.mubr.f32.mxu0 0.0
  %595 = vmatmul.mubr.f32.gmra.mxu0 %v424
  %v596 = vpop.f32.mrf.mxu0
  %v597 = vadd.f32 %v332, %v596
  %v598 = vpop.f32.mrf.mxu0
  %599 = vmatprep.mubr.f32.mxu0 0.0
  %600 = vmatmul.mubr.f32.gmra.mxu0 %v427
  %v601 = vpop.f32.mrf.mxu0
  %v602 = vadd.f32 %v337, %v601
  %v603 = vpop.f32.mrf.mxu0
  %604 = vmatprep.mubr.f32.mxu0 0.0
  %605 = vmatmul.mubr.f32.gmra.mxu0 %v430
  %v606 = vpop.f32.mrf.mxu0
  %v607 = vadd.f32 %v342, %v606
  %v608 = vpop.f32.mrf.mxu0
  %609 = vmatprep.mubr.f32.mxu0 0.0
  %610 = vmatmul.mubr.f32.gmra.mxu0 %v433
  %v611 = vpop.f32.mrf.mxu0
  %v612 = vadd.f32 %v347, %v611
  %v613 = vpop.f32.mrf.mxu0
  %614 = vmatprep.mubr.f32.mxu0 0.0
  %615 = vmatmul.mubr.f32.gmra.mxu0 %v436
  %v616 = vpop.f32.mrf.mxu0
  %v617 = vadd.f32 %v352, %v616
  %v618 = vpop.f32.mrf.mxu0
  %619 = vmatprep.mubr.f32.mxu0 0.0
  %620 = vmatmul.mubr.f32.gmra.mxu0 %v439
  %v621 = vpop.f32.mrf.mxu0
  %v622 = vadd.f32 %v357, %v621
  %v623 = vpop.f32.mrf.mxu0
  %624 = vmatprep.mubr.f32.mxu0 0.0
  %625 = vmatmul.mubr.f32.gmra.mxu0 %v442
  %v626 = vpop.f32.mrf.mxu0
  %v627 = vadd.f32 %v362, %v626
  %v628 = vpop.f32.mrf.mxu0
  %629 = vmatprep.mubr.f32.mxu0 0.0
  %630 = vmatmul.mubr.f32.gmra.mxu0 %v445
  %v631 = vpop.f32.mrf.mxu0
  %v632 = vadd.f32 %v367, %v631
  %v633 = vpop.f32.mrf.mxu0
  %634 = vmatprep.mubr.f32.mxu0 0.0
  %635 = vmatmul.mubr.f32.gmra.mxu0 %v448
  %v636 = vpop.f32.mrf.mxu0
  %v637 = vadd.f32 %v372, %v636
  %v638 = vpop.f32.mrf.mxu0
  %639 = vdwg.mxu0
  %s640 = scalar_lea.vmem %s2, 40
  %v641 = vld [vmem:[%s640] sm:$0xff]
  %v642 = vld [vmem:[%s640 + $0x8] sm:$0xff]
  %v643 = vld [vmem:[%s640 + $0x10] sm:$0xff]
  %v644 = vld [vmem:[%s640 + $0x18] sm:$0xff]
  %v645 = vld [vmem:[%s640 + $0x20] sm:$0xff]
  %646 = vmatprep.subr.mxu0 0.0
  %647 = vmatpush1.msra.mxu0 0.0
  %648 = vmatprep.subr.mxu0 0.0
  %649 = vmatpush1.msra.mxu0 0.0
  %650 = vmatprep.subr.mxu0 0.0
  %651 = vmatpush1.msra.mxu0 0.0
  %652 = vmatprep.subr.mxu0 0.0
  %653 = vmatpush1.msra.mxu0 0.0
  %654 = vmatprep.subr.mxu0 0.0
  %655 = vmatpush1.msra.mxu0 0.0
  %656 = vmatprep.subr.mxu0 0.0
  %657 = vmatpush1.msra.mxu0 0.0
  %658 = vmatprep.subr.mxu0 0.0
  %659 = vmatpush1.msra.mxu0 0.0
  %660 = vmatprep.subr.mxu0 0.0
  %661 = vmatpush1.msra.mxu0 0.0
  %662 = vmatprep.subr.mxu0 0.0
  %663 = vmatpush1.msra.mxu0 0.0
  %664 = vmatprep.subr.mxu0 0.0
  %665 = vmatpush1.msra.mxu0 0.0
  %666 = vmatprep.subr.mxu0 0.0
  %667 = vmatpush1.msra.mxu0 0.0
  %668 = vmatprep.subr.mxu0 0.0
  %669 = vmatpush1.msra.mxu0 %v645
  %670 = vmatprep.subr.mxu0 0.0
  %671 = vmatpush1.msra.mxu0 %v644
  %672 = vmatprep.subr.mxu0 0.0
  %673 = vmatpush1.msra.mxu0 %v643
  %674 = vmatprep.subr.mxu0 0.0
  %675 = vmatpush1.msra.mxu0 %v642
  %676 = vmatprep.subr.mxu0 0.0
  %677 = vmatpush1.msra.mxu0 %v641
  %678 = vmatprep.subr.mxu0 0.0
  %679 = vmatpush2.msra.mxu0 0.0
  %680 = vmatprep.subr.mxu0 0.0
  %681 = vmatpush2.msra.mxu0 0.0
  %682 = vmatprep.subr.mxu0 0.0
  %683 = vmatpush2.msra.mxu0 0.0
  %684 = vmatprep.subr.mxu0 0.0
  %685 = vmatpush2.msra.mxu0 0.0
  %686 = vmatprep.subr.mxu0 0.0
  %687 = vmatpush2.msra.mxu0 0.0
  %688 = vmatprep.subr.mxu0 0.0
  %689 = vmatpush2.msra.mxu0 0.0
  %690 = vmatprep.subr.mxu0 0.0
  %691 = vmatpush2.msra.mxu0 0.0
  %692 = vmatprep.subr.mxu0 0.0
  %693 = vmatpush2.msra.mxu0 0.0
  %694 = vmatprep.subr.mxu0 0.0
  %695 = vmatpush2.msra.mxu0 0.0
  %696 = vmatprep.subr.mxu0 0.0
  %697 = vmatpush2.msra.mxu0 0.0
  %698 = vmatprep.subr.mxu0 0.0
  %699 = vmatpush2.msra.mxu0 0.0
  %700 = vmatprep.subr.mxu0 0.0
  %701 = vmatpush2.msra.mxu0 0.0
  %702 = vmatprep.subr.mxu0 0.0
  %703 = vmatpush2.msra.mxu0 0.0
  %704 = vmatprep.subr.mxu0 0.0
  %705 = vmatpush2.msra.mxu0 0.0
  %706 = vmatprep.subr.mxu0 0.0
  %707 = vmatpush2.msra.mxu0 0.0
  %708 = vmatprep.subr.mxu0 0.0
  %709 = vmatpush2.msra.mxu0 0.0
  %710 = vmatprep.mubr.f32.mxu0 0.0
  %711 = vmatmul.mubr.f32.gmra.mxu0 %v111
  %v712 = vpop.f32.mrf.mxu0
  %v713 = vadd.f32 0.0, %v712
  %v714 = vpop.f32.mrf.mxu0
  %715 = vmatprep.mubr.f32.mxu0 0.0
  %716 = vmatmul.mubr.f32.gmra.mxu0 %v114
  %v717 = vpop.f32.mrf.mxu0
  %v718 = vadd.f32 0.0, %v717
  %v719 = vpop.f32.mrf.mxu0
  %720 = vmatprep.mubr.f32.mxu0 0.0
  %721 = vmatmul.mubr.f32.gmra.mxu0 %v117
  %v722 = vpop.f32.mrf.mxu0
  %v723 = vadd.f32 0.0, %v722
  %v724 = vpop.f32.mrf.mxu0
  %725 = vmatprep.mubr.f32.mxu0 0.0
  %726 = vmatmul.mubr.f32.gmra.mxu0 %v120
  %v727 = vpop.f32.mrf.mxu0
  %v728 = vadd.f32 0.0, %v727
  %v729 = vpop.f32.mrf.mxu0
  %730 = vmatprep.mubr.f32.mxu0 0.0
  %731 = vmatmul.mubr.f32.gmra.mxu0 %v123
  %v732 = vpop.f32.mrf.mxu0
  %v733 = vadd.f32 0.0, %v732
  %v734 = vpop.f32.mrf.mxu0
  %735 = vmatprep.mubr.f32.mxu0 0.0
  %736 = vmatmul.mubr.f32.gmra.mxu0 %v126
  %v737 = vpop.f32.mrf.mxu0
  %v738 = vadd.f32 0.0, %v737
  %v739 = vpop.f32.mrf.mxu0
  %740 = vmatprep.mubr.f32.mxu0 0.0
  %741 = vmatmul.mubr.f32.gmra.mxu0 %v129
  %v742 = vpop.f32.mrf.mxu0
  %v743 = vadd.f32 0.0, %v742
  %v744 = vpop.f32.mrf.mxu0
  %745 = vmatprep.mubr.f32.mxu0 0.0
  %746 = vmatmul.mubr.f32.gmra.mxu0 %v132
  %v747 = vpop.f32.mrf.mxu0
  %v748 = vadd.f32 0.0, %v747
  %v749 = vpop.f32.mrf.mxu0
  %750 = vmatprep.mubr.f32.mxu0 0.0
  %751 = vmatmul.mubr.f32.gmra.mxu0 %v135
  %v752 = vpop.f32.mrf.mxu0
  %v753 = vadd.f32 0.0, %v752
  %v754 = vpop.f32.mrf.mxu0
  %755 = vmatprep.mubr.f32.mxu0 0.0
  %756 = vmatmul.mubr.f32.gmra.mxu0 %v138
  %v757 = vpop.f32.mrf.mxu0
  %v758 = vadd.f32 0.0, %v757
  %v759 = vpop.f32.mrf.mxu0
  %760 = vmatprep.mubr.f32.mxu0 0.0
  %761 = vmatmul.mubr.f32.gmra.mxu0 %v141
  %v762 = vpop.f32.mrf.mxu0
  %v763 = vadd.f32 0.0, %v762
  %v764 = vpop.f32.mrf.mxu0
  %765 = vmatprep.mubr.f32.mxu0 0.0
  %766 = vmatmul.mubr.f32.gmra.mxu0 %v144
  %v767 = vpop.f32.mrf.mxu0
  %v768 = vadd.f32 0.0, %v767
  %v769 = vpop.f32.mrf.mxu0
  %770 = vmatprep.mubr.f32.mxu0 0.0
  %771 = vmatmul.mubr.f32.gmra.mxu0 %v147
  %v772 = vpop.f32.mrf.mxu0
  %v773 = vadd.f32 0.0, %v772
  %v774 = vpop.f32.mrf.mxu0
  %775 = vmatprep.mubr.f32.mxu0 0.0
  %776 = vmatmul.mubr.f32.gmra.mxu0 %v150
  %v777 = vpop.f32.mrf.mxu0
  %v778 = vadd.f32 0.0, %v777
  %v779 = vpop.f32.mrf.mxu0
  %780 = vmatprep.mubr.f32.mxu0 0.0
  %781 = vmatmul.mubr.f32.gmra.mxu0 %v153
  %v782 = vpop.f32.mrf.mxu0
  %v783 = vadd.f32 0.0, %v782
  %v784 = vpop.f32.mrf.mxu0
  %785 = vmatprep.mubr.f32.mxu0 0.0
  %786 = vmatmul.mubr.f32.gmra.mxu0 %v156
  %v787 = vpop.f32.mrf.mxu0
  %v788 = vadd.f32 0.0, %v787
  %v789 = vpop.f32.mrf.mxu0
  %790 = vmatprep.mubr.f32.mxu0 0.0
  %791 = vmatmul.mubr.f32.gmra.mxu0 %v159
  %v792 = vpop.f32.mrf.mxu0
  %v793 = vadd.f32 0.0, %v792
  %v794 = vpop.f32.mrf.mxu0
  %795 = vmatprep.mubr.f32.mxu0 0.0
  %796 = vmatmul.mubr.f32.gmra.mxu0 %v162
  %v797 = vpop.f32.mrf.mxu0
  %v798 = vadd.f32 0.0, %v797
  %v799 = vpop.f32.mrf.mxu0
  %800 = vmatprep.mubr.f32.mxu0 0.0
  %801 = vmatmul.mubr.f32.gmra.mxu0 %v165
  %v802 = vpop.f32.mrf.mxu0
  %v803 = vadd.f32 0.0, %v802
  %v804 = vpop.f32.mrf.mxu0
  %805 = vmatprep.mubr.f32.mxu0 0.0
  %806 = vmatmul.mubr.f32.gmra.mxu0 %v168
  %v807 = vpop.f32.mrf.mxu0
  %v808 = vadd.f32 0.0, %v807
  %v809 = vpop.f32.mrf.mxu0
  %810 = vmatprep.mubr.f32.mxu0 0.0
  %811 = vmatmul.mubr.f32.gmra.mxu0 %v171
  %v812 = vpop.f32.mrf.mxu0
  %v813 = vadd.f32 0.0, %v812
  %v814 = vpop.f32.mrf.mxu0
  %815 = vmatprep.mubr.f32.mxu0 0.0
  %816 = vmatmul.mubr.f32.gmra.mxu0 %v174
  %v817 = vpop.f32.mrf.mxu0
  %v818 = vadd.f32 0.0, %v817
  %v819 = vpop.f32.mrf.mxu0
  %820 = vmatprep.mubr.f32.mxu0 0.0
  %821 = vmatmul.mubr.f32.gmra.mxu0 %v177
  %v822 = vpop.f32.mrf.mxu0
  %v823 = vadd.f32 0.0, %v822
  %v824 = vpop.f32.mrf.mxu0
  %825 = vmatprep.mubr.f32.mxu0 0.0
  %826 = vmatmul.mubr.f32.gmra.mxu0 %v180
  %v827 = vpop.f32.mrf.mxu0
  %v828 = vadd.f32 0.0, %v827
  %v829 = vpop.f32.mrf.mxu0
  %830 = vmatprep.mubr.f32.mxu0 0.0
  %831 = vmatmul.mubr.f32.gmra.mxu0 %v183
  %v832 = vpop.f32.mrf.mxu0
  %v833 = vadd.f32 0.0, %v832
  %v834 = vpop.f32.mrf.mxu0
  %835 = vdwg.mxu0
  %836 = vmatprep.subr.mxu0 0.0
  %837 = vmatpush1.msra.mxu0 0.0
  %838 = vmatprep.subr.mxu0 0.0
  %839 = vmatpush1.msra.mxu0 0.0
  %840 = vmatprep.subr.mxu0 0.0
  %841 = vmatpush1.msra.mxu0 0.0
  %842 = vmatprep.subr.mxu0 0.0
  %843 = vmatpush1.msra.mxu0 0.0
  %844 = vmatprep.subr.mxu0 0.0
  %845 = vmatpush1.msra.mxu0 0.0
  %846 = vmatprep.subr.mxu0 0.0
  %847 = vmatpush1.msra.mxu0 0.0
  %848 = vmatprep.subr.mxu0 0.0
  %849 = vmatpush1.msra.mxu0 0.0
  %850 = vmatprep.subr.mxu0 0.0
  %851 = vmatpush1.msra.mxu0 0.0
  %852 = vmatprep.subr.mxu0 0.0
  %853 = vmatpush1.msra.mxu0 0.0
  %854 = vmatprep.subr.mxu0 0.0
  %855 = vmatpush1.msra.mxu0 0.0
  %856 = vmatprep.subr.mxu0 0.0
  %857 = vmatpush1.msra.mxu0 0.0
  %858 = vmatprep.subr.mxu0 0.0
  %859 = vmatpush1.msra.mxu0 %v77
  %860 = vmatprep.subr.mxu0 0.0
  %861 = vmatpush1.msra.mxu0 %v76
  %862 = vmatprep.subr.mxu0 0.0
  %863 = vmatpush1.msra.mxu0 %v75
  %864 = vmatprep.subr.mxu0 0.0
  %865 = vmatpush1.msra.mxu0 %v74
  %866 = vmatprep.subr.mxu0 0.0
  %867 = vmatpush1.msra.mxu0 %v73
  %868 = vmatprep.subr.mxu0 0.0
  %869 = vmatpush2.msra.mxu0 0.0
  %870 = vmatprep.subr.mxu0 0.0
  %871 = vmatpush2.msra.mxu0 0.0
  %872 = vmatprep.subr.mxu0 0.0
  %873 = vmatpush2.msra.mxu0 0.0
  %874 = vmatprep.subr.mxu0 0.0
  %875 = vmatpush2.msra.mxu0 0.0
  %876 = vmatprep.subr.mxu0 0.0
  %877 = vmatpush2.msra.mxu0 0.0
  %878 = vmatprep.subr.mxu0 0.0
  %879 = vmatpush2.msra.mxu0 0.0
  %880 = vmatprep.subr.mxu0 0.0
  %881 = vmatpush2.msra.mxu0 0.0
  %882 = vmatprep.subr.mxu0 0.0
  %883 = vmatpush2.msra.mxu0 0.0
  %884 = vmatprep.subr.mxu0 0.0
  %885 = vmatpush2.msra.mxu0 0.0
  %886 = vmatprep.subr.mxu0 0.0
  %887 = vmatpush2.msra.mxu0 0.0
  %888 = vmatprep.subr.mxu0 0.0
  %889 = vmatpush2.msra.mxu0 0.0
  %890 = vmatprep.subr.mxu0 0.0
  %891 = vmatpush2.msra.mxu0 0.0
  %892 = vmatprep.subr.mxu0 0.0
  %893 = vmatpush2.msra.mxu0 0.0
  %894 = vmatprep.subr.mxu0 0.0
  %895 = vmatpush2.msra.mxu0 0.0
  %896 = vmatprep.subr.mxu0 0.0
  %897 = vmatpush2.msra.mxu0 0.0
  %898 = vmatprep.subr.mxu0 0.0
  %899 = vmatpush2.msra.mxu0 0.0
  %900 = vmatprep.mubr.f32.mxu0 0.0
  %901 = vmatmul.mubr.f32.gmra.mxu0 %v376
  %v902 = vpop.f32.mrf.mxu0
  %v903 = vadd.f32 %v713, %v902
  %v904 = vpop.f32.mrf.mxu0
  %905 = vmatprep.mubr.f32.mxu0 0.0
  %906 = vmatmul.mubr.f32.gmra.mxu0 %v379
  %v907 = vpop.f32.mrf.mxu0
  %v908 = vadd.f32 %v718, %v907
  %v909 = vpop.f32.mrf.mxu0
  %910 = vmatprep.mubr.f32.mxu0 0.0
  %911 = vmatmul.mubr.f32.gmra.mxu0 %v382
  %v912 = vpop.f32.mrf.mxu0
  %v913 = vadd.f32 %v723, %v912
  %v914 = vpop.f32.mrf.mxu0
  %915 = vmatprep.mubr.f32.mxu0 0.0
  %916 = vmatmul.mubr.f32.gmra.mxu0 %v385
  %v917 = vpop.f32.mrf.mxu0
  %v918 = vadd.f32 %v728, %v917
  %v919 = vpop.f32.mrf.mxu0
  %920 = vmatprep.mubr.f32.mxu0 0.0
  %921 = vmatmul.mubr.f32.gmra.mxu0 %v388
  %v922 = vpop.f32.mrf.mxu0
  %v923 = vadd.f32 %v733, %v922
  %v924 = vpop.f32.mrf.mxu0
  %925 = vmatprep.mubr.f32.mxu0 0.0
  %926 = vmatmul.mubr.f32.gmra.mxu0 %v391
  %v927 = vpop.f32.mrf.mxu0
  %v928 = vadd.f32 %v738, %v927
  %v929 = vpop.f32.mrf.mxu0
  %930 = vmatprep.mubr.f32.mxu0 0.0
  %931 = vmatmul.mubr.f32.gmra.mxu0 %v394
  %v932 = vpop.f32.mrf.mxu0
  %v933 = vadd.f32 %v743, %v932
  %v934 = vpop.f32.mrf.mxu0
  %935 = vmatprep.mubr.f32.mxu0 0.0
  %936 = vmatmul.mubr.f32.gmra.mxu0 %v397
  %v937 = vpop.f32.mrf.mxu0
  %v938 = vadd.f32 %v748, %v937
  %v939 = vpop.f32.mrf.mxu0
  %940 = vmatprep.mubr.f32.mxu0 0.0
  %941 = vmatmul.mubr.f32.gmra.mxu0 %v400
  %v942 = vpop.f32.mrf.mxu0
  %v943 = vadd.f32 %v753, %v942
  %v944 = vpop.f32.mrf.mxu0
  %945 = vmatprep.mubr.f32.mxu0 0.0
  %946 = vmatmul.mubr.f32.gmra.mxu0 %v403
  %v947 = vpop.f32.mrf.mxu0
  %v948 = vadd.f32 %v758, %v947
  %v949 = vpop.f32.mrf.mxu0
  %950 = vmatprep.mubr.f32.mxu0 0.0
  %951 = vmatmul.mubr.f32.gmra.mxu0 %v406
  %v952 = vpop.f32.mrf.mxu0
  %v953 = vadd.f32 %v763, %v952
  %v954 = vpop.f32.mrf.mxu0
  %955 = vmatprep.mubr.f32.mxu0 0.0
  %956 = vmatmul.mubr.f32.gmra.mxu0 %v409
  %v957 = vpop.f32.mrf.mxu0
  %v958 = vadd.f32 %v768, %v957
  %v959 = vpop.f32.mrf.mxu0
  %960 = vmatprep.mubr.f32.mxu0 0.0
  %961 = vmatmul.mubr.f32.gmra.mxu0 %v412
  %v962 = vpop.f32.mrf.mxu0
  %v963 = vadd.f32 %v773, %v962
  %v964 = vpop.f32.mrf.mxu0
  %965 = vmatprep.mubr.f32.mxu0 0.0
  %966 = vmatmul.mubr.f32.gmra.mxu0 %v415
  %v967 = vpop.f32.mrf.mxu0
  %v968 = vadd.f32 %v778, %v967
  %v969 = vpop.f32.mrf.mxu0
  %970 = vmatprep.mubr.f32.mxu0 0.0
  %971 = vmatmul.mubr.f32.gmra.mxu0 %v418
  %v972 = vpop.f32.mrf.mxu0
  %v973 = vadd.f32 %v783, %v972
  %v974 = vpop.f32.mrf.mxu0
  %975 = vmatprep.mubr.f32.mxu0 0.0
  %976 = vmatmul.mubr.f32.gmra.mxu0 %v421
  %v977 = vpop.f32.mrf.mxu0
  %v978 = vadd.f32 %v788, %v977
  %v979 = vpop.f32.mrf.mxu0
  %980 = vmatprep.mubr.f32.mxu0 0.0
  %981 = vmatmul.mubr.f32.gmra.mxu0 %v424
  %v982 = vpop.f32.mrf.mxu0
  %v983 = vadd.f32 %v793, %v982
  %v984 = vpop.f32.mrf.mxu0
  %985 = vmatprep.mubr.f32.mxu0 0.0
  %986 = vmatmul.mubr.f32.gmra.mxu0 %v427
  %v987 = vpop.f32.mrf.mxu0
  %v988 = vadd.f32 %v798, %v987
  %v989 = vpop.f32.mrf.mxu0
  %990 = vmatprep.mubr.f32.mxu0 0.0
  %991 = vmatmul.mubr.f32.gmra.mxu0 %v430
  %v992 = vpop.f32.mrf.mxu0
  %v993 = vadd.f32 %v803, %v992
  %v994 = vpop.f32.mrf.mxu0
  %995 = vmatprep.mubr.f32.mxu0 0.0
  %996 = vmatmul.mubr.f32.gmra.mxu0 %v433
  %v997 = vpop.f32.mrf.mxu0
  %v998 = vadd.f32 %v808, %v997
  %v999 = vpop.f32.mrf.mxu0
  %1000 = vmatprep.mubr.f32.mxu0 0.0
  %1001 = vmatmul.mubr.f32.gmra.mxu0 %v436
  %v1002 = vpop.f32.mrf.mxu0
  %v1003 = vadd.f32 %v813, %v1002
  %v1004 = vpop.f32.mrf.mxu0
  %1005 = vmatprep.mubr.f32.mxu0 0.0
  %1006 = vmatmul.mubr.f32.gmra.mxu0 %v439
  %v1007 = vpop.f32.mrf.mxu0
  %v1008 = vadd.f32 %v818, %v1007
  %v1009 = vpop.f32.mrf.mxu0
  %1010 = vmatprep.mubr.f32.mxu0 0.0
  %1011 = vmatmul.mubr.f32.gmra.mxu0 %v442
  %v1012 = vpop.f32.mrf.mxu0
  %v1013 = vadd.f32 %v823, %v1012
  %v1014 = vpop.f32.mrf.mxu0
  %1015 = vmatprep.mubr.f32.mxu0 0.0
  %1016 = vmatmul.mubr.f32.gmra.mxu0 %v445
  %v1017 = vpop.f32.mrf.mxu0
  %v1018 = vadd.f32 %v828, %v1017
  %v1019 = vpop.f32.mrf.mxu0
  %1020 = vmatprep.mubr.f32.mxu0 0.0
  %1021 = vmatmul.mubr.f32.gmra.mxu0 %v448
  %v1022 = vpop.f32.mrf.mxu0
  %v1023 = vadd.f32 %v833, %v1022
  %v1024 = vpop.f32.mrf.mxu0
  %1025 = vdwg.mxu0
  %v1026 = vld [vmem:[%s0 + $0x7] sm:$0xff]
  %v1027 = vld [vmem:[%s0 + $0xf] sm:$0xff]
  %v1028 = vld [vmem:[%s0 + $0x17] sm:$0xff]
  %v1029 = vld [vmem:[%s0 + $0x1f] sm:$0xff]
  %v1030 = vld [vmem:[%s0 + $0x27] sm:$0xff]
  %v1031 = vld [vmem:[%s0 + $0x2f] sm:$0xff]
  %v1032 = vld [vmem:[%s0 + $0x37] sm:$0xff]
  %v1033 = vld [vmem:[%s0 + $0x3f] sm:$0xff]
  %v1034 = vld [vmem:[%s0 + $0x47] sm:$0xff]
  %v1035 = vld [vmem:[%s0 + $0x4f] sm:$0xff]
  %v1036 = vld [vmem:[%s0 + $0x57] sm:$0xff]
  %v1037 = vld [vmem:[%s0 + $0x5f] sm:$0xff]
  %v1038 = vld [vmem:[%s0 + $0x67] sm:$0xff]
  %v1039 = vld [vmem:[%s0 + $0x6f] sm:$0xff]
  %v1040 = vld [vmem:[%s0 + $0x77] sm:$0xff]
  %v1041 = vld [vmem:[%s0 + $0x7f] sm:$0xff]
  %v1042 = vld [vmem:[%s0 + $0x87] sm:$0xff]
  %v1043 = vld [vmem:[%s0 + $0x8f] sm:$0xff]
  %v1044 = vld [vmem:[%s0 + $0x97] sm:$0xff]
  %v1045 = vld [vmem:[%s0 + $0x9f] sm:$0xff]
  %v1046 = vld [vmem:[%s0 + $0xa7] sm:$0xff]
  %v1047 = vld [vmem:[%s0 + $0xaf] sm:$0xff]
  %v1048 = vld [vmem:[%s0 + $0xb7] sm:$0xff]
  %v1049 = vld [vmem:[%s0 + $0xbf] sm:$0xff]
  %v1050 = vld [vmem:[%s0 + $0xc7] sm:$0xff]
  %s1051 = scalar_lea.vmem %s1, 80
  %v1052 = vld [vmem:[%s1051] sm:$0xff]
  %v1053 = vld [vmem:[%s1051 + $0x8] sm:$0xff]
  %v1054 = vld [vmem:[%s1051 + $0x10] sm:$0xff]
  %v1055 = vld [vmem:[%s1051 + $0x18] sm:$0xff]
  %v1056 = vld [vmem:[%s1051 + $0x20] sm:$0xff]
  %v1058 = vsel %vm109, %v1026, 0
  %v1061 = vsel %vm109, %v1027, 0
  %v1064 = vsel %vm109, %v1028, 0
  %v1067 = vsel %vm109, %v1029, 0
  %v1070 = vsel %vm109, %v1030, 0
  %v1073 = vsel %vm109, %v1031, 0
  %v1076 = vsel %vm109, %v1032, 0
  %v1079 = vsel %vm109, %v1033, 0
  %v1082 = vsel %vm109, %v1034, 0
  %v1085 = vsel %vm109, %v1035, 0
  %v1088 = vsel %vm109, %v1036, 0
  %v1091 = vsel %vm109, %v1037, 0
  %v1094 = vsel %vm109, %v1038, 0
  %v1097 = vsel %vm109, %v1039, 0
  %v1100 = vsel %vm109, %v1040, 0
  %v1103 = vsel %vm109, %v1041, 0
  %v1106 = vsel %vm109, %v1042, 0
  %v1109 = vsel %vm109, %v1043, 0
  %v1112 = vsel %vm109, %v1044, 0
  %v1115 = vsel %vm109, %v1045, 0
  %v1118 = vsel %vm109, %v1046, 0
  %v1121 = vsel %vm109, %v1047, 0
  %v1124 = vsel %vm109, %v1048, 0
  %v1127 = vsel %vm109, %v1049, 0
  %v1130 = vsel %vm109, %v1050, 0
  %1132 = vmatprep.subr.mxu0 0.0
  %1133 = vmatpush1.msra.mxu0 0.0
  %1134 = vmatprep.subr.mxu0 0.0
  %1135 = vmatpush1.msra.mxu0 0.0
  %1136 = vmatprep.subr.mxu0 0.0
  %1137 = vmatpush1.msra.mxu0 0.0
  %1138 = vmatprep.subr.mxu0 0.0
  %1139 = vmatpush1.msra.mxu0 0.0
  %1140 = vmatprep.subr.mxu0 0.0
  %1141 = vmatpush1.msra.mxu0 0.0
  %1142 = vmatprep.subr.mxu0 0.0
  %1143 = vmatpush1.msra.mxu0 0.0
  %1144 = vmatprep.subr.mxu0 0.0
  %1145 = vmatpush1.msra.mxu0 0.0
  %1146 = vmatprep.subr.mxu0 0.0
  %1147 = vmatpush1.msra.mxu0 0.0
  %1148 = vmatprep.subr.mxu0 0.0
  %1149 = vmatpush1.msra.mxu0 0.0
  %1150 = vmatprep.subr.mxu0 0.0
  %1151 = vmatpush1.msra.mxu0 0.0
  %1152 = vmatprep.subr.mxu0 0.0
  %1153 = vmatpush1.msra.mxu0 0.0
  %1154 = vmatprep.subr.mxu0 0.0
  %1155 = vmatpush1.msra.mxu0 %v1056
  %1156 = vmatprep.subr.mxu0 0.0
  %1157 = vmatpush1.msra.mxu0 %v1055
  %1158 = vmatprep.subr.mxu0 0.0
  %1159 = vmatpush1.msra.mxu0 %v1054
  %1160 = vmatprep.subr.mxu0 0.0
  %1161 = vmatpush1.msra.mxu0 %v1053
  %1162 = vmatprep.subr.mxu0 0.0
  %1163 = vmatpush1.msra.mxu0 %v1052
  %1164 = vmatprep.subr.mxu0 0.0
  %1165 = vmatpush2.msra.mxu0 0.0
  %1166 = vmatprep.subr.mxu0 0.0
  %1167 = vmatpush2.msra.mxu0 0.0
  %1168 = vmatprep.subr.mxu0 0.0
  %1169 = vmatpush2.msra.mxu0 0.0
  %1170 = vmatprep.subr.mxu0 0.0
  %1171 = vmatpush2.msra.mxu0 0.0
  %1172 = vmatprep.subr.mxu0 0.0
  %1173 = vmatpush2.msra.mxu0 0.0
  %1174 = vmatprep.subr.mxu0 0.0
  %1175 = vmatpush2.msra.mxu0 0.0
  %1176 = vmatprep.subr.mxu0 0.0
  %1177 = vmatpush2.msra.mxu0 0.0
  %1178 = vmatprep.subr.mxu0 0.0
  %1179 = vmatpush2.msra.mxu0 0.0
  %1180 = vmatprep.subr.mxu0 0.0
  %1181 = vmatpush2.msra.mxu0 0.0
  %1182 = vmatprep.subr.mxu0 0.0
  %1183 = vmatpush2.msra.mxu0 0.0
  %1184 = vmatprep.subr.mxu0 0.0
  %1185 = vmatpush2.msra.mxu0 0.0
  %1186 = vmatprep.subr.mxu0 0.0
  %1187 = vmatpush2.msra.mxu0 0.0
  %1188 = vmatprep.subr.mxu0 0.0
  %1189 = vmatpush2.msra.mxu0 0.0
  %1190 = vmatprep.subr.mxu0 0.0
  %1191 = vmatpush2.msra.mxu0 0.0
  %1192 = vmatprep.subr.mxu0 0.0
  %1193 = vmatpush2.msra.mxu0 0.0
  %1194 = vmatprep.subr.mxu0 0.0
  %1195 = vmatpush2.msra.mxu0 0.0
  %1196 = vmatprep.mubr.f32.mxu0 0.0
  %1197 = vmatmul.mubr.f32.gmra.mxu0 %v1058
  %v1198 = vpop.f32.mrf.mxu0
  %v1199 = vadd.f32 0.0, %v1198
  %v1200 = vpop.f32.mrf.mxu0
  %1201 = vmatprep.mubr.f32.mxu0 0.0
  %1202 = vmatmul.mubr.f32.gmra.mxu0 %v1061
  %v1203 = vpop.f32.mrf.mxu0
  %v1204 = vadd.f32 0.0, %v1203
  %v1205 = vpop.f32.mrf.mxu0
  %1206 = vmatprep.mubr.f32.mxu0 0.0
  %1207 = vmatmul.mubr.f32.gmra.mxu0 %v1064
  %v1208 = vpop.f32.mrf.mxu0
  %v1209 = vadd.f32 0.0, %v1208
  %v1210 = vpop.f32.mrf.mxu0
  %1211 = vmatprep.mubr.f32.mxu0 0.0
  %1212 = vmatmul.mubr.f32.gmra.mxu0 %v1067
  %v1213 = vpop.f32.mrf.mxu0
  %v1214 = vadd.f32 0.0, %v1213
  %v1215 = vpop.f32.mrf.mxu0
  %1216 = vmatprep.mubr.f32.mxu0 0.0
  %1217 = vmatmul.mubr.f32.gmra.mxu0 %v1070
  %v1218 = vpop.f32.mrf.mxu0
  %v1219 = vadd.f32 0.0, %v1218
  %v1220 = vpop.f32.mrf.mxu0
  %1221 = vmatprep.mubr.f32.mxu0 0.0
  %1222 = vmatmul.mubr.f32.gmra.mxu0 %v1073
  %v1223 = vpop.f32.mrf.mxu0
  %v1224 = vadd.f32 0.0, %v1223
  %v1225 = vpop.f32.mrf.mxu0
  %1226 = vmatprep.mubr.f32.mxu0 0.0
  %1227 = vmatmul.mubr.f32.gmra.mxu0 %v1076
  %v1228 = vpop.f32.mrf.mxu0
  %v1229 = vadd.f32 0.0, %v1228
  %v1230 = vpop.f32.mrf.mxu0
  %1231 = vmatprep.mubr.f32.mxu0 0.0
  %1232 = vmatmul.mubr.f32.gmra.mxu0 %v1079
  %v1233 = vpop.f32.mrf.mxu0
  %v1234 = vadd.f32 0.0, %v1233
  %v1235 = vpop.f32.mrf.mxu0
  %1236 = vmatprep.mubr.f32.mxu0 0.0
  %1237 = vmatmul.mubr.f32.gmra.mxu0 %v1082
  %v1238 = vpop.f32.mrf.mxu0
  %v1239 = vadd.f32 0.0, %v1238
  %v1240 = vpop.f32.mrf.mxu0
  %1241 = vmatprep.mubr.f32.mxu0 0.0
  %1242 = vmatmul.mubr.f32.gmra.mxu0 %v1085
  %v1243 = vpop.f32.mrf.mxu0
  %v1244 = vadd.f32 0.0, %v1243
  %v1245 = vpop.f32.mrf.mxu0
  %1246 = vmatprep.mubr.f32.mxu0 0.0
  %1247 = vmatmul.mubr.f32.gmra.mxu0 %v1088
  %v1248 = vpop.f32.mrf.mxu0
  %v1249 = vadd.f32 0.0, %v1248
  %v1250 = vpop.f32.mrf.mxu0
  %1251 = vmatprep.mubr.f32.mxu0 0.0
  %1252 = vmatmul.mubr.f32.gmra.mxu0 %v1091
  %v1253 = vpop.f32.mrf.mxu0
  %v1254 = vadd.f32 0.0, %v1253
  %v1255 = vpop.f32.mrf.mxu0
  %1256 = vmatprep.mubr.f32.mxu0 0.0
  %1257 = vmatmul.mubr.f32.gmra.mxu0 %v1094
  %v1258 = vpop.f32.mrf.mxu0
  %v1259 = vadd.f32 0.0, %v1258
  %v1260 = vpop.f32.mrf.mxu0
  %1261 = vmatprep.mubr.f32.mxu0 0.0
  %1262 = vmatmul.mubr.f32.gmra.mxu0 %v1097
  %v1263 = vpop.f32.mrf.mxu0
  %v1264 = vadd.f32 0.0, %v1263
  %v1265 = vpop.f32.mrf.mxu0
  %1266 = vmatprep.mubr.f32.mxu0 0.0
  %1267 = vmatmul.mubr.f32.gmra.mxu0 %v1100
  %v1268 = vpop.f32.mrf.mxu0
  %v1269 = vadd.f32 0.0, %v1268
  %v1270 = vpop.f32.mrf.mxu0
  %1271 = vmatprep.mubr.f32.mxu0 0.0
  %1272 = vmatmul.mubr.f32.gmra.mxu0 %v1103
  %v1273 = vpop.f32.mrf.mxu0
  %v1274 = vadd.f32 0.0, %v1273
  %v1275 = vpop.f32.mrf.mxu0
  %1276 = vmatprep.mubr.f32.mxu0 0.0
  %1277 = vmatmul.mubr.f32.gmra.mxu0 %v1106
  %v1278 = vpop.f32.mrf.mxu0
  %v1279 = vadd.f32 0.0, %v1278
  %v1280 = vpop.f32.mrf.mxu0
  %1281 = vmatprep.mubr.f32.mxu0 0.0
  %1282 = vmatmul.mubr.f32.gmra.mxu0 %v1109
  %v1283 = vpop.f32.mrf.mxu0
  %v1284 = vadd.f32 0.0, %v1283
  %v1285 = vpop.f32.mrf.mxu0
  %1286 = vmatprep.mubr.f32.mxu0 0.0
  %1287 = vmatmul.mubr.f32.gmra.mxu0 %v1112
  %v1288 = vpop.f32.mrf.mxu0
  %v1289 = vadd.f32 0.0, %v1288
  %v1290 = vpop.f32.mrf.mxu0
  %1291 = vmatprep.mubr.f32.mxu0 0.0
  %1292 = vmatmul.mubr.f32.gmra.mxu0 %v1115
  %v1293 = vpop.f32.mrf.mxu0
  %v1294 = vadd.f32 0.0, %v1293
  %v1295 = vpop.f32.mrf.mxu0
  %1296 = vmatprep.mubr.f32.mxu0 0.0
  %1297 = vmatmul.mubr.f32.gmra.mxu0 %v1118
  %v1298 = vpop.f32.mrf.mxu0
  %v1299 = vadd.f32 0.0, %v1298
  %v1300 = vpop.f32.mrf.mxu0
  %1301 = vmatprep.mubr.f32.mxu0 0.0
  %1302 = vmatmul.mubr.f32.gmra.mxu0 %v1121
  %v1303 = vpop.f32.mrf.mxu0
  %v1304 = vadd.f32 0.0, %v1303
  %v1305 = vpop.f32.mrf.mxu0
  %1306 = vmatprep.mubr.f32.mxu0 0.0
  %1307 = vmatmul.mubr.f32.gmra.mxu0 %v1124
  %v1308 = vpop.f32.mrf.mxu0
  %v1309 = vadd.f32 0.0, %v1308
  %v1310 = vpop.f32.mrf.mxu0
  %1311 = vmatprep.mubr.f32.mxu0 0.0
  %1312 = vmatmul.mubr.f32.gmra.mxu0 %v1127
  %v1313 = vpop.f32.mrf.mxu0
  %v1314 = vadd.f32 0.0, %v1313
  %v1315 = vpop.f32.mrf.mxu0
  %1316 = vmatprep.mubr.f32.mxu0 0.0
  %1317 = vmatmul.mubr.f32.gmra.mxu0 %v1130
  %v1318 = vpop.f32.mrf.mxu0
  %v1319 = vadd.f32 0.0, %v1318
  %v1320 = vpop.f32.mrf.mxu0
  %1321 = vdwg.mxu0
  %v1322 = vadd.f32 %v517, %v1199
  %v1323 = vadd.f32 %v522, %v1204
  %v1324 = vadd.f32 %v527, %v1209
  %v1325 = vadd.f32 %v532, %v1214
  %v1326 = vadd.f32 %v537, %v1219
  %v1327 = vadd.f32 %v542, %v1224
  %v1328 = vadd.f32 %v547, %v1229
  %v1329 = vadd.f32 %v552, %v1234
  %v1330 = vadd.f32 %v557, %v1239
  %v1331 = vadd.f32 %v562, %v1244
  %v1332 = vadd.f32 %v567, %v1249
  %v1333 = vadd.f32 %v572, %v1254
  %v1334 = vadd.f32 %v577, %v1259
  %v1335 = vadd.f32 %v582, %v1264
  %v1336 = vadd.f32 %v587, %v1269
  %v1337 = vadd.f32 %v592, %v1274
  %v1338 = vadd.f32 %v597, %v1279
  %v1339 = vadd.f32 %v602, %v1284
  %v1340 = vadd.f32 %v607, %v1289
  %v1341 = vadd.f32 %v612, %v1294
  %v1342 = vadd.f32 %v617, %v1299
  %v1343 = vadd.f32 %v622, %v1304
  %v1344 = vadd.f32 %v627, %v1309
  %v1345 = vadd.f32 %v632, %v1314
  %v1346 = vadd.f32 %v637, %v1319
  %s1347 = scalar_lea.vmem %s2, 80
  %v1348 = vld [vmem:[%s1347] sm:$0xff]
  %v1349 = vld [vmem:[%s1347 + $0x8] sm:$0xff]
  %v1350 = vld [vmem:[%s1347 + $0x10] sm:$0xff]
  %v1351 = vld [vmem:[%s1347 + $0x18] sm:$0xff]
  %v1352 = vld [vmem:[%s1347 + $0x20] sm:$0xff]
  %1353 = vmatprep.subr.mxu0 0.0
  %1354 = vmatpush1.msra.mxu0 0.0
  %1355 = vmatprep.subr.mxu0 0.0
  %1356 = vmatpush1.msra.mxu0 0.0
  %1357 = vmatprep.subr.mxu0 0.0
  %1358 = vmatpush1.msra.mxu0 0.0
  %1359 = vmatprep.subr.mxu0 0.0
  %1360 = vmatpush1.msra.mxu0 0.0
  %1361 = vmatprep.subr.mxu0 0.0
  %1362 = vmatpush1.msra.mxu0 0.0
  %1363 = vmatprep.subr.mxu0 0.0
  %1364 = vmatpush1.msra.mxu0 0.0
  %1365 = vmatprep.subr.mxu0 0.0
  %1366 = vmatpush1.msra.mxu0 0.0
  %1367 = vmatprep.subr.mxu0 0.0
  %1368 = vmatpush1.msra.mxu0 0.0
  %1369 = vmatprep.subr.mxu0 0.0
  %1370 = vmatpush1.msra.mxu0 0.0
  %1371 = vmatprep.subr.mxu0 0.0
  %1372 = vmatpush1.msra.mxu0 0.0
  %1373 = vmatprep.subr.mxu0 0.0
  %1374 = vmatpush1.msra.mxu0 0.0
  %1375 = vmatprep.subr.mxu0 0.0
  %1376 = vmatpush1.msra.mxu0 %v1352
  %1377 = vmatprep.subr.mxu0 0.0
  %1378 = vmatpush1.msra.mxu0 %v1351
  %1379 = vmatprep.subr.mxu0 0.0
  %1380 = vmatpush1.msra.mxu0 %v1350
  %1381 = vmatprep.subr.mxu0 0.0
  %1382 = vmatpush1.msra.mxu0 %v1349
  %1383 = vmatprep.subr.mxu0 0.0
  %1384 = vmatpush1.msra.mxu0 %v1348
  %1385 = vmatprep.subr.mxu0 0.0
  %1386 = vmatpush2.msra.mxu0 0.0
  %1387 = vmatprep.subr.mxu0 0.0
  %1388 = vmatpush2.msra.mxu0 0.0
  %1389 = vmatprep.subr.mxu0 0.0
  %1390 = vmatpush2.msra.mxu0 0.0
  %1391 = vmatprep.subr.mxu0 0.0
  %1392 = vmatpush2.msra.mxu0 0.0
  %1393 = vmatprep.subr.mxu0 0.0
  %1394 = vmatpush2.msra.mxu0 0.0
  %1395 = vmatprep.subr.mxu0 0.0
  %1396 = vmatpush2.msra.mxu0 0.0
  %1397 = vmatprep.subr.mxu0 0.0
  %1398 = vmatpush2.msra.mxu0 0.0
  %1399 = vmatprep.subr.mxu0 0.0
  %1400 = vmatpush2.msra.mxu0 0.0
  %1401 = vmatprep.subr.mxu0 0.0
  %1402 = vmatpush2.msra.mxu0 0.0
  %1403 = vmatprep.subr.mxu0 0.0
  %1404 = vmatpush2.msra.mxu0 0.0
  %1405 = vmatprep.subr.mxu0 0.0
  %1406 = vmatpush2.msra.mxu0 0.0
  %1407 = vmatprep.subr.mxu0 0.0
  %1408 = vmatpush2.msra.mxu0 0.0
  %1409 = vmatprep.subr.mxu0 0.0
  %1410 = vmatpush2.msra.mxu0 0.0
  %1411 = vmatprep.subr.mxu0 0.0
  %1412 = vmatpush2.msra.mxu0 0.0
  %1413 = vmatprep.subr.mxu0 0.0
  %1414 = vmatpush2.msra.mxu0 0.0
  %1415 = vmatprep.subr.mxu0 0.0
  %1416 = vmatpush2.msra.mxu0 0.0
  %1417 = vmatprep.mubr.f32.mxu0 0.0
  %1418 = vmatmul.mubr.f32.gmra.mxu0 %v1058
  %v1419 = vpop.f32.mrf.mxu0
  %v1420 = vadd.f32 0.0, %v1419
  %v1421 = vpop.f32.mrf.mxu0
  %1422 = vmatprep.mubr.f32.mxu0 0.0
  %1423 = vmatmul.mubr.f32.gmra.mxu0 %v1061
  %v1424 = vpop.f32.mrf.mxu0
  %v1425 = vadd.f32 0.0, %v1424
  %v1426 = vpop.f32.mrf.mxu0
  %1427 = vmatprep.mubr.f32.mxu0 0.0
  %1428 = vmatmul.mubr.f32.gmra.mxu0 %v1064
  %v1429 = vpop.f32.mrf.mxu0
  %v1430 = vadd.f32 0.0, %v1429
  %v1431 = vpop.f32.mrf.mxu0
  %1432 = vmatprep.mubr.f32.mxu0 0.0
  %1433 = vmatmul.mubr.f32.gmra.mxu0 %v1067
  %v1434 = vpop.f32.mrf.mxu0
  %v1435 = vadd.f32 0.0, %v1434
  %v1436 = vpop.f32.mrf.mxu0
  %1437 = vmatprep.mubr.f32.mxu0 0.0
  %1438 = vmatmul.mubr.f32.gmra.mxu0 %v1070
  %v1439 = vpop.f32.mrf.mxu0
  %v1440 = vadd.f32 0.0, %v1439
  %v1441 = vpop.f32.mrf.mxu0
  %1442 = vmatprep.mubr.f32.mxu0 0.0
  %1443 = vmatmul.mubr.f32.gmra.mxu0 %v1073
  %v1444 = vpop.f32.mrf.mxu0
  %v1445 = vadd.f32 0.0, %v1444
  %v1446 = vpop.f32.mrf.mxu0
  %1447 = vmatprep.mubr.f32.mxu0 0.0
  %1448 = vmatmul.mubr.f32.gmra.mxu0 %v1076
  %v1449 = vpop.f32.mrf.mxu0
  %v1450 = vadd.f32 0.0, %v1449
  %v1451 = vpop.f32.mrf.mxu0
  %1452 = vmatprep.mubr.f32.mxu0 0.0
  %1453 = vmatmul.mubr.f32.gmra.mxu0 %v1079
  %v1454 = vpop.f32.mrf.mxu0
  %v1455 = vadd.f32 0.0, %v1454
  %v1456 = vpop.f32.mrf.mxu0
  %1457 = vmatprep.mubr.f32.mxu0 0.0
  %1458 = vmatmul.mubr.f32.gmra.mxu0 %v1082
  %v1459 = vpop.f32.mrf.mxu0
  %v1460 = vadd.f32 0.0, %v1459
  %v1461 = vpop.f32.mrf.mxu0
  %1462 = vmatprep.mubr.f32.mxu0 0.0
  %1463 = vmatmul.mubr.f32.gmra.mxu0 %v1085
  %v1464 = vpop.f32.mrf.mxu0
  %v1465 = vadd.f32 0.0, %v1464
  %v1466 = vpop.f32.mrf.mxu0
  %1467 = vmatprep.mubr.f32.mxu0 0.0
  %1468 = vmatmul.mubr.f32.gmra.mxu0 %v1088
  %v1469 = vpop.f32.mrf.mxu0
  %v1470 = vadd.f32 0.0, %v1469
  %v1471 = vpop.f32.mrf.mxu0
  %1472 = vmatprep.mubr.f32.mxu0 0.0
  %1473 = vmatmul.mubr.f32.gmra.mxu0 %v1091
  %v1474 = vpop.f32.mrf.mxu0
  %v1475 = vadd.f32 0.0, %v1474
  %v1476 = vpop.f32.mrf.mxu0
  %1477 = vmatprep.mubr.f32.mxu0 0.0
  %1478 = vmatmul.mubr.f32.gmra.mxu0 %v1094
  %v1479 = vpop.f32.mrf.mxu0
  %v1480 = vadd.f32 0.0, %v1479
  %v1481 = vpop.f32.mrf.mxu0
  %1482 = vmatprep.mubr.f32.mxu0 0.0
  %1483 = vmatmul.mubr.f32.gmra.mxu0 %v1097
  %v1484 = vpop.f32.mrf.mxu0
  %v1485 = vadd.f32 0.0, %v1484
  %v1486 = vpop.f32.mrf.mxu0
  %1487 = vmatprep.mubr.f32.mxu0 0.0
  %1488 = vmatmul.mubr.f32.gmra.mxu0 %v1100
  %v1489 = vpop.f32.mrf.mxu0
  %v1490 = vadd.f32 0.0, %v1489
  %v1491 = vpop.f32.mrf.mxu0
  %1492 = vmatprep.mubr.f32.mxu0 0.0
  %1493 = vmatmul.mubr.f32.gmra.mxu0 %v1103
  %v1494 = vpop.f32.mrf.mxu0
  %v1495 = vadd.f32 0.0, %v1494
  %v1496 = vpop.f32.mrf.mxu0
  %1497 = vmatprep.mubr.f32.mxu0 0.0
  %1498 = vmatmul.mubr.f32.gmra.mxu0 %v1106
  %v1499 = vpop.f32.mrf.mxu0
  %v1500 = vadd.f32 0.0, %v1499
  %v1501 = vpop.f32.mrf.mxu0
  %1502 = vmatprep.mubr.f32.mxu0 0.0
  %1503 = vmatmul.mubr.f32.gmra.mxu0 %v1109
  %v1504 = vpop.f32.mrf.mxu0
  %v1505 = vadd.f32 0.0, %v1504
  %v1506 = vpop.f32.mrf.mxu0
  %1507 = vmatprep.mubr.f32.mxu0 0.0
  %1508 = vmatmul.mubr.f32.gmra.mxu0 %v1112
  %v1509 = vpop.f32.mrf.mxu0
  %v1510 = vadd.f32 0.0, %v1509
  %v1511 = vpop.f32.mrf.mxu0
  %1512 = vmatprep.mubr.f32.mxu0 0.0
  %1513 = vmatmul.mubr.f32.gmra.mxu0 %v1115
  %v1514 = vpop.f32.mrf.mxu0
  %v1515 = vadd.f32 0.0, %v1514
  %v1516 = vpop.f32.mrf.mxu0
  %1517 = vmatprep.mubr.f32.mxu0 0.0
  %1518 = vmatmul.mubr.f32.gmra.mxu0 %v1118
  %v1519 = vpop.f32.mrf.mxu0
  %v1520 = vadd.f32 0.0, %v1519
  %v1521 = vpop.f32.mrf.mxu0
  %1522 = vmatprep.mubr.f32.mxu0 0.0
  %1523 = vmatmul.mubr.f32.gmra.mxu0 %v1121
  %v1524 = vpop.f32.mrf.mxu0
  %v1525 = vadd.f32 0.0, %v1524
  %v1526 = vpop.f32.mrf.mxu0
  %1527 = vmatprep.mubr.f32.mxu0 0.0
  %1528 = vmatmul.mubr.f32.gmra.mxu0 %v1124
  %v1529 = vpop.f32.mrf.mxu0
  %v1530 = vadd.f32 0.0, %v1529
  %v1531 = vpop.f32.mrf.mxu0
  %1532 = vmatprep.mubr.f32.mxu0 0.0
  %1533 = vmatmul.mubr.f32.gmra.mxu0 %v1127
  %v1534 = vpop.f32.mrf.mxu0
  %v1535 = vadd.f32 0.0, %v1534
  %v1536 = vpop.f32.mrf.mxu0
  %1537 = vmatprep.mubr.f32.mxu0 0.0
  %1538 = vmatmul.mubr.f32.gmra.mxu0 %v1130
  %v1539 = vpop.f32.mrf.mxu0
  %v1540 = vadd.f32 0.0, %v1539
  %v1541 = vpop.f32.mrf.mxu0
  %1542 = vdwg.mxu0
  %v1543 = vadd.f32 %v903, %v1420
  %v1544 = vadd.f32 %v908, %v1425
  %v1545 = vadd.f32 %v913, %v1430
  %v1546 = vadd.f32 %v918, %v1435
  %v1547 = vadd.f32 %v923, %v1440
  %v1548 = vadd.f32 %v928, %v1445
  %v1549 = vadd.f32 %v933, %v1450
  %v1550 = vadd.f32 %v938, %v1455
  %v1551 = vadd.f32 %v943, %v1460
  %v1552 = vadd.f32 %v948, %v1465
  %v1553 = vadd.f32 %v953, %v1470
  %v1554 = vadd.f32 %v958, %v1475
  %v1555 = vadd.f32 %v963, %v1480
  %v1556 = vadd.f32 %v968, %v1485
  %v1557 = vadd.f32 %v973, %v1490
  %v1558 = vadd.f32 %v978, %v1495
  %v1559 = vadd.f32 %v983, %v1500
  %v1560 = vadd.f32 %v988, %v1505
  %v1561 = vadd.f32 %v993, %v1510
  %v1562 = vadd.f32 %v998, %v1515
  %v1563 = vadd.f32 %v1003, %v1520
  %v1564 = vadd.f32 %v1008, %v1525
  %v1565 = vadd.f32 %v1013, %v1530
  %v1566 = vadd.f32 %v1018, %v1535
  %v1567 = vadd.f32 %v1023, %v1540
  %v1568 = vld [vmem:[%s0 + $0xf] sm:$0xff]
  %v1569 = vld [vmem:[%s0 + $0x17] sm:$0xff]
  %v1570 = vld [vmem:[%s0 + $0x1f] sm:$0xff]
  %v1571 = vld [vmem:[%s0 + $0x27] sm:$0xff]
  %v1572 = vld [vmem:[%s0 + $0x2f] sm:$0xff]
  %v1573 = vld [vmem:[%s0 + $0x37] sm:$0xff]
  %v1574 = vld [vmem:[%s0 + $0x3f] sm:$0xff]
  %v1575 = vld [vmem:[%s0 + $0x47] sm:$0xff]
  %v1576 = vld [vmem:[%s0 + $0x4f] sm:$0xff]
  %v1577 = vld [vmem:[%s0 + $0x57] sm:$0xff]
  %v1578 = vld [vmem:[%s0 + $0x5f] sm:$0xff]
  %v1579 = vld [vmem:[%s0 + $0x67] sm:$0xff]
  %v1580 = vld [vmem:[%s0 + $0x6f] sm:$0xff]
  %v1581 = vld [vmem:[%s0 + $0x77] sm:$0xff]
  %v1582 = vld [vmem:[%s0 + $0x7f] sm:$0xff]
  %v1583 = vld [vmem:[%s0 + $0x87] sm:$0xff]
  %v1584 = vld [vmem:[%s0 + $0x8f] sm:$0xff]
  %v1585 = vld [vmem:[%s0 + $0x97] sm:$0xff]
  %v1586 = vld [vmem:[%s0 + $0x9f] sm:$0xff]
  %v1587 = vld [vmem:[%s0 + $0xa7] sm:$0xff]
  %v1588 = vld [vmem:[%s0 + $0xaf] sm:$0xff]
  %v1589 = vld [vmem:[%s0 + $0xb7] sm:$0xff]
  %v1590 = vld [vmem:[%s0 + $0xbf] sm:$0xff]
  %v1591 = vld [vmem:[%s0 + $0xc7] sm:$0xff]
  %v1592 = vld [vmem:[%s0 + $0xcf] sm:$0xff]
  %s1593 = scalar_lea.vmem %s1, 120
  %v1594 = vld [vmem:[%s1593] sm:$0xff]
  %v1595 = vld [vmem:[%s1593 + $0x8] sm:$0xff]
  %v1596 = vld [vmem:[%s1593 + $0x10] sm:$0xff]
  %v1597 = vld [vmem:[%s1593 + $0x18] sm:$0xff]
  %v1598 = vld [vmem:[%s1593 + $0x20] sm:$0xff]
  %v1600 = vsel %vm109, %v1568, 0
  %v1603 = vsel %vm109, %v1569, 0
  %v1606 = vsel %vm109, %v1570, 0
  %v1609 = vsel %vm109, %v1571, 0
  %v1612 = vsel %vm109, %v1572, 0
  %v1615 = vsel %vm109, %v1573, 0
  %v1618 = vsel %vm109, %v1574, 0
  %v1621 = vsel %vm109, %v1575, 0
  %v1624 = vsel %vm109, %v1576, 0
  %v1627 = vsel %vm109, %v1577, 0
  %v1630 = vsel %vm109, %v1578, 0
  %v1633 = vsel %vm109, %v1579, 0
  %v1636 = vsel %vm109, %v1580, 0
  %v1639 = vsel %vm109, %v1581, 0
  %v1642 = vsel %vm109, %v1582, 0
  %v1645 = vsel %vm109, %v1583, 0
  %v1648 = vsel %vm109, %v1584, 0
  %v1651 = vsel %vm109, %v1585, 0
  %v1654 = vsel %vm109, %v1586, 0
  %v1657 = vsel %vm109, %v1587, 0
  %v1660 = vsel %vm109, %v1588, 0
  %v1663 = vsel %vm109, %v1589, 0
  %v1666 = vsel %vm109, %v1590, 0
  %v1669 = vsel %vm109, %v1591, 0
  %v1672 = vsel %vm109, %v1592, 0
  %1674 = vmatprep.subr.mxu0 0.0
  %1675 = vmatpush1.msra.mxu0 0.0
  %1676 = vmatprep.subr.mxu0 0.0
  %1677 = vmatpush1.msra.mxu0 0.0
  %1678 = vmatprep.subr.mxu0 0.0
  %1679 = vmatpush1.msra.mxu0 0.0
  %1680 = vmatprep.subr.mxu0 0.0
  %1681 = vmatpush1.msra.mxu0 0.0
  %1682 = vmatprep.subr.mxu0 0.0
  %1683 = vmatpush1.msra.mxu0 0.0
  %1684 = vmatprep.subr.mxu0 0.0
  %1685 = vmatpush1.msra.mxu0 0.0
  %1686 = vmatprep.subr.mxu0 0.0
  %1687 = vmatpush1.msra.mxu0 0.0
  %1688 = vmatprep.subr.mxu0 0.0
  %1689 = vmatpush1.msra.mxu0 0.0
  %1690 = vmatprep.subr.mxu0 0.0
  %1691 = vmatpush1.msra.mxu0 0.0
  %1692 = vmatprep.subr.mxu0 0.0
  %1693 = vmatpush1.msra.mxu0 0.0
  %1694 = vmatprep.subr.mxu0 0.0
  %1695 = vmatpush1.msra.mxu0 0.0
  %1696 = vmatprep.subr.mxu0 0.0
  %1697 = vmatpush1.msra.mxu0 %v1598
  %1698 = vmatprep.subr.mxu0 0.0
  %1699 = vmatpush1.msra.mxu0 %v1597
  %1700 = vmatprep.subr.mxu0 0.0
  %1701 = vmatpush1.msra.mxu0 %v1596
  %1702 = vmatprep.subr.mxu0 0.0
  %1703 = vmatpush1.msra.mxu0 %v1595
  %1704 = vmatprep.subr.mxu0 0.0
  %1705 = vmatpush1.msra.mxu0 %v1594
  %1706 = vmatprep.subr.mxu0 0.0
  %1707 = vmatpush2.msra.mxu0 0.0
  %1708 = vmatprep.subr.mxu0 0.0
  %1709 = vmatpush2.msra.mxu0 0.0
  %1710 = vmatprep.subr.mxu0 0.0
  %1711 = vmatpush2.msra.mxu0 0.0
  %1712 = vmatprep.subr.mxu0 0.0
  %1713 = vmatpush2.msra.mxu0 0.0
  %1714 = vmatprep.subr.mxu0 0.0
  %1715 = vmatpush2.msra.mxu0 0.0
  %1716 = vmatprep.subr.mxu0 0.0
  %1717 = vmatpush2.msra.mxu0 0.0
  %1718 = vmatprep.subr.mxu0 0.0
  %1719 = vmatpush2.msra.mxu0 0.0
  %1720 = vmatprep.subr.mxu0 0.0
  %1721 = vmatpush2.msra.mxu0 0.0
  %1722 = vmatprep.subr.mxu0 0.0
  %1723 = vmatpush2.msra.mxu0 0.0
  %1724 = vmatprep.subr.mxu0 0.0
  %1725 = vmatpush2.msra.mxu0 0.0
  %1726 = vmatprep.subr.mxu0 0.0
  %1727 = vmatpush2.msra.mxu0 0.0
  %1728 = vmatprep.subr.mxu0 0.0
  %1729 = vmatpush2.msra.mxu0 0.0
  %1730 = vmatprep.subr.mxu0 0.0
  %1731 = vmatpush2.msra.mxu0 0.0
  %1732 = vmatprep.subr.mxu0 0.0
  %1733 = vmatpush2.msra.mxu0 0.0
  %1734 = vmatprep.subr.mxu0 0.0
  %1735 = vmatpush2.msra.mxu0 0.0
  %1736 = vmatprep.subr.mxu0 0.0
  %1737 = vmatpush2.msra.mxu0 0.0
  %1738 = vmatprep.mubr.f32.mxu0 0.0
  %1739 = vmatmul.mubr.f32.gmra.mxu0 %v1600
  %v1740 = vpop.f32.mrf.mxu0
  %v1741 = vadd.f32 0.0, %v1740
  %v1742 = vpop.f32.mrf.mxu0
  %1743 = vmatprep.mubr.f32.mxu0 0.0
  %1744 = vmatmul.mubr.f32.gmra.mxu0 %v1603
  %v1745 = vpop.f32.mrf.mxu0
  %v1746 = vadd.f32 0.0, %v1745
  %v1747 = vpop.f32.mrf.mxu0
  %1748 = vmatprep.mubr.f32.mxu0 0.0
  %1749 = vmatmul.mubr.f32.gmra.mxu0 %v1606
  %v1750 = vpop.f32.mrf.mxu0
  %v1751 = vadd.f32 0.0, %v1750
  %v1752 = vpop.f32.mrf.mxu0
  %1753 = vmatprep.mubr.f32.mxu0 0.0
  %1754 = vmatmul.mubr.f32.gmra.mxu0 %v1609
  %v1755 = vpop.f32.mrf.mxu0
  %v1756 = vadd.f32 0.0, %v1755
  %v1757 = vpop.f32.mrf.mxu0
  %1758 = vmatprep.mubr.f32.mxu0 0.0
  %1759 = vmatmul.mubr.f32.gmra.mxu0 %v1612
  %v1760 = vpop.f32.mrf.mxu0
  %v1761 = vadd.f32 0.0, %v1760
  %v1762 = vpop.f32.mrf.mxu0
  %1763 = vmatprep.mubr.f32.mxu0 0.0
  %1764 = vmatmul.mubr.f32.gmra.mxu0 %v1615
  %v1765 = vpop.f32.mrf.mxu0
  %v1766 = vadd.f32 0.0, %v1765
  %v1767 = vpop.f32.mrf.mxu0
  %1768 = vmatprep.mubr.f32.mxu0 0.0
  %1769 = vmatmul.mubr.f32.gmra.mxu0 %v1618
  %v1770 = vpop.f32.mrf.mxu0
  %v1771 = vadd.f32 0.0, %v1770
  %v1772 = vpop.f32.mrf.mxu0
  %1773 = vmatprep.mubr.f32.mxu0 0.0
  %1774 = vmatmul.mubr.f32.gmra.mxu0 %v1621
  %v1775 = vpop.f32.mrf.mxu0
  %v1776 = vadd.f32 0.0, %v1775
  %v1777 = vpop.f32.mrf.mxu0
  %1778 = vmatprep.mubr.f32.mxu0 0.0
  %1779 = vmatmul.mubr.f32.gmra.mxu0 %v1624
  %v1780 = vpop.f32.mrf.mxu0
  %v1781 = vadd.f32 0.0, %v1780
  %v1782 = vpop.f32.mrf.mxu0
  %1783 = vmatprep.mubr.f32.mxu0 0.0
  %1784 = vmatmul.mubr.f32.gmra.mxu0 %v1627
  %v1785 = vpop.f32.mrf.mxu0
  %v1786 = vadd.f32 0.0, %v1785
  %v1787 = vpop.f32.mrf.mxu0
  %1788 = vmatprep.mubr.f32.mxu0 0.0
  %1789 = vmatmul.mubr.f32.gmra.mxu0 %v1630
  %v1790 = vpop.f32.mrf.mxu0
  %v1791 = vadd.f32 0.0, %v1790
  %v1792 = vpop.f32.mrf.mxu0
  %1793 = vmatprep.mubr.f32.mxu0 0.0
  %1794 = vmatmul.mubr.f32.gmra.mxu0 %v1633
  %v1795 = vpop.f32.mrf.mxu0
  %v1796 = vadd.f32 0.0, %v1795
  %v1797 = vpop.f32.mrf.mxu0
  %1798 = vmatprep.mubr.f32.mxu0 0.0
  %1799 = vmatmul.mubr.f32.gmra.mxu0 %v1636
  %v1800 = vpop.f32.mrf.mxu0
  %v1801 = vadd.f32 0.0, %v1800
  %v1802 = vpop.f32.mrf.mxu0
  %1803 = vmatprep.mubr.f32.mxu0 0.0
  %1804 = vmatmul.mubr.f32.gmra.mxu0 %v1639
  %v1805 = vpop.f32.mrf.mxu0
  %v1806 = vadd.f32 0.0, %v1805
  %v1807 = vpop.f32.mrf.mxu0
  %1808 = vmatprep.mubr.f32.mxu0 0.0
  %1809 = vmatmul.mubr.f32.gmra.mxu0 %v1642
  %v1810 = vpop.f32.mrf.mxu0
  %v1811 = vadd.f32 0.0, %v1810
  %v1812 = vpop.f32.mrf.mxu0
  %1813 = vmatprep.mubr.f32.mxu0 0.0
  %1814 = vmatmul.mubr.f32.gmra.mxu0 %v1645
  %v1815 = vpop.f32.mrf.mxu0
  %v1816 = vadd.f32 0.0, %v1815
  %v1817 = vpop.f32.mrf.mxu0
  %1818 = vmatprep.mubr.f32.mxu0 0.0
  %1819 = vmatmul.mubr.f32.gmra.mxu0 %v1648
  %v1820 = vpop.f32.mrf.mxu0
  %v1821 = vadd.f32 0.0, %v1820
  %v1822 = vpop.f32.mrf.mxu0
  %1823 = vmatprep.mubr.f32.mxu0 0.0
  %1824 = vmatmul.mubr.f32.gmra.mxu0 %v1651
  %v1825 = vpop.f32.mrf.mxu0
  %v1826 = vadd.f32 0.0, %v1825
  %v1827 = vpop.f32.mrf.mxu0
  %1828 = vmatprep.mubr.f32.mxu0 0.0
  %1829 = vmatmul.mubr.f32.gmra.mxu0 %v1654
  %v1830 = vpop.f32.mrf.mxu0
  %v1831 = vadd.f32 0.0, %v1830
  %v1832 = vpop.f32.mrf.mxu0
  %1833 = vmatprep.mubr.f32.mxu0 0.0
  %1834 = vmatmul.mubr.f32.gmra.mxu0 %v1657
  %v1835 = vpop.f32.mrf.mxu0
  %v1836 = vadd.f32 0.0, %v1835
  %v1837 = vpop.f32.mrf.mxu0
  %1838 = vmatprep.mubr.f32.mxu0 0.0
  %1839 = vmatmul.mubr.f32.gmra.mxu0 %v1660
  %v1840 = vpop.f32.mrf.mxu0
  %v1841 = vadd.f32 0.0, %v1840
  %v1842 = vpop.f32.mrf.mxu0
  %1843 = vmatprep.mubr.f32.mxu0 0.0
  %1844 = vmatmul.mubr.f32.gmra.mxu0 %v1663
  %v1845 = vpop.f32.mrf.mxu0
  %v1846 = vadd.f32 0.0, %v1845
  %v1847 = vpop.f32.mrf.mxu0
  %1848 = vmatprep.mubr.f32.mxu0 0.0
  %1849 = vmatmul.mubr.f32.gmra.mxu0 %v1666
  %v1850 = vpop.f32.mrf.mxu0
  %v1851 = vadd.f32 0.0, %v1850
  %v1852 = vpop.f32.mrf.mxu0
  %1853 = vmatprep.mubr.f32.mxu0 0.0
  %1854 = vmatmul.mubr.f32.gmra.mxu0 %v1669
  %v1855 = vpop.f32.mrf.mxu0
  %v1856 = vadd.f32 0.0, %v1855
  %v1857 = vpop.f32.mrf.mxu0
  %1858 = vmatprep.mubr.f32.mxu0 0.0
  %1859 = vmatmul.mubr.f32.gmra.mxu0 %v1672
  %v1860 = vpop.f32.mrf.mxu0
  %v1861 = vadd.f32 0.0, %v1860
  %v1862 = vpop.f32.mrf.mxu0
  %1863 = vdwg.mxu0
  %v1864 = vadd.f32 %v1322, %v1741
  %v1865 = vadd.f32 %v1323, %v1746
  %v1866 = vadd.f32 %v1324, %v1751
  %v1867 = vadd.f32 %v1325, %v1756
  %v1868 = vadd.f32 %v1326, %v1761
  %v1869 = vadd.f32 %v1327, %v1766
  %v1870 = vadd.f32 %v1328, %v1771
  %v1871 = vadd.f32 %v1329, %v1776
  %v1872 = vadd.f32 %v1330, %v1781
  %v1873 = vadd.f32 %v1331, %v1786
  %v1874 = vadd.f32 %v1332, %v1791
  %v1875 = vadd.f32 %v1333, %v1796
  %v1876 = vadd.f32 %v1334, %v1801
  %v1877 = vadd.f32 %v1335, %v1806
  %v1878 = vadd.f32 %v1336, %v1811
  %v1879 = vadd.f32 %v1337, %v1816
  %v1880 = vadd.f32 %v1338, %v1821
  %v1881 = vadd.f32 %v1339, %v1826
  %v1882 = vadd.f32 %v1340, %v1831
  %v1883 = vadd.f32 %v1341, %v1836
  %v1884 = vadd.f32 %v1342, %v1841
  %v1885 = vadd.f32 %v1343, %v1846
  %v1886 = vadd.f32 %v1344, %v1851
  %v1887 = vadd.f32 %v1345, %v1856
  %v1888 = vadd.f32 %v1346, %v1861
  %s1889 = scalar_lea.vmem %s2, 120
  %v1890 = vld [vmem:[%s1889] sm:$0xff]
  %v1891 = vld [vmem:[%s1889 + $0x8] sm:$0xff]
  %v1892 = vld [vmem:[%s1889 + $0x10] sm:$0xff]
  %v1893 = vld [vmem:[%s1889 + $0x18] sm:$0xff]
  %v1894 = vld [vmem:[%s1889 + $0x20] sm:$0xff]
  %1895 = vmatprep.subr.mxu0 0.0
  %1896 = vmatpush1.msra.mxu0 0.0
  %1897 = vmatprep.subr.mxu0 0.0
  %1898 = vmatpush1.msra.mxu0 0.0
  %1899 = vmatprep.subr.mxu0 0.0
  %1900 = vmatpush1.msra.mxu0 0.0
  %1901 = vmatprep.subr.mxu0 0.0
  %1902 = vmatpush1.msra.mxu0 0.0
  %1903 = vmatprep.subr.mxu0 0.0
  %1904 = vmatpush1.msra.mxu0 0.0
  %1905 = vmatprep.subr.mxu0 0.0
  %1906 = vmatpush1.msra.mxu0 0.0
  %1907 = vmatprep.subr.mxu0 0.0
  %1908 = vmatpush1.msra.mxu0 0.0
  %1909 = vmatprep.subr.mxu0 0.0
  %1910 = vmatpush1.msra.mxu0 0.0
  %1911 = vmatprep.subr.mxu0 0.0
  %1912 = vmatpush1.msra.mxu0 0.0
  %1913 = vmatprep.subr.mxu0 0.0
  %1914 = vmatpush1.msra.mxu0 0.0
  %1915 = vmatprep.subr.mxu0 0.0
  %1916 = vmatpush1.msra.mxu0 0.0
  %1917 = vmatprep.subr.mxu0 0.0
  %1918 = vmatpush1.msra.mxu0 %v1894
  %1919 = vmatprep.subr.mxu0 0.0
  %1920 = vmatpush1.msra.mxu0 %v1893
  %1921 = vmatprep.subr.mxu0 0.0
  %1922 = vmatpush1.msra.mxu0 %v1892
  %1923 = vmatprep.subr.mxu0 0.0
  %1924 = vmatpush1.msra.mxu0 %v1891
  %1925 = vmatprep.subr.mxu0 0.0
  %1926 = vmatpush1.msra.mxu0 %v1890
  %1927 = vmatprep.subr.mxu0 0.0
  %1928 = vmatpush2.msra.mxu0 0.0
  %1929 = vmatprep.subr.mxu0 0.0
  %1930 = vmatpush2.msra.mxu0 0.0
  %1931 = vmatprep.subr.mxu0 0.0
  %1932 = vmatpush2.msra.mxu0 0.0
  %1933 = vmatprep.subr.mxu0 0.0
  %1934 = vmatpush2.msra.mxu0 0.0
  %1935 = vmatprep.subr.mxu0 0.0
  %1936 = vmatpush2.msra.mxu0 0.0
  %1937 = vmatprep.subr.mxu0 0.0
  %1938 = vmatpush2.msra.mxu0 0.0
  %1939 = vmatprep.subr.mxu0 0.0
  %1940 = vmatpush2.msra.mxu0 0.0
  %1941 = vmatprep.subr.mxu0 0.0
  %1942 = vmatpush2.msra.mxu0 0.0
  %1943 = vmatprep.subr.mxu0 0.0
  %1944 = vmatpush2.msra.mxu0 0.0
  %1945 = vmatprep.subr.mxu0 0.0
  %1946 = vmatpush2.msra.mxu0 0.0
  %1947 = vmatprep.subr.mxu0 0.0
  %1948 = vmatpush2.msra.mxu0 0.0
  %1949 = vmatprep.subr.mxu0 0.0
  %1950 = vmatpush2.msra.mxu0 0.0
  %1951 = vmatprep.subr.mxu0 0.0
  %1952 = vmatpush2.msra.mxu0 0.0
  %1953 = vmatprep.subr.mxu0 0.0
  %1954 = vmatpush2.msra.mxu0 0.0
  %1955 = vmatprep.subr.mxu0 0.0
  %1956 = vmatpush2.msra.mxu0 0.0
  %1957 = vmatprep.subr.mxu0 0.0
  %1958 = vmatpush2.msra.mxu0 0.0
  %1959 = vmatprep.mubr.f32.mxu0 0.0
  %1960 = vmatmul.mubr.f32.gmra.mxu0 %v1600
  %v1961 = vpop.f32.mrf.mxu0
  %v1962 = vadd.f32 0.0, %v1961
  %v1963 = vpop.f32.mrf.mxu0
  %1964 = vmatprep.mubr.f32.mxu0 0.0
  %1965 = vmatmul.mubr.f32.gmra.mxu0 %v1603
  %v1966 = vpop.f32.mrf.mxu0
  %v1967 = vadd.f32 0.0, %v1966
  %v1968 = vpop.f32.mrf.mxu0
  %1969 = vmatprep.mubr.f32.mxu0 0.0
  %1970 = vmatmul.mubr.f32.gmra.mxu0 %v1606
  %v1971 = vpop.f32.mrf.mxu0
  %v1972 = vadd.f32 0.0, %v1971
  %v1973 = vpop.f32.mrf.mxu0
  %1974 = vmatprep.mubr.f32.mxu0 0.0
  %1975 = vmatmul.mubr.f32.gmra.mxu0 %v1609
  %v1976 = vpop.f32.mrf.mxu0
  %v1977 = vadd.f32 0.0, %v1976
  %v1978 = vpop.f32.mrf.mxu0
  %1979 = vmatprep.mubr.f32.mxu0 0.0
  %1980 = vmatmul.mubr.f32.gmra.mxu0 %v1612
  %v1981 = vpop.f32.mrf.mxu0
  %v1982 = vadd.f32 0.0, %v1981
  %v1983 = vpop.f32.mrf.mxu0
  %1984 = vmatprep.mubr.f32.mxu0 0.0
  %1985 = vmatmul.mubr.f32.gmra.mxu0 %v1615
  %v1986 = vpop.f32.mrf.mxu0
  %v1987 = vadd.f32 0.0, %v1986
  %v1988 = vpop.f32.mrf.mxu0
  %1989 = vmatprep.mubr.f32.mxu0 0.0
  %1990 = vmatmul.mubr.f32.gmra.mxu0 %v1618
  %v1991 = vpop.f32.mrf.mxu0
  %v1992 = vadd.f32 0.0, %v1991
  %v1993 = vpop.f32.mrf.mxu0
  %1994 = vmatprep.mubr.f32.mxu0 0.0
  %1995 = vmatmul.mubr.f32.gmra.mxu0 %v1621
  %v1996 = vpop.f32.mrf.mxu0
  %v1997 = vadd.f32 0.0, %v1996
  %v1998 = vpop.f32.mrf.mxu0
  %1999 = vmatprep.mubr.f32.mxu0 0.0
  %2000 = vmatmul.mubr.f32.gmra.mxu0 %v1624
  %v2001 = vpop.f32.mrf.mxu0
  %v2002 = vadd.f32 0.0, %v2001
  %v2003 = vpop.f32.mrf.mxu0
  %2004 = vmatprep.mubr.f32.mxu0 0.0
  %2005 = vmatmul.mubr.f32.gmra.mxu0 %v1627
  %v2006 = vpop.f32.mrf.mxu0
  %v2007 = vadd.f32 0.0, %v2006
  %v2008 = vpop.f32.mrf.mxu0
  %2009 = vmatprep.mubr.f32.mxu0 0.0
  %2010 = vmatmul.mubr.f32.gmra.mxu0 %v1630
  %v2011 = vpop.f32.mrf.mxu0
  %v2012 = vadd.f32 0.0, %v2011
  %v2013 = vpop.f32.mrf.mxu0
  %2014 = vmatprep.mubr.f32.mxu0 0.0
  %2015 = vmatmul.mubr.f32.gmra.mxu0 %v1633
  %v2016 = vpop.f32.mrf.mxu0
  %v2017 = vadd.f32 0.0, %v2016
  %v2018 = vpop.f32.mrf.mxu0
  %2019 = vmatprep.mubr.f32.mxu0 0.0
  %2020 = vmatmul.mubr.f32.gmra.mxu0 %v1636
  %v2021 = vpop.f32.mrf.mxu0
  %v2022 = vadd.f32 0.0, %v2021
  %v2023 = vpop.f32.mrf.mxu0
  %2024 = vmatprep.mubr.f32.mxu0 0.0
  %2025 = vmatmul.mubr.f32.gmra.mxu0 %v1639
  %v2026 = vpop.f32.mrf.mxu0
  %v2027 = vadd.f32 0.0, %v2026
  %v2028 = vpop.f32.mrf.mxu0
  %2029 = vmatprep.mubr.f32.mxu0 0.0
  %2030 = vmatmul.mubr.f32.gmra.mxu0 %v1642
  %v2031 = vpop.f32.mrf.mxu0
  %v2032 = vadd.f32 0.0, %v2031
  %v2033 = vpop.f32.mrf.mxu0
  %2034 = vmatprep.mubr.f32.mxu0 0.0
  %2035 = vmatmul.mubr.f32.gmra.mxu0 %v1645
  %v2036 = vpop.f32.mrf.mxu0
  %v2037 = vadd.f32 0.0, %v2036
  %v2038 = vpop.f32.mrf.mxu0
  %2039 = vmatprep.mubr.f32.mxu0 0.0
  %2040 = vmatmul.mubr.f32.gmra.mxu0 %v1648
  %v2041 = vpop.f32.mrf.mxu0
  %v2042 = vadd.f32 0.0, %v2041
  %v2043 = vpop.f32.mrf.mxu0
  %2044 = vmatprep.mubr.f32.mxu0 0.0
  %2045 = vmatmul.mubr.f32.gmra.mxu0 %v1651
  %v2046 = vpop.f32.mrf.mxu0
  %v2047 = vadd.f32 0.0, %v2046
  %v2048 = vpop.f32.mrf.mxu0
  %2049 = vmatprep.mubr.f32.mxu0 0.0
  %2050 = vmatmul.mubr.f32.gmra.mxu0 %v1654
  %v2051 = vpop.f32.mrf.mxu0
  %v2052 = vadd.f32 0.0, %v2051
  %v2053 = vpop.f32.mrf.mxu0
  %2054 = vmatprep.mubr.f32.mxu0 0.0
  %2055 = vmatmul.mubr.f32.gmra.mxu0 %v1657
  %v2056 = vpop.f32.mrf.mxu0
  %v2057 = vadd.f32 0.0, %v2056
  %v2058 = vpop.f32.mrf.mxu0
  %2059 = vmatprep.mubr.f32.mxu0 0.0
  %2060 = vmatmul.mubr.f32.gmra.mxu0 %v1660
  %v2061 = vpop.f32.mrf.mxu0
  %v2062 = vadd.f32 0.0, %v2061
  %v2063 = vpop.f32.mrf.mxu0
  %2064 = vmatprep.mubr.f32.mxu0 0.0
  %2065 = vmatmul.mubr.f32.gmra.mxu0 %v1663
  %v2066 = vpop.f32.mrf.mxu0
  %v2067 = vadd.f32 0.0, %v2066
  %v2068 = vpop.f32.mrf.mxu0
  %2069 = vmatprep.mubr.f32.mxu0 0.0
  %2070 = vmatmul.mubr.f32.gmra.mxu0 %v1666
  %v2071 = vpop.f32.mrf.mxu0
  %v2072 = vadd.f32 0.0, %v2071
  %v2073 = vpop.f32.mrf.mxu0
  %2074 = vmatprep.mubr.f32.mxu0 0.0
  %2075 = vmatmul.mubr.f32.gmra.mxu0 %v1669
  %v2076 = vpop.f32.mrf.mxu0
  %v2077 = vadd.f32 0.0, %v2076
  %v2078 = vpop.f32.mrf.mxu0
  %2079 = vmatprep.mubr.f32.mxu0 0.0
  %2080 = vmatmul.mubr.f32.gmra.mxu0 %v1672
  %v2081 = vpop.f32.mrf.mxu0
  %v2082 = vadd.f32 0.0, %v2081
  %v2083 = vpop.f32.mrf.mxu0
  %2084 = vdwg.mxu0
  %v2085 = vadd.f32 %v1543, %v1962
  %v2086 = vadd.f32 %v1544, %v1967
  %v2087 = vadd.f32 %v1545, %v1972
  %v2088 = vadd.f32 %v1546, %v1977
  %v2089 = vadd.f32 %v1547, %v1982
  %v2090 = vadd.f32 %v1548, %v1987
  %v2091 = vadd.f32 %v1549, %v1992
  %v2092 = vadd.f32 %v1550, %v1997
  %v2093 = vadd.f32 %v1551, %v2002
  %v2094 = vadd.f32 %v1552, %v2007
  %v2095 = vadd.f32 %v1553, %v2012
  %v2096 = vadd.f32 %v1554, %v2017
  %v2097 = vadd.f32 %v1555, %v2022
  %v2098 = vadd.f32 %v1556, %v2027
  %v2099 = vadd.f32 %v1557, %v2032
  %v2100 = vadd.f32 %v1558, %v2037
  %v2101 = vadd.f32 %v1559, %v2042
  %v2102 = vadd.f32 %v1560, %v2047
  %v2103 = vadd.f32 %v1561, %v2052
  %v2104 = vadd.f32 %v1562, %v2057
  %v2105 = vadd.f32 %v1563, %v2062
  %v2106 = vadd.f32 %v1564, %v2067
  %v2107 = vadd.f32 %v1565, %v2072
  %v2108 = vadd.f32 %v1566, %v2077
  %v2109 = vadd.f32 %v1567, %v2082
  %v2110 = vld [vmem:[%s0 + $0x10] sm:$0xff]
  %v2111 = vld [vmem:[%s0 + $0x18] sm:$0xff]
  %v2112 = vld [vmem:[%s0 + $0x20] sm:$0xff]
  %v2113 = vld [vmem:[%s0 + $0x28] sm:$0xff]
  %v2114 = vld [vmem:[%s0 + $0x30] sm:$0xff]
  %v2115 = vld [vmem:[%s0 + $0x38] sm:$0xff]
  %v2116 = vld [vmem:[%s0 + $0x40] sm:$0xff]
  %v2117 = vld [vmem:[%s0 + $0x48] sm:$0xff]
  %v2118 = vld [vmem:[%s0 + $0x50] sm:$0xff]
  %v2119 = vld [vmem:[%s0 + $0x58] sm:$0xff]
  %v2120 = vld [vmem:[%s0 + $0x60] sm:$0xff]
  %v2121 = vld [vmem:[%s0 + $0x68] sm:$0xff]
  %v2122 = vld [vmem:[%s0 + $0x70] sm:$0xff]
  %v2123 = vld [vmem:[%s0 + $0x78] sm:$0xff]
  %v2124 = vld [vmem:[%s0 + $0x80] sm:$0xff]
  %v2125 = vld [vmem:[%s0 + $0x88] sm:$0xff]
  %v2126 = vld [vmem:[%s0 + $0x90] sm:$0xff]
  %v2127 = vld [vmem:[%s0 + $0x98] sm:$0xff]
  %v2128 = vld [vmem:[%s0 + $0xa0] sm:$0xff]
  %v2129 = vld [vmem:[%s0 + $0xa8] sm:$0xff]
  %v2130 = vld [vmem:[%s0 + $0xb0] sm:$0xff]
  %v2131 = vld [vmem:[%s0 + $0xb8] sm:$0xff]
  %v2132 = vld [vmem:[%s0 + $0xc0] sm:$0xff]
  %v2133 = vld [vmem:[%s0 + $0xc8] sm:$0xff]
  %v2134 = vld [vmem:[%s0 + $0xd0] sm:$0xff]
  %s2135 = scalar_lea.vmem %s1, 160
  %v2136 = vld [vmem:[%s2135] sm:$0xff]
  %v2137 = vld [vmem:[%s2135 + $0x8] sm:$0xff]
  %v2138 = vld [vmem:[%s2135 + $0x10] sm:$0xff]
  %v2139 = vld [vmem:[%s2135 + $0x18] sm:$0xff]
  %v2140 = vld [vmem:[%s2135 + $0x20] sm:$0xff]
  %v2142 = vsel %vm109, %v2110, 0
  %v2145 = vsel %vm109, %v2111, 0
  %v2148 = vsel %vm109, %v2112, 0
  %v2151 = vsel %vm109, %v2113, 0
  %v2154 = vsel %vm109, %v2114, 0
  %v2157 = vsel %vm109, %v2115, 0
  %v2160 = vsel %vm109, %v2116, 0
  %v2163 = vsel %vm109, %v2117, 0
  %v2166 = vsel %vm109, %v2118, 0
  %v2169 = vsel %vm109, %v2119, 0
  %v2172 = vsel %vm109, %v2120, 0
  %v2175 = vsel %vm109, %v2121, 0
  %v2178 = vsel %vm109, %v2122, 0
  %v2181 = vsel %vm109, %v2123, 0
  %v2184 = vsel %vm109, %v2124, 0
  %v2187 = vsel %vm109, %v2125, 0
  %v2190 = vsel %vm109, %v2126, 0
  %v2193 = vsel %vm109, %v2127, 0
  %v2196 = vsel %vm109, %v2128, 0
  %v2199 = vsel %vm109, %v2129, 0
  %v2202 = vsel %vm109, %v2130, 0
  %v2205 = vsel %vm109, %v2131, 0
  %v2208 = vsel %vm109, %v2132, 0
  %v2211 = vsel %vm109, %v2133, 0
  %v2214 = vsel %vm109, %v2134, 0
  %2216 = vmatprep.subr.mxu0 0.0
  %2217 = vmatpush1.msra.mxu0 0.0
  %2218 = vmatprep.subr.mxu0 0.0
  %2219 = vmatpush1.msra.mxu0 0.0
  %2220 = vmatprep.subr.mxu0 0.0
  %2221 = vmatpush1.msra.mxu0 0.0
  %2222 = vmatprep.subr.mxu0 0.0
  %2223 = vmatpush1.msra.mxu0 0.0
  %2224 = vmatprep.subr.mxu0 0.0
  %2225 = vmatpush1.msra.mxu0 0.0
  %2226 = vmatprep.subr.mxu0 0.0
  %2227 = vmatpush1.msra.mxu0 0.0
  %2228 = vmatprep.subr.mxu0 0.0
  %2229 = vmatpush1.msra.mxu0 0.0
  %2230 = vmatprep.subr.mxu0 0.0
  %2231 = vmatpush1.msra.mxu0 0.0
  %2232 = vmatprep.subr.mxu0 0.0
  %2233 = vmatpush1.msra.mxu0 0.0
  %2234 = vmatprep.subr.mxu0 0.0
  %2235 = vmatpush1.msra.mxu0 0.0
  %2236 = vmatprep.subr.mxu0 0.0
  %2237 = vmatpush1.msra.mxu0 0.0
  %2238 = vmatprep.subr.mxu0 0.0
  %2239 = vmatpush1.msra.mxu0 %v2140
  %2240 = vmatprep.subr.mxu0 0.0
  %2241 = vmatpush1.msra.mxu0 %v2139
  %2242 = vmatprep.subr.mxu0 0.0
  %2243 = vmatpush1.msra.mxu0 %v2138
  %2244 = vmatprep.subr.mxu0 0.0
  %2245 = vmatpush1.msra.mxu0 %v2137
  %2246 = vmatprep.subr.mxu0 0.0
  %2247 = vmatpush1.msra.mxu0 %v2136
  %2248 = vmatprep.subr.mxu0 0.0
  %2249 = vmatpush2.msra.mxu0 0.0
  %2250 = vmatprep.subr.mxu0 0.0
  %2251 = vmatpush2.msra.mxu0 0.0
  %2252 = vmatprep.subr.mxu0 0.0
  %2253 = vmatpush2.msra.mxu0 0.0
  %2254 = vmatprep.subr.mxu0 0.0
  %2255 = vmatpush2.msra.mxu0 0.0
  %2256 = vmatprep.subr.mxu0 0.0
  %2257 = vmatpush2.msra.mxu0 0.0
  %2258 = vmatprep.subr.mxu0 0.0
  %2259 = vmatpush2.msra.mxu0 0.0
  %2260 = vmatprep.subr.mxu0 0.0
  %2261 = vmatpush2.msra.mxu0 0.0
  %2262 = vmatprep.subr.mxu0 0.0
  %2263 = vmatpush2.msra.mxu0 0.0
  %2264 = vmatprep.subr.mxu0 0.0
  %2265 = vmatpush2.msra.mxu0 0.0
  %2266 = vmatprep.subr.mxu0 0.0
  %2267 = vmatpush2.msra.mxu0 0.0
  %2268 = vmatprep.subr.mxu0 0.0
  %2269 = vmatpush2.msra.mxu0 0.0
  %2270 = vmatprep.subr.mxu0 0.0
  %2271 = vmatpush2.msra.mxu0 0.0
  %2272 = vmatprep.subr.mxu0 0.0
  %2273 = vmatpush2.msra.mxu0 0.0
  %2274 = vmatprep.subr.mxu0 0.0
  %2275 = vmatpush2.msra.mxu0 0.0
  %2276 = vmatprep.subr.mxu0 0.0
  %2277 = vmatpush2.msra.mxu0 0.0
  %2278 = vmatprep.subr.mxu0 0.0
  %2279 = vmatpush2.msra.mxu0 0.0
  %2280 = vmatprep.mubr.f32.mxu0 0.0
  %2281 = vmatmul.mubr.f32.gmra.mxu0 %v2142
  %v2282 = vpop.f32.mrf.mxu0
  %v2283 = vadd.f32 0.0, %v2282
  %v2284 = vpop.f32.mrf.mxu0
  %2285 = vmatprep.mubr.f32.mxu0 0.0
  %2286 = vmatmul.mubr.f32.gmra.mxu0 %v2145
  %v2287 = vpop.f32.mrf.mxu0
  %v2288 = vadd.f32 0.0, %v2287
  %v2289 = vpop.f32.mrf.mxu0
  %2290 = vmatprep.mubr.f32.mxu0 0.0
  %2291 = vmatmul.mubr.f32.gmra.mxu0 %v2148
  %v2292 = vpop.f32.mrf.mxu0
  %v2293 = vadd.f32 0.0, %v2292
  %v2294 = vpop.f32.mrf.mxu0
  %2295 = vmatprep.mubr.f32.mxu0 0.0
  %2296 = vmatmul.mubr.f32.gmra.mxu0 %v2151
  %v2297 = vpop.f32.mrf.mxu0
  %v2298 = vadd.f32 0.0, %v2297
  %v2299 = vpop.f32.mrf.mxu0
  %2300 = vmatprep.mubr.f32.mxu0 0.0
  %2301 = vmatmul.mubr.f32.gmra.mxu0 %v2154
  %v2302 = vpop.f32.mrf.mxu0
  %v2303 = vadd.f32 0.0, %v2302
  %v2304 = vpop.f32.mrf.mxu0
  %2305 = vmatprep.mubr.f32.mxu0 0.0
  %2306 = vmatmul.mubr.f32.gmra.mxu0 %v2157
  %v2307 = vpop.f32.mrf.mxu0
  %v2308 = vadd.f32 0.0, %v2307
  %v2309 = vpop.f32.mrf.mxu0
  %2310 = vmatprep.mubr.f32.mxu0 0.0
  %2311 = vmatmul.mubr.f32.gmra.mxu0 %v2160
  %v2312 = vpop.f32.mrf.mxu0
  %v2313 = vadd.f32 0.0, %v2312
  %v2314 = vpop.f32.mrf.mxu0
  %2315 = vmatprep.mubr.f32.mxu0 0.0
  %2316 = vmatmul.mubr.f32.gmra.mxu0 %v2163
  %v2317 = vpop.f32.mrf.mxu0
  %v2318 = vadd.f32 0.0, %v2317
  %v2319 = vpop.f32.mrf.mxu0
  %2320 = vmatprep.mubr.f32.mxu0 0.0
  %2321 = vmatmul.mubr.f32.gmra.mxu0 %v2166
  %v2322 = vpop.f32.mrf.mxu0
  %v2323 = vadd.f32 0.0, %v2322
  %v2324 = vpop.f32.mrf.mxu0
  %2325 = vmatprep.mubr.f32.mxu0 0.0
  %2326 = vmatmul.mubr.f32.gmra.mxu0 %v2169
  %v2327 = vpop.f32.mrf.mxu0
  %v2328 = vadd.f32 0.0, %v2327
  %v2329 = vpop.f32.mrf.mxu0
  %2330 = vmatprep.mubr.f32.mxu0 0.0
  %2331 = vmatmul.mubr.f32.gmra.mxu0 %v2172
  %v2332 = vpop.f32.mrf.mxu0
  %v2333 = vadd.f32 0.0, %v2332
  %v2334 = vpop.f32.mrf.mxu0
  %2335 = vmatprep.mubr.f32.mxu0 0.0
  %2336 = vmatmul.mubr.f32.gmra.mxu0 %v2175
  %v2337 = vpop.f32.mrf.mxu0
  %v2338 = vadd.f32 0.0, %v2337
  %v2339 = vpop.f32.mrf.mxu0
  %2340 = vmatprep.mubr.f32.mxu0 0.0
  %2341 = vmatmul.mubr.f32.gmra.mxu0 %v2178
  %v2342 = vpop.f32.mrf.mxu0
  %v2343 = vadd.f32 0.0, %v2342
  %v2344 = vpop.f32.mrf.mxu0
  %2345 = vmatprep.mubr.f32.mxu0 0.0
  %2346 = vmatmul.mubr.f32.gmra.mxu0 %v2181
  %v2347 = vpop.f32.mrf.mxu0
  %v2348 = vadd.f32 0.0, %v2347
  %v2349 = vpop.f32.mrf.mxu0
  %2350 = vmatprep.mubr.f32.mxu0 0.0
  %2351 = vmatmul.mubr.f32.gmra.mxu0 %v2184
  %v2352 = vpop.f32.mrf.mxu0
  %v2353 = vadd.f32 0.0, %v2352
  %v2354 = vpop.f32.mrf.mxu0
  %2355 = vmatprep.mubr.f32.mxu0 0.0
  %2356 = vmatmul.mubr.f32.gmra.mxu0 %v2187
  %v2357 = vpop.f32.mrf.mxu0
  %v2358 = vadd.f32 0.0, %v2357
  %v2359 = vpop.f32.mrf.mxu0
  %2360 = vmatprep.mubr.f32.mxu0 0.0
  %2361 = vmatmul.mubr.f32.gmra.mxu0 %v2190
  %v2362 = vpop.f32.mrf.mxu0
  %v2363 = vadd.f32 0.0, %v2362
  %v2364 = vpop.f32.mrf.mxu0
  %2365 = vmatprep.mubr.f32.mxu0 0.0
  %2366 = vmatmul.mubr.f32.gmra.mxu0 %v2193
  %v2367 = vpop.f32.mrf.mxu0
  %v2368 = vadd.f32 0.0, %v2367
  %v2369 = vpop.f32.mrf.mxu0
  %2370 = vmatprep.mubr.f32.mxu0 0.0
  %2371 = vmatmul.mubr.f32.gmra.mxu0 %v2196
  %v2372 = vpop.f32.mrf.mxu0
  %v2373 = vadd.f32 0.0, %v2372
  %v2374 = vpop.f32.mrf.mxu0
  %2375 = vmatprep.mubr.f32.mxu0 0.0
  %2376 = vmatmul.mubr.f32.gmra.mxu0 %v2199
  %v2377 = vpop.f32.mrf.mxu0
  %v2378 = vadd.f32 0.0, %v2377
  %v2379 = vpop.f32.mrf.mxu0
  %2380 = vmatprep.mubr.f32.mxu0 0.0
  %2381 = vmatmul.mubr.f32.gmra.mxu0 %v2202
  %v2382 = vpop.f32.mrf.mxu0
  %v2383 = vadd.f32 0.0, %v2382
  %v2384 = vpop.f32.mrf.mxu0
  %2385 = vmatprep.mubr.f32.mxu0 0.0
  %2386 = vmatmul.mubr.f32.gmra.mxu0 %v2205
  %v2387 = vpop.f32.mrf.mxu0
  %v2388 = vadd.f32 0.0, %v2387
  %v2389 = vpop.f32.mrf.mxu0
  %2390 = vmatprep.mubr.f32.mxu0 0.0
  %2391 = vmatmul.mubr.f32.gmra.mxu0 %v2208
  %v2392 = vpop.f32.mrf.mxu0
  %v2393 = vadd.f32 0.0, %v2392
  %v2394 = vpop.f32.mrf.mxu0
  %2395 = vmatprep.mubr.f32.mxu0 0.0
  %2396 = vmatmul.mubr.f32.gmra.mxu0 %v2211
  %v2397 = vpop.f32.mrf.mxu0
  %v2398 = vadd.f32 0.0, %v2397
  %v2399 = vpop.f32.mrf.mxu0
  %2400 = vmatprep.mubr.f32.mxu0 0.0
  %2401 = vmatmul.mubr.f32.gmra.mxu0 %v2214
  %v2402 = vpop.f32.mrf.mxu0
  %v2403 = vadd.f32 0.0, %v2402
  %v2404 = vpop.f32.mrf.mxu0
  %2405 = vdwg.mxu0
  %v2406 = vadd.f32 %v1864, %v2283
  %v2407 = vadd.f32 %v1865, %v2288
  %v2408 = vadd.f32 %v1866, %v2293
  %v2409 = vadd.f32 %v1867, %v2298
  %v2410 = vadd.f32 %v1868, %v2303
  %v2411 = vadd.f32 %v1869, %v2308
  %v2412 = vadd.f32 %v1870, %v2313
  %v2413 = vadd.f32 %v1871, %v2318
  %v2414 = vadd.f32 %v1872, %v2323
  %v2415 = vadd.f32 %v1873, %v2328
  %v2416 = vadd.f32 %v1874, %v2333
  %v2417 = vadd.f32 %v1875, %v2338
  %v2418 = vadd.f32 %v1876, %v2343
  %v2419 = vadd.f32 %v1877, %v2348
  %v2420 = vadd.f32 %v1878, %v2353
  %v2421 = vadd.f32 %v1879, %v2358
  %v2422 = vadd.f32 %v1880, %v2363
  %v2423 = vadd.f32 %v1881, %v2368
  %v2424 = vadd.f32 %v1882, %v2373
  %v2425 = vadd.f32 %v1883, %v2378
  %v2426 = vadd.f32 %v1884, %v2383
  %v2427 = vadd.f32 %v1885, %v2388
  %v2428 = vadd.f32 %v1886, %v2393
  %v2429 = vadd.f32 %v1887, %v2398
  %v2430 = vadd.f32 %v1888, %v2403
  %s2431 = scalar_lea.vmem %s2, 160
  %v2432 = vld [vmem:[%s2431] sm:$0xff]
  %v2433 = vld [vmem:[%s2431 + $0x8] sm:$0xff]
  %v2434 = vld [vmem:[%s2431 + $0x10] sm:$0xff]
  %v2435 = vld [vmem:[%s2431 + $0x18] sm:$0xff]
  %v2436 = vld [vmem:[%s2431 + $0x20] sm:$0xff]
  %2437 = vmatprep.subr.mxu0 0.0
  %2438 = vmatpush1.msra.mxu0 0.0
  %2439 = vmatprep.subr.mxu0 0.0
  %2440 = vmatpush1.msra.mxu0 0.0
  %2441 = vmatprep.subr.mxu0 0.0
  %2442 = vmatpush1.msra.mxu0 0.0
  %2443 = vmatprep.subr.mxu0 0.0
  %2444 = vmatpush1.msra.mxu0 0.0
  %2445 = vmatprep.subr.mxu0 0.0
  %2446 = vmatpush1.msra.mxu0 0.0
  %2447 = vmatprep.subr.mxu0 0.0
  %2448 = vmatpush1.msra.mxu0 0.0
  %2449 = vmatprep.subr.mxu0 0.0
  %2450 = vmatpush1.msra.mxu0 0.0
  %2451 = vmatprep.subr.mxu0 0.0
  %2452 = vmatpush1.msra.mxu0 0.0
  %2453 = vmatprep.subr.mxu0 0.0
  %2454 = vmatpush1.msra.mxu0 0.0
  %2455 = vmatprep.subr.mxu0 0.0
  %2456 = vmatpush1.msra.mxu0 0.0
  %2457 = vmatprep.subr.mxu0 0.0
  %2458 = vmatpush1.msra.mxu0 0.0
  %2459 = vmatprep.subr.mxu0 0.0
  %2460 = vmatpush1.msra.mxu0 %v2436
  %2461 = vmatprep.subr.mxu0 0.0
  %2462 = vmatpush1.msra.mxu0 %v2435
  %2463 = vmatprep.subr.mxu0 0.0
  %2464 = vmatpush1.msra.mxu0 %v2434
  %2465 = vmatprep.subr.mxu0 0.0
  %2466 = vmatpush1.msra.mxu0 %v2433
  %2467 = vmatprep.subr.mxu0 0.0
  %2468 = vmatpush1.msra.mxu0 %v2432
  %2469 = vmatprep.subr.mxu0 0.0
  %2470 = vmatpush2.msra.mxu0 0.0
  %2471 = vmatprep.subr.mxu0 0.0
  %2472 = vmatpush2.msra.mxu0 0.0
  %2473 = vmatprep.subr.mxu0 0.0
  %2474 = vmatpush2.msra.mxu0 0.0
  %2475 = vmatprep.subr.mxu0 0.0
  %2476 = vmatpush2.msra.mxu0 0.0
  %2477 = vmatprep.subr.mxu0 0.0
  %2478 = vmatpush2.msra.mxu0 0.0
  %2479 = vmatprep.subr.mxu0 0.0
  %2480 = vmatpush2.msra.mxu0 0.0
  %2481 = vmatprep.subr.mxu0 0.0
  %2482 = vmatpush2.msra.mxu0 0.0
  %2483 = vmatprep.subr.mxu0 0.0
  %2484 = vmatpush2.msra.mxu0 0.0
  %2485 = vmatprep.subr.mxu0 0.0
  %2486 = vmatpush2.msra.mxu0 0.0
  %2487 = vmatprep.subr.mxu0 0.0
  %2488 = vmatpush2.msra.mxu0 0.0
  %2489 = vmatprep.subr.mxu0 0.0
  %2490 = vmatpush2.msra.mxu0 0.0
  %2491 = vmatprep.subr.mxu0 0.0
  %2492 = vmatpush2.msra.mxu0 0.0
  %2493 = vmatprep.subr.mxu0 0.0
  %2494 = vmatpush2.msra.mxu0 0.0
  %2495 = vmatprep.subr.mxu0 0.0
  %2496 = vmatpush2.msra.mxu0 0.0
  %2497 = vmatprep.subr.mxu0 0.0
  %2498 = vmatpush2.msra.mxu0 0.0
  %2499 = vmatprep.subr.mxu0 0.0
  %2500 = vmatpush2.msra.mxu0 0.0
  %2501 = vmatprep.mubr.f32.mxu0 0.0
  %2502 = vmatmul.mubr.f32.gmra.mxu0 %v2142
  %v2503 = vpop.f32.mrf.mxu0
  %v2504 = vadd.f32 0.0, %v2503
  %v2505 = vpop.f32.mrf.mxu0
  %2506 = vmatprep.mubr.f32.mxu0 0.0
  %2507 = vmatmul.mubr.f32.gmra.mxu0 %v2145
  %v2508 = vpop.f32.mrf.mxu0
  %v2509 = vadd.f32 0.0, %v2508
  %v2510 = vpop.f32.mrf.mxu0
  %2511 = vmatprep.mubr.f32.mxu0 0.0
  %2512 = vmatmul.mubr.f32.gmra.mxu0 %v2148
  %v2513 = vpop.f32.mrf.mxu0
  %v2514 = vadd.f32 0.0, %v2513
  %v2515 = vpop.f32.mrf.mxu0
  %2516 = vmatprep.mubr.f32.mxu0 0.0
  %2517 = vmatmul.mubr.f32.gmra.mxu0 %v2151
  %v2518 = vpop.f32.mrf.mxu0
  %v2519 = vadd.f32 0.0, %v2518
  %v2520 = vpop.f32.mrf.mxu0
  %2521 = vmatprep.mubr.f32.mxu0 0.0
  %2522 = vmatmul.mubr.f32.gmra.mxu0 %v2154
  %v2523 = vpop.f32.mrf.mxu0
  %v2524 = vadd.f32 0.0, %v2523
  %v2525 = vpop.f32.mrf.mxu0
  %2526 = vmatprep.mubr.f32.mxu0 0.0
  %2527 = vmatmul.mubr.f32.gmra.mxu0 %v2157
  %v2528 = vpop.f32.mrf.mxu0
  %v2529 = vadd.f32 0.0, %v2528
  %v2530 = vpop.f32.mrf.mxu0
  %2531 = vmatprep.mubr.f32.mxu0 0.0
  %2532 = vmatmul.mubr.f32.gmra.mxu0 %v2160
  %v2533 = vpop.f32.mrf.mxu0
  %v2534 = vadd.f32 0.0, %v2533
  %v2535 = vpop.f32.mrf.mxu0
  %2536 = vmatprep.mubr.f32.mxu0 0.0
  %2537 = vmatmul.mubr.f32.gmra.mxu0 %v2163
  %v2538 = vpop.f32.mrf.mxu0
  %v2539 = vadd.f32 0.0, %v2538
  %v2540 = vpop.f32.mrf.mxu0
  %2541 = vmatprep.mubr.f32.mxu0 0.0
  %2542 = vmatmul.mubr.f32.gmra.mxu0 %v2166
  %v2543 = vpop.f32.mrf.mxu0
  %v2544 = vadd.f32 0.0, %v2543
  %v2545 = vpop.f32.mrf.mxu0
  %2546 = vmatprep.mubr.f32.mxu0 0.0
  %2547 = vmatmul.mubr.f32.gmra.mxu0 %v2169
  %v2548 = vpop.f32.mrf.mxu0
  %v2549 = vadd.f32 0.0, %v2548
  %v2550 = vpop.f32.mrf.mxu0
  %2551 = vmatprep.mubr.f32.mxu0 0.0
  %2552 = vmatmul.mubr.f32.gmra.mxu0 %v2172
  %v2553 = vpop.f32.mrf.mxu0
  %v2554 = vadd.f32 0.0, %v2553
  %v2555 = vpop.f32.mrf.mxu0
  %2556 = vmatprep.mubr.f32.mxu0 0.0
  %2557 = vmatmul.mubr.f32.gmra.mxu0 %v2175
  %v2558 = vpop.f32.mrf.mxu0
  %v2559 = vadd.f32 0.0, %v2558
  %v2560 = vpop.f32.mrf.mxu0
  %2561 = vmatprep.mubr.f32.mxu0 0.0
  %2562 = vmatmul.mubr.f32.gmra.mxu0 %v2178
  %v2563 = vpop.f32.mrf.mxu0
  %v2564 = vadd.f32 0.0, %v2563
  %v2565 = vpop.f32.mrf.mxu0
  %2566 = vmatprep.mubr.f32.mxu0 0.0
  %2567 = vmatmul.mubr.f32.gmra.mxu0 %v2181
  %v2568 = vpop.f32.mrf.mxu0
  %v2569 = vadd.f32 0.0, %v2568
  %v2570 = vpop.f32.mrf.mxu0
  %2571 = vmatprep.mubr.f32.mxu0 0.0
  %2572 = vmatmul.mubr.f32.gmra.mxu0 %v2184
  %v2573 = vpop.f32.mrf.mxu0
  %v2574 = vadd.f32 0.0, %v2573
  %v2575 = vpop.f32.mrf.mxu0
  %2576 = vmatprep.mubr.f32.mxu0 0.0
  %2577 = vmatmul.mubr.f32.gmra.mxu0 %v2187
  %v2578 = vpop.f32.mrf.mxu0
  %v2579 = vadd.f32 0.0, %v2578
  %v2580 = vpop.f32.mrf.mxu0
  %2581 = vmatprep.mubr.f32.mxu0 0.0
  %2582 = vmatmul.mubr.f32.gmra.mxu0 %v2190
  %v2583 = vpop.f32.mrf.mxu0
  %v2584 = vadd.f32 0.0, %v2583
  %v2585 = vpop.f32.mrf.mxu0
  %2586 = vmatprep.mubr.f32.mxu0 0.0
  %2587 = vmatmul.mubr.f32.gmra.mxu0 %v2193
  %v2588 = vpop.f32.mrf.mxu0
  %v2589 = vadd.f32 0.0, %v2588
  %v2590 = vpop.f32.mrf.mxu0
  %2591 = vmatprep.mubr.f32.mxu0 0.0
  %2592 = vmatmul.mubr.f32.gmra.mxu0 %v2196
  %v2593 = vpop.f32.mrf.mxu0
  %v2594 = vadd.f32 0.0, %v2593
  %v2595 = vpop.f32.mrf.mxu0
  %2596 = vmatprep.mubr.f32.mxu0 0.0
  %2597 = vmatmul.mubr.f32.gmra.mxu0 %v2199
  %v2598 = vpop.f32.mrf.mxu0
  %v2599 = vadd.f32 0.0, %v2598
  %v2600 = vpop.f32.mrf.mxu0
  %2601 = vmatprep.mubr.f32.mxu0 0.0
  %2602 = vmatmul.mubr.f32.gmra.mxu0 %v2202
  %v2603 = vpop.f32.mrf.mxu0
  %v2604 = vadd.f32 0.0, %v2603
  %v2605 = vpop.f32.mrf.mxu0
  %2606 = vmatprep.mubr.f32.mxu0 0.0
  %2607 = vmatmul.mubr.f32.gmra.mxu0 %v2205
  %v2608 = vpop.f32.mrf.mxu0
  %v2609 = vadd.f32 0.0, %v2608
  %v2610 = vpop.f32.mrf.mxu0
  %2611 = vmatprep.mubr.f32.mxu0 0.0
  %2612 = vmatmul.mubr.f32.gmra.mxu0 %v2208
  %v2613 = vpop.f32.mrf.mxu0
  %v2614 = vadd.f32 0.0, %v2613
  %v2615 = vpop.f32.mrf.mxu0
  %2616 = vmatprep.mubr.f32.mxu0 0.0
  %2617 = vmatmul.mubr.f32.gmra.mxu0 %v2211
  %v2618 = vpop.f32.mrf.mxu0
  %v2619 = vadd.f32 0.0, %v2618
  %v2620 = vpop.f32.mrf.mxu0
  %2621 = vmatprep.mubr.f32.mxu0 0.0
  %2622 = vmatmul.mubr.f32.gmra.mxu0 %v2214
  %v2623 = vpop.f32.mrf.mxu0
  %v2624 = vadd.f32 0.0, %v2623
  %v2625 = vpop.f32.mrf.mxu0
  %2626 = vdwg.mxu0
  %v2627 = vadd.f32 %v2085, %v2504
  %v2628 = vadd.f32 %v2086, %v2509
  %v2629 = vadd.f32 %v2087, %v2514
  %v2630 = vadd.f32 %v2088, %v2519
  %v2631 = vadd.f32 %v2089, %v2524
  %v2632 = vadd.f32 %v2090, %v2529
  %v2633 = vadd.f32 %v2091, %v2534
  %v2634 = vadd.f32 %v2092, %v2539
  %v2635 = vadd.f32 %v2093, %v2544
  %v2636 = vadd.f32 %v2094, %v2549
  %v2637 = vadd.f32 %v2095, %v2554
  %v2638 = vadd.f32 %v2096, %v2559
  %v2639 = vadd.f32 %v2097, %v2564
  %v2640 = vadd.f32 %v2098, %v2569
  %v2641 = vadd.f32 %v2099, %v2574
  %v2642 = vadd.f32 %v2100, %v2579
  %v2643 = vadd.f32 %v2101, %v2584
  %v2644 = vadd.f32 %v2102, %v2589
  %v2645 = vadd.f32 %v2103, %v2594
  %v2646 = vadd.f32 %v2104, %v2599
  %v2647 = vadd.f32 %v2105, %v2604
  %v2648 = vadd.f32 %v2106, %v2609
  %v2649 = vadd.f32 %v2107, %v2614
  %v2650 = vadd.f32 %v2108, %v2619
  %v2651 = vadd.f32 %v2109, %v2624
  %v2652 = vld [vmem:[%s0 + $0x11] sm:$0xff]
  %v2653 = vld [vmem:[%s0 + $0x19] sm:$0xff]
  %v2654 = vld [vmem:[%s0 + $0x21] sm:$0xff]
  %v2655 = vld [vmem:[%s0 + $0x29] sm:$0xff]
  %v2656 = vld [vmem:[%s0 + $0x31] sm:$0xff]
  %v2657 = vld [vmem:[%s0 + $0x39] sm:$0xff]
  %v2658 = vld [vmem:[%s0 + $0x41] sm:$0xff]
  %v2659 = vld [vmem:[%s0 + $0x49] sm:$0xff]
  %v2660 = vld [vmem:[%s0 + $0x51] sm:$0xff]
  %v2661 = vld [vmem:[%s0 + $0x59] sm:$0xff]
  %v2662 = vld [vmem:[%s0 + $0x61] sm:$0xff]
  %v2663 = vld [vmem:[%s0 + $0x69] sm:$0xff]
  %v2664 = vld [vmem:[%s0 + $0x71] sm:$0xff]
  %v2665 = vld [vmem:[%s0 + $0x79] sm:$0xff]
  %v2666 = vld [vmem:[%s0 + $0x81] sm:$0xff]
  %v2667 = vld [vmem:[%s0 + $0x89] sm:$0xff]
  %v2668 = vld [vmem:[%s0 + $0x91] sm:$0xff]
  %v2669 = vld [vmem:[%s0 + $0x99] sm:$0xff]
  %v2670 = vld [vmem:[%s0 + $0xa1] sm:$0xff]
  %v2671 = vld [vmem:[%s0 + $0xa9] sm:$0xff]
  %v2672 = vld [vmem:[%s0 + $0xb1] sm:$0xff]
  %v2673 = vld [vmem:[%s0 + $0xb9] sm:$0xff]
  %v2674 = vld [vmem:[%s0 + $0xc1] sm:$0xff]
  %v2675 = vld [vmem:[%s0 + $0xc9] sm:$0xff]
  %v2676 = vld [vmem:[%s0 + $0xd1] sm:$0xff]
  %s2677 = scalar_lea.vmem %s1, 200
  %v2678 = vld [vmem:[%s2677] sm:$0xff]
  %v2679 = vld [vmem:[%s2677 + $0x8] sm:$0xff]
  %v2680 = vld [vmem:[%s2677 + $0x10] sm:$0xff]
  %v2681 = vld [vmem:[%s2677 + $0x18] sm:$0xff]
  %v2682 = vld [vmem:[%s2677 + $0x20] sm:$0xff]
  %v2684 = vsel %vm109, %v2652, 0
  %v2687 = vsel %vm109, %v2653, 0
  %v2690 = vsel %vm109, %v2654, 0
  %v2693 = vsel %vm109, %v2655, 0
  %v2696 = vsel %vm109, %v2656, 0
  %v2699 = vsel %vm109, %v2657, 0
  %v2702 = vsel %vm109, %v2658, 0
  %v2705 = vsel %vm109, %v2659, 0
  %v2708 = vsel %vm109, %v2660, 0
  %v2711 = vsel %vm109, %v2661, 0
  %v2714 = vsel %vm109, %v2662, 0
  %v2717 = vsel %vm109, %v2663, 0
  %v2720 = vsel %vm109, %v2664, 0
  %v2723 = vsel %vm109, %v2665, 0
  %v2726 = vsel %vm109, %v2666, 0
  %v2729 = vsel %vm109, %v2667, 0
  %v2732 = vsel %vm109, %v2668, 0
  %v2735 = vsel %vm109, %v2669, 0
  %v2738 = vsel %vm109, %v2670, 0
  %v2741 = vsel %vm109, %v2671, 0
  %v2744 = vsel %vm109, %v2672, 0
  %v2747 = vsel %vm109, %v2673, 0
  %v2750 = vsel %vm109, %v2674, 0
  %v2753 = vsel %vm109, %v2675, 0
  %v2756 = vsel %vm109, %v2676, 0
  %2758 = vmatprep.subr.mxu0 0.0
  %2759 = vmatpush1.msra.mxu0 0.0
  %2760 = vmatprep.subr.mxu0 0.0
  %2761 = vmatpush1.msra.mxu0 0.0
  %2762 = vmatprep.subr.mxu0 0.0
  %2763 = vmatpush1.msra.mxu0 0.0
  %2764 = vmatprep.subr.mxu0 0.0
  %2765 = vmatpush1.msra.mxu0 0.0
  %2766 = vmatprep.subr.mxu0 0.0
  %2767 = vmatpush1.msra.mxu0 0.0
  %2768 = vmatprep.subr.mxu0 0.0
  %2769 = vmatpush1.msra.mxu0 0.0
  %2770 = vmatprep.subr.mxu0 0.0
  %2771 = vmatpush1.msra.mxu0 0.0
  %2772 = vmatprep.subr.mxu0 0.0
  %2773 = vmatpush1.msra.mxu0 0.0
  %2774 = vmatprep.subr.mxu0 0.0
  %2775 = vmatpush1.msra.mxu0 0.0
  %2776 = vmatprep.subr.mxu0 0.0
  %2777 = vmatpush1.msra.mxu0 0.0
  %2778 = vmatprep.subr.mxu0 0.0
  %2779 = vmatpush1.msra.mxu0 0.0
  %2780 = vmatprep.subr.mxu0 0.0
  %2781 = vmatpush1.msra.mxu0 %v2682
  %2782 = vmatprep.subr.mxu0 0.0
  %2783 = vmatpush1.msra.mxu0 %v2681
  %2784 = vmatprep.subr.mxu0 0.0
  %2785 = vmatpush1.msra.mxu0 %v2680
  %2786 = vmatprep.subr.mxu0 0.0
  %2787 = vmatpush1.msra.mxu0 %v2679
  %2788 = vmatprep.subr.mxu0 0.0
  %2789 = vmatpush1.msra.mxu0 %v2678
  %2790 = vmatprep.subr.mxu0 0.0
  %2791 = vmatpush2.msra.mxu0 0.0
  %2792 = vmatprep.subr.mxu0 0.0
  %2793 = vmatpush2.msra.mxu0 0.0
  %2794 = vmatprep.subr.mxu0 0.0
  %2795 = vmatpush2.msra.mxu0 0.0
  %2796 = vmatprep.subr.mxu0 0.0
  %2797 = vmatpush2.msra.mxu0 0.0
  %2798 = vmatprep.subr.mxu0 0.0
  %2799 = vmatpush2.msra.mxu0 0.0
  %2800 = vmatprep.subr.mxu0 0.0
  %2801 = vmatpush2.msra.mxu0 0.0
  %2802 = vmatprep.subr.mxu0 0.0
  %2803 = vmatpush2.msra.mxu0 0.0
  %2804 = vmatprep.subr.mxu0 0.0
  %2805 = vmatpush2.msra.mxu0 0.0
  %2806 = vmatprep.subr.mxu0 0.0
  %2807 = vmatpush2.msra.mxu0 0.0
  %2808 = vmatprep.subr.mxu0 0.0
  %2809 = vmatpush2.msra.mxu0 0.0
  %2810 = vmatprep.subr.mxu0 0.0
  %2811 = vmatpush2.msra.mxu0 0.0
  %2812 = vmatprep.subr.mxu0 0.0
  %2813 = vmatpush2.msra.mxu0 0.0
  %2814 = vmatprep.subr.mxu0 0.0
  %2815 = vmatpush2.msra.mxu0 0.0
  %2816 = vmatprep.subr.mxu0 0.0
  %2817 = vmatpush2.msra.mxu0 0.0
  %2818 = vmatprep.subr.mxu0 0.0
  %2819 = vmatpush2.msra.mxu0 0.0
  %2820 = vmatprep.subr.mxu0 0.0
  %2821 = vmatpush2.msra.mxu0 0.0
  %2822 = vmatprep.mubr.f32.mxu0 0.0
  %2823 = vmatmul.mubr.f32.gmra.mxu0 %v2684
  %v2824 = vpop.f32.mrf.mxu0
  %v2825 = vadd.f32 0.0, %v2824
  %v2826 = vpop.f32.mrf.mxu0
  %2827 = vmatprep.mubr.f32.mxu0 0.0
  %2828 = vmatmul.mubr.f32.gmra.mxu0 %v2687
  %v2829 = vpop.f32.mrf.mxu0
  %v2830 = vadd.f32 0.0, %v2829
  %v2831 = vpop.f32.mrf.mxu0
  %2832 = vmatprep.mubr.f32.mxu0 0.0
  %2833 = vmatmul.mubr.f32.gmra.mxu0 %v2690
  %v2834 = vpop.f32.mrf.mxu0
  %v2835 = vadd.f32 0.0, %v2834
  %v2836 = vpop.f32.mrf.mxu0
  %2837 = vmatprep.mubr.f32.mxu0 0.0
  %2838 = vmatmul.mubr.f32.gmra.mxu0 %v2693
  %v2839 = vpop.f32.mrf.mxu0
  %v2840 = vadd.f32 0.0, %v2839
  %v2841 = vpop.f32.mrf.mxu0
  %2842 = vmatprep.mubr.f32.mxu0 0.0
  %2843 = vmatmul.mubr.f32.gmra.mxu0 %v2696
  %v2844 = vpop.f32.mrf.mxu0
  %v2845 = vadd.f32 0.0, %v2844
  %v2846 = vpop.f32.mrf.mxu0
  %2847 = vmatprep.mubr.f32.mxu0 0.0
  %2848 = vmatmul.mubr.f32.gmra.mxu0 %v2699
  %v2849 = vpop.f32.mrf.mxu0
  %v2850 = vadd.f32 0.0, %v2849
  %v2851 = vpop.f32.mrf.mxu0
  %2852 = vmatprep.mubr.f32.mxu0 0.0
  %2853 = vmatmul.mubr.f32.gmra.mxu0 %v2702
  %v2854 = vpop.f32.mrf.mxu0
  %v2855 = vadd.f32 0.0, %v2854
  %v2856 = vpop.f32.mrf.mxu0
  %2857 = vmatprep.mubr.f32.mxu0 0.0
  %2858 = vmatmul.mubr.f32.gmra.mxu0 %v2705
  %v2859 = vpop.f32.mrf.mxu0
  %v2860 = vadd.f32 0.0, %v2859
  %v2861 = vpop.f32.mrf.mxu0
  %2862 = vmatprep.mubr.f32.mxu0 0.0
  %2863 = vmatmul.mubr.f32.gmra.mxu0 %v2708
  %v2864 = vpop.f32.mrf.mxu0
  %v2865 = vadd.f32 0.0, %v2864
  %v2866 = vpop.f32.mrf.mxu0
  %2867 = vmatprep.mubr.f32.mxu0 0.0
  %2868 = vmatmul.mubr.f32.gmra.mxu0 %v2711
  %v2869 = vpop.f32.mrf.mxu0
  %v2870 = vadd.f32 0.0, %v2869
  %v2871 = vpop.f32.mrf.mxu0
  %2872 = vmatprep.mubr.f32.mxu0 0.0
  %2873 = vmatmul.mubr.f32.gmra.mxu0 %v2714
  %v2874 = vpop.f32.mrf.mxu0
  %v2875 = vadd.f32 0.0, %v2874
  %v2876 = vpop.f32.mrf.mxu0
  %2877 = vmatprep.mubr.f32.mxu0 0.0
  %2878 = vmatmul.mubr.f32.gmra.mxu0 %v2717
  %v2879 = vpop.f32.mrf.mxu0
  %v2880 = vadd.f32 0.0, %v2879
  %v2881 = vpop.f32.mrf.mxu0
  %2882 = vmatprep.mubr.f32.mxu0 0.0
  %2883 = vmatmul.mubr.f32.gmra.mxu0 %v2720
  %v2884 = vpop.f32.mrf.mxu0
  %v2885 = vadd.f32 0.0, %v2884
  %v2886 = vpop.f32.mrf.mxu0
  %2887 = vmatprep.mubr.f32.mxu0 0.0
  %2888 = vmatmul.mubr.f32.gmra.mxu0 %v2723
  %v2889 = vpop.f32.mrf.mxu0
  %v2890 = vadd.f32 0.0, %v2889
  %v2891 = vpop.f32.mrf.mxu0
  %2892 = vmatprep.mubr.f32.mxu0 0.0
  %2893 = vmatmul.mubr.f32.gmra.mxu0 %v2726
  %v2894 = vpop.f32.mrf.mxu0
  %v2895 = vadd.f32 0.0, %v2894
  %v2896 = vpop.f32.mrf.mxu0
  %2897 = vmatprep.mubr.f32.mxu0 0.0
  %2898 = vmatmul.mubr.f32.gmra.mxu0 %v2729
  %v2899 = vpop.f32.mrf.mxu0
  %v2900 = vadd.f32 0.0, %v2899
  %v2901 = vpop.f32.mrf.mxu0
  %2902 = vmatprep.mubr.f32.mxu0 0.0
  %2903 = vmatmul.mubr.f32.gmra.mxu0 %v2732
  %v2904 = vpop.f32.mrf.mxu0
  %v2905 = vadd.f32 0.0, %v2904
  %v2906 = vpop.f32.mrf.mxu0
  %2907 = vmatprep.mubr.f32.mxu0 0.0
  %2908 = vmatmul.mubr.f32.gmra.mxu0 %v2735
  %v2909 = vpop.f32.mrf.mxu0
  %v2910 = vadd.f32 0.0, %v2909
  %v2911 = vpop.f32.mrf.mxu0
  %2912 = vmatprep.mubr.f32.mxu0 0.0
  %2913 = vmatmul.mubr.f32.gmra.mxu0 %v2738
  %v2914 = vpop.f32.mrf.mxu0
  %v2915 = vadd.f32 0.0, %v2914
  %v2916 = vpop.f32.mrf.mxu0
  %2917 = vmatprep.mubr.f32.mxu0 0.0
  %2918 = vmatmul.mubr.f32.gmra.mxu0 %v2741
  %v2919 = vpop.f32.mrf.mxu0
  %v2920 = vadd.f32 0.0, %v2919
  %v2921 = vpop.f32.mrf.mxu0
  %2922 = vmatprep.mubr.f32.mxu0 0.0
  %2923 = vmatmul.mubr.f32.gmra.mxu0 %v2744
  %v2924 = vpop.f32.mrf.mxu0
  %v2925 = vadd.f32 0.0, %v2924
  %v2926 = vpop.f32.mrf.mxu0
  %2927 = vmatprep.mubr.f32.mxu0 0.0
  %2928 = vmatmul.mubr.f32.gmra.mxu0 %v2747
  %v2929 = vpop.f32.mrf.mxu0
  %v2930 = vadd.f32 0.0, %v2929
  %v2931 = vpop.f32.mrf.mxu0
  %2932 = vmatprep.mubr.f32.mxu0 0.0
  %2933 = vmatmul.mubr.f32.gmra.mxu0 %v2750
  %v2934 = vpop.f32.mrf.mxu0
  %v2935 = vadd.f32 0.0, %v2934
  %v2936 = vpop.f32.mrf.mxu0
  %2937 = vmatprep.mubr.f32.mxu0 0.0
  %2938 = vmatmul.mubr.f32.gmra.mxu0 %v2753
  %v2939 = vpop.f32.mrf.mxu0
  %v2940 = vadd.f32 0.0, %v2939
  %v2941 = vpop.f32.mrf.mxu0
  %2942 = vmatprep.mubr.f32.mxu0 0.0
  %2943 = vmatmul.mubr.f32.gmra.mxu0 %v2756
  %v2944 = vpop.f32.mrf.mxu0
  %v2945 = vadd.f32 0.0, %v2944
  %v2946 = vpop.f32.mrf.mxu0
  %2947 = vdwg.mxu0
  %v2948 = vadd.f32 %v2406, %v2825
  %v2949 = vadd.f32 %v2407, %v2830
  %v2950 = vadd.f32 %v2408, %v2835
  %v2951 = vadd.f32 %v2409, %v2840
  %v2952 = vadd.f32 %v2410, %v2845
  %v2953 = vadd.f32 %v2411, %v2850
  %v2954 = vadd.f32 %v2412, %v2855
  %v2955 = vadd.f32 %v2413, %v2860
  %v2956 = vadd.f32 %v2414, %v2865
  %v2957 = vadd.f32 %v2415, %v2870
  %v2958 = vadd.f32 %v2416, %v2875
  %v2959 = vadd.f32 %v2417, %v2880
  %v2960 = vadd.f32 %v2418, %v2885
  %v2961 = vadd.f32 %v2419, %v2890
  %v2962 = vadd.f32 %v2420, %v2895
  %v2963 = vadd.f32 %v2421, %v2900
  %v2964 = vadd.f32 %v2422, %v2905
  %v2965 = vadd.f32 %v2423, %v2910
  %v2966 = vadd.f32 %v2424, %v2915
  %v2967 = vadd.f32 %v2425, %v2920
  %v2968 = vadd.f32 %v2426, %v2925
  %v2969 = vadd.f32 %v2427, %v2930
  %v2970 = vadd.f32 %v2428, %v2935
  %v2971 = vadd.f32 %v2429, %v2940
  %v2972 = vadd.f32 %v2430, %v2945
  %s2973 = scalar_lea.vmem %s2, 200
  %v2974 = vld [vmem:[%s2973] sm:$0xff]
  %v2975 = vld [vmem:[%s2973 + $0x8] sm:$0xff]
  %v2976 = vld [vmem:[%s2973 + $0x10] sm:$0xff]
  %v2977 = vld [vmem:[%s2973 + $0x18] sm:$0xff]
  %v2978 = vld [vmem:[%s2973 + $0x20] sm:$0xff]
  %2979 = vmatprep.subr.mxu0 0.0
  %2980 = vmatpush1.msra.mxu0 0.0
  %2981 = vmatprep.subr.mxu0 0.0
  %2982 = vmatpush1.msra.mxu0 0.0
  %2983 = vmatprep.subr.mxu0 0.0
  %2984 = vmatpush1.msra.mxu0 0.0
  %2985 = vmatprep.subr.mxu0 0.0
  %2986 = vmatpush1.msra.mxu0 0.0
  %2987 = vmatprep.subr.mxu0 0.0
  %2988 = vmatpush1.msra.mxu0 0.0
  %2989 = vmatprep.subr.mxu0 0.0
  %2990 = vmatpush1.msra.mxu0 0.0
  %2991 = vmatprep.subr.mxu0 0.0
  %2992 = vmatpush1.msra.mxu0 0.0
  %2993 = vmatprep.subr.mxu0 0.0
  %2994 = vmatpush1.msra.mxu0 0.0
  %2995 = vmatprep.subr.mxu0 0.0
  %2996 = vmatpush1.msra.mxu0 0.0
  %2997 = vmatprep.subr.mxu0 0.0
  %2998 = vmatpush1.msra.mxu0 0.0
  %2999 = vmatprep.subr.mxu0 0.0
  %3000 = vmatpush1.msra.mxu0 0.0
  %3001 = vmatprep.subr.mxu0 0.0
  %3002 = vmatpush1.msra.mxu0 %v2978
  %3003 = vmatprep.subr.mxu0 0.0
  %3004 = vmatpush1.msra.mxu0 %v2977
  %3005 = vmatprep.subr.mxu0 0.0
  %3006 = vmatpush1.msra.mxu0 %v2976
  %3007 = vmatprep.subr.mxu0 0.0
  %3008 = vmatpush1.msra.mxu0 %v2975
  %3009 = vmatprep.subr.mxu0 0.0
  %3010 = vmatpush1.msra.mxu0 %v2974
  %3011 = vmatprep.subr.mxu0 0.0
  %3012 = vmatpush2.msra.mxu0 0.0
  %3013 = vmatprep.subr.mxu0 0.0
  %3014 = vmatpush2.msra.mxu0 0.0
  %3015 = vmatprep.subr.mxu0 0.0
  %3016 = vmatpush2.msra.mxu0 0.0
  %3017 = vmatprep.subr.mxu0 0.0
  %3018 = vmatpush2.msra.mxu0 0.0
  %3019 = vmatprep.subr.mxu0 0.0
  %3020 = vmatpush2.msra.mxu0 0.0
  %3021 = vmatprep.subr.mxu0 0.0
  %3022 = vmatpush2.msra.mxu0 0.0
  %3023 = vmatprep.subr.mxu0 0.0
  %3024 = vmatpush2.msra.mxu0 0.0
  %3025 = vmatprep.subr.mxu0 0.0
  %3026 = vmatpush2.msra.mxu0 0.0
  %3027 = vmatprep.subr.mxu0 0.0
  %3028 = vmatpush2.msra.mxu0 0.0
  %3029 = vmatprep.subr.mxu0 0.0
  %3030 = vmatpush2.msra.mxu0 0.0
  %3031 = vmatprep.subr.mxu0 0.0
  %3032 = vmatpush2.msra.mxu0 0.0
  %3033 = vmatprep.subr.mxu0 0.0
  %3034 = vmatpush2.msra.mxu0 0.0
  %3035 = vmatprep.subr.mxu0 0.0
  %3036 = vmatpush2.msra.mxu0 0.0
  %3037 = vmatprep.subr.mxu0 0.0
  %3038 = vmatpush2.msra.mxu0 0.0
  %3039 = vmatprep.subr.mxu0 0.0
  %3040 = vmatpush2.msra.mxu0 0.0
  %3041 = vmatprep.subr.mxu0 0.0
  %3042 = vmatpush2.msra.mxu0 0.0
  %3043 = vmatprep.mubr.f32.mxu0 0.0
  %3044 = vmatmul.mubr.f32.gmra.mxu0 %v2684
  %v3045 = vpop.f32.mrf.mxu0
  %v3046 = vadd.f32 0.0, %v3045
  %v3047 = vpop.f32.mrf.mxu0
  %3048 = vmatprep.mubr.f32.mxu0 0.0
  %3049 = vmatmul.mubr.f32.gmra.mxu0 %v2687
  %v3050 = vpop.f32.mrf.mxu0
  %v3051 = vadd.f32 0.0, %v3050
  %v3052 = vpop.f32.mrf.mxu0
  %3053 = vmatprep.mubr.f32.mxu0 0.0
  %3054 = vmatmul.mubr.f32.gmra.mxu0 %v2690
  %v3055 = vpop.f32.mrf.mxu0
  %v3056 = vadd.f32 0.0, %v3055
  %v3057 = vpop.f32.mrf.mxu0
  %3058 = vmatprep.mubr.f32.mxu0 0.0
  %3059 = vmatmul.mubr.f32.gmra.mxu0 %v2693
  %v3060 = vpop.f32.mrf.mxu0
  %v3061 = vadd.f32 0.0, %v3060
  %v3062 = vpop.f32.mrf.mxu0
  %3063 = vmatprep.mubr.f32.mxu0 0.0
  %3064 = vmatmul.mubr.f32.gmra.mxu0 %v2696
  %v3065 = vpop.f32.mrf.mxu0
  %v3066 = vadd.f32 0.0, %v3065
  %v3067 = vpop.f32.mrf.mxu0
  %3068 = vmatprep.mubr.f32.mxu0 0.0
  %3069 = vmatmul.mubr.f32.gmra.mxu0 %v2699
  %v3070 = vpop.f32.mrf.mxu0
  %v3071 = vadd.f32 0.0, %v3070
  %v3072 = vpop.f32.mrf.mxu0
  %3073 = vmatprep.mubr.f32.mxu0 0.0
  %3074 = vmatmul.mubr.f32.gmra.mxu0 %v2702
  %v3075 = vpop.f32.mrf.mxu0
  %v3076 = vadd.f32 0.0, %v3075
  %v3077 = vpop.f32.mrf.mxu0
  %3078 = vmatprep.mubr.f32.mxu0 0.0
  %3079 = vmatmul.mubr.f32.gmra.mxu0 %v2705
  %v3080 = vpop.f32.mrf.mxu0
  %v3081 = vadd.f32 0.0, %v3080
  %v3082 = vpop.f32.mrf.mxu0
  %3083 = vmatprep.mubr.f32.mxu0 0.0
  %3084 = vmatmul.mubr.f32.gmra.mxu0 %v2708
  %v3085 = vpop.f32.mrf.mxu0
  %v3086 = vadd.f32 0.0, %v3085
  %v3087 = vpop.f32.mrf.mxu0
  %3088 = vmatprep.mubr.f32.mxu0 0.0
  %3089 = vmatmul.mubr.f32.gmra.mxu0 %v2711
  %v3090 = vpop.f32.mrf.mxu0
  %v3091 = vadd.f32 0.0, %v3090
  %v3092 = vpop.f32.mrf.mxu0
  %3093 = vmatprep.mubr.f32.mxu0 0.0
  %3094 = vmatmul.mubr.f32.gmra.mxu0 %v2714
  %v3095 = vpop.f32.mrf.mxu0
  %v3096 = vadd.f32 0.0, %v3095
  %v3097 = vpop.f32.mrf.mxu0
  %3098 = vmatprep.mubr.f32.mxu0 0.0
  %3099 = vmatmul.mubr.f32.gmra.mxu0 %v2717
  %v3100 = vpop.f32.mrf.mxu0
  %v3101 = vadd.f32 0.0, %v3100
  %v3102 = vpop.f32.mrf.mxu0
  %3103 = vmatprep.mubr.f32.mxu0 0.0
  %3104 = vmatmul.mubr.f32.gmra.mxu0 %v2720
  %v3105 = vpop.f32.mrf.mxu0
  %v3106 = vadd.f32 0.0, %v3105
  %v3107 = vpop.f32.mrf.mxu0
  %3108 = vmatprep.mubr.f32.mxu0 0.0
  %3109 = vmatmul.mubr.f32.gmra.mxu0 %v2723
  %v3110 = vpop.f32.mrf.mxu0
  %v3111 = vadd.f32 0.0, %v3110
  %v3112 = vpop.f32.mrf.mxu0
  %3113 = vmatprep.mubr.f32.mxu0 0.0
  %3114 = vmatmul.mubr.f32.gmra.mxu0 %v2726
  %v3115 = vpop.f32.mrf.mxu0
  %v3116 = vadd.f32 0.0, %v3115
  %v3117 = vpop.f32.mrf.mxu0
  %3118 = vmatprep.mubr.f32.mxu0 0.0
  %3119 = vmatmul.mubr.f32.gmra.mxu0 %v2729
  %v3120 = vpop.f32.mrf.mxu0
  %v3121 = vadd.f32 0.0, %v3120
  %v3122 = vpop.f32.mrf.mxu0
  %3123 = vmatprep.mubr.f32.mxu0 0.0
  %3124 = vmatmul.mubr.f32.gmra.mxu0 %v2732
  %v3125 = vpop.f32.mrf.mxu0
  %v3126 = vadd.f32 0.0, %v3125
  %v3127 = vpop.f32.mrf.mxu0
  %3128 = vmatprep.mubr.f32.mxu0 0.0
  %3129 = vmatmul.mubr.f32.gmra.mxu0 %v2735
  %v3130 = vpop.f32.mrf.mxu0
  %v3131 = vadd.f32 0.0, %v3130
  %v3132 = vpop.f32.mrf.mxu0
  %3133 = vmatprep.mubr.f32.mxu0 0.0
  %3134 = vmatmul.mubr.f32.gmra.mxu0 %v2738
  %v3135 = vpop.f32.mrf.mxu0
  %v3136 = vadd.f32 0.0, %v3135
  %v3137 = vpop.f32.mrf.mxu0
  %3138 = vmatprep.mubr.f32.mxu0 0.0
  %3139 = vmatmul.mubr.f32.gmra.mxu0 %v2741
  %v3140 = vpop.f32.mrf.mxu0
  %v3141 = vadd.f32 0.0, %v3140
  %v3142 = vpop.f32.mrf.mxu0
  %3143 = vmatprep.mubr.f32.mxu0 0.0
  %3144 = vmatmul.mubr.f32.gmra.mxu0 %v2744
  %v3145 = vpop.f32.mrf.mxu0
  %v3146 = vadd.f32 0.0, %v3145
  %v3147 = vpop.f32.mrf.mxu0
  %3148 = vmatprep.mubr.f32.mxu0 0.0
  %3149 = vmatmul.mubr.f32.gmra.mxu0 %v2747
  %v3150 = vpop.f32.mrf.mxu0
  %v3151 = vadd.f32 0.0, %v3150
  %v3152 = vpop.f32.mrf.mxu0
  %3153 = vmatprep.mubr.f32.mxu0 0.0
  %3154 = vmatmul.mubr.f32.gmra.mxu0 %v2750
  %v3155 = vpop.f32.mrf.mxu0
  %v3156 = vadd.f32 0.0, %v3155
  %v3157 = vpop.f32.mrf.mxu0
  %3158 = vmatprep.mubr.f32.mxu0 0.0
  %3159 = vmatmul.mubr.f32.gmra.mxu0 %v2753
  %v3160 = vpop.f32.mrf.mxu0
  %v3161 = vadd.f32 0.0, %v3160
  %v3162 = vpop.f32.mrf.mxu0
  %3163 = vmatprep.mubr.f32.mxu0 0.0
  %3164 = vmatmul.mubr.f32.gmra.mxu0 %v2756
  %v3165 = vpop.f32.mrf.mxu0
  %v3166 = vadd.f32 0.0, %v3165
  %v3167 = vpop.f32.mrf.mxu0
  %3168 = vdwg.mxu0
  %v3169 = vadd.f32 %v2627, %v3046
  %v3170 = vadd.f32 %v2628, %v3051
  %v3171 = vadd.f32 %v2629, %v3056
  %v3172 = vadd.f32 %v2630, %v3061
  %v3173 = vadd.f32 %v2631, %v3066
  %v3174 = vadd.f32 %v2632, %v3071
  %v3175 = vadd.f32 %v2633, %v3076
  %v3176 = vadd.f32 %v2634, %v3081
  %v3177 = vadd.f32 %v2635, %v3086
  %v3178 = vadd.f32 %v2636, %v3091
  %v3179 = vadd.f32 %v2637, %v3096
  %v3180 = vadd.f32 %v2638, %v3101
  %v3181 = vadd.f32 %v2639, %v3106
  %v3182 = vadd.f32 %v2640, %v3111
  %v3183 = vadd.f32 %v2641, %v3116
  %v3184 = vadd.f32 %v2642, %v3121
  %v3185 = vadd.f32 %v2643, %v3126
  %v3186 = vadd.f32 %v2644, %v3131
  %v3187 = vadd.f32 %v2645, %v3136
  %v3188 = vadd.f32 %v2646, %v3141
  %v3189 = vadd.f32 %v2647, %v3146
  %v3190 = vadd.f32 %v2648, %v3151
  %v3191 = vadd.f32 %v2649, %v3156
  %v3192 = vadd.f32 %v2650, %v3161
  %v3193 = vadd.f32 %v2651, %v3166
  %v3194 = vld [vmem:[%s0 + $0x19] sm:$0xff]
  %v3195 = vld [vmem:[%s0 + $0x21] sm:$0xff]
  %v3196 = vld [vmem:[%s0 + $0x29] sm:$0xff]
  %v3197 = vld [vmem:[%s0 + $0x31] sm:$0xff]
  %v3198 = vld [vmem:[%s0 + $0x39] sm:$0xff]
  %v3199 = vld [vmem:[%s0 + $0x41] sm:$0xff]
  %v3200 = vld [vmem:[%s0 + $0x49] sm:$0xff]
  %v3201 = vld [vmem:[%s0 + $0x51] sm:$0xff]
  %v3202 = vld [vmem:[%s0 + $0x59] sm:$0xff]
  %v3203 = vld [vmem:[%s0 + $0x61] sm:$0xff]
  %v3204 = vld [vmem:[%s0 + $0x69] sm:$0xff]
  %v3205 = vld [vmem:[%s0 + $0x71] sm:$0xff]
  %v3206 = vld [vmem:[%s0 + $0x79] sm:$0xff]
  %v3207 = vld [vmem:[%s0 + $0x81] sm:$0xff]
  %v3208 = vld [vmem:[%s0 + $0x89] sm:$0xff]
  %v3209 = vld [vmem:[%s0 + $0x91] sm:$0xff]
  %v3210 = vld [vmem:[%s0 + $0x99] sm:$0xff]
  %v3211 = vld [vmem:[%s0 + $0xa1] sm:$0xff]
  %v3212 = vld [vmem:[%s0 + $0xa9] sm:$0xff]
  %v3213 = vld [vmem:[%s0 + $0xb1] sm:$0xff]
  %v3214 = vld [vmem:[%s0 + $0xb9] sm:$0xff]
  %v3215 = vld [vmem:[%s0 + $0xc1] sm:$0xff]
  %v3216 = vld [vmem:[%s0 + $0xc9] sm:$0xff]
  %v3217 = vld [vmem:[%s0 + $0xd1] sm:$0xff]
  %v3218 = vld [vmem:[%s0 + $0xd9] sm:$0xff]
  %s3219 = scalar_lea.vmem %s1, 240
  %v3220 = vld [vmem:[%s3219] sm:$0xff]
  %v3221 = vld [vmem:[%s3219 + $0x8] sm:$0xff]
  %v3222 = vld [vmem:[%s3219 + $0x10] sm:$0xff]
  %v3223 = vld [vmem:[%s3219 + $0x18] sm:$0xff]
  %v3224 = vld [vmem:[%s3219 + $0x20] sm:$0xff]
  %v3226 = vsel %vm109, %v3194, 0
  %v3229 = vsel %vm109, %v3195, 0
  %v3232 = vsel %vm109, %v3196, 0
  %v3235 = vsel %vm109, %v3197, 0
  %v3238 = vsel %vm109, %v3198, 0
  %v3241 = vsel %vm109, %v3199, 0
  %v3244 = vsel %vm109, %v3200, 0
  %v3247 = vsel %vm109, %v3201, 0
  %v3250 = vsel %vm109, %v3202, 0
  %v3253 = vsel %vm109, %v3203, 0
  %v3256 = vsel %vm109, %v3204, 0
  %v3259 = vsel %vm109, %v3205, 0
  %v3262 = vsel %vm109, %v3206, 0
  %v3265 = vsel %vm109, %v3207, 0
  %v3268 = vsel %vm109, %v3208, 0
  %v3271 = vsel %vm109, %v3209, 0
  %v3274 = vsel %vm109, %v3210, 0
  %v3277 = vsel %vm109, %v3211, 0
  %v3280 = vsel %vm109, %v3212, 0
  %v3283 = vsel %vm109, %v3213, 0
  %v3286 = vsel %vm109, %v3214, 0
  %v3289 = vsel %vm109, %v3215, 0
  %v3292 = vsel %vm109, %v3216, 0
  %v3295 = vsel %vm109, %v3217, 0
  %v3298 = vsel %vm109, %v3218, 0
  %3300 = vmatprep.subr.mxu0 0.0
  %3301 = vmatpush1.msra.mxu0 0.0
  %3302 = vmatprep.subr.mxu0 0.0
  %3303 = vmatpush1.msra.mxu0 0.0
  %3304 = vmatprep.subr.mxu0 0.0
  %3305 = vmatpush1.msra.mxu0 0.0
  %3306 = vmatprep.subr.mxu0 0.0
  %3307 = vmatpush1.msra.mxu0 0.0
  %3308 = vmatprep.subr.mxu0 0.0
  %3309 = vmatpush1.msra.mxu0 0.0
  %3310 = vmatprep.subr.mxu0 0.0
  %3311 = vmatpush1.msra.mxu0 0.0
  %3312 = vmatprep.subr.mxu0 0.0
  %3313 = vmatpush1.msra.mxu0 0.0
  %3314 = vmatprep.subr.mxu0 0.0
  %3315 = vmatpush1.msra.mxu0 0.0
  %3316 = vmatprep.subr.mxu0 0.0
  %3317 = vmatpush1.msra.mxu0 0.0
  %3318 = vmatprep.subr.mxu0 0.0
  %3319 = vmatpush1.msra.mxu0 0.0
  %3320 = vmatprep.subr.mxu0 0.0
  %3321 = vmatpush1.msra.mxu0 0.0
  %3322 = vmatprep.subr.mxu0 0.0
  %3323 = vmatpush1.msra.mxu0 %v3224
  %3324 = vmatprep.subr.mxu0 0.0
  %3325 = vmatpush1.msra.mxu0 %v3223
  %3326 = vmatprep.subr.mxu0 0.0
  %3327 = vmatpush1.msra.mxu0 %v3222
  %3328 = vmatprep.subr.mxu0 0.0
  %3329 = vmatpush1.msra.mxu0 %v3221
  %3330 = vmatprep.subr.mxu0 0.0
  %3331 = vmatpush1.msra.mxu0 %v3220
  %3332 = vmatprep.subr.mxu0 0.0
  %3333 = vmatpush2.msra.mxu0 0.0
  %3334 = vmatprep.subr.mxu0 0.0
  %3335 = vmatpush2.msra.mxu0 0.0
  %3336 = vmatprep.subr.mxu0 0.0
  %3337 = vmatpush2.msra.mxu0 0.0
  %3338 = vmatprep.subr.mxu0 0.0
  %3339 = vmatpush2.msra.mxu0 0.0
  %3340 = vmatprep.subr.mxu0 0.0
  %3341 = vmatpush2.msra.mxu0 0.0
  %3342 = vmatprep.subr.mxu0 0.0
  %3343 = vmatpush2.msra.mxu0 0.0
  %3344 = vmatprep.subr.mxu0 0.0
  %3345 = vmatpush2.msra.mxu0 0.0
  %3346 = vmatprep.subr.mxu0 0.0
  %3347 = vmatpush2.msra.mxu0 0.0
  %3348 = vmatprep.subr.mxu0 0.0
  %3349 = vmatpush2.msra.mxu0 0.0
  %3350 = vmatprep.subr.mxu0 0.0
  %3351 = vmatpush2.msra.mxu0 0.0
  %3352 = vmatprep.subr.mxu0 0.0
  %3353 = vmatpush2.msra.mxu0 0.0
  %3354 = vmatprep.subr.mxu0 0.0
  %3355 = vmatpush2.msra.mxu0 0.0
  %3356 = vmatprep.subr.mxu0 0.0
  %3357 = vmatpush2.msra.mxu0 0.0
  %3358 = vmatprep.subr.mxu0 0.0
  %3359 = vmatpush2.msra.mxu0 0.0
  %3360 = vmatprep.subr.mxu0 0.0
  %3361 = vmatpush2.msra.mxu0 0.0
  %3362 = vmatprep.subr.mxu0 0.0
  %3363 = vmatpush2.msra.mxu0 0.0
  %3364 = vmatprep.mubr.f32.mxu0 0.0
  %3365 = vmatmul.mubr.f32.gmra.mxu0 %v3226
  %v3366 = vpop.f32.mrf.mxu0
  %v3367 = vadd.f32 0.0, %v3366
  %v3368 = vpop.f32.mrf.mxu0
  %3369 = vmatprep.mubr.f32.mxu0 0.0
  %3370 = vmatmul.mubr.f32.gmra.mxu0 %v3229
  %v3371 = vpop.f32.mrf.mxu0
  %v3372 = vadd.f32 0.0, %v3371
  %v3373 = vpop.f32.mrf.mxu0
  %3374 = vmatprep.mubr.f32.mxu0 0.0
  %3375 = vmatmul.mubr.f32.gmra.mxu0 %v3232
  %v3376 = vpop.f32.mrf.mxu0
  %v3377 = vadd.f32 0.0, %v3376
  %v3378 = vpop.f32.mrf.mxu0
  %3379 = vmatprep.mubr.f32.mxu0 0.0
  %3380 = vmatmul.mubr.f32.gmra.mxu0 %v3235
  %v3381 = vpop.f32.mrf.mxu0
  %v3382 = vadd.f32 0.0, %v3381
  %v3383 = vpop.f32.mrf.mxu0
  %3384 = vmatprep.mubr.f32.mxu0 0.0
  %3385 = vmatmul.mubr.f32.gmra.mxu0 %v3238
  %v3386 = vpop.f32.mrf.mxu0
  %v3387 = vadd.f32 0.0, %v3386
  %v3388 = vpop.f32.mrf.mxu0
  %3389 = vmatprep.mubr.f32.mxu0 0.0
  %3390 = vmatmul.mubr.f32.gmra.mxu0 %v3241
  %v3391 = vpop.f32.mrf.mxu0
  %v3392 = vadd.f32 0.0, %v3391
  %v3393 = vpop.f32.mrf.mxu0
  %3394 = vmatprep.mubr.f32.mxu0 0.0
  %3395 = vmatmul.mubr.f32.gmra.mxu0 %v3244
  %v3396 = vpop.f32.mrf.mxu0
  %v3397 = vadd.f32 0.0, %v3396
  %v3398 = vpop.f32.mrf.mxu0
  %3399 = vmatprep.mubr.f32.mxu0 0.0
  %3400 = vmatmul.mubr.f32.gmra.mxu0 %v3247
  %v3401 = vpop.f32.mrf.mxu0
  %v3402 = vadd.f32 0.0, %v3401
  %v3403 = vpop.f32.mrf.mxu0
  %3404 = vmatprep.mubr.f32.mxu0 0.0
  %3405 = vmatmul.mubr.f32.gmra.mxu0 %v3250
  %v3406 = vpop.f32.mrf.mxu0
  %v3407 = vadd.f32 0.0, %v3406
  %v3408 = vpop.f32.mrf.mxu0
  %3409 = vmatprep.mubr.f32.mxu0 0.0
  %3410 = vmatmul.mubr.f32.gmra.mxu0 %v3253
  %v3411 = vpop.f32.mrf.mxu0
  %v3412 = vadd.f32 0.0, %v3411
  %v3413 = vpop.f32.mrf.mxu0
  %3414 = vmatprep.mubr.f32.mxu0 0.0
  %3415 = vmatmul.mubr.f32.gmra.mxu0 %v3256
  %v3416 = vpop.f32.mrf.mxu0
  %v3417 = vadd.f32 0.0, %v3416
  %v3418 = vpop.f32.mrf.mxu0
  %3419 = vmatprep.mubr.f32.mxu0 0.0
  %3420 = vmatmul.mubr.f32.gmra.mxu0 %v3259
  %v3421 = vpop.f32.mrf.mxu0
  %v3422 = vadd.f32 0.0, %v3421
  %v3423 = vpop.f32.mrf.mxu0
  %3424 = vmatprep.mubr.f32.mxu0 0.0
  %3425 = vmatmul.mubr.f32.gmra.mxu0 %v3262
  %v3426 = vpop.f32.mrf.mxu0
  %v3427 = vadd.f32 0.0, %v3426
  %v3428 = vpop.f32.mrf.mxu0
  %3429 = vmatprep.mubr.f32.mxu0 0.0
  %3430 = vmatmul.mubr.f32.gmra.mxu0 %v3265
  %v3431 = vpop.f32.mrf.mxu0
  %v3432 = vadd.f32 0.0, %v3431
  %v3433 = vpop.f32.mrf.mxu0
  %3434 = vmatprep.mubr.f32.mxu0 0.0
  %3435 = vmatmul.mubr.f32.gmra.mxu0 %v3268
  %v3436 = vpop.f32.mrf.mxu0
  %v3437 = vadd.f32 0.0, %v3436
  %v3438 = vpop.f32.mrf.mxu0
  %3439 = vmatprep.mubr.f32.mxu0 0.0
  %3440 = vmatmul.mubr.f32.gmra.mxu0 %v3271
  %v3441 = vpop.f32.mrf.mxu0
  %v3442 = vadd.f32 0.0, %v3441
  %v3443 = vpop.f32.mrf.mxu0
  %3444 = vmatprep.mubr.f32.mxu0 0.0
  %3445 = vmatmul.mubr.f32.gmra.mxu0 %v3274
  %v3446 = vpop.f32.mrf.mxu0
  %v3447 = vadd.f32 0.0, %v3446
  %v3448 = vpop.f32.mrf.mxu0
  %3449 = vmatprep.mubr.f32.mxu0 0.0
  %3450 = vmatmul.mubr.f32.gmra.mxu0 %v3277
  %v3451 = vpop.f32.mrf.mxu0
  %v3452 = vadd.f32 0.0, %v3451
  %v3453 = vpop.f32.mrf.mxu0
  %3454 = vmatprep.mubr.f32.mxu0 0.0
  %3455 = vmatmul.mubr.f32.gmra.mxu0 %v3280
  %v3456 = vpop.f32.mrf.mxu0
  %v3457 = vadd.f32 0.0, %v3456
  %v3458 = vpop.f32.mrf.mxu0
  %3459 = vmatprep.mubr.f32.mxu0 0.0
  %3460 = vmatmul.mubr.f32.gmra.mxu0 %v3283
  %v3461 = vpop.f32.mrf.mxu0
  %v3462 = vadd.f32 0.0, %v3461
  %v3463 = vpop.f32.mrf.mxu0
  %3464 = vmatprep.mubr.f32.mxu0 0.0
  %3465 = vmatmul.mubr.f32.gmra.mxu0 %v3286
  %v3466 = vpop.f32.mrf.mxu0
  %v3467 = vadd.f32 0.0, %v3466
  %v3468 = vpop.f32.mrf.mxu0
  %3469 = vmatprep.mubr.f32.mxu0 0.0
  %3470 = vmatmul.mubr.f32.gmra.mxu0 %v3289
  %v3471 = vpop.f32.mrf.mxu0
  %v3472 = vadd.f32 0.0, %v3471
  %v3473 = vpop.f32.mrf.mxu0
  %3474 = vmatprep.mubr.f32.mxu0 0.0
  %3475 = vmatmul.mubr.f32.gmra.mxu0 %v3292
  %v3476 = vpop.f32.mrf.mxu0
  %v3477 = vadd.f32 0.0, %v3476
  %v3478 = vpop.f32.mrf.mxu0
  %3479 = vmatprep.mubr.f32.mxu0 0.0
  %3480 = vmatmul.mubr.f32.gmra.mxu0 %v3295
  %v3481 = vpop.f32.mrf.mxu0
  %v3482 = vadd.f32 0.0, %v3481
  %v3483 = vpop.f32.mrf.mxu0
  %3484 = vmatprep.mubr.f32.mxu0 0.0
  %3485 = vmatmul.mubr.f32.gmra.mxu0 %v3298
  %v3486 = vpop.f32.mrf.mxu0
  %v3487 = vadd.f32 0.0, %v3486
  %v3488 = vpop.f32.mrf.mxu0
  %3489 = vdwg.mxu0
  %v3490 = vadd.f32 %v2948, %v3367
  %v3491 = vadd.f32 %v2949, %v3372
  %v3492 = vadd.f32 %v2950, %v3377
  %v3493 = vadd.f32 %v2951, %v3382
  %v3494 = vadd.f32 %v2952, %v3387
  %v3495 = vadd.f32 %v2953, %v3392
  %v3496 = vadd.f32 %v2954, %v3397
  %v3497 = vadd.f32 %v2955, %v3402
  %v3498 = vadd.f32 %v2956, %v3407
  %v3499 = vadd.f32 %v2957, %v3412
  %v3500 = vadd.f32 %v2958, %v3417
  %v3501 = vadd.f32 %v2959, %v3422
  %v3502 = vadd.f32 %v2960, %v3427
  %v3503 = vadd.f32 %v2961, %v3432
  %v3504 = vadd.f32 %v2962, %v3437
  %v3505 = vadd.f32 %v2963, %v3442
  %v3506 = vadd.f32 %v2964, %v3447
  %v3507 = vadd.f32 %v2965, %v3452
  %v3508 = vadd.f32 %v2966, %v3457
  %v3509 = vadd.f32 %v2967, %v3462
  %v3510 = vadd.f32 %v2968, %v3467
  %v3511 = vadd.f32 %v2969, %v3472
  %v3512 = vadd.f32 %v2970, %v3477
  %v3513 = vadd.f32 %v2971, %v3482
  %v3514 = vadd.f32 %v2972, %v3487
  %s3515 = scalar_lea.vmem %s2, 240
  %v3516 = vld [vmem:[%s3515] sm:$0xff]
  %v3517 = vld [vmem:[%s3515 + $0x8] sm:$0xff]
  %v3518 = vld [vmem:[%s3515 + $0x10] sm:$0xff]
  %v3519 = vld [vmem:[%s3515 + $0x18] sm:$0xff]
  %v3520 = vld [vmem:[%s3515 + $0x20] sm:$0xff]
  %3521 = vmatprep.subr.mxu0 0.0
  %3522 = vmatpush1.msra.mxu0 0.0
  %3523 = vmatprep.subr.mxu0 0.0
  %3524 = vmatpush1.msra.mxu0 0.0
  %3525 = vmatprep.subr.mxu0 0.0
  %3526 = vmatpush1.msra.mxu0 0.0
  %3527 = vmatprep.subr.mxu0 0.0
  %3528 = vmatpush1.msra.mxu0 0.0
  %3529 = vmatprep.subr.mxu0 0.0
  %3530 = vmatpush1.msra.mxu0 0.0
  %3531 = vmatprep.subr.mxu0 0.0
  %3532 = vmatpush1.msra.mxu0 0.0
  %3533 = vmatprep.subr.mxu0 0.0
  %3534 = vmatpush1.msra.mxu0 0.0
  %3535 = vmatprep.subr.mxu0 0.0
  %3536 = vmatpush1.msra.mxu0 0.0
  %3537 = vmatprep.subr.mxu0 0.0
  %3538 = vmatpush1.msra.mxu0 0.0
  %3539 = vmatprep.subr.mxu0 0.0
  %3540 = vmatpush1.msra.mxu0 0.0
  %3541 = vmatprep.subr.mxu0 0.0
  %3542 = vmatpush1.msra.mxu0 0.0
  %3543 = vmatprep.subr.mxu0 0.0
  %3544 = vmatpush1.msra.mxu0 %v3520
  %3545 = vmatprep.subr.mxu0 0.0
  %3546 = vmatpush1.msra.mxu0 %v3519
  %3547 = vmatprep.subr.mxu0 0.0
  %3548 = vmatpush1.msra.mxu0 %v3518
  %3549 = vmatprep.subr.mxu0 0.0
  %3550 = vmatpush1.msra.mxu0 %v3517
  %3551 = vmatprep.subr.mxu0 0.0
  %3552 = vmatpush1.msra.mxu0 %v3516
  %3553 = vmatprep.subr.mxu0 0.0
  %3554 = vmatpush2.msra.mxu0 0.0
  %3555 = vmatprep.subr.mxu0 0.0
  %3556 = vmatpush2.msra.mxu0 0.0
  %3557 = vmatprep.subr.mxu0 0.0
  %3558 = vmatpush2.msra.mxu0 0.0
  %3559 = vmatprep.subr.mxu0 0.0
  %3560 = vmatpush2.msra.mxu0 0.0
  %3561 = vmatprep.subr.mxu0 0.0
  %3562 = vmatpush2.msra.mxu0 0.0
  %3563 = vmatprep.subr.mxu0 0.0
  %3564 = vmatpush2.msra.mxu0 0.0
  %3565 = vmatprep.subr.mxu0 0.0
  %3566 = vmatpush2.msra.mxu0 0.0
  %3567 = vmatprep.subr.mxu0 0.0
  %3568 = vmatpush2.msra.mxu0 0.0
  %3569 = vmatprep.subr.mxu0 0.0
  %3570 = vmatpush2.msra.mxu0 0.0
  %3571 = vmatprep.subr.mxu0 0.0
  %3572 = vmatpush2.msra.mxu0 0.0
  %3573 = vmatprep.subr.mxu0 0.0
  %3574 = vmatpush2.msra.mxu0 0.0
  %3575 = vmatprep.subr.mxu0 0.0
  %3576 = vmatpush2.msra.mxu0 0.0
  %3577 = vmatprep.subr.mxu0 0.0
  %3578 = vmatpush2.msra.mxu0 0.0
  %3579 = vmatprep.subr.mxu0 0.0
  %3580 = vmatpush2.msra.mxu0 0.0
  %3581 = vmatprep.subr.mxu0 0.0
  %3582 = vmatpush2.msra.mxu0 0.0
  %3583 = vmatprep.subr.mxu0 0.0
  %3584 = vmatpush2.msra.mxu0 0.0
  %3585 = vmatprep.mubr.f32.mxu0 0.0
  %3586 = vmatmul.mubr.f32.gmra.mxu0 %v3226
  %v3587 = vpop.f32.mrf.mxu0
  %v3588 = vadd.f32 0.0, %v3587
  %v3589 = vpop.f32.mrf.mxu0
  %3590 = vmatprep.mubr.f32.mxu0 0.0
  %3591 = vmatmul.mubr.f32.gmra.mxu0 %v3229
  %v3592 = vpop.f32.mrf.mxu0
  %v3593 = vadd.f32 0.0, %v3592
  %v3594 = vpop.f32.mrf.mxu0
  %3595 = vmatprep.mubr.f32.mxu0 0.0
  %3596 = vmatmul.mubr.f32.gmra.mxu0 %v3232
  %v3597 = vpop.f32.mrf.mxu0
  %v3598 = vadd.f32 0.0, %v3597
  %v3599 = vpop.f32.mrf.mxu0
  %3600 = vmatprep.mubr.f32.mxu0 0.0
  %3601 = vmatmul.mubr.f32.gmra.mxu0 %v3235
  %v3602 = vpop.f32.mrf.mxu0
  %v3603 = vadd.f32 0.0, %v3602
  %v3604 = vpop.f32.mrf.mxu0
  %3605 = vmatprep.mubr.f32.mxu0 0.0
  %3606 = vmatmul.mubr.f32.gmra.mxu0 %v3238
  %v3607 = vpop.f32.mrf.mxu0
  %v3608 = vadd.f32 0.0, %v3607
  %v3609 = vpop.f32.mrf.mxu0
  %3610 = vmatprep.mubr.f32.mxu0 0.0
  %3611 = vmatmul.mubr.f32.gmra.mxu0 %v3241
  %v3612 = vpop.f32.mrf.mxu0
  %v3613 = vadd.f32 0.0, %v3612
  %v3614 = vpop.f32.mrf.mxu0
  %3615 = vmatprep.mubr.f32.mxu0 0.0
  %3616 = vmatmul.mubr.f32.gmra.mxu0 %v3244
  %v3617 = vpop.f32.mrf.mxu0
  %v3618 = vadd.f32 0.0, %v3617
  %v3619 = vpop.f32.mrf.mxu0
  %3620 = vmatprep.mubr.f32.mxu0 0.0
  %3621 = vmatmul.mubr.f32.gmra.mxu0 %v3247
  %v3622 = vpop.f32.mrf.mxu0
  %v3623 = vadd.f32 0.0, %v3622
  %v3624 = vpop.f32.mrf.mxu0
  %3625 = vmatprep.mubr.f32.mxu0 0.0
  %3626 = vmatmul.mubr.f32.gmra.mxu0 %v3250
  %v3627 = vpop.f32.mrf.mxu0
  %v3628 = vadd.f32 0.0, %v3627
  %v3629 = vpop.f32.mrf.mxu0
  %3630 = vmatprep.mubr.f32.mxu0 0.0
  %3631 = vmatmul.mubr.f32.gmra.mxu0 %v3253
  %v3632 = vpop.f32.mrf.mxu0
  %v3633 = vadd.f32 0.0, %v3632
  %v3634 = vpop.f32.mrf.mxu0
  %3635 = vmatprep.mubr.f32.mxu0 0.0
  %3636 = vmatmul.mubr.f32.gmra.mxu0 %v3256
  %v3637 = vpop.f32.mrf.mxu0
  %v3638 = vadd.f32 0.0, %v3637
  %v3639 = vpop.f32.mrf.mxu0
  %3640 = vmatprep.mubr.f32.mxu0 0.0
  %3641 = vmatmul.mubr.f32.gmra.mxu0 %v3259
  %v3642 = vpop.f32.mrf.mxu0
  %v3643 = vadd.f32 0.0, %v3642
  %v3644 = vpop.f32.mrf.mxu0
  %3645 = vmatprep.mubr.f32.mxu0 0.0
  %3646 = vmatmul.mubr.f32.gmra.mxu0 %v3262
  %v3647 = vpop.f32.mrf.mxu0
  %v3648 = vadd.f32 0.0, %v3647
  %v3649 = vpop.f32.mrf.mxu0
  %3650 = vmatprep.mubr.f32.mxu0 0.0
  %3651 = vmatmul.mubr.f32.gmra.mxu0 %v3265
  %v3652 = vpop.f32.mrf.mxu0
  %v3653 = vadd.f32 0.0, %v3652
  %v3654 = vpop.f32.mrf.mxu0
  %3655 = vmatprep.mubr.f32.mxu0 0.0
  %3656 = vmatmul.mubr.f32.gmra.mxu0 %v3268
  %v3657 = vpop.f32.mrf.mxu0
  %v3658 = vadd.f32 0.0, %v3657
  %v3659 = vpop.f32.mrf.mxu0
  %3660 = vmatprep.mubr.f32.mxu0 0.0
  %3661 = vmatmul.mubr.f32.gmra.mxu0 %v3271
  %v3662 = vpop.f32.mrf.mxu0
  %v3663 = vadd.f32 0.0, %v3662
  %v3664 = vpop.f32.mrf.mxu0
  %3665 = vmatprep.mubr.f32.mxu0 0.0
  %3666 = vmatmul.mubr.f32.gmra.mxu0 %v3274
  %v3667 = vpop.f32.mrf.mxu0
  %v3668 = vadd.f32 0.0, %v3667
  %v3669 = vpop.f32.mrf.mxu0
  %3670 = vmatprep.mubr.f32.mxu0 0.0
  %3671 = vmatmul.mubr.f32.gmra.mxu0 %v3277
  %v3672 = vpop.f32.mrf.mxu0
  %v3673 = vadd.f32 0.0, %v3672
  %v3674 = vpop.f32.mrf.mxu0
  %3675 = vmatprep.mubr.f32.mxu0 0.0
  %3676 = vmatmul.mubr.f32.gmra.mxu0 %v3280
  %v3677 = vpop.f32.mrf.mxu0
  %v3678 = vadd.f32 0.0, %v3677
  %v3679 = vpop.f32.mrf.mxu0
  %3680 = vmatprep.mubr.f32.mxu0 0.0
  %3681 = vmatmul.mubr.f32.gmra.mxu0 %v3283
  %v3682 = vpop.f32.mrf.mxu0
  %v3683 = vadd.f32 0.0, %v3682
  %v3684 = vpop.f32.mrf.mxu0
  %3685 = vmatprep.mubr.f32.mxu0 0.0
  %3686 = vmatmul.mubr.f32.gmra.mxu0 %v3286
  %v3687 = vpop.f32.mrf.mxu0
  %v3688 = vadd.f32 0.0, %v3687
  %v3689 = vpop.f32.mrf.mxu0
  %3690 = vmatprep.mubr.f32.mxu0 0.0
  %3691 = vmatmul.mubr.f32.gmra.mxu0 %v3289
  %v3692 = vpop.f32.mrf.mxu0
  %v3693 = vadd.f32 0.0, %v3692
  %v3694 = vpop.f32.mrf.mxu0
  %3695 = vmatprep.mubr.f32.mxu0 0.0
  %3696 = vmatmul.mubr.f32.gmra.mxu0 %v3292
  %v3697 = vpop.f32.mrf.mxu0
  %v3698 = vadd.f32 0.0, %v3697
  %v3699 = vpop.f32.mrf.mxu0
  %3700 = vmatprep.mubr.f32.mxu0 0.0
  %3701 = vmatmul.mubr.f32.gmra.mxu0 %v3295
  %v3702 = vpop.f32.mrf.mxu0
  %v3703 = vadd.f32 0.0, %v3702
  %v3704 = vpop.f32.mrf.mxu0
  %3705 = vmatprep.mubr.f32.mxu0 0.0
  %3706 = vmatmul.mubr.f32.gmra.mxu0 %v3298
  %v3707 = vpop.f32.mrf.mxu0
  %v3708 = vadd.f32 0.0, %v3707
  %v3709 = vpop.f32.mrf.mxu0
  %3710 = vdwg.mxu0
  %v3711 = vadd.f32 %v3169, %v3588
  %v3712 = vadd.f32 %v3170, %v3593
  %v3713 = vadd.f32 %v3171, %v3598
  %v3714 = vadd.f32 %v3172, %v3603
  %v3715 = vadd.f32 %v3173, %v3608
  %v3716 = vadd.f32 %v3174, %v3613
  %v3717 = vadd.f32 %v3175, %v3618
  %v3718 = vadd.f32 %v3176, %v3623
  %v3719 = vadd.f32 %v3177, %v3628
  %v3720 = vadd.f32 %v3178, %v3633
  %v3721 = vadd.f32 %v3179, %v3638
  %v3722 = vadd.f32 %v3180, %v3643
  %v3723 = vadd.f32 %v3181, %v3648
  %v3724 = vadd.f32 %v3182, %v3653
  %v3725 = vadd.f32 %v3183, %v3658
  %v3726 = vadd.f32 %v3184, %v3663
  %v3727 = vadd.f32 %v3185, %v3668
  %v3728 = vadd.f32 %v3186, %v3673
  %v3729 = vadd.f32 %v3187, %v3678
  %v3730 = vadd.f32 %v3188, %v3683
  %v3731 = vadd.f32 %v3189, %v3688
  %v3732 = vadd.f32 %v3190, %v3693
  %v3733 = vadd.f32 %v3191, %v3698
  %v3734 = vadd.f32 %v3192, %v3703
  %v3735 = vadd.f32 %v3193, %v3708
  %v3736 = vld [vmem:[%s0 + $0x1a] sm:$0xff]
  %v3737 = vld [vmem:[%s0 + $0x22] sm:$0xff]
  %v3738 = vld [vmem:[%s0 + $0x2a] sm:$0xff]
  %v3739 = vld [vmem:[%s0 + $0x32] sm:$0xff]
  %v3740 = vld [vmem:[%s0 + $0x3a] sm:$0xff]
  %v3741 = vld [vmem:[%s0 + $0x42] sm:$0xff]
  %v3742 = vld [vmem:[%s0 + $0x4a] sm:$0xff]
  %v3743 = vld [vmem:[%s0 + $0x52] sm:$0xff]
  %v3744 = vld [vmem:[%s0 + $0x5a] sm:$0xff]
  %v3745 = vld [vmem:[%s0 + $0x62] sm:$0xff]
  %v3746 = vld [vmem:[%s0 + $0x6a] sm:$0xff]
  %v3747 = vld [vmem:[%s0 + $0x72] sm:$0xff]
  %v3748 = vld [vmem:[%s0 + $0x7a] sm:$0xff]
  %v3749 = vld [vmem:[%s0 + $0x82] sm:$0xff]
  %v3750 = vld [vmem:[%s0 + $0x8a] sm:$0xff]
  %v3751 = vld [vmem:[%s0 + $0x92] sm:$0xff]
  %v3752 = vld [vmem:[%s0 + $0x9a] sm:$0xff]
  %v3753 = vld [vmem:[%s0 + $0xa2] sm:$0xff]
  %v3754 = vld [vmem:[%s0 + $0xaa] sm:$0xff]
  %v3755 = vld [vmem:[%s0 + $0xb2] sm:$0xff]
  %v3756 = vld [vmem:[%s0 + $0xba] sm:$0xff]
  %v3757 = vld [vmem:[%s0 + $0xc2] sm:$0xff]
  %v3758 = vld [vmem:[%s0 + $0xca] sm:$0xff]
  %v3759 = vld [vmem:[%s0 + $0xd2] sm:$0xff]
  %v3760 = vld [vmem:[%s0 + $0xda] sm:$0xff]
  %s3761 = scalar_lea.vmem %s1, 280
  %v3762 = vld [vmem:[%s3761] sm:$0xff]
  %v3763 = vld [vmem:[%s3761 + $0x8] sm:$0xff]
  %v3764 = vld [vmem:[%s3761 + $0x10] sm:$0xff]
  %v3765 = vld [vmem:[%s3761 + $0x18] sm:$0xff]
  %v3766 = vld [vmem:[%s3761 + $0x20] sm:$0xff]
  %v3768 = vsel %vm109, %v3736, 0
  %v3771 = vsel %vm109, %v3737, 0
  %v3774 = vsel %vm109, %v3738, 0
  %v3777 = vsel %vm109, %v3739, 0
  %v3780 = vsel %vm109, %v3740, 0
  %v3783 = vsel %vm109, %v3741, 0
  %v3786 = vsel %vm109, %v3742, 0
  %v3789 = vsel %vm109, %v3743, 0
  %v3792 = vsel %vm109, %v3744, 0
  %v3795 = vsel %vm109, %v3745, 0
  %v3798 = vsel %vm109, %v3746, 0
  %v3801 = vsel %vm109, %v3747, 0
  %v3804 = vsel %vm109, %v3748, 0
  %v3807 = vsel %vm109, %v3749, 0
  %v3810 = vsel %vm109, %v3750, 0
  %v3813 = vsel %vm109, %v3751, 0
  %v3816 = vsel %vm109, %v3752, 0
  %v3819 = vsel %vm109, %v3753, 0
  %v3822 = vsel %vm109, %v3754, 0
  %v3825 = vsel %vm109, %v3755, 0
  %v3828 = vsel %vm109, %v3756, 0
  %v3831 = vsel %vm109, %v3757, 0
  %v3834 = vsel %vm109, %v3758, 0
  %v3837 = vsel %vm109, %v3759, 0
  %v3840 = vsel %vm109, %v3760, 0
  %3842 = vmatprep.subr.mxu0 0.0
  %3843 = vmatpush1.msra.mxu0 0.0
  %3844 = vmatprep.subr.mxu0 0.0
  %3845 = vmatpush1.msra.mxu0 0.0
  %3846 = vmatprep.subr.mxu0 0.0
  %3847 = vmatpush1.msra.mxu0 0.0
  %3848 = vmatprep.subr.mxu0 0.0
  %3849 = vmatpush1.msra.mxu0 0.0
  %3850 = vmatprep.subr.mxu0 0.0
  %3851 = vmatpush1.msra.mxu0 0.0
  %3852 = vmatprep.subr.mxu0 0.0
  %3853 = vmatpush1.msra.mxu0 0.0
  %3854 = vmatprep.subr.mxu0 0.0
  %3855 = vmatpush1.msra.mxu0 0.0
  %3856 = vmatprep.subr.mxu0 0.0
  %3857 = vmatpush1.msra.mxu0 0.0
  %3858 = vmatprep.subr.mxu0 0.0
  %3859 = vmatpush1.msra.mxu0 0.0
  %3860 = vmatprep.subr.mxu0 0.0
  %3861 = vmatpush1.msra.mxu0 0.0
  %3862 = vmatprep.subr.mxu0 0.0
  %3863 = vmatpush1.msra.mxu0 0.0
  %3864 = vmatprep.subr.mxu0 0.0
  %3865 = vmatpush1.msra.mxu0 %v3766
  %3866 = vmatprep.subr.mxu0 0.0
  %3867 = vmatpush1.msra.mxu0 %v3765
  %3868 = vmatprep.subr.mxu0 0.0
  %3869 = vmatpush1.msra.mxu0 %v3764
  %3870 = vmatprep.subr.mxu0 0.0
  %3871 = vmatpush1.msra.mxu0 %v3763
  %3872 = vmatprep.subr.mxu0 0.0
  %3873 = vmatpush1.msra.mxu0 %v3762
  %3874 = vmatprep.subr.mxu0 0.0
  %3875 = vmatpush2.msra.mxu0 0.0
  %3876 = vmatprep.subr.mxu0 0.0
  %3877 = vmatpush2.msra.mxu0 0.0
  %3878 = vmatprep.subr.mxu0 0.0
  %3879 = vmatpush2.msra.mxu0 0.0
  %3880 = vmatprep.subr.mxu0 0.0
  %3881 = vmatpush2.msra.mxu0 0.0
  %3882 = vmatprep.subr.mxu0 0.0
  %3883 = vmatpush2.msra.mxu0 0.0
  %3884 = vmatprep.subr.mxu0 0.0
  %3885 = vmatpush2.msra.mxu0 0.0
  %3886 = vmatprep.subr.mxu0 0.0
  %3887 = vmatpush2.msra.mxu0 0.0
  %3888 = vmatprep.subr.mxu0 0.0
  %3889 = vmatpush2.msra.mxu0 0.0
  %3890 = vmatprep.subr.mxu0 0.0
  %3891 = vmatpush2.msra.mxu0 0.0
  %3892 = vmatprep.subr.mxu0 0.0
  %3893 = vmatpush2.msra.mxu0 0.0
  %3894 = vmatprep.subr.mxu0 0.0
  %3895 = vmatpush2.msra.mxu0 0.0
  %3896 = vmatprep.subr.mxu0 0.0
  %3897 = vmatpush2.msra.mxu0 0.0
  %3898 = vmatprep.subr.mxu0 0.0
  %3899 = vmatpush2.msra.mxu0 0.0
  %3900 = vmatprep.subr.mxu0 0.0
  %3901 = vmatpush2.msra.mxu0 0.0
  %3902 = vmatprep.subr.mxu0 0.0
  %3903 = vmatpush2.msra.mxu0 0.0
  %3904 = vmatprep.subr.mxu0 0.0
  %3905 = vmatpush2.msra.mxu0 0.0
  %3906 = vmatprep.mubr.f32.mxu0 0.0
  %3907 = vmatmul.mubr.f32.gmra.mxu0 %v3768
  %v3908 = vpop.f32.mrf.mxu0
  %v3909 = vadd.f32 0.0, %v3908
  %v3910 = vpop.f32.mrf.mxu0
  %3911 = vmatprep.mubr.f32.mxu0 0.0
  %3912 = vmatmul.mubr.f32.gmra.mxu0 %v3771
  %v3913 = vpop.f32.mrf.mxu0
  %v3914 = vadd.f32 0.0, %v3913
  %v3915 = vpop.f32.mrf.mxu0
  %3916 = vmatprep.mubr.f32.mxu0 0.0
  %3917 = vmatmul.mubr.f32.gmra.mxu0 %v3774
  %v3918 = vpop.f32.mrf.mxu0
  %v3919 = vadd.f32 0.0, %v3918
  %v3920 = vpop.f32.mrf.mxu0
  %3921 = vmatprep.mubr.f32.mxu0 0.0
  %3922 = vmatmul.mubr.f32.gmra.mxu0 %v3777
  %v3923 = vpop.f32.mrf.mxu0
  %v3924 = vadd.f32 0.0, %v3923
  %v3925 = vpop.f32.mrf.mxu0
  %3926 = vmatprep.mubr.f32.mxu0 0.0
  %3927 = vmatmul.mubr.f32.gmra.mxu0 %v3780
  %v3928 = vpop.f32.mrf.mxu0
  %v3929 = vadd.f32 0.0, %v3928
  %v3930 = vpop.f32.mrf.mxu0
  %3931 = vmatprep.mubr.f32.mxu0 0.0
  %3932 = vmatmul.mubr.f32.gmra.mxu0 %v3783
  %v3933 = vpop.f32.mrf.mxu0
  %v3934 = vadd.f32 0.0, %v3933
  %v3935 = vpop.f32.mrf.mxu0
  %3936 = vmatprep.mubr.f32.mxu0 0.0
  %3937 = vmatmul.mubr.f32.gmra.mxu0 %v3786
  %v3938 = vpop.f32.mrf.mxu0
  %v3939 = vadd.f32 0.0, %v3938
  %v3940 = vpop.f32.mrf.mxu0
  %3941 = vmatprep.mubr.f32.mxu0 0.0
  %3942 = vmatmul.mubr.f32.gmra.mxu0 %v3789
  %v3943 = vpop.f32.mrf.mxu0
  %v3944 = vadd.f32 0.0, %v3943
  %v3945 = vpop.f32.mrf.mxu0
  %3946 = vmatprep.mubr.f32.mxu0 0.0
  %3947 = vmatmul.mubr.f32.gmra.mxu0 %v3792
  %v3948 = vpop.f32.mrf.mxu0
  %v3949 = vadd.f32 0.0, %v3948
  %v3950 = vpop.f32.mrf.mxu0
  %3951 = vmatprep.mubr.f32.mxu0 0.0
  %3952 = vmatmul.mubr.f32.gmra.mxu0 %v3795
  %v3953 = vpop.f32.mrf.mxu0
  %v3954 = vadd.f32 0.0, %v3953
  %v3955 = vpop.f32.mrf.mxu0
  %3956 = vmatprep.mubr.f32.mxu0 0.0
  %3957 = vmatmul.mubr.f32.gmra.mxu0 %v3798
  %v3958 = vpop.f32.mrf.mxu0
  %v3959 = vadd.f32 0.0, %v3958
  %v3960 = vpop.f32.mrf.mxu0
  %3961 = vmatprep.mubr.f32.mxu0 0.0
  %3962 = vmatmul.mubr.f32.gmra.mxu0 %v3801
  %v3963 = vpop.f32.mrf.mxu0
  %v3964 = vadd.f32 0.0, %v3963
  %v3965 = vpop.f32.mrf.mxu0
  %3966 = vmatprep.mubr.f32.mxu0 0.0
  %3967 = vmatmul.mubr.f32.gmra.mxu0 %v3804
  %v3968 = vpop.f32.mrf.mxu0
  %v3969 = vadd.f32 0.0, %v3968
  %v3970 = vpop.f32.mrf.mxu0
  %3971 = vmatprep.mubr.f32.mxu0 0.0
  %3972 = vmatmul.mubr.f32.gmra.mxu0 %v3807
  %v3973 = vpop.f32.mrf.mxu0
  %v3974 = vadd.f32 0.0, %v3973
  %v3975 = vpop.f32.mrf.mxu0
  %3976 = vmatprep.mubr.f32.mxu0 0.0
  %3977 = vmatmul.mubr.f32.gmra.mxu0 %v3810
  %v3978 = vpop.f32.mrf.mxu0
  %v3979 = vadd.f32 0.0, %v3978
  %v3980 = vpop.f32.mrf.mxu0
  %3981 = vmatprep.mubr.f32.mxu0 0.0
  %3982 = vmatmul.mubr.f32.gmra.mxu0 %v3813
  %v3983 = vpop.f32.mrf.mxu0
  %v3984 = vadd.f32 0.0, %v3983
  %v3985 = vpop.f32.mrf.mxu0
  %3986 = vmatprep.mubr.f32.mxu0 0.0
  %3987 = vmatmul.mubr.f32.gmra.mxu0 %v3816
  %v3988 = vpop.f32.mrf.mxu0
  %v3989 = vadd.f32 0.0, %v3988
  %v3990 = vpop.f32.mrf.mxu0
  %3991 = vmatprep.mubr.f32.mxu0 0.0
  %3992 = vmatmul.mubr.f32.gmra.mxu0 %v3819
  %v3993 = vpop.f32.mrf.mxu0
  %v3994 = vadd.f32 0.0, %v3993
  %v3995 = vpop.f32.mrf.mxu0
  %3996 = vmatprep.mubr.f32.mxu0 0.0
  %3997 = vmatmul.mubr.f32.gmra.mxu0 %v3822
  %v3998 = vpop.f32.mrf.mxu0
  %v3999 = vadd.f32 0.0, %v3998
  %v4000 = vpop.f32.mrf.mxu0
  %4001 = vmatprep.mubr.f32.mxu0 0.0
  %4002 = vmatmul.mubr.f32.gmra.mxu0 %v3825
  %v4003 = vpop.f32.mrf.mxu0
  %v4004 = vadd.f32 0.0, %v4003
  %v4005 = vpop.f32.mrf.mxu0
  %4006 = vmatprep.mubr.f32.mxu0 0.0
  %4007 = vmatmul.mubr.f32.gmra.mxu0 %v3828
  %v4008 = vpop.f32.mrf.mxu0
  %v4009 = vadd.f32 0.0, %v4008
  %v4010 = vpop.f32.mrf.mxu0
  %4011 = vmatprep.mubr.f32.mxu0 0.0
  %4012 = vmatmul.mubr.f32.gmra.mxu0 %v3831
  %v4013 = vpop.f32.mrf.mxu0
  %v4014 = vadd.f32 0.0, %v4013
  %v4015 = vpop.f32.mrf.mxu0
  %4016 = vmatprep.mubr.f32.mxu0 0.0
  %4017 = vmatmul.mubr.f32.gmra.mxu0 %v3834
  %v4018 = vpop.f32.mrf.mxu0
  %v4019 = vadd.f32 0.0, %v4018
  %v4020 = vpop.f32.mrf.mxu0
  %4021 = vmatprep.mubr.f32.mxu0 0.0
  %4022 = vmatmul.mubr.f32.gmra.mxu0 %v3837
  %v4023 = vpop.f32.mrf.mxu0
  %v4024 = vadd.f32 0.0, %v4023
  %v4025 = vpop.f32.mrf.mxu0
  %4026 = vmatprep.mubr.f32.mxu0 0.0
  %4027 = vmatmul.mubr.f32.gmra.mxu0 %v3840
  %v4028 = vpop.f32.mrf.mxu0
  %v4029 = vadd.f32 0.0, %v4028
  %v4030 = vpop.f32.mrf.mxu0
  %4031 = vdwg.mxu0
  %v4032 = vadd.f32 %v3490, %v3909
  %v4033 = vadd.f32 %v3491, %v3914
  %v4034 = vadd.f32 %v3492, %v3919
  %v4035 = vadd.f32 %v3493, %v3924
  %v4036 = vadd.f32 %v3494, %v3929
  %v4037 = vadd.f32 %v3495, %v3934
  %v4038 = vadd.f32 %v3496, %v3939
  %v4039 = vadd.f32 %v3497, %v3944
  %v4040 = vadd.f32 %v3498, %v3949
  %v4041 = vadd.f32 %v3499, %v3954
  %v4042 = vadd.f32 %v3500, %v3959
  %v4043 = vadd.f32 %v3501, %v3964
  %v4044 = vadd.f32 %v3502, %v3969
  %v4045 = vadd.f32 %v3503, %v3974
  %v4046 = vadd.f32 %v3504, %v3979
  %v4047 = vadd.f32 %v3505, %v3984
  %v4048 = vadd.f32 %v3506, %v3989
  %v4049 = vadd.f32 %v3507, %v3994
  %v4050 = vadd.f32 %v3508, %v3999
  %v4051 = vadd.f32 %v3509, %v4004
  %v4052 = vadd.f32 %v3510, %v4009
  %v4053 = vadd.f32 %v3511, %v4014
  %v4054 = vadd.f32 %v3512, %v4019
  %v4055 = vadd.f32 %v3513, %v4024
  %v4056 = vadd.f32 %v3514, %v4029
  %s4057 = scalar_lea.vmem %s2, 280
  %v4058 = vld [vmem:[%s4057] sm:$0xff]
  %v4059 = vld [vmem:[%s4057 + $0x8] sm:$0xff]
  %v4060 = vld [vmem:[%s4057 + $0x10] sm:$0xff]
  %v4061 = vld [vmem:[%s4057 + $0x18] sm:$0xff]
  %v4062 = vld [vmem:[%s4057 + $0x20] sm:$0xff]
  %4063 = vmatprep.subr.mxu0 0.0
  %4064 = vmatpush1.msra.mxu0 0.0
  %4065 = vmatprep.subr.mxu0 0.0
  %4066 = vmatpush1.msra.mxu0 0.0
  %4067 = vmatprep.subr.mxu0 0.0
  %4068 = vmatpush1.msra.mxu0 0.0
  %4069 = vmatprep.subr.mxu0 0.0
  %4070 = vmatpush1.msra.mxu0 0.0
  %4071 = vmatprep.subr.mxu0 0.0
  %4072 = vmatpush1.msra.mxu0 0.0
  %4073 = vmatprep.subr.mxu0 0.0
  %4074 = vmatpush1.msra.mxu0 0.0
  %4075 = vmatprep.subr.mxu0 0.0
  %4076 = vmatpush1.msra.mxu0 0.0
  %4077 = vmatprep.subr.mxu0 0.0
  %4078 = vmatpush1.msra.mxu0 0.0
  %4079 = vmatprep.subr.mxu0 0.0
  %4080 = vmatpush1.msra.mxu0 0.0
  %4081 = vmatprep.subr.mxu0 0.0
  %4082 = vmatpush1.msra.mxu0 0.0
  %4083 = vmatprep.subr.mxu0 0.0
  %4084 = vmatpush1.msra.mxu0 0.0
  %4085 = vmatprep.subr.mxu0 0.0
  %4086 = vmatpush1.msra.mxu0 %v4062
  %4087 = vmatprep.subr.mxu0 0.0
  %4088 = vmatpush1.msra.mxu0 %v4061
  %4089 = vmatprep.subr.mxu0 0.0
  %4090 = vmatpush1.msra.mxu0 %v4060
  %4091 = vmatprep.subr.mxu0 0.0
  %4092 = vmatpush1.msra.mxu0 %v4059
  %4093 = vmatprep.subr.mxu0 0.0
  %4094 = vmatpush1.msra.mxu0 %v4058
  %4095 = vmatprep.subr.mxu0 0.0
  %4096 = vmatpush2.msra.mxu0 0.0
  %4097 = vmatprep.subr.mxu0 0.0
  %4098 = vmatpush2.msra.mxu0 0.0
  %4099 = vmatprep.subr.mxu0 0.0
  %4100 = vmatpush2.msra.mxu0 0.0
  %4101 = vmatprep.subr.mxu0 0.0
  %4102 = vmatpush2.msra.mxu0 0.0
  %4103 = vmatprep.subr.mxu0 0.0
  %4104 = vmatpush2.msra.mxu0 0.0
  %4105 = vmatprep.subr.mxu0 0.0
  %4106 = vmatpush2.msra.mxu0 0.0
  %4107 = vmatprep.subr.mxu0 0.0
  %4108 = vmatpush2.msra.mxu0 0.0
  %4109 = vmatprep.subr.mxu0 0.0
  %4110 = vmatpush2.msra.mxu0 0.0
  %4111 = vmatprep.subr.mxu0 0.0
  %4112 = vmatpush2.msra.mxu0 0.0
  %4113 = vmatprep.subr.mxu0 0.0
  %4114 = vmatpush2.msra.mxu0 0.0
  %4115 = vmatprep.subr.mxu0 0.0
  %4116 = vmatpush2.msra.mxu0 0.0
  %4117 = vmatprep.subr.mxu0 0.0
  %4118 = vmatpush2.msra.mxu0 0.0
  %4119 = vmatprep.subr.mxu0 0.0
  %4120 = vmatpush2.msra.mxu0 0.0
  %4121 = vmatprep.subr.mxu0 0.0
  %4122 = vmatpush2.msra.mxu0 0.0
  %4123 = vmatprep.subr.mxu0 0.0
  %4124 = vmatpush2.msra.mxu0 0.0
  %4125 = vmatprep.subr.mxu0 0.0
  %4126 = vmatpush2.msra.mxu0 0.0
  %4127 = vmatprep.mubr.f32.mxu0 0.0
  %4128 = vmatmul.mubr.f32.gmra.mxu0 %v3768
  %v4129 = vpop.f32.mrf.mxu0
  %v4130 = vadd.f32 0.0, %v4129
  %v4131 = vpop.f32.mrf.mxu0
  %4132 = vmatprep.mubr.f32.mxu0 0.0
  %4133 = vmatmul.mubr.f32.gmra.mxu0 %v3771
  %v4134 = vpop.f32.mrf.mxu0
  %v4135 = vadd.f32 0.0, %v4134
  %v4136 = vpop.f32.mrf.mxu0
  %4137 = vmatprep.mubr.f32.mxu0 0.0
  %4138 = vmatmul.mubr.f32.gmra.mxu0 %v3774
  %v4139 = vpop.f32.mrf.mxu0
  %v4140 = vadd.f32 0.0, %v4139
  %v4141 = vpop.f32.mrf.mxu0
  %4142 = vmatprep.mubr.f32.mxu0 0.0
  %4143 = vmatmul.mubr.f32.gmra.mxu0 %v3777
  %v4144 = vpop.f32.mrf.mxu0
  %v4145 = vadd.f32 0.0, %v4144
  %v4146 = vpop.f32.mrf.mxu0
  %4147 = vmatprep.mubr.f32.mxu0 0.0
  %4148 = vmatmul.mubr.f32.gmra.mxu0 %v3780
  %v4149 = vpop.f32.mrf.mxu0
  %v4150 = vadd.f32 0.0, %v4149
  %v4151 = vpop.f32.mrf.mxu0
  %4152 = vmatprep.mubr.f32.mxu0 0.0
  %4153 = vmatmul.mubr.f32.gmra.mxu0 %v3783
  %v4154 = vpop.f32.mrf.mxu0
  %v4155 = vadd.f32 0.0, %v4154
  %v4156 = vpop.f32.mrf.mxu0
  %4157 = vmatprep.mubr.f32.mxu0 0.0
  %4158 = vmatmul.mubr.f32.gmra.mxu0 %v3786
  %v4159 = vpop.f32.mrf.mxu0
  %v4160 = vadd.f32 0.0, %v4159
  %v4161 = vpop.f32.mrf.mxu0
  %4162 = vmatprep.mubr.f32.mxu0 0.0
  %4163 = vmatmul.mubr.f32.gmra.mxu0 %v3789
  %v4164 = vpop.f32.mrf.mxu0
  %v4165 = vadd.f32 0.0, %v4164
  %v4166 = vpop.f32.mrf.mxu0
  %4167 = vmatprep.mubr.f32.mxu0 0.0
  %4168 = vmatmul.mubr.f32.gmra.mxu0 %v3792
  %v4169 = vpop.f32.mrf.mxu0
  %v4170 = vadd.f32 0.0, %v4169
  %v4171 = vpop.f32.mrf.mxu0
  %4172 = vmatprep.mubr.f32.mxu0 0.0
  %4173 = vmatmul.mubr.f32.gmra.mxu0 %v3795
  %v4174 = vpop.f32.mrf.mxu0
  %v4175 = vadd.f32 0.0, %v4174
  %v4176 = vpop.f32.mrf.mxu0
  %4177 = vmatprep.mubr.f32.mxu0 0.0
  %4178 = vmatmul.mubr.f32.gmra.mxu0 %v3798
  %v4179 = vpop.f32.mrf.mxu0
  %v4180 = vadd.f32 0.0, %v4179
  %v4181 = vpop.f32.mrf.mxu0
  %4182 = vmatprep.mubr.f32.mxu0 0.0
  %4183 = vmatmul.mubr.f32.gmra.mxu0 %v3801
  %v4184 = vpop.f32.mrf.mxu0
  %v4185 = vadd.f32 0.0, %v4184
  %v4186 = vpop.f32.mrf.mxu0
  %4187 = vmatprep.mubr.f32.mxu0 0.0
  %4188 = vmatmul.mubr.f32.gmra.mxu0 %v3804
  %v4189 = vpop.f32.mrf.mxu0
  %v4190 = vadd.f32 0.0, %v4189
  %v4191 = vpop.f32.mrf.mxu0
  %4192 = vmatprep.mubr.f32.mxu0 0.0
  %4193 = vmatmul.mubr.f32.gmra.mxu0 %v3807
  %v4194 = vpop.f32.mrf.mxu0
  %v4195 = vadd.f32 0.0, %v4194
  %v4196 = vpop.f32.mrf.mxu0
  %4197 = vmatprep.mubr.f32.mxu0 0.0
  %4198 = vmatmul.mubr.f32.gmra.mxu0 %v3810
  %v4199 = vpop.f32.mrf.mxu0
  %v4200 = vadd.f32 0.0, %v4199
  %v4201 = vpop.f32.mrf.mxu0
  %4202 = vmatprep.mubr.f32.mxu0 0.0
  %4203 = vmatmul.mubr.f32.gmra.mxu0 %v3813
  %v4204 = vpop.f32.mrf.mxu0
  %v4205 = vadd.f32 0.0, %v4204
  %v4206 = vpop.f32.mrf.mxu0
  %4207 = vmatprep.mubr.f32.mxu0 0.0
  %4208 = vmatmul.mubr.f32.gmra.mxu0 %v3816
  %v4209 = vpop.f32.mrf.mxu0
  %v4210 = vadd.f32 0.0, %v4209
  %v4211 = vpop.f32.mrf.mxu0
  %4212 = vmatprep.mubr.f32.mxu0 0.0
  %4213 = vmatmul.mubr.f32.gmra.mxu0 %v3819
  %v4214 = vpop.f32.mrf.mxu0
  %v4215 = vadd.f32 0.0, %v4214
  %v4216 = vpop.f32.mrf.mxu0
  %4217 = vmatprep.mubr.f32.mxu0 0.0
  %4218 = vmatmul.mubr.f32.gmra.mxu0 %v3822
  %v4219 = vpop.f32.mrf.mxu0
  %v4220 = vadd.f32 0.0, %v4219
  %v4221 = vpop.f32.mrf.mxu0
  %4222 = vmatprep.mubr.f32.mxu0 0.0
  %4223 = vmatmul.mubr.f32.gmra.mxu0 %v3825
  %v4224 = vpop.f32.mrf.mxu0
  %v4225 = vadd.f32 0.0, %v4224
  %v4226 = vpop.f32.mrf.mxu0
  %4227 = vmatprep.mubr.f32.mxu0 0.0
  %4228 = vmatmul.mubr.f32.gmra.mxu0 %v3828
  %v4229 = vpop.f32.mrf.mxu0
  %v4230 = vadd.f32 0.0, %v4229
  %v4231 = vpop.f32.mrf.mxu0
  %4232 = vmatprep.mubr.f32.mxu0 0.0
  %4233 = vmatmul.mubr.f32.gmra.mxu0 %v3831
  %v4234 = vpop.f32.mrf.mxu0
  %v4235 = vadd.f32 0.0, %v4234
  %v4236 = vpop.f32.mrf.mxu0
  %4237 = vmatprep.mubr.f32.mxu0 0.0
  %4238 = vmatmul.mubr.f32.gmra.mxu0 %v3834
  %v4239 = vpop.f32.mrf.mxu0
  %v4240 = vadd.f32 0.0, %v4239
  %v4241 = vpop.f32.mrf.mxu0
  %4242 = vmatprep.mubr.f32.mxu0 0.0
  %4243 = vmatmul.mubr.f32.gmra.mxu0 %v3837
  %v4244 = vpop.f32.mrf.mxu0
  %v4245 = vadd.f32 0.0, %v4244
  %v4246 = vpop.f32.mrf.mxu0
  %4247 = vmatprep.mubr.f32.mxu0 0.0
  %4248 = vmatmul.mubr.f32.gmra.mxu0 %v3840
  %v4249 = vpop.f32.mrf.mxu0
  %v4250 = vadd.f32 0.0, %v4249
  %v4251 = vpop.f32.mrf.mxu0
  %4252 = vdwg.mxu0
  %v4253 = vadd.f32 %v3711, %v4130
  %v4254 = vadd.f32 %v3712, %v4135
  %v4255 = vadd.f32 %v3713, %v4140
  %v4256 = vadd.f32 %v3714, %v4145
  %v4257 = vadd.f32 %v3715, %v4150
  %v4258 = vadd.f32 %v3716, %v4155
  %v4259 = vadd.f32 %v3717, %v4160
  %v4260 = vadd.f32 %v3718, %v4165
  %v4261 = vadd.f32 %v3719, %v4170
  %v4262 = vadd.f32 %v3720, %v4175
  %v4263 = vadd.f32 %v3721, %v4180
  %v4264 = vadd.f32 %v3722, %v4185
  %v4265 = vadd.f32 %v3723, %v4190
  %v4266 = vadd.f32 %v3724, %v4195
  %v4267 = vadd.f32 %v3725, %v4200
  %v4268 = vadd.f32 %v3726, %v4205
  %v4269 = vadd.f32 %v3727, %v4210
  %v4270 = vadd.f32 %v3728, %v4215
  %v4271 = vadd.f32 %v3729, %v4220
  %v4272 = vadd.f32 %v3730, %v4225
  %v4273 = vadd.f32 %v3731, %v4230
  %v4274 = vadd.f32 %v3732, %v4235
  %v4275 = vadd.f32 %v3733, %v4240
  %v4276 = vadd.f32 %v3734, %v4245
  %v4277 = vadd.f32 %v3735, %v4250
  %v4278 = vld [vmem:[%s0 + $0x1b] sm:$0xff]
  %v4279 = vld [vmem:[%s0 + $0x23] sm:$0xff]
  %v4280 = vld [vmem:[%s0 + $0x2b] sm:$0xff]
  %v4281 = vld [vmem:[%s0 + $0x33] sm:$0xff]
  %v4282 = vld [vmem:[%s0 + $0x3b] sm:$0xff]
  %v4283 = vld [vmem:[%s0 + $0x43] sm:$0xff]
  %v4284 = vld [vmem:[%s0 + $0x4b] sm:$0xff]
  %v4285 = vld [vmem:[%s0 + $0x53] sm:$0xff]
  %v4286 = vld [vmem:[%s0 + $0x5b] sm:$0xff]
  %v4287 = vld [vmem:[%s0 + $0x63] sm:$0xff]
  %v4288 = vld [vmem:[%s0 + $0x6b] sm:$0xff]
  %v4289 = vld [vmem:[%s0 + $0x73] sm:$0xff]
  %v4290 = vld [vmem:[%s0 + $0x7b] sm:$0xff]
  %v4291 = vld [vmem:[%s0 + $0x83] sm:$0xff]
  %v4292 = vld [vmem:[%s0 + $0x8b] sm:$0xff]
  %v4293 = vld [vmem:[%s0 + $0x93] sm:$0xff]
  %v4294 = vld [vmem:[%s0 + $0x9b] sm:$0xff]
  %v4295 = vld [vmem:[%s0 + $0xa3] sm:$0xff]
  %v4296 = vld [vmem:[%s0 + $0xab] sm:$0xff]
  %v4297 = vld [vmem:[%s0 + $0xb3] sm:$0xff]
  %v4298 = vld [vmem:[%s0 + $0xbb] sm:$0xff]
  %v4299 = vld [vmem:[%s0 + $0xc3] sm:$0xff]
  %v4300 = vld [vmem:[%s0 + $0xcb] sm:$0xff]
  %v4301 = vld [vmem:[%s0 + $0xd3] sm:$0xff]
  %v4302 = vld [vmem:[%s0 + $0xdb] sm:$0xff]
  %s4303 = scalar_lea.vmem %s1, 320
  %v4304 = vld [vmem:[%s4303] sm:$0xff]
  %v4305 = vld [vmem:[%s4303 + $0x8] sm:$0xff]
  %v4306 = vld [vmem:[%s4303 + $0x10] sm:$0xff]
  %v4307 = vld [vmem:[%s4303 + $0x18] sm:$0xff]
  %v4308 = vld [vmem:[%s4303 + $0x20] sm:$0xff]
  %v4310 = vsel %vm109, %v4278, 0
  %v4313 = vsel %vm109, %v4279, 0
  %v4316 = vsel %vm109, %v4280, 0
  %v4319 = vsel %vm109, %v4281, 0
  %v4322 = vsel %vm109, %v4282, 0
  %v4325 = vsel %vm109, %v4283, 0
  %v4328 = vsel %vm109, %v4284, 0
  %v4331 = vsel %vm109, %v4285, 0
  %v4334 = vsel %vm109, %v4286, 0
  %v4337 = vsel %vm109, %v4287, 0
  %v4340 = vsel %vm109, %v4288, 0
  %v4343 = vsel %vm109, %v4289, 0
  %v4346 = vsel %vm109, %v4290, 0
  %v4349 = vsel %vm109, %v4291, 0
  %v4352 = vsel %vm109, %v4292, 0
  %v4355 = vsel %vm109, %v4293, 0
  %v4358 = vsel %vm109, %v4294, 0
  %v4361 = vsel %vm109, %v4295, 0
  %v4364 = vsel %vm109, %v4296, 0
  %v4367 = vsel %vm109, %v4297, 0
  %v4370 = vsel %vm109, %v4298, 0
  %v4373 = vsel %vm109, %v4299, 0
  %v4376 = vsel %vm109, %v4300, 0
  %v4379 = vsel %vm109, %v4301, 0
  %v4382 = vsel %vm109, %v4302, 0
  %4384 = vmatprep.subr.mxu0 0.0
  %4385 = vmatpush1.msra.mxu0 0.0
  %4386 = vmatprep.subr.mxu0 0.0
  %4387 = vmatpush1.msra.mxu0 0.0
  %4388 = vmatprep.subr.mxu0 0.0
  %4389 = vmatpush1.msra.mxu0 0.0
  %4390 = vmatprep.subr.mxu0 0.0
  %4391 = vmatpush1.msra.mxu0 0.0
  %4392 = vmatprep.subr.mxu0 0.0
  %4393 = vmatpush1.msra.mxu0 0.0
  %4394 = vmatprep.subr.mxu0 0.0
  %4395 = vmatpush1.msra.mxu0 0.0
  %4396 = vmatprep.subr.mxu0 0.0
  %4397 = vmatpush1.msra.mxu0 0.0
  %4398 = vmatprep.subr.mxu0 0.0
  %4399 = vmatpush1.msra.mxu0 0.0
  %4400 = vmatprep.subr.mxu0 0.0
  %4401 = vmatpush1.msra.mxu0 0.0
  %4402 = vmatprep.subr.mxu0 0.0
  %4403 = vmatpush1.msra.mxu0 0.0
  %4404 = vmatprep.subr.mxu0 0.0
  %4405 = vmatpush1.msra.mxu0 0.0
  %4406 = vmatprep.subr.mxu0 0.0
  %4407 = vmatpush1.msra.mxu0 %v4308
  %4408 = vmatprep.subr.mxu0 0.0
  %4409 = vmatpush1.msra.mxu0 %v4307
  %4410 = vmatprep.subr.mxu0 0.0
  %4411 = vmatpush1.msra.mxu0 %v4306
  %4412 = vmatprep.subr.mxu0 0.0
  %4413 = vmatpush1.msra.mxu0 %v4305
  %4414 = vmatprep.subr.mxu0 0.0
  %4415 = vmatpush1.msra.mxu0 %v4304
  %4416 = vmatprep.subr.mxu0 0.0
  %4417 = vmatpush2.msra.mxu0 0.0
  %4418 = vmatprep.subr.mxu0 0.0
  %4419 = vmatpush2.msra.mxu0 0.0
  %4420 = vmatprep.subr.mxu0 0.0
  %4421 = vmatpush2.msra.mxu0 0.0
  %4422 = vmatprep.subr.mxu0 0.0
  %4423 = vmatpush2.msra.mxu0 0.0
  %4424 = vmatprep.subr.mxu0 0.0
  %4425 = vmatpush2.msra.mxu0 0.0
  %4426 = vmatprep.subr.mxu0 0.0
  %4427 = vmatpush2.msra.mxu0 0.0
  %4428 = vmatprep.subr.mxu0 0.0
  %4429 = vmatpush2.msra.mxu0 0.0
  %4430 = vmatprep.subr.mxu0 0.0
  %4431 = vmatpush2.msra.mxu0 0.0
  %4432 = vmatprep.subr.mxu0 0.0
  %4433 = vmatpush2.msra.mxu0 0.0
  %4434 = vmatprep.subr.mxu0 0.0
  %4435 = vmatpush2.msra.mxu0 0.0
  %4436 = vmatprep.subr.mxu0 0.0
  %4437 = vmatpush2.msra.mxu0 0.0
  %4438 = vmatprep.subr.mxu0 0.0
  %4439 = vmatpush2.msra.mxu0 0.0
  %4440 = vmatprep.subr.mxu0 0.0
  %4441 = vmatpush2.msra.mxu0 0.0
  %4442 = vmatprep.subr.mxu0 0.0
  %4443 = vmatpush2.msra.mxu0 0.0
  %4444 = vmatprep.subr.mxu0 0.0
  %4445 = vmatpush2.msra.mxu0 0.0
  %4446 = vmatprep.subr.mxu0 0.0
  %4447 = vmatpush2.msra.mxu0 0.0
  %4448 = vmatprep.mubr.f32.mxu0 0.0
  %4449 = vmatmul.mubr.f32.gmra.mxu0 %v4310
  %v4450 = vpop.f32.mrf.mxu0
  %v4451 = vadd.f32 0.0, %v4450
  %v4452 = vpop.f32.mrf.mxu0
  %4453 = vmatprep.mubr.f32.mxu0 0.0
  %4454 = vmatmul.mubr.f32.gmra.mxu0 %v4313
  %v4455 = vpop.f32.mrf.mxu0
  %v4456 = vadd.f32 0.0, %v4455
  %v4457 = vpop.f32.mrf.mxu0
  %4458 = vmatprep.mubr.f32.mxu0 0.0
  %4459 = vmatmul.mubr.f32.gmra.mxu0 %v4316
  %v4460 = vpop.f32.mrf.mxu0
  %v4461 = vadd.f32 0.0, %v4460
  %v4462 = vpop.f32.mrf.mxu0
  %4463 = vmatprep.mubr.f32.mxu0 0.0
  %4464 = vmatmul.mubr.f32.gmra.mxu0 %v4319
  %v4465 = vpop.f32.mrf.mxu0
  %v4466 = vadd.f32 0.0, %v4465
  %v4467 = vpop.f32.mrf.mxu0
  %4468 = vmatprep.mubr.f32.mxu0 0.0
  %4469 = vmatmul.mubr.f32.gmra.mxu0 %v4322
  %v4470 = vpop.f32.mrf.mxu0
  %v4471 = vadd.f32 0.0, %v4470
  %v4472 = vpop.f32.mrf.mxu0
  %4473 = vmatprep.mubr.f32.mxu0 0.0
  %4474 = vmatmul.mubr.f32.gmra.mxu0 %v4325
  %v4475 = vpop.f32.mrf.mxu0
  %v4476 = vadd.f32 0.0, %v4475
  %v4477 = vpop.f32.mrf.mxu0
  %4478 = vmatprep.mubr.f32.mxu0 0.0
  %4479 = vmatmul.mubr.f32.gmra.mxu0 %v4328
  %v4480 = vpop.f32.mrf.mxu0
  %v4481 = vadd.f32 0.0, %v4480
  %v4482 = vpop.f32.mrf.mxu0
  %4483 = vmatprep.mubr.f32.mxu0 0.0
  %4484 = vmatmul.mubr.f32.gmra.mxu0 %v4331
  %v4485 = vpop.f32.mrf.mxu0
  %v4486 = vadd.f32 0.0, %v4485
  %v4487 = vpop.f32.mrf.mxu0
  %4488 = vmatprep.mubr.f32.mxu0 0.0
  %4489 = vmatmul.mubr.f32.gmra.mxu0 %v4334
  %v4490 = vpop.f32.mrf.mxu0
  %v4491 = vadd.f32 0.0, %v4490
  %v4492 = vpop.f32.mrf.mxu0
  %4493 = vmatprep.mubr.f32.mxu0 0.0
  %4494 = vmatmul.mubr.f32.gmra.mxu0 %v4337
  %v4495 = vpop.f32.mrf.mxu0
  %v4496 = vadd.f32 0.0, %v4495
  %v4497 = vpop.f32.mrf.mxu0
  %4498 = vmatprep.mubr.f32.mxu0 0.0
  %4499 = vmatmul.mubr.f32.gmra.mxu0 %v4340
  %v4500 = vpop.f32.mrf.mxu0
  %v4501 = vadd.f32 0.0, %v4500
  %v4502 = vpop.f32.mrf.mxu0
  %4503 = vmatprep.mubr.f32.mxu0 0.0
  %4504 = vmatmul.mubr.f32.gmra.mxu0 %v4343
  %v4505 = vpop.f32.mrf.mxu0
  %v4506 = vadd.f32 0.0, %v4505
  %v4507 = vpop.f32.mrf.mxu0
  %4508 = vmatprep.mubr.f32.mxu0 0.0
  %4509 = vmatmul.mubr.f32.gmra.mxu0 %v4346
  %v4510 = vpop.f32.mrf.mxu0
  %v4511 = vadd.f32 0.0, %v4510
  %v4512 = vpop.f32.mrf.mxu0
  %4513 = vmatprep.mubr.f32.mxu0 0.0
  %4514 = vmatmul.mubr.f32.gmra.mxu0 %v4349
  %v4515 = vpop.f32.mrf.mxu0
  %v4516 = vadd.f32 0.0, %v4515
  %v4517 = vpop.f32.mrf.mxu0
  %4518 = vmatprep.mubr.f32.mxu0 0.0
  %4519 = vmatmul.mubr.f32.gmra.mxu0 %v4352
  %v4520 = vpop.f32.mrf.mxu0
  %v4521 = vadd.f32 0.0, %v4520
  %v4522 = vpop.f32.mrf.mxu0
  %4523 = vmatprep.mubr.f32.mxu0 0.0
  %4524 = vmatmul.mubr.f32.gmra.mxu0 %v4355
  %v4525 = vpop.f32.mrf.mxu0
  %v4526 = vadd.f32 0.0, %v4525
  %v4527 = vpop.f32.mrf.mxu0
  %4528 = vmatprep.mubr.f32.mxu0 0.0
  %4529 = vmatmul.mubr.f32.gmra.mxu0 %v4358
  %v4530 = vpop.f32.mrf.mxu0
  %v4531 = vadd.f32 0.0, %v4530
  %v4532 = vpop.f32.mrf.mxu0
  %4533 = vmatprep.mubr.f32.mxu0 0.0
  %4534 = vmatmul.mubr.f32.gmra.mxu0 %v4361
  %v4535 = vpop.f32.mrf.mxu0
  %v4536 = vadd.f32 0.0, %v4535
  %v4537 = vpop.f32.mrf.mxu0
  %4538 = vmatprep.mubr.f32.mxu0 0.0
  %4539 = vmatmul.mubr.f32.gmra.mxu0 %v4364
  %v4540 = vpop.f32.mrf.mxu0
  %v4541 = vadd.f32 0.0, %v4540
  %v4542 = vpop.f32.mrf.mxu0
  %4543 = vmatprep.mubr.f32.mxu0 0.0
  %4544 = vmatmul.mubr.f32.gmra.mxu0 %v4367
  %v4545 = vpop.f32.mrf.mxu0
  %v4546 = vadd.f32 0.0, %v4545
  %v4547 = vpop.f32.mrf.mxu0
  %4548 = vmatprep.mubr.f32.mxu0 0.0
  %4549 = vmatmul.mubr.f32.gmra.mxu0 %v4370
  %v4550 = vpop.f32.mrf.mxu0
  %v4551 = vadd.f32 0.0, %v4550
  %v4552 = vpop.f32.mrf.mxu0
  %4553 = vmatprep.mubr.f32.mxu0 0.0
  %4554 = vmatmul.mubr.f32.gmra.mxu0 %v4373
  %v4555 = vpop.f32.mrf.mxu0
  %v4556 = vadd.f32 0.0, %v4555
  %v4557 = vpop.f32.mrf.mxu0
  %4558 = vmatprep.mubr.f32.mxu0 0.0
  %4559 = vmatmul.mubr.f32.gmra.mxu0 %v4376
  %v4560 = vpop.f32.mrf.mxu0
  %v4561 = vadd.f32 0.0, %v4560
  %v4562 = vpop.f32.mrf.mxu0
  %4563 = vmatprep.mubr.f32.mxu0 0.0
  %4564 = vmatmul.mubr.f32.gmra.mxu0 %v4379
  %v4565 = vpop.f32.mrf.mxu0
  %v4566 = vadd.f32 0.0, %v4565
  %v4567 = vpop.f32.mrf.mxu0
  %4568 = vmatprep.mubr.f32.mxu0 0.0
  %4569 = vmatmul.mubr.f32.gmra.mxu0 %v4382
  %v4570 = vpop.f32.mrf.mxu0
  %v4571 = vadd.f32 0.0, %v4570
  %v4572 = vpop.f32.mrf.mxu0
  %4573 = vdwg.mxu0
  %v4574 = vadd.f32 %v4032, %v4451
  %v4575 = vadd.f32 %v4033, %v4456
  %v4576 = vadd.f32 %v4034, %v4461
  %v4577 = vadd.f32 %v4035, %v4466
  %v4578 = vadd.f32 %v4036, %v4471
  %v4579 = vadd.f32 %v4037, %v4476
  %v4580 = vadd.f32 %v4038, %v4481
  %v4581 = vadd.f32 %v4039, %v4486
  %v4582 = vadd.f32 %v4040, %v4491
  %v4583 = vadd.f32 %v4041, %v4496
  %v4584 = vadd.f32 %v4042, %v4501
  %v4585 = vadd.f32 %v4043, %v4506
  %v4586 = vadd.f32 %v4044, %v4511
  %v4587 = vadd.f32 %v4045, %v4516
  %v4588 = vadd.f32 %v4046, %v4521
  %v4589 = vadd.f32 %v4047, %v4526
  %v4590 = vadd.f32 %v4048, %v4531
  %v4591 = vadd.f32 %v4049, %v4536
  %v4592 = vadd.f32 %v4050, %v4541
  %v4593 = vadd.f32 %v4051, %v4546
  %v4594 = vadd.f32 %v4052, %v4551
  %v4595 = vadd.f32 %v4053, %v4556
  %v4596 = vadd.f32 %v4054, %v4561
  %v4597 = vadd.f32 %v4055, %v4566
  %v4598 = vadd.f32 %v4056, %v4571
  %s4599 = scalar_lea.vmem %s2, 320
  %v4600 = vld [vmem:[%s4599] sm:$0xff]
  %v4601 = vld [vmem:[%s4599 + $0x8] sm:$0xff]
  %v4602 = vld [vmem:[%s4599 + $0x10] sm:$0xff]
  %v4603 = vld [vmem:[%s4599 + $0x18] sm:$0xff]
  %v4604 = vld [vmem:[%s4599 + $0x20] sm:$0xff]
  %4605 = vmatprep.subr.mxu0 0.0
  %4606 = vmatpush1.msra.mxu0 0.0
  %4607 = vmatprep.subr.mxu0 0.0
  %4608 = vmatpush1.msra.mxu0 0.0
  %4609 = vmatprep.subr.mxu0 0.0
  %4610 = vmatpush1.msra.mxu0 0.0
  %4611 = vmatprep.subr.mxu0 0.0
  %4612 = vmatpush1.msra.mxu0 0.0
  %4613 = vmatprep.subr.mxu0 0.0
  %4614 = vmatpush1.msra.mxu0 0.0
  %4615 = vmatprep.subr.mxu0 0.0
  %4616 = vmatpush1.msra.mxu0 0.0
  %4617 = vmatprep.subr.mxu0 0.0
  %4618 = vmatpush1.msra.mxu0 0.0
  %4619 = vmatprep.subr.mxu0 0.0
  %4620 = vmatpush1.msra.mxu0 0.0
  %4621 = vmatprep.subr.mxu0 0.0
  %4622 = vmatpush1.msra.mxu0 0.0
  %4623 = vmatprep.subr.mxu0 0.0
  %4624 = vmatpush1.msra.mxu0 0.0
  %4625 = vmatprep.subr.mxu0 0.0
  %4626 = vmatpush1.msra.mxu0 0.0
  %4627 = vmatprep.subr.mxu0 0.0
  %4628 = vmatpush1.msra.mxu0 %v4604
  %4629 = vmatprep.subr.mxu0 0.0
  %4630 = vmatpush1.msra.mxu0 %v4603
  %4631 = vmatprep.subr.mxu0 0.0
  %4632 = vmatpush1.msra.mxu0 %v4602
  %4633 = vmatprep.subr.mxu0 0.0
  %4634 = vmatpush1.msra.mxu0 %v4601
  %4635 = vmatprep.subr.mxu0 0.0
  %4636 = vmatpush1.msra.mxu0 %v4600
  %4637 = vmatprep.subr.mxu0 0.0
  %4638 = vmatpush2.msra.mxu0 0.0
  %4639 = vmatprep.subr.mxu0 0.0
  %4640 = vmatpush2.msra.mxu0 0.0
  %4641 = vmatprep.subr.mxu0 0.0
  %4642 = vmatpush2.msra.mxu0 0.0
  %4643 = vmatprep.subr.mxu0 0.0
  %4644 = vmatpush2.msra.mxu0 0.0
  %4645 = vmatprep.subr.mxu0 0.0
  %4646 = vmatpush2.msra.mxu0 0.0
  %4647 = vmatprep.subr.mxu0 0.0
  %4648 = vmatpush2.msra.mxu0 0.0
  %4649 = vmatprep.subr.mxu0 0.0
  %4650 = vmatpush2.msra.mxu0 0.0
  %4651 = vmatprep.subr.mxu0 0.0
  %4652 = vmatpush2.msra.mxu0 0.0
  %4653 = vmatprep.subr.mxu0 0.0
  %4654 = vmatpush2.msra.mxu0 0.0
  %4655 = vmatprep.subr.mxu0 0.0
  %4656 = vmatpush2.msra.mxu0 0.0
  %4657 = vmatprep.subr.mxu0 0.0
  %4658 = vmatpush2.msra.mxu0 0.0
  %4659 = vmatprep.subr.mxu0 0.0
  %4660 = vmatpush2.msra.mxu0 0.0
  %4661 = vmatprep.subr.mxu0 0.0
  %4662 = vmatpush2.msra.mxu0 0.0
  %4663 = vmatprep.subr.mxu0 0.0
  %4664 = vmatpush2.msra.mxu0 0.0
  %4665 = vmatprep.subr.mxu0 0.0
  %4666 = vmatpush2.msra.mxu0 0.0
  %4667 = vmatprep.subr.mxu0 0.0
  %4668 = vmatpush2.msra.mxu0 0.0
  %4669 = vmatprep.mubr.f32.mxu0 0.0
  %4670 = vmatmul.mubr.f32.gmra.mxu0 %v4310
  %v4671 = vpop.f32.mrf.mxu0
  %v4672 = vadd.f32 0.0, %v4671
  %v4673 = vpop.f32.mrf.mxu0
  %4674 = vmatprep.mubr.f32.mxu0 0.0
  %4675 = vmatmul.mubr.f32.gmra.mxu0 %v4313
  %v4676 = vpop.f32.mrf.mxu0
  %v4677 = vadd.f32 0.0, %v4676
  %v4678 = vpop.f32.mrf.mxu0
  %4679 = vmatprep.mubr.f32.mxu0 0.0
  %4680 = vmatmul.mubr.f32.gmra.mxu0 %v4316
  %v4681 = vpop.f32.mrf.mxu0
  %v4682 = vadd.f32 0.0, %v4681
  %v4683 = vpop.f32.mrf.mxu0
  %4684 = vmatprep.mubr.f32.mxu0 0.0
  %4685 = vmatmul.mubr.f32.gmra.mxu0 %v4319
  %v4686 = vpop.f32.mrf.mxu0
  %v4687 = vadd.f32 0.0, %v4686
  %v4688 = vpop.f32.mrf.mxu0
  %4689 = vmatprep.mubr.f32.mxu0 0.0
  %4690 = vmatmul.mubr.f32.gmra.mxu0 %v4322
  %v4691 = vpop.f32.mrf.mxu0
  %v4692 = vadd.f32 0.0, %v4691
  %v4693 = vpop.f32.mrf.mxu0
  %4694 = vmatprep.mubr.f32.mxu0 0.0
  %4695 = vmatmul.mubr.f32.gmra.mxu0 %v4325
  %v4696 = vpop.f32.mrf.mxu0
  %v4697 = vadd.f32 0.0, %v4696
  %v4698 = vpop.f32.mrf.mxu0
  %4699 = vmatprep.mubr.f32.mxu0 0.0
  %4700 = vmatmul.mubr.f32.gmra.mxu0 %v4328
  %v4701 = vpop.f32.mrf.mxu0
  %v4702 = vadd.f32 0.0, %v4701
  %v4703 = vpop.f32.mrf.mxu0
  %4704 = vmatprep.mubr.f32.mxu0 0.0
  %4705 = vmatmul.mubr.f32.gmra.mxu0 %v4331
  %v4706 = vpop.f32.mrf.mxu0
  %v4707 = vadd.f32 0.0, %v4706
  %v4708 = vpop.f32.mrf.mxu0
  %4709 = vmatprep.mubr.f32.mxu0 0.0
  %4710 = vmatmul.mubr.f32.gmra.mxu0 %v4334
  %v4711 = vpop.f32.mrf.mxu0
  %v4712 = vadd.f32 0.0, %v4711
  %v4713 = vpop.f32.mrf.mxu0
  %4714 = vmatprep.mubr.f32.mxu0 0.0
  %4715 = vmatmul.mubr.f32.gmra.mxu0 %v4337
  %v4716 = vpop.f32.mrf.mxu0
  %v4717 = vadd.f32 0.0, %v4716
  %v4718 = vpop.f32.mrf.mxu0
  %4719 = vmatprep.mubr.f32.mxu0 0.0
  %4720 = vmatmul.mubr.f32.gmra.mxu0 %v4340
  %v4721 = vpop.f32.mrf.mxu0
  %v4722 = vadd.f32 0.0, %v4721
  %v4723 = vpop.f32.mrf.mxu0
  %4724 = vmatprep.mubr.f32.mxu0 0.0
  %4725 = vmatmul.mubr.f32.gmra.mxu0 %v4343
  %v4726 = vpop.f32.mrf.mxu0
  %v4727 = vadd.f32 0.0, %v4726
  %v4728 = vpop.f32.mrf.mxu0
  %4729 = vmatprep.mubr.f32.mxu0 0.0
  %4730 = vmatmul.mubr.f32.gmra.mxu0 %v4346
  %v4731 = vpop.f32.mrf.mxu0
  %v4732 = vadd.f32 0.0, %v4731
  %v4733 = vpop.f32.mrf.mxu0
  %4734 = vmatprep.mubr.f32.mxu0 0.0
  %4735 = vmatmul.mubr.f32.gmra.mxu0 %v4349
  %v4736 = vpop.f32.mrf.mxu0
  %v4737 = vadd.f32 0.0, %v4736
  %v4738 = vpop.f32.mrf.mxu0
  %4739 = vmatprep.mubr.f32.mxu0 0.0
  %4740 = vmatmul.mubr.f32.gmra.mxu0 %v4352
  %v4741 = vpop.f32.mrf.mxu0
  %v4742 = vadd.f32 0.0, %v4741
  %v4743 = vpop.f32.mrf.mxu0
  %4744 = vmatprep.mubr.f32.mxu0 0.0
  %4745 = vmatmul.mubr.f32.gmra.mxu0 %v4355
  %v4746 = vpop.f32.mrf.mxu0
  %v4747 = vadd.f32 0.0, %v4746
  %v4748 = vpop.f32.mrf.mxu0
  %4749 = vmatprep.mubr.f32.mxu0 0.0
  %4750 = vmatmul.mubr.f32.gmra.mxu0 %v4358
  %v4751 = vpop.f32.mrf.mxu0
  %v4752 = vadd.f32 0.0, %v4751
  %v4753 = vpop.f32.mrf.mxu0
  %4754 = vmatprep.mubr.f32.mxu0 0.0
  %4755 = vmatmul.mubr.f32.gmra.mxu0 %v4361
  %v4756 = vpop.f32.mrf.mxu0
  %v4757 = vadd.f32 0.0, %v4756
  %v4758 = vpop.f32.mrf.mxu0
  %4759 = vmatprep.mubr.f32.mxu0 0.0
  %4760 = vmatmul.mubr.f32.gmra.mxu0 %v4364
  %v4761 = vpop.f32.mrf.mxu0
  %v4762 = vadd.f32 0.0, %v4761
  %v4763 = vpop.f32.mrf.mxu0
  %4764 = vmatprep.mubr.f32.mxu0 0.0
  %4765 = vmatmul.mubr.f32.gmra.mxu0 %v4367
  %v4766 = vpop.f32.mrf.mxu0
  %v4767 = vadd.f32 0.0, %v4766
  %v4768 = vpop.f32.mrf.mxu0
  %4769 = vmatprep.mubr.f32.mxu0 0.0
  %4770 = vmatmul.mubr.f32.gmra.mxu0 %v4370
  %v4771 = vpop.f32.mrf.mxu0
  %v4772 = vadd.f32 0.0, %v4771
  %v4773 = vpop.f32.mrf.mxu0
  %4774 = vmatprep.mubr.f32.mxu0 0.0
  %4775 = vmatmul.mubr.f32.gmra.mxu0 %v4373
  %v4776 = vpop.f32.mrf.mxu0
  %v4777 = vadd.f32 0.0, %v4776
  %v4778 = vpop.f32.mrf.mxu0
  %4779 = vmatprep.mubr.f32.mxu0 0.0
  %4780 = vmatmul.mubr.f32.gmra.mxu0 %v4376
  %v4781 = vpop.f32.mrf.mxu0
  %v4782 = vadd.f32 0.0, %v4781
  %v4783 = vpop.f32.mrf.mxu0
  %4784 = vmatprep.mubr.f32.mxu0 0.0
  %4785 = vmatmul.mubr.f32.gmra.mxu0 %v4379
  %v4786 = vpop.f32.mrf.mxu0
  %v4787 = vadd.f32 0.0, %v4786
  %v4788 = vpop.f32.mrf.mxu0
  %4789 = vmatprep.mubr.f32.mxu0 0.0
  %4790 = vmatmul.mubr.f32.gmra.mxu0 %v4382
  %v4791 = vpop.f32.mrf.mxu0
  %v4792 = vadd.f32 0.0, %v4791
  %v4793 = vpop.f32.mrf.mxu0
  %4794 = vdwg.mxu0
  %v4795 = vadd.f32 %v4253, %v4672
  %v4796 = vadd.f32 %v4254, %v4677
  %v4797 = vadd.f32 %v4255, %v4682
  %v4798 = vadd.f32 %v4256, %v4687
  %v4799 = vadd.f32 %v4257, %v4692
  %v4800 = vadd.f32 %v4258, %v4697
  %v4801 = vadd.f32 %v4259, %v4702
  %v4802 = vadd.f32 %v4260, %v4707
  %v4803 = vadd.f32 %v4261, %v4712
  %v4804 = vadd.f32 %v4262, %v4717
  %v4805 = vadd.f32 %v4263, %v4722
  %v4806 = vadd.f32 %v4264, %v4727
  %v4807 = vadd.f32 %v4265, %v4732
  %v4808 = vadd.f32 %v4266, %v4737
  %v4809 = vadd.f32 %v4267, %v4742
  %v4810 = vadd.f32 %v4268, %v4747
  %v4811 = vadd.f32 %v4269, %v4752
  %v4812 = vadd.f32 %v4270, %v4757
  %v4813 = vadd.f32 %v4271, %v4762
  %v4814 = vadd.f32 %v4272, %v4767
  %v4815 = vadd.f32 %v4273, %v4772
  %v4816 = vadd.f32 %v4274, %v4777
  %v4817 = vadd.f32 %v4275, %v4782
  %v4818 = vadd.f32 %v4276, %v4787
  %v4819 = vadd.f32 %v4277, %v4792
  %v4820 = vld [vmem:[%s4] sm:$0x1]
  %v4822 = vlaneseq
  %v4823 = vshrl.u32 %v4822, 7
  %v4824 = vsub.s32 0, %v4823
  %v4825 = vrot.slane %v4820, %v4824
  %v4827 = vadd.f32 %v4574, %v4825
  %v4828 = vadd.f32 %v4575, %v4825
  %v4829 = vadd.f32 %v4576, %v4825
  %v4830 = vadd.f32 %v4577, %v4825
  %v4831 = vadd.f32 %v4578, %v4825
  %v4832 = vadd.f32 %v4579, %v4825
  %v4833 = vadd.f32 %v4580, %v4825
  %v4834 = vadd.f32 %v4581, %v4825
  %v4835 = vadd.f32 %v4582, %v4825
  %v4836 = vadd.f32 %v4583, %v4825
  %v4837 = vadd.f32 %v4584, %v4825
  %v4838 = vadd.f32 %v4585, %v4825
  %v4839 = vadd.f32 %v4586, %v4825
  %v4840 = vadd.f32 %v4587, %v4825
  %v4841 = vadd.f32 %v4588, %v4825
  %v4842 = vadd.f32 %v4589, %v4825
  %v4843 = vadd.f32 %v4590, %v4825
  %v4844 = vadd.f32 %v4591, %v4825
  %v4845 = vadd.f32 %v4592, %v4825
  %v4846 = vadd.f32 %v4593, %v4825
  %v4847 = vadd.f32 %v4594, %v4825
  %v4848 = vadd.f32 %v4595, %v4825
  %v4849 = vadd.f32 %v4596, %v4825
  %v4850 = vadd.f32 %v4597, %v4825
  %v4851 = vadd.f32 %v4598, %v4825
  %v4852 = vmax.f32 %v4827, 0.0
  %v4853 = vmax.f32 %v4828, 0.0
  %v4854 = vmax.f32 %v4829, 0.0
  %v4855 = vmax.f32 %v4830, 0.0
  %v4856 = vmax.f32 %v4831, 0.0
  %v4857 = vmax.f32 %v4832, 0.0
  %v4858 = vmax.f32 %v4833, 0.0
  %v4859 = vmax.f32 %v4834, 0.0
  %v4860 = vmax.f32 %v4835, 0.0
  %v4861 = vmax.f32 %v4836, 0.0
  %v4862 = vmax.f32 %v4837, 0.0
  %v4863 = vmax.f32 %v4838, 0.0
  %v4864 = vmax.f32 %v4839, 0.0
  %v4865 = vmax.f32 %v4840, 0.0
  %v4866 = vmax.f32 %v4841, 0.0
  %v4867 = vmax.f32 %v4842, 0.0
  %v4868 = vmax.f32 %v4843, 0.0
  %v4869 = vmax.f32 %v4844, 0.0
  %v4870 = vmax.f32 %v4845, 0.0
  %v4871 = vmax.f32 %v4846, 0.0
  %v4872 = vmax.f32 %v4847, 0.0
  %v4873 = vmax.f32 %v4848, 0.0
  %v4874 = vmax.f32 %v4849, 0.0
  %v4875 = vmax.f32 %v4850, 0.0
  %v4876 = vmax.f32 %v4851, 0.0
  %v4877 = vld [vmem:[%s6] sm:$0xff]
  %v4878 = vld [vmem:[%s6 + $0x8] sm:$0xff]
  %v4879 = vld [vmem:[%s6 + $0x10] sm:$0xff]
  %v4880 = vld [vmem:[%s6 + $0x18] sm:$0xff]
  %v4881 = vld [vmem:[%s6 + $0x20] sm:$0xff]
  %v4882 = vld [vmem:[%s6 + $0x28] sm:$0xff]
  %v4883 = vld [vmem:[%s6 + $0x30] sm:$0xff]
  %v4884 = vld [vmem:[%s6 + $0x38] sm:$0xff]
  %v4885 = vld [vmem:[%s6 + $0x40] sm:$0xff]
  %v4886 = vld [vmem:[%s6 + $0x48] sm:$0xff]
  %v4887 = vld [vmem:[%s6 + $0x50] sm:$0xff]
  %v4888 = vld [vmem:[%s6 + $0x58] sm:$0xff]
  %v4889 = vld [vmem:[%s6 + $0x60] sm:$0xff]
  %v4890 = vld [vmem:[%s6 + $0x68] sm:$0xff]
  %v4891 = vld [vmem:[%s6 + $0x70] sm:$0xff]
  %v4892 = vld [vmem:[%s6 + $0x78] sm:$0xff]
  %v4893 = vld [vmem:[%s6 + $0x80] sm:$0xff]
  %v4894 = vld [vmem:[%s6 + $0x88] sm:$0xff]
  %v4895 = vld [vmem:[%s6 + $0x90] sm:$0xff]
  %v4896 = vld [vmem:[%s6 + $0x98] sm:$0xff]
  %v4897 = vld [vmem:[%s6 + $0xa0] sm:$0xff]
  %v4898 = vld [vmem:[%s6 + $0xa8] sm:$0xff]
  %v4899 = vld [vmem:[%s6 + $0xb0] sm:$0xff]
  %v4900 = vld [vmem:[%s6 + $0xb8] sm:$0xff]
  %v4901 = vld [vmem:[%s6 + $0xc0] sm:$0xff]
  %v4902 = vmul.f32 %v4852, %v4877
  %v4903 = vmul.f32 %v4853, %v4878
  %v4904 = vmul.f32 %v4854, %v4879
  %v4905 = vmul.f32 %v4855, %v4880
  %v4906 = vmul.f32 %v4856, %v4881
  %v4907 = vmul.f32 %v4857, %v4882
  %v4908 = vmul.f32 %v4858, %v4883
  %v4909 = vmul.f32 %v4859, %v4884
  %v4910 = vmul.f32 %v4860, %v4885
  %v4911 = vmul.f32 %v4861, %v4886
  %v4912 = vmul.f32 %v4862, %v4887
  %v4913 = vmul.f32 %v4863, %v4888
  %v4914 = vmul.f32 %v4864, %v4889
  %v4915 = vmul.f32 %v4865, %v4890
  %v4916 = vmul.f32 %v4866, %v4891
  %v4917 = vmul.f32 %v4867, %v4892
  %v4918 = vmul.f32 %v4868, %v4893
  %v4919 = vmul.f32 %v4869, %v4894
  %v4920 = vmul.f32 %v4870, %v4895
  %v4921 = vmul.f32 %v4871, %v4896
  %v4922 = vmul.f32 %v4872, %v4897
  %v4923 = vmul.f32 %v4873, %v4898
  %v4924 = vmul.f32 %v4874, %v4899
  %v4925 = vmul.f32 %v4875, %v4900
  %v4926 = vmul.f32 %v4876, %v4901
  %vm4927 = vcmask 654336
  %4928 = vst.msk [vmem:[#allocation2] sm:$0xff] %vm4927, 0.0
  %4929 = vst.msk [vmem:[#allocation2 + $0x8] sm:$0xff] %vm4927, 0.0
  %4930 = vst.msk [vmem:[#allocation2 + $0x10] sm:$0xff] %vm4927, 0.0
  %4931 = vst.msk [vmem:[#allocation2 + $0x18] sm:$0xff] %vm4927, 0.0
  %4932 = vst.msk [vmem:[#allocation2 + $0x20] sm:$0xff] %vm4927, 0.0
  %4933 = vst.msk [vmem:[#allocation2 + $0x28] sm:$0xff] %vm4927, 0.0
  %4934 = vst.msk [vmem:[#allocation2 + $0x30] sm:$0xff] %vm4927, 0.0
  %4935 = vst.msk [vmem:[#allocation2 + $0x38] sm:$0xff] %vm4927, 0.0
  %4936 = vst.msk [vmem:[#allocation2 + $0x40] sm:$0xff] %vm4927, 0.0
  %4937 = vst.msk [vmem:[#allocation2 + $0x48] sm:$0xff] %vm4927, 0.0
  %4938 = vst.msk [vmem:[#allocation2 + $0x50] sm:$0xff] %vm4927, 0.0
  %4939 = vst.msk [vmem:[#allocation2 + $0x58] sm:$0xff] %vm4927, 0.0
  %4940 = vst.msk [vmem:[#allocation2 + $0x60] sm:$0xff] %vm4927, 0.0
  %4941 = vst.msk [vmem:[#allocation2 + $0x68] sm:$0xff] %vm4927, 0.0
  %4942 = vst.msk [vmem:[#allocation2 + $0x70] sm:$0xff] %vm4927, 0.0
  %4943 = vst.msk [vmem:[#allocation2 + $0x78] sm:$0xff] %vm4927, 0.0
  %4944 = vst.msk [vmem:[#allocation2 + $0x80] sm:$0xff] %vm4927, 0.0
  %4945 = vst.msk [vmem:[#allocation2 + $0x88] sm:$0xff] %vm4927, 0.0
  %4946 = vst.msk [vmem:[#allocation2 + $0x90] sm:$0xff] %vm4927, 0.0
  %4947 = vst.msk [vmem:[#allocation2 + $0x98] sm:$0xff] %vm4927, 0.0
  %4948 = vst.msk [vmem:[#allocation2 + $0xa0] sm:$0xff] %vm4927, 0.0
  %4949 = vst.msk [vmem:[#allocation2 + $0xa8] sm:$0xff] %vm4927, 0.0
  %4950 = vst.msk [vmem:[#allocation2 + $0xb0] sm:$0xff] %vm4927, 0.0
  %4951 = vst.msk [vmem:[#allocation2 + $0xb8] sm:$0xff] %vm4927, 0.0
  %4952 = vst.msk [vmem:[#allocation2 + $0xc0] sm:$0xff] %vm4927, 0.0
  %4953 = vst.msk [vmem:[#allocation2 + $0xc8] sm:$0xff] %vm4927, 0.0
  %4954 = vst.msk [vmem:[#allocation2 + $0xd0] sm:$0xff] %vm4927, 0.0
  %4955 = vst.msk [vmem:[#allocation2 + $0xd8] sm:$0xff] %vm4927, 0.0
  %4956 = vst.msk [vmem:[#allocation2 + $0xe0] sm:$0xff] %vm4927, 0.0
  %4957 = vst.msk [vmem:[#allocation2 + $0x10] sm:$0xff] %vm4927, %v4902
  %4958 = vst.msk [vmem:[#allocation2 + $0x18] sm:$0xff] %vm4927, %v4903
  %4959 = vst.msk [vmem:[#allocation2 + $0x20] sm:$0xff] %vm4927, %v4904
  %4960 = vst.msk [vmem:[#allocation2 + $0x28] sm:$0xff] %vm4927, %v4905
  %4961 = vst.msk [vmem:[#allocation2 + $0x30] sm:$0xff] %vm4927, %v4906
  %4962 = vst.msk [vmem:[#allocation2 + $0x38] sm:$0xff] %vm4927, %v4907
  %4963 = vst.msk [vmem:[#allocation2 + $0x40] sm:$0xff] %vm4927, %v4908
  %4964 = vst.msk [vmem:[#allocation2 + $0x48] sm:$0xff] %vm4927, %v4909
  %4965 = vst.msk [vmem:[#allocation2 + $0x50] sm:$0xff] %vm4927, %v4910
  %4966 = vst.msk [vmem:[#allocation2 + $0x58] sm:$0xff] %vm4927, %v4911
  %4967 = vst.msk [vmem:[#allocation2 + $0x60] sm:$0xff] %vm4927, %v4912
  %4968 = vst.msk [vmem:[#allocation2 + $0x68] sm:$0xff] %vm4927, %v4913
  %4969 = vst.msk [vmem:[#allocation2 + $0x70] sm:$0xff] %vm4927, %v4914
  %4970 = vst.msk [vmem:[#allocation2 + $0x78] sm:$0xff] %vm4927, %v4915
  %4971 = vst.msk [vmem:[#allocation2 + $0x80] sm:$0xff] %vm4927, %v4916
  %4972 = vst.msk [vmem:[#allocation2 + $0x88] sm:$0xff] %vm4927, %v4917
  %4973 = vst.msk [vmem:[#allocation2 + $0x90] sm:$0xff] %vm4927, %v4918
  %4974 = vst.msk [vmem:[#allocation2 + $0x98] sm:$0xff] %vm4927, %v4919
  %4975 = vst.msk [vmem:[#allocation2 + $0xa0] sm:$0xff] %vm4927, %v4920
  %4976 = vst.msk [vmem:[#allocation2 + $0xa8] sm:$0xff] %vm4927, %v4921
  %4977 = vst.msk [vmem:[#allocation2 + $0xb0] sm:$0xff] %vm4927, %v4922
  %4978 = vst.msk [vmem:[#allocation2 + $0xb8] sm:$0xff] %vm4927, %v4923
  %4979 = vst.msk [vmem:[#allocation2 + $0xc0] sm:$0xff] %vm4927, %v4924
  %4980 = vst.msk [vmem:[#allocation2 + $0xc8] sm:$0xff] %vm4927, %v4925
  %4981 = vst.msk [vmem:[#allocation2 + $0xd0] sm:$0xff] %vm4927, %v4926
  %v4982 = vld [vmem:[#allocation2 + $0x5] sm:$0xff]
  %v4983 = vld [vmem:[#allocation2 + $0xd] sm:$0xff]
  %v4984 = vld [vmem:[#allocation2 + $0x15] sm:$0xff]
  %v4985 = vld [vmem:[#allocation2 + $0x1d] sm:$0xff]
  %v4986 = vld [vmem:[#allocation2 + $0x25] sm:$0xff]
  %v4987 = vld [vmem:[#allocation2 + $0x2d] sm:$0xff]
  %v4988 = vld [vmem:[#allocation2 + $0x35] sm:$0xff]
  %v4989 = vld [vmem:[#allocation2 + $0x3d] sm:$0xff]
  %v4990 = vld [vmem:[#allocation2 + $0x45] sm:$0xff]
  %v4991 = vld [vmem:[#allocation2 + $0x4d] sm:$0xff]
  %v4992 = vld [vmem:[#allocation2 + $0x55] sm:$0xff]
  %v4993 = vld [vmem:[#allocation2 + $0x5d] sm:$0xff]
  %v4994 = vld [vmem:[#allocation2 + $0x65] sm:$0xff]
  %v4995 = vld [vmem:[#allocation2 + $0x6d] sm:$0xff]
  %v4996 = vld [vmem:[#allocation2 + $0x75] sm:$0xff]
  %v4997 = vld [vmem:[#allocation2 + $0x7d] sm:$0xff]
  %v4998 = vld [vmem:[#allocation2 + $0x85] sm:$0xff]
  %v4999 = vld [vmem:[#allocation2 + $0x8d] sm:$0xff]
  %v5000 = vld [vmem:[#allocation2 + $0x95] sm:$0xff]
  %v5001 = vld [vmem:[#allocation2 + $0x9d] sm:$0xff]
  %v5002 = vld [vmem:[#allocation2 + $0xa5] sm:$0xff]
  %v5003 = vld [vmem:[#allocation2 + $0xad] sm:$0xff]
  %v5004 = vld [vmem:[#allocation2 + $0xb5] sm:$0xff]
  %v5005 = vld [vmem:[#allocation2 + $0xbd] sm:$0xff]
  %v5006 = vld [vmem:[#allocation2 + $0xc5] sm:$0xff]
  %v5007 = vld [vmem:[%s3] sm:$0xff]
  %v5008 = vld [vmem:[%s3 + $0x8] sm:$0xff]
  %v5009 = vld [vmem:[%s3 + $0x10] sm:$0xff]
  %v5010 = vld [vmem:[%s3 + $0x18] sm:$0xff]
  %v5011 = vld [vmem:[%s3 + $0x20] sm:$0xff]
  %v5012 = vld [vmem:[%s3 + $0x28] sm:$0xff]
  %v5013 = vld [vmem:[%s3 + $0x30] sm:$0xff]
  %v5014 = vld [vmem:[%s3 + $0x38] sm:$0xff]
  %v5015 = vld [vmem:[%s3 + $0x40] sm:$0xff]
  %v5016 = vld [vmem:[%s3 + $0x48] sm:$0xff]
  %v5018 = vsel %vm4927, %v4982, 0
  %v5021 = vsel %vm4927, %v4983, 0
  %v5024 = vsel %vm4927, %v4984, 0
  %v5027 = vsel %vm4927, %v4985, 0
  %v5030 = vsel %vm4927, %v4986, 0
  %v5033 = vsel %vm4927, %v4987, 0
  %v5036 = vsel %vm4927, %v4988, 0
  %v5039 = vsel %vm4927, %v4989, 0
  %v5042 = vsel %vm4927, %v4990, 0
  %v5045 = vsel %vm4927, %v4991, 0
  %v5048 = vsel %vm4927, %v4992, 0
  %v5051 = vsel %vm4927, %v4993, 0
  %v5054 = vsel %vm4927, %v4994, 0
  %v5057 = vsel %vm4927, %v4995, 0
  %v5060 = vsel %vm4927, %v4996, 0
  %v5063 = vsel %vm4927, %v4997, 0
  %v5066 = vsel %vm4927, %v4998, 0
  %v5069 = vsel %vm4927, %v4999, 0
  %v5072 = vsel %vm4927, %v5000, 0
  %v5075 = vsel %vm4927, %v5001, 0
  %v5078 = vsel %vm4927, %v5002, 0
  %v5081 = vsel %vm4927, %v5003, 0
  %v5084 = vsel %vm4927, %v5004, 0
  %v5087 = vsel %vm4927, %v5005, 0
  %v5090 = vsel %vm4927, %v5006, 0
  %5092 = vmatprep.subr.mxu0 0.0
  %5093 = vmatpush1.msra.mxu0 0.0
  %5094 = vmatprep.subr.mxu0 0.0
  %5095 = vmatpush1.msra.mxu0 0.0
  %5096 = vmatprep.subr.mxu0 0.0
  %5097 = vmatpush1.msra.mxu0 0.0
  %5098 = vmatprep.subr.mxu0 0.0
  %5099 = vmatpush1.msra.mxu0 0.0
  %5100 = vmatprep.subr.mxu0 0.0
  %5101 = vmatpush1.msra.mxu0 0.0
  %5102 = vmatprep.subr.mxu0 0.0
  %5103 = vmatpush1.msra.mxu0 0.0
  %5104 = vmatprep.subr.mxu0 0.0
  %5105 = vmatpush1.msra.mxu0 %v5016
  %5106 = vmatprep.subr.mxu0 0.0
  %5107 = vmatpush1.msra.mxu0 %v5015
  %5108 = vmatprep.subr.mxu0 0.0
  %5109 = vmatpush1.msra.mxu0 %v5014
  %5110 = vmatprep.subr.mxu0 0.0
  %5111 = vmatpush1.msra.mxu0 %v5013
  %5112 = vmatprep.subr.mxu0 0.0
  %5113 = vmatpush1.msra.mxu0 %v5012
  %5114 = vmatprep.subr.mxu0 0.0
  %5115 = vmatpush1.msra.mxu0 %v5011
  %5116 = vmatprep.subr.mxu0 0.0
  %5117 = vmatpush1.msra.mxu0 %v5010
  %5118 = vmatprep.subr.mxu0 0.0
  %5119 = vmatpush1.msra.mxu0 %v5009
  %5120 = vmatprep.subr.mxu0 0.0
  %5121 = vmatpush1.msra.mxu0 %v5008
  %5122 = vmatprep.subr.mxu0 0.0
  %5123 = vmatpush1.msra.mxu0 %v5007
  %5124 = vmatprep.subr.mxu0 0.0
  %5125 = vmatpush2.msra.mxu0 0.0
  %5126 = vmatprep.subr.mxu0 0.0
  %5127 = vmatpush2.msra.mxu0 0.0
  %5128 = vmatprep.subr.mxu0 0.0
  %5129 = vmatpush2.msra.mxu0 0.0
  %5130 = vmatprep.subr.mxu0 0.0
  %5131 = vmatpush2.msra.mxu0 0.0
  %5132 = vmatprep.subr.mxu0 0.0
  %5133 = vmatpush2.msra.mxu0 0.0
  %5134 = vmatprep.subr.mxu0 0.0
  %5135 = vmatpush2.msra.mxu0 0.0
  %5136 = vmatprep.subr.mxu0 0.0
  %5137 = vmatpush2.msra.mxu0 0.0
  %5138 = vmatprep.subr.mxu0 0.0
  %5139 = vmatpush2.msra.mxu0 0.0
  %5140 = vmatprep.subr.mxu0 0.0
  %5141 = vmatpush2.msra.mxu0 0.0
  %5142 = vmatprep.subr.mxu0 0.0
  %5143 = vmatpush2.msra.mxu0 0.0
  %5144 = vmatprep.subr.mxu0 0.0
  %5145 = vmatpush2.msra.mxu0 0.0
  %5146 = vmatprep.subr.mxu0 0.0
  %5147 = vmatpush2.msra.mxu0 0.0
  %5148 = vmatprep.subr.mxu0 0.0
  %5149 = vmatpush2.msra.mxu0 0.0
  %5150 = vmatprep.subr.mxu0 0.0
  %5151 = vmatpush2.msra.mxu0 0.0
  %5152 = vmatprep.subr.mxu0 0.0
  %5153 = vmatpush2.msra.mxu0 0.0
  %5154 = vmatprep.subr.mxu0 0.0
  %5155 = vmatpush2.msra.mxu0 0.0
  %5156 = vmatprep.mubr.f32.mxu0 0.0
  %5157 = vmatmul.mubr.f32.gmra.mxu0 %v5018
  %v5158 = vpop.f32.mrf.mxu0
  %v5159 = vadd.f32 0.0, %v5158
  %v5160 = vpop.f32.mrf.mxu0
  %5161 = vmatprep.mubr.f32.mxu0 0.0
  %5162 = vmatmul.mubr.f32.gmra.mxu0 %v5021
  %v5163 = vpop.f32.mrf.mxu0
  %v5164 = vadd.f32 0.0, %v5163
  %v5165 = vpop.f32.mrf.mxu0
  %5166 = vmatprep.mubr.f32.mxu0 0.0
  %5167 = vmatmul.mubr.f32.gmra.mxu0 %v5024
  %v5168 = vpop.f32.mrf.mxu0
  %v5169 = vadd.f32 0.0, %v5168
  %v5170 = vpop.f32.mrf.mxu0
  %5171 = vmatprep.mubr.f32.mxu0 0.0
  %5172 = vmatmul.mubr.f32.gmra.mxu0 %v5027
  %v5173 = vpop.f32.mrf.mxu0
  %v5174 = vadd.f32 0.0, %v5173
  %v5175 = vpop.f32.mrf.mxu0
  %5176 = vmatprep.mubr.f32.mxu0 0.0
  %5177 = vmatmul.mubr.f32.gmra.mxu0 %v5030
  %v5178 = vpop.f32.mrf.mxu0
  %v5179 = vadd.f32 0.0, %v5178
  %v5180 = vpop.f32.mrf.mxu0
  %5181 = vmatprep.mubr.f32.mxu0 0.0
  %5182 = vmatmul.mubr.f32.gmra.mxu0 %v5033
  %v5183 = vpop.f32.mrf.mxu0
  %v5184 = vadd.f32 0.0, %v5183
  %v5185 = vpop.f32.mrf.mxu0
  %5186 = vmatprep.mubr.f32.mxu0 0.0
  %5187 = vmatmul.mubr.f32.gmra.mxu0 %v5036
  %v5188 = vpop.f32.mrf.mxu0
  %v5189 = vadd.f32 0.0, %v5188
  %v5190 = vpop.f32.mrf.mxu0
  %5191 = vmatprep.mubr.f32.mxu0 0.0
  %5192 = vmatmul.mubr.f32.gmra.mxu0 %v5039
  %v5193 = vpop.f32.mrf.mxu0
  %v5194 = vadd.f32 0.0, %v5193
  %v5195 = vpop.f32.mrf.mxu0
  %5196 = vmatprep.mubr.f32.mxu0 0.0
  %5197 = vmatmul.mubr.f32.gmra.mxu0 %v5042
  %v5198 = vpop.f32.mrf.mxu0
  %v5199 = vadd.f32 0.0, %v5198
  %v5200 = vpop.f32.mrf.mxu0
  %5201 = vmatprep.mubr.f32.mxu0 0.0
  %5202 = vmatmul.mubr.f32.gmra.mxu0 %v5045
  %v5203 = vpop.f32.mrf.mxu0
  %v5204 = vadd.f32 0.0, %v5203
  %v5205 = vpop.f32.mrf.mxu0
  %5206 = vmatprep.mubr.f32.mxu0 0.0
  %5207 = vmatmul.mubr.f32.gmra.mxu0 %v5048
  %v5208 = vpop.f32.mrf.mxu0
  %v5209 = vadd.f32 0.0, %v5208
  %v5210 = vpop.f32.mrf.mxu0
  %5211 = vmatprep.mubr.f32.mxu0 0.0
  %5212 = vmatmul.mubr.f32.gmra.mxu0 %v5051
  %v5213 = vpop.f32.mrf.mxu0
  %v5214 = vadd.f32 0.0, %v5213
  %v5215 = vpop.f32.mrf.mxu0
  %5216 = vmatprep.mubr.f32.mxu0 0.0
  %5217 = vmatmul.mubr.f32.gmra.mxu0 %v5054
  %v5218 = vpop.f32.mrf.mxu0
  %v5219 = vadd.f32 0.0, %v5218
  %v5220 = vpop.f32.mrf.mxu0
  %5221 = vmatprep.mubr.f32.mxu0 0.0
  %5222 = vmatmul.mubr.f32.gmra.mxu0 %v5057
  %v5223 = vpop.f32.mrf.mxu0
  %v5224 = vadd.f32 0.0, %v5223
  %v5225 = vpop.f32.mrf.mxu0
  %5226 = vmatprep.mubr.f32.mxu0 0.0
  %5227 = vmatmul.mubr.f32.gmra.mxu0 %v5060
  %v5228 = vpop.f32.mrf.mxu0
  %v5229 = vadd.f32 0.0, %v5228
  %v5230 = vpop.f32.mrf.mxu0
  %5231 = vmatprep.mubr.f32.mxu0 0.0
  %5232 = vmatmul.mubr.f32.gmra.mxu0 %v5063
  %v5233 = vpop.f32.mrf.mxu0
  %v5234 = vadd.f32 0.0, %v5233
  %v5235 = vpop.f32.mrf.mxu0
  %5236 = vmatprep.mubr.f32.mxu0 0.0
  %5237 = vmatmul.mubr.f32.gmra.mxu0 %v5066
  %v5238 = vpop.f32.mrf.mxu0
  %v5239 = vadd.f32 0.0, %v5238
  %v5240 = vpop.f32.mrf.mxu0
  %5241 = vmatprep.mubr.f32.mxu0 0.0
  %5242 = vmatmul.mubr.f32.gmra.mxu0 %v5069
  %v5243 = vpop.f32.mrf.mxu0
  %v5244 = vadd.f32 0.0, %v5243
  %v5245 = vpop.f32.mrf.mxu0
  %5246 = vmatprep.mubr.f32.mxu0 0.0
  %5247 = vmatmul.mubr.f32.gmra.mxu0 %v5072
  %v5248 = vpop.f32.mrf.mxu0
  %v5249 = vadd.f32 0.0, %v5248
  %v5250 = vpop.f32.mrf.mxu0
  %5251 = vmatprep.mubr.f32.mxu0 0.0
  %5252 = vmatmul.mubr.f32.gmra.mxu0 %v5075
  %v5253 = vpop.f32.mrf.mxu0
  %v5254 = vadd.f32 0.0, %v5253
  %v5255 = vpop.f32.mrf.mxu0
  %5256 = vmatprep.mubr.f32.mxu0 0.0
  %5257 = vmatmul.mubr.f32.gmra.mxu0 %v5078
  %v5258 = vpop.f32.mrf.mxu0
  %v5259 = vadd.f32 0.0, %v5258
  %v5260 = vpop.f32.mrf.mxu0
  %5261 = vmatprep.mubr.f32.mxu0 0.0
  %5262 = vmatmul.mubr.f32.gmra.mxu0 %v5081
  %v5263 = vpop.f32.mrf.mxu0
  %v5264 = vadd.f32 0.0, %v5263
  %v5265 = vpop.f32.mrf.mxu0
  %5266 = vmatprep.mubr.f32.mxu0 0.0
  %5267 = vmatmul.mubr.f32.gmra.mxu0 %v5084
  %v5268 = vpop.f32.mrf.mxu0
  %v5269 = vadd.f32 0.0, %v5268
  %v5270 = vpop.f32.mrf.mxu0
  %5271 = vmatprep.mubr.f32.mxu0 0.0
  %5272 = vmatmul.mubr.f32.gmra.mxu0 %v5087
  %v5273 = vpop.f32.mrf.mxu0
  %v5274 = vadd.f32 0.0, %v5273
  %v5275 = vpop.f32.mrf.mxu0
  %5276 = vmatprep.mubr.f32.mxu0 0.0
  %5277 = vmatmul.mubr.f32.gmra.mxu0 %v5090
  %v5278 = vpop.f32.mrf.mxu0
  %v5279 = vadd.f32 0.0, %v5278
  %v5280 = vpop.f32.mrf.mxu0
  %5281 = vdwg.mxu0
  %v5282 = vadd.f32 %v4795, %v5159
  %v5283 = vadd.f32 %v4796, %v5164
  %v5284 = vadd.f32 %v4797, %v5169
  %v5285 = vadd.f32 %v4798, %v5174
  %v5286 = vadd.f32 %v4799, %v5179
  %v5287 = vadd.f32 %v4800, %v5184
  %v5288 = vadd.f32 %v4801, %v5189
  %v5289 = vadd.f32 %v4802, %v5194
  %v5290 = vadd.f32 %v4803, %v5199
  %v5291 = vadd.f32 %v4804, %v5204
  %v5292 = vadd.f32 %v4805, %v5209
  %v5293 = vadd.f32 %v4806, %v5214
  %v5294 = vadd.f32 %v4807, %v5219
  %v5295 = vadd.f32 %v4808, %v5224
  %v5296 = vadd.f32 %v4809, %v5229
  %v5297 = vadd.f32 %v4810, %v5234
  %v5298 = vadd.f32 %v4811, %v5239
  %v5299 = vadd.f32 %v4812, %v5244
  %v5300 = vadd.f32 %v4813, %v5249
  %v5301 = vadd.f32 %v4814, %v5254
  %v5302 = vadd.f32 %v4815, %v5259
  %v5303 = vadd.f32 %v4816, %v5264
  %v5304 = vadd.f32 %v4817, %v5269
  %v5305 = vadd.f32 %v4818, %v5274
  %v5306 = vadd.f32 %v4819, %v5279
  %v5307 = vld [vmem:[#allocation2 + $0x6] sm:$0xff]
  %v5308 = vld [vmem:[#allocation2 + $0xe] sm:$0xff]
  %v5309 = vld [vmem:[#allocation2 + $0x16] sm:$0xff]
  %v5310 = vld [vmem:[#allocation2 + $0x1e] sm:$0xff]
  %v5311 = vld [vmem:[#allocation2 + $0x26] sm:$0xff]
  %v5312 = vld [vmem:[#allocation2 + $0x2e] sm:$0xff]
  %v5313 = vld [vmem:[#allocation2 + $0x36] sm:$0xff]
  %v5314 = vld [vmem:[#allocation2 + $0x3e] sm:$0xff]
  %v5315 = vld [vmem:[#allocation2 + $0x46] sm:$0xff]
  %v5316 = vld [vmem:[#allocation2 + $0x4e] sm:$0xff]
  %v5317 = vld [vmem:[#allocation2 + $0x56] sm:$0xff]
  %v5318 = vld [vmem:[#allocation2 + $0x5e] sm:$0xff]
  %v5319 = vld [vmem:[#allocation2 + $0x66] sm:$0xff]
  %v5320 = vld [vmem:[#allocation2 + $0x6e] sm:$0xff]
  %v5321 = vld [vmem:[#allocation2 + $0x76] sm:$0xff]
  %v5322 = vld [vmem:[#allocation2 + $0x7e] sm:$0xff]
  %v5323 = vld [vmem:[#allocation2 + $0x86] sm:$0xff]
  %v5324 = vld [vmem:[#allocation2 + $0x8e] sm:$0xff]
  %v5325 = vld [vmem:[#allocation2 + $0x96] sm:$0xff]
  %v5326 = vld [vmem:[#allocation2 + $0x9e] sm:$0xff]
  %v5327 = vld [vmem:[#allocation2 + $0xa6] sm:$0xff]
  %v5328 = vld [vmem:[#allocation2 + $0xae] sm:$0xff]
  %v5329 = vld [vmem:[#allocation2 + $0xb6] sm:$0xff]
  %v5330 = vld [vmem:[#allocation2 + $0xbe] sm:$0xff]
  %v5331 = vld [vmem:[#allocation2 + $0xc6] sm:$0xff]
  %s5332 = scalar_lea.vmem %s3, 80
  %v5333 = vld [vmem:[%s5332] sm:$0xff]
  %v5334 = vld [vmem:[%s5332 + $0x8] sm:$0xff]
  %v5335 = vld [vmem:[%s5332 + $0x10] sm:$0xff]
  %v5336 = vld [vmem:[%s5332 + $0x18] sm:$0xff]
  %v5337 = vld [vmem:[%s5332 + $0x20] sm:$0xff]
  %v5338 = vld [vmem:[%s5332 + $0x28] sm:$0xff]
  %v5339 = vld [vmem:[%s5332 + $0x30] sm:$0xff]
  %v5340 = vld [vmem:[%s5332 + $0x38] sm:$0xff]
  %v5341 = vld [vmem:[%s5332 + $0x40] sm:$0xff]
  %v5342 = vld [vmem:[%s5332 + $0x48] sm:$0xff]
  %v5344 = vsel %vm4927, %v5307, 0
  %v5347 = vsel %vm4927, %v5308, 0
  %v5350 = vsel %vm4927, %v5309, 0
  %v5353 = vsel %vm4927, %v5310, 0
  %v5356 = vsel %vm4927, %v5311, 0
  %v5359 = vsel %vm4927, %v5312, 0
  %v5362 = vsel %vm4927, %v5313, 0
  %v5365 = vsel %vm4927, %v5314, 0
  %v5368 = vsel %vm4927, %v5315, 0
  %v5371 = vsel %vm4927, %v5316, 0
  %v5374 = vsel %vm4927, %v5317, 0
  %v5377 = vsel %vm4927, %v5318, 0
  %v5380 = vsel %vm4927, %v5319, 0
  %v5383 = vsel %vm4927, %v5320, 0
  %v5386 = vsel %vm4927, %v5321, 0
  %v5389 = vsel %vm4927, %v5322, 0
  %v5392 = vsel %vm4927, %v5323, 0
  %v5395 = vsel %vm4927, %v5324, 0
  %v5398 = vsel %vm4927, %v5325, 0
  %v5401 = vsel %vm4927, %v5326, 0
  %v5404 = vsel %vm4927, %v5327, 0
  %v5407 = vsel %vm4927, %v5328, 0
  %v5410 = vsel %vm4927, %v5329, 0
  %v5413 = vsel %vm4927, %v5330, 0
  %v5416 = vsel %vm4927, %v5331, 0
  %5418 = vmatprep.subr.mxu0 0.0
  %5419 = vmatpush1.msra.mxu0 0.0
  %5420 = vmatprep.subr.mxu0 0.0
  %5421 = vmatpush1.msra.mxu0 0.0
  %5422 = vmatprep.subr.mxu0 0.0
  %5423 = vmatpush1.msra.mxu0 0.0
  %5424 = vmatprep.subr.mxu0 0.0
  %5425 = vmatpush1.msra.mxu0 0.0
  %5426 = vmatprep.subr.mxu0 0.0
  %5427 = vmatpush1.msra.mxu0 0.0
  %5428 = vmatprep.subr.mxu0 0.0
  %5429 = vmatpush1.msra.mxu0 0.0
  %5430 = vmatprep.subr.mxu0 0.0
  %5431 = vmatpush1.msra.mxu0 %v5342
  %5432 = vmatprep.subr.mxu0 0.0
  %5433 = vmatpush1.msra.mxu0 %v5341
  %5434 = vmatprep.subr.mxu0 0.0
  %5435 = vmatpush1.msra.mxu0 %v5340
  %5436 = vmatprep.subr.mxu0 0.0
  %5437 = vmatpush1.msra.mxu0 %v5339
  %5438 = vmatprep.subr.mxu0 0.0
  %5439 = vmatpush1.msra.mxu0 %v5338
  %5440 = vmatprep.subr.mxu0 0.0
  %5441 = vmatpush1.msra.mxu0 %v5337
  %5442 = vmatprep.subr.mxu0 0.0
  %5443 = vmatpush1.msra.mxu0 %v5336
  %5444 = vmatprep.subr.mxu0 0.0
  %5445 = vmatpush1.msra.mxu0 %v5335
  %5446 = vmatprep.subr.mxu0 0.0
  %5447 = vmatpush1.msra.mxu0 %v5334
  %5448 = vmatprep.subr.mxu0 0.0
  %5449 = vmatpush1.msra.mxu0 %v5333
  %5450 = vmatprep.subr.mxu0 0.0
  %5451 = vmatpush2.msra.mxu0 0.0
  %5452 = vmatprep.subr.mxu0 0.0
  %5453 = vmatpush2.msra.mxu0 0.0
  %5454 = vmatprep.subr.mxu0 0.0
  %5455 = vmatpush2.msra.mxu0 0.0
  %5456 = vmatprep.subr.mxu0 0.0
  %5457 = vmatpush2.msra.mxu0 0.0
  %5458 = vmatprep.subr.mxu0 0.0
  %5459 = vmatpush2.msra.mxu0 0.0
  %5460 = vmatprep.subr.mxu0 0.0
  %5461 = vmatpush2.msra.mxu0 0.0
  %5462 = vmatprep.subr.mxu0 0.0
  %5463 = vmatpush2.msra.mxu0 0.0
  %5464 = vmatprep.subr.mxu0 0.0
  %5465 = vmatpush2.msra.mxu0 0.0
  %5466 = vmatprep.subr.mxu0 0.0
  %5467 = vmatpush2.msra.mxu0 0.0
  %5468 = vmatprep.subr.mxu0 0.0
  %5469 = vmatpush2.msra.mxu0 0.0
  %5470 = vmatprep.subr.mxu0 0.0
  %5471 = vmatpush2.msra.mxu0 0.0
  %5472 = vmatprep.subr.mxu0 0.0
  %5473 = vmatpush2.msra.mxu0 0.0
  %5474 = vmatprep.subr.mxu0 0.0
  %5475 = vmatpush2.msra.mxu0 0.0
  %5476 = vmatprep.subr.mxu0 0.0
  %5477 = vmatpush2.msra.mxu0 0.0
  %5478 = vmatprep.subr.mxu0 0.0
  %5479 = vmatpush2.msra.mxu0 0.0
  %5480 = vmatprep.subr.mxu0 0.0
  %5481 = vmatpush2.msra.mxu0 0.0
  %5482 = vmatprep.mubr.f32.mxu0 0.0
  %5483 = vmatmul.mubr.f32.gmra.mxu0 %v5344
  %v5484 = vpop.f32.mrf.mxu0
  %v5485 = vadd.f32 0.0, %v5484
  %v5486 = vpop.f32.mrf.mxu0
  %5487 = vmatprep.mubr.f32.mxu0 0.0
  %5488 = vmatmul.mubr.f32.gmra.mxu0 %v5347
  %v5489 = vpop.f32.mrf.mxu0
  %v5490 = vadd.f32 0.0, %v5489
  %v5491 = vpop.f32.mrf.mxu0
  %5492 = vmatprep.mubr.f32.mxu0 0.0
  %5493 = vmatmul.mubr.f32.gmra.mxu0 %v5350
  %v5494 = vpop.f32.mrf.mxu0
  %v5495 = vadd.f32 0.0, %v5494
  %v5496 = vpop.f32.mrf.mxu0
  %5497 = vmatprep.mubr.f32.mxu0 0.0
  %5498 = vmatmul.mubr.f32.gmra.mxu0 %v5353
  %v5499 = vpop.f32.mrf.mxu0
  %v5500 = vadd.f32 0.0, %v5499
  %v5501 = vpop.f32.mrf.mxu0
  %5502 = vmatprep.mubr.f32.mxu0 0.0
  %5503 = vmatmul.mubr.f32.gmra.mxu0 %v5356
  %v5504 = vpop.f32.mrf.mxu0
  %v5505 = vadd.f32 0.0, %v5504
  %v5506 = vpop.f32.mrf.mxu0
  %5507 = vmatprep.mubr.f32.mxu0 0.0
  %5508 = vmatmul.mubr.f32.gmra.mxu0 %v5359
  %v5509 = vpop.f32.mrf.mxu0
  %v5510 = vadd.f32 0.0, %v5509
  %v5511 = vpop.f32.mrf.mxu0
  %5512 = vmatprep.mubr.f32.mxu0 0.0
  %5513 = vmatmul.mubr.f32.gmra.mxu0 %v5362
  %v5514 = vpop.f32.mrf.mxu0
  %v5515 = vadd.f32 0.0, %v5514
  %v5516 = vpop.f32.mrf.mxu0
  %5517 = vmatprep.mubr.f32.mxu0 0.0
  %5518 = vmatmul.mubr.f32.gmra.mxu0 %v5365
  %v5519 = vpop.f32.mrf.mxu0
  %v5520 = vadd.f32 0.0, %v5519
  %v5521 = vpop.f32.mrf.mxu0
  %5522 = vmatprep.mubr.f32.mxu0 0.0
  %5523 = vmatmul.mubr.f32.gmra.mxu0 %v5368
  %v5524 = vpop.f32.mrf.mxu0
  %v5525 = vadd.f32 0.0, %v5524
  %v5526 = vpop.f32.mrf.mxu0
  %5527 = vmatprep.mubr.f32.mxu0 0.0
  %5528 = vmatmul.mubr.f32.gmra.mxu0 %v5371
  %v5529 = vpop.f32.mrf.mxu0
  %v5530 = vadd.f32 0.0, %v5529
  %v5531 = vpop.f32.mrf.mxu0
  %5532 = vmatprep.mubr.f32.mxu0 0.0
  %5533 = vmatmul.mubr.f32.gmra.mxu0 %v5374
  %v5534 = vpop.f32.mrf.mxu0
  %v5535 = vadd.f32 0.0, %v5534
  %v5536 = vpop.f32.mrf.mxu0
  %5537 = vmatprep.mubr.f32.mxu0 0.0
  %5538 = vmatmul.mubr.f32.gmra.mxu0 %v5377
  %v5539 = vpop.f32.mrf.mxu0
  %v5540 = vadd.f32 0.0, %v5539
  %v5541 = vpop.f32.mrf.mxu0
  %5542 = vmatprep.mubr.f32.mxu0 0.0
  %5543 = vmatmul.mubr.f32.gmra.mxu0 %v5380
  %v5544 = vpop.f32.mrf.mxu0
  %v5545 = vadd.f32 0.0, %v5544
  %v5546 = vpop.f32.mrf.mxu0
  %5547 = vmatprep.mubr.f32.mxu0 0.0
  %5548 = vmatmul.mubr.f32.gmra.mxu0 %v5383
  %v5549 = vpop.f32.mrf.mxu0
  %v5550 = vadd.f32 0.0, %v5549
  %v5551 = vpop.f32.mrf.mxu0
  %5552 = vmatprep.mubr.f32.mxu0 0.0
  %5553 = vmatmul.mubr.f32.gmra.mxu0 %v5386
  %v5554 = vpop.f32.mrf.mxu0
  %v5555 = vadd.f32 0.0, %v5554
  %v5556 = vpop.f32.mrf.mxu0
  %5557 = vmatprep.mubr.f32.mxu0 0.0
  %5558 = vmatmul.mubr.f32.gmra.mxu0 %v5389
  %v5559 = vpop.f32.mrf.mxu0
  %v5560 = vadd.f32 0.0, %v5559
  %v5561 = vpop.f32.mrf.mxu0
  %5562 = vmatprep.mubr.f32.mxu0 0.0
  %5563 = vmatmul.mubr.f32.gmra.mxu0 %v5392
  %v5564 = vpop.f32.mrf.mxu0
  %v5565 = vadd.f32 0.0, %v5564
  %v5566 = vpop.f32.mrf.mxu0
  %5567 = vmatprep.mubr.f32.mxu0 0.0
  %5568 = vmatmul.mubr.f32.gmra.mxu0 %v5395
  %v5569 = vpop.f32.mrf.mxu0
  %v5570 = vadd.f32 0.0, %v5569
  %v5571 = vpop.f32.mrf.mxu0
  %5572 = vmatprep.mubr.f32.mxu0 0.0
  %5573 = vmatmul.mubr.f32.gmra.mxu0 %v5398
  %v5574 = vpop.f32.mrf.mxu0
  %v5575 = vadd.f32 0.0, %v5574
  %v5576 = vpop.f32.mrf.mxu0
  %5577 = vmatprep.mubr.f32.mxu0 0.0
  %5578 = vmatmul.mubr.f32.gmra.mxu0 %v5401
  %v5579 = vpop.f32.mrf.mxu0
  %v5580 = vadd.f32 0.0, %v5579
  %v5581 = vpop.f32.mrf.mxu0
  %5582 = vmatprep.mubr.f32.mxu0 0.0
  %5583 = vmatmul.mubr.f32.gmra.mxu0 %v5404
  %v5584 = vpop.f32.mrf.mxu0
  %v5585 = vadd.f32 0.0, %v5584
  %v5586 = vpop.f32.mrf.mxu0
  %5587 = vmatprep.mubr.f32.mxu0 0.0
  %5588 = vmatmul.mubr.f32.gmra.mxu0 %v5407
  %v5589 = vpop.f32.mrf.mxu0
  %v5590 = vadd.f32 0.0, %v5589
  %v5591 = vpop.f32.mrf.mxu0
  %5592 = vmatprep.mubr.f32.mxu0 0.0
  %5593 = vmatmul.mubr.f32.gmra.mxu0 %v5410
  %v5594 = vpop.f32.mrf.mxu0
  %v5595 = vadd.f32 0.0, %v5594
  %v5596 = vpop.f32.mrf.mxu0
  %5597 = vmatprep.mubr.f32.mxu0 0.0
  %5598 = vmatmul.mubr.f32.gmra.mxu0 %v5413
  %v5599 = vpop.f32.mrf.mxu0
  %v5600 = vadd.f32 0.0, %v5599
  %v5601 = vpop.f32.mrf.mxu0
  %5602 = vmatprep.mubr.f32.mxu0 0.0
  %5603 = vmatmul.mubr.f32.gmra.mxu0 %v5416
  %v5604 = vpop.f32.mrf.mxu0
  %v5605 = vadd.f32 0.0, %v5604
  %v5606 = vpop.f32.mrf.mxu0
  %5607 = vdwg.mxu0
  %v5608 = vadd.f32 %v5282, %v5485
  %v5609 = vadd.f32 %v5283, %v5490
  %v5610 = vadd.f32 %v5284, %v5495
  %v5611 = vadd.f32 %v5285, %v5500
  %v5612 = vadd.f32 %v5286, %v5505
  %v5613 = vadd.f32 %v5287, %v5510
  %v5614 = vadd.f32 %v5288, %v5515
  %v5615 = vadd.f32 %v5289, %v5520
  %v5616 = vadd.f32 %v5290, %v5525
  %v5617 = vadd.f32 %v5291, %v5530
  %v5618 = vadd.f32 %v5292, %v5535
  %v5619 = vadd.f32 %v5293, %v5540
  %v5620 = vadd.f32 %v5294, %v5545
  %v5621 = vadd.f32 %v5295, %v5550
  %v5622 = vadd.f32 %v5296, %v5555
  %v5623 = vadd.f32 %v5297, %v5560
  %v5624 = vadd.f32 %v5298, %v5565
  %v5625 = vadd.f32 %v5299, %v5570
  %v5626 = vadd.f32 %v5300, %v5575
  %v5627 = vadd.f32 %v5301, %v5580
  %v5628 = vadd.f32 %v5302, %v5585
  %v5629 = vadd.f32 %v5303, %v5590
  %v5630 = vadd.f32 %v5304, %v5595
  %v5631 = vadd.f32 %v5305, %v5600
  %v5632 = vadd.f32 %v5306, %v5605
  %v5633 = vld [vmem:[#allocation2 + $0x7] sm:$0xff]
  %v5634 = vld [vmem:[#allocation2 + $0xf] sm:$0xff]
  %v5635 = vld [vmem:[#allocation2 + $0x17] sm:$0xff]
  %v5636 = vld [vmem:[#allocation2 + $0x1f] sm:$0xff]
  %v5637 = vld [vmem:[#allocation2 + $0x27] sm:$0xff]
  %v5638 = vld [vmem:[#allocation2 + $0x2f] sm:$0xff]
  %v5639 = vld [vmem:[#allocation2 + $0x37] sm:$0xff]
  %v5640 = vld [vmem:[#allocation2 + $0x3f] sm:$0xff]
  %v5641 = vld [vmem:[#allocation2 + $0x47] sm:$0xff]
  %v5642 = vld [vmem:[#allocation2 + $0x4f] sm:$0xff]
  %v5643 = vld [vmem:[#allocation2 + $0x57] sm:$0xff]
  %v5644 = vld [vmem:[#allocation2 + $0x5f] sm:$0xff]
  %v5645 = vld [vmem:[#allocation2 + $0x67] sm:$0xff]
  %v5646 = vld [vmem:[#allocation2 + $0x6f] sm:$0xff]
  %v5647 = vld [vmem:[#allocation2 + $0x77] sm:$0xff]
  %v5648 = vld [vmem:[#allocation2 + $0x7f] sm:$0xff]
  %v5649 = vld [vmem:[#allocation2 + $0x87] sm:$0xff]
  %v5650 = vld [vmem:[#allocation2 + $0x8f] sm:$0xff]
  %v5651 = vld [vmem:[#allocation2 + $0x97] sm:$0xff]
  %v5652 = vld [vmem:[#allocation2 + $0x9f] sm:$0xff]
  %v5653 = vld [vmem:[#allocation2 + $0xa7] sm:$0xff]
  %v5654 = vld [vmem:[#allocation2 + $0xaf] sm:$0xff]
  %v5655 = vld [vmem:[#allocation2 + $0xb7] sm:$0xff]
  %v5656 = vld [vmem:[#allocation2 + $0xbf] sm:$0xff]
  %v5657 = vld [vmem:[#allocation2 + $0xc7] sm:$0xff]
  %s5658 = scalar_lea.vmem %s3, 160
  %v5659 = vld [vmem:[%s5658] sm:$0xff]
  %v5660 = vld [vmem:[%s5658 + $0x8] sm:$0xff]
  %v5661 = vld [vmem:[%s5658 + $0x10] sm:$0xff]
  %v5662 = vld [vmem:[%s5658 + $0x18] sm:$0xff]
  %v5663 = vld [vmem:[%s5658 + $0x20] sm:$0xff]
  %v5664 = vld [vmem:[%s5658 + $0x28] sm:$0xff]
  %v5665 = vld [vmem:[%s5658 + $0x30] sm:$0xff]
  %v5666 = vld [vmem:[%s5658 + $0x38] sm:$0xff]
  %v5667 = vld [vmem:[%s5658 + $0x40] sm:$0xff]
  %v5668 = vld [vmem:[%s5658 + $0x48] sm:$0xff]
  %v5670 = vsel %vm4927, %v5633, 0
  %v5673 = vsel %vm4927, %v5634, 0
  %v5676 = vsel %vm4927, %v5635, 0
  %v5679 = vsel %vm4927, %v5636, 0
  %v5682 = vsel %vm4927, %v5637, 0
  %v5685 = vsel %vm4927, %v5638, 0
  %v5688 = vsel %vm4927, %v5639, 0
  %v5691 = vsel %vm4927, %v5640, 0
  %v5694 = vsel %vm4927, %v5641, 0
  %v5697 = vsel %vm4927, %v5642, 0
  %v5700 = vsel %vm4927, %v5643, 0
  %v5703 = vsel %vm4927, %v5644, 0
  %v5706 = vsel %vm4927, %v5645, 0
  %v5709 = vsel %vm4927, %v5646, 0
  %v5712 = vsel %vm4927, %v5647, 0
  %v5715 = vsel %vm4927, %v5648, 0
  %v5718 = vsel %vm4927, %v5649, 0
  %v5721 = vsel %vm4927, %v5650, 0
  %v5724 = vsel %vm4927, %v5651, 0
  %v5727 = vsel %vm4927, %v5652, 0
  %v5730 = vsel %vm4927, %v5653, 0
  %v5733 = vsel %vm4927, %v5654, 0
  %v5736 = vsel %vm4927, %v5655, 0
  %v5739 = vsel %vm4927, %v5656, 0
  %v5742 = vsel %vm4927, %v5657, 0
  %5744 = vmatprep.subr.mxu0 0.0
  %5745 = vmatpush1.msra.mxu0 0.0
  %5746 = vmatprep.subr.mxu0 0.0
  %5747 = vmatpush1.msra.mxu0 0.0
  %5748 = vmatprep.subr.mxu0 0.0
  %5749 = vmatpush1.msra.mxu0 0.0
  %5750 = vmatprep.subr.mxu0 0.0
  %5751 = vmatpush1.msra.mxu0 0.0
  %5752 = vmatprep.subr.mxu0 0.0
  %5753 = vmatpush1.msra.mxu0 0.0
  %5754 = vmatprep.subr.mxu0 0.0
  %5755 = vmatpush1.msra.mxu0 0.0
  %5756 = vmatprep.subr.mxu0 0.0
  %5757 = vmatpush1.msra.mxu0 %v5668
  %5758 = vmatprep.subr.mxu0 0.0
  %5759 = vmatpush1.msra.mxu0 %v5667
  %5760 = vmatprep.subr.mxu0 0.0
  %5761 = vmatpush1.msra.mxu0 %v5666
  %5762 = vmatprep.subr.mxu0 0.0
  %5763 = vmatpush1.msra.mxu0 %v5665
  %5764 = vmatprep.subr.mxu0 0.0
  %5765 = vmatpush1.msra.mxu0 %v5664
  %5766 = vmatprep.subr.mxu0 0.0
  %5767 = vmatpush1.msra.mxu0 %v5663
  %5768 = vmatprep.subr.mxu0 0.0
  %5769 = vmatpush1.msra.mxu0 %v5662
  %5770 = vmatprep.subr.mxu0 0.0
  %5771 = vmatpush1.msra.mxu0 %v5661
  %5772 = vmatprep.subr.mxu0 0.0
  %5773 = vmatpush1.msra.mxu0 %v5660
  %5774 = vmatprep.subr.mxu0 0.0
  %5775 = vmatpush1.msra.mxu0 %v5659
  %5776 = vmatprep.subr.mxu0 0.0
  %5777 = vmatpush2.msra.mxu0 0.0
  %5778 = vmatprep.subr.mxu0 0.0
  %5779 = vmatpush2.msra.mxu0 0.0
  %5780 = vmatprep.subr.mxu0 0.0
  %5781 = vmatpush2.msra.mxu0 0.0
  %5782 = vmatprep.subr.mxu0 0.0
  %5783 = vmatpush2.msra.mxu0 0.0
  %5784 = vmatprep.subr.mxu0 0.0
  %5785 = vmatpush2.msra.mxu0 0.0
  %5786 = vmatprep.subr.mxu0 0.0
  %5787 = vmatpush2.msra.mxu0 0.0
  %5788 = vmatprep.subr.mxu0 0.0
  %5789 = vmatpush2.msra.mxu0 0.0
  %5790 = vmatprep.subr.mxu0 0.0
  %5791 = vmatpush2.msra.mxu0 0.0
  %5792 = vmatprep.subr.mxu0 0.0
  %5793 = vmatpush2.msra.mxu0 0.0
  %5794 = vmatprep.subr.mxu0 0.0
  %5795 = vmatpush2.msra.mxu0 0.0
  %5796 = vmatprep.subr.mxu0 0.0
  %5797 = vmatpush2.msra.mxu0 0.0
  %5798 = vmatprep.subr.mxu0 0.0
  %5799 = vmatpush2.msra.mxu0 0.0
  %5800 = vmatprep.subr.mxu0 0.0
  %5801 = vmatpush2.msra.mxu0 0.0
  %5802 = vmatprep.subr.mxu0 0.0
  %5803 = vmatpush2.msra.mxu0 0.0
  %5804 = vmatprep.subr.mxu0 0.0
  %5805 = vmatpush2.msra.mxu0 0.0
  %5806 = vmatprep.subr.mxu0 0.0
  %5807 = vmatpush2.msra.mxu0 0.0
  %5808 = vmatprep.mubr.f32.mxu0 0.0
  %5809 = vmatmul.mubr.f32.gmra.mxu0 %v5670
  %v5810 = vpop.f32.mrf.mxu0
  %v5811 = vadd.f32 0.0, %v5810
  %v5812 = vpop.f32.mrf.mxu0
  %5813 = vmatprep.mubr.f32.mxu0 0.0
  %5814 = vmatmul.mubr.f32.gmra.mxu0 %v5673
  %v5815 = vpop.f32.mrf.mxu0
  %v5816 = vadd.f32 0.0, %v5815
  %v5817 = vpop.f32.mrf.mxu0
  %5818 = vmatprep.mubr.f32.mxu0 0.0
  %5819 = vmatmul.mubr.f32.gmra.mxu0 %v5676
  %v5820 = vpop.f32.mrf.mxu0
  %v5821 = vadd.f32 0.0, %v5820
  %v5822 = vpop.f32.mrf.mxu0
  %5823 = vmatprep.mubr.f32.mxu0 0.0
  %5824 = vmatmul.mubr.f32.gmra.mxu0 %v5679
  %v5825 = vpop.f32.mrf.mxu0
  %v5826 = vadd.f32 0.0, %v5825
  %v5827 = vpop.f32.mrf.mxu0
  %5828 = vmatprep.mubr.f32.mxu0 0.0
  %5829 = vmatmul.mubr.f32.gmra.mxu0 %v5682
  %v5830 = vpop.f32.mrf.mxu0
  %v5831 = vadd.f32 0.0, %v5830
  %v5832 = vpop.f32.mrf.mxu0
  %5833 = vmatprep.mubr.f32.mxu0 0.0
  %5834 = vmatmul.mubr.f32.gmra.mxu0 %v5685
  %v5835 = vpop.f32.mrf.mxu0
  %v5836 = vadd.f32 0.0, %v5835
  %v5837 = vpop.f32.mrf.mxu0
  %5838 = vmatprep.mubr.f32.mxu0 0.0
  %5839 = vmatmul.mubr.f32.gmra.mxu0 %v5688
  %v5840 = vpop.f32.mrf.mxu0
  %v5841 = vadd.f32 0.0, %v5840
  %v5842 = vpop.f32.mrf.mxu0
  %5843 = vmatprep.mubr.f32.mxu0 0.0
  %5844 = vmatmul.mubr.f32.gmra.mxu0 %v5691
  %v5845 = vpop.f32.mrf.mxu0
  %v5846 = vadd.f32 0.0, %v5845
  %v5847 = vpop.f32.mrf.mxu0
  %5848 = vmatprep.mubr.f32.mxu0 0.0
  %5849 = vmatmul.mubr.f32.gmra.mxu0 %v5694
  %v5850 = vpop.f32.mrf.mxu0
  %v5851 = vadd.f32 0.0, %v5850
  %v5852 = vpop.f32.mrf.mxu0
  %5853 = vmatprep.mubr.f32.mxu0 0.0
  %5854 = vmatmul.mubr.f32.gmra.mxu0 %v5697
  %v5855 = vpop.f32.mrf.mxu0
  %v5856 = vadd.f32 0.0, %v5855
  %v5857 = vpop.f32.mrf.mxu0
  %5858 = vmatprep.mubr.f32.mxu0 0.0
  %5859 = vmatmul.mubr.f32.gmra.mxu0 %v5700
  %v5860 = vpop.f32.mrf.mxu0
  %v5861 = vadd.f32 0.0, %v5860
  %v5862 = vpop.f32.mrf.mxu0
  %5863 = vmatprep.mubr.f32.mxu0 0.0
  %5864 = vmatmul.mubr.f32.gmra.mxu0 %v5703
  %v5865 = vpop.f32.mrf.mxu0
  %v5866 = vadd.f32 0.0, %v5865
  %v5867 = vpop.f32.mrf.mxu0
  %5868 = vmatprep.mubr.f32.mxu0 0.0
  %5869 = vmatmul.mubr.f32.gmra.mxu0 %v5706
  %v5870 = vpop.f32.mrf.mxu0
  %v5871 = vadd.f32 0.0, %v5870
  %v5872 = vpop.f32.mrf.mxu0
  %5873 = vmatprep.mubr.f32.mxu0 0.0
  %5874 = vmatmul.mubr.f32.gmra.mxu0 %v5709
  %v5875 = vpop.f32.mrf.mxu0
  %v5876 = vadd.f32 0.0, %v5875
  %v5877 = vpop.f32.mrf.mxu0
  %5878 = vmatprep.mubr.f32.mxu0 0.0
  %5879 = vmatmul.mubr.f32.gmra.mxu0 %v5712
  %v5880 = vpop.f32.mrf.mxu0
  %v5881 = vadd.f32 0.0, %v5880
  %v5882 = vpop.f32.mrf.mxu0
  %5883 = vmatprep.mubr.f32.mxu0 0.0
  %5884 = vmatmul.mubr.f32.gmra.mxu0 %v5715
  %v5885 = vpop.f32.mrf.mxu0
  %v5886 = vadd.f32 0.0, %v5885
  %v5887 = vpop.f32.mrf.mxu0
  %5888 = vmatprep.mubr.f32.mxu0 0.0
  %5889 = vmatmul.mubr.f32.gmra.mxu0 %v5718
  %v5890 = vpop.f32.mrf.mxu0
  %v5891 = vadd.f32 0.0, %v5890
  %v5892 = vpop.f32.mrf.mxu0
  %5893 = vmatprep.mubr.f32.mxu0 0.0
  %5894 = vmatmul.mubr.f32.gmra.mxu0 %v5721
  %v5895 = vpop.f32.mrf.mxu0
  %v5896 = vadd.f32 0.0, %v5895
  %v5897 = vpop.f32.mrf.mxu0
  %5898 = vmatprep.mubr.f32.mxu0 0.0
  %5899 = vmatmul.mubr.f32.gmra.mxu0 %v5724
  %v5900 = vpop.f32.mrf.mxu0
  %v5901 = vadd.f32 0.0, %v5900
  %v5902 = vpop.f32.mrf.mxu0
  %5903 = vmatprep.mubr.f32.mxu0 0.0
  %5904 = vmatmul.mubr.f32.gmra.mxu0 %v5727
  %v5905 = vpop.f32.mrf.mxu0
  %v5906 = vadd.f32 0.0, %v5905
  %v5907 = vpop.f32.mrf.mxu0
  %5908 = vmatprep.mubr.f32.mxu0 0.0
  %5909 = vmatmul.mubr.f32.gmra.mxu0 %v5730
  %v5910 = vpop.f32.mrf.mxu0
  %v5911 = vadd.f32 0.0, %v5910
  %v5912 = vpop.f32.mrf.mxu0
  %5913 = vmatprep.mubr.f32.mxu0 0.0
  %5914 = vmatmul.mubr.f32.gmra.mxu0 %v5733
  %v5915 = vpop.f32.mrf.mxu0
  %v5916 = vadd.f32 0.0, %v5915
  %v5917 = vpop.f32.mrf.mxu0
  %5918 = vmatprep.mubr.f32.mxu0 0.0
  %5919 = vmatmul.mubr.f32.gmra.mxu0 %v5736
  %v5920 = vpop.f32.mrf.mxu0
  %v5921 = vadd.f32 0.0, %v5920
  %v5922 = vpop.f32.mrf.mxu0
  %5923 = vmatprep.mubr.f32.mxu0 0.0
  %5924 = vmatmul.mubr.f32.gmra.mxu0 %v5739
  %v5925 = vpop.f32.mrf.mxu0
  %v5926 = vadd.f32 0.0, %v5925
  %v5927 = vpop.f32.mrf.mxu0
  %5928 = vmatprep.mubr.f32.mxu0 0.0
  %5929 = vmatmul.mubr.f32.gmra.mxu0 %v5742
  %v5930 = vpop.f32.mrf.mxu0
  %v5931 = vadd.f32 0.0, %v5930
  %v5932 = vpop.f32.mrf.mxu0
  %5933 = vdwg.mxu0
  %v5934 = vadd.f32 %v5608, %v5811
  %v5935 = vadd.f32 %v5609, %v5816
  %v5936 = vadd.f32 %v5610, %v5821
  %v5937 = vadd.f32 %v5611, %v5826
  %v5938 = vadd.f32 %v5612, %v5831
  %v5939 = vadd.f32 %v5613, %v5836
  %v5940 = vadd.f32 %v5614, %v5841
  %v5941 = vadd.f32 %v5615, %v5846
  %v5942 = vadd.f32 %v5616, %v5851
  %v5943 = vadd.f32 %v5617, %v5856
  %v5944 = vadd.f32 %v5618, %v5861
  %v5945 = vadd.f32 %v5619, %v5866
  %v5946 = vadd.f32 %v5620, %v5871
  %v5947 = vadd.f32 %v5621, %v5876
  %v5948 = vadd.f32 %v5622, %v5881
  %v5949 = vadd.f32 %v5623, %v5886
  %v5950 = vadd.f32 %v5624, %v5891
  %v5951 = vadd.f32 %v5625, %v5896
  %v5952 = vadd.f32 %v5626, %v5901
  %v5953 = vadd.f32 %v5627, %v5906
  %v5954 = vadd.f32 %v5628, %v5911
  %v5955 = vadd.f32 %v5629, %v5916
  %v5956 = vadd.f32 %v5630, %v5921
  %v5957 = vadd.f32 %v5631, %v5926
  %v5958 = vadd.f32 %v5632, %v5931
  %v5959 = vld [vmem:[#allocation2 + $0xf] sm:$0xff]
  %v5960 = vld [vmem:[#allocation2 + $0x17] sm:$0xff]
  %v5961 = vld [vmem:[#allocation2 + $0x1f] sm:$0xff]
  %v5962 = vld [vmem:[#allocation2 + $0x27] sm:$0xff]
  %v5963 = vld [vmem:[#allocation2 + $0x2f] sm:$0xff]
  %v5964 = vld [vmem:[#allocation2 + $0x37] sm:$0xff]
  %v5965 = vld [vmem:[#allocation2 + $0x3f] sm:$0xff]
  %v5966 = vld [vmem:[#allocation2 + $0x47] sm:$0xff]
  %v5967 = vld [vmem:[#allocation2 + $0x4f] sm:$0xff]
  %v5968 = vld [vmem:[#allocation2 + $0x57] sm:$0xff]
  %v5969 = vld [vmem:[#allocation2 + $0x5f] sm:$0xff]
  %v5970 = vld [vmem:[#allocation2 + $0x67] sm:$0xff]
  %v5971 = vld [vmem:[#allocation2 + $0x6f] sm:$0xff]
  %v5972 = vld [vmem:[#allocation2 + $0x77] sm:$0xff]
  %v5973 = vld [vmem:[#allocation2 + $0x7f] sm:$0xff]
  %v5974 = vld [vmem:[#allocation2 + $0x87] sm:$0xff]
  %v5975 = vld [vmem:[#allocation2 + $0x8f] sm:$0xff]
  %v5976 = vld [vmem:[#allocation2 + $0x97] sm:$0xff]
  %v5977 = vld [vmem:[#allocation2 + $0x9f] sm:$0xff]
  %v5978 = vld [vmem:[#allocation2 + $0xa7] sm:$0xff]
  %v5979 = vld [vmem:[#allocation2 + $0xaf] sm:$0xff]
  %v5980 = vld [vmem:[#allocation2 + $0xb7] sm:$0xff]
  %v5981 = vld [vmem:[#allocation2 + $0xbf] sm:$0xff]
  %v5982 = vld [vmem:[#allocation2 + $0xc7] sm:$0xff]
  %v5983 = vld [vmem:[#allocation2 + $0xcf] sm:$0xff]
  %s5984 = scalar_lea.vmem %s3, 240
  %v5985 = vld [vmem:[%s5984] sm:$0xff]
  %v5986 = vld [vmem:[%s5984 + $0x8] sm:$0xff]
  %v5987 = vld [vmem:[%s5984 + $0x10] sm:$0xff]
  %v5988 = vld [vmem:[%s5984 + $0x18] sm:$0xff]
  %v5989 = vld [vmem:[%s5984 + $0x20] sm:$0xff]
  %v5990 = vld [vmem:[%s5984 + $0x28] sm:$0xff]
  %v5991 = vld [vmem:[%s5984 + $0x30] sm:$0xff]
  %v5992 = vld [vmem:[%s5984 + $0x38] sm:$0xff]
  %v5993 = vld [vmem:[%s5984 + $0x40] sm:$0xff]
  %v5994 = vld [vmem:[%s5984 + $0x48] sm:$0xff]
  %v5996 = vsel %vm4927, %v5959, 0
  %v5999 = vsel %vm4927, %v5960, 0
  %v6002 = vsel %vm4927, %v5961, 0
  %v6005 = vsel %vm4927, %v5962, 0
  %v6008 = vsel %vm4927, %v5963, 0
  %v6011 = vsel %vm4927, %v5964, 0
  %v6014 = vsel %vm4927, %v5965, 0
  %v6017 = vsel %vm4927, %v5966, 0
  %v6020 = vsel %vm4927, %v5967, 0
  %v6023 = vsel %vm4927, %v5968, 0
  %v6026 = vsel %vm4927, %v5969, 0
  %v6029 = vsel %vm4927, %v5970, 0
  %v6032 = vsel %vm4927, %v5971, 0
  %v6035 = vsel %vm4927, %v5972, 0
  %v6038 = vsel %vm4927, %v5973, 0
  %v6041 = vsel %vm4927, %v5974, 0
  %v6044 = vsel %vm4927, %v5975, 0
  %v6047 = vsel %vm4927, %v5976, 0
  %v6050 = vsel %vm4927, %v5977, 0
  %v6053 = vsel %vm4927, %v5978, 0
  %v6056 = vsel %vm4927, %v5979, 0
  %v6059 = vsel %vm4927, %v5980, 0
  %v6062 = vsel %vm4927, %v5981, 0
  %v6065 = vsel %vm4927, %v5982, 0
  %v6068 = vsel %vm4927, %v5983, 0
  %6070 = vmatprep.subr.mxu0 0.0
  %6071 = vmatpush1.msra.mxu0 0.0
  %6072 = vmatprep.subr.mxu0 0.0
  %6073 = vmatpush1.msra.mxu0 0.0
  %6074 = vmatprep.subr.mxu0 0.0
  %6075 = vmatpush1.msra.mxu0 0.0
  %6076 = vmatprep.subr.mxu0 0.0
  %6077 = vmatpush1.msra.mxu0 0.0
  %6078 = vmatprep.subr.mxu0 0.0
  %6079 = vmatpush1.msra.mxu0 0.0
  %6080 = vmatprep.subr.mxu0 0.0
  %6081 = vmatpush1.msra.mxu0 0.0
  %6082 = vmatprep.subr.mxu0 0.0
  %6083 = vmatpush1.msra.mxu0 %v5994
  %6084 = vmatprep.subr.mxu0 0.0
  %6085 = vmatpush1.msra.mxu0 %v5993
  %6086 = vmatprep.subr.mxu0 0.0
  %6087 = vmatpush1.msra.mxu0 %v5992
  %6088 = vmatprep.subr.mxu0 0.0
  %6089 = vmatpush1.msra.mxu0 %v5991
  %6090 = vmatprep.subr.mxu0 0.0
  %6091 = vmatpush1.msra.mxu0 %v5990
  %6092 = vmatprep.subr.mxu0 0.0
  %6093 = vmatpush1.msra.mxu0 %v5989
  %6094 = vmatprep.subr.mxu0 0.0
  %6095 = vmatpush1.msra.mxu0 %v5988
  %6096 = vmatprep.subr.mxu0 0.0
  %6097 = vmatpush1.msra.mxu0 %v5987
  %6098 = vmatprep.subr.mxu0 0.0
  %6099 = vmatpush1.msra.mxu0 %v5986
  %6100 = vmatprep.subr.mxu0 0.0
  %6101 = vmatpush1.msra.mxu0 %v5985
  %6102 = vmatprep.subr.mxu0 0.0
  %6103 = vmatpush2.msra.mxu0 0.0
  %6104 = vmatprep.subr.mxu0 0.0
  %6105 = vmatpush2.msra.mxu0 0.0
  %6106 = vmatprep.subr.mxu0 0.0
  %6107 = vmatpush2.msra.mxu0 0.0
  %6108 = vmatprep.subr.mxu0 0.0
  %6109 = vmatpush2.msra.mxu0 0.0
  %6110 = vmatprep.subr.mxu0 0.0
  %6111 = vmatpush2.msra.mxu0 0.0
  %6112 = vmatprep.subr.mxu0 0.0
  %6113 = vmatpush2.msra.mxu0 0.0
  %6114 = vmatprep.subr.mxu0 0.0
  %6115 = vmatpush2.msra.mxu0 0.0
  %6116 = vmatprep.subr.mxu0 0.0
  %6117 = vmatpush2.msra.mxu0 0.0
  %6118 = vmatprep.subr.mxu0 0.0
  %6119 = vmatpush2.msra.mxu0 0.0
  %6120 = vmatprep.subr.mxu0 0.0
  %6121 = vmatpush2.msra.mxu0 0.0
  %6122 = vmatprep.subr.mxu0 0.0
  %6123 = vmatpush2.msra.mxu0 0.0
  %6124 = vmatprep.subr.mxu0 0.0
  %6125 = vmatpush2.msra.mxu0 0.0
  %6126 = vmatprep.subr.mxu0 0.0
  %6127 = vmatpush2.msra.mxu0 0.0
  %6128 = vmatprep.subr.mxu0 0.0
  %6129 = vmatpush2.msra.mxu0 0.0
  %6130 = vmatprep.subr.mxu0 0.0
  %6131 = vmatpush2.msra.mxu0 0.0
  %6132 = vmatprep.subr.mxu0 0.0
  %6133 = vmatpush2.msra.mxu0 0.0
  %6134 = vmatprep.mubr.f32.mxu0 0.0
  %6135 = vmatmul.mubr.f32.gmra.mxu0 %v5996
  %v6136 = vpop.f32.mrf.mxu0
  %v6137 = vadd.f32 0.0, %v6136
  %v6138 = vpop.f32.mrf.mxu0
  %6139 = vmatprep.mubr.f32.mxu0 0.0
  %6140 = vmatmul.mubr.f32.gmra.mxu0 %v5999
  %v6141 = vpop.f32.mrf.mxu0
  %v6142 = vadd.f32 0.0, %v6141
  %v6143 = vpop.f32.mrf.mxu0
  %6144 = vmatprep.mubr.f32.mxu0 0.0
  %6145 = vmatmul.mubr.f32.gmra.mxu0 %v6002
  %v6146 = vpop.f32.mrf.mxu0
  %v6147 = vadd.f32 0.0, %v6146
  %v6148 = vpop.f32.mrf.mxu0
  %6149 = vmatprep.mubr.f32.mxu0 0.0
  %6150 = vmatmul.mubr.f32.gmra.mxu0 %v6005
  %v6151 = vpop.f32.mrf.mxu0
  %v6152 = vadd.f32 0.0, %v6151
  %v6153 = vpop.f32.mrf.mxu0
  %6154 = vmatprep.mubr.f32.mxu0 0.0
  %6155 = vmatmul.mubr.f32.gmra.mxu0 %v6008
  %v6156 = vpop.f32.mrf.mxu0
  %v6157 = vadd.f32 0.0, %v6156
  %v6158 = vpop.f32.mrf.mxu0
  %6159 = vmatprep.mubr.f32.mxu0 0.0
  %6160 = vmatmul.mubr.f32.gmra.mxu0 %v6011
  %v6161 = vpop.f32.mrf.mxu0
  %v6162 = vadd.f32 0.0, %v6161
  %v6163 = vpop.f32.mrf.mxu0
  %6164 = vmatprep.mubr.f32.mxu0 0.0
  %6165 = vmatmul.mubr.f32.gmra.mxu0 %v6014
  %v6166 = vpop.f32.mrf.mxu0
  %v6167 = vadd.f32 0.0, %v6166
  %v6168 = vpop.f32.mrf.mxu0
  %6169 = vmatprep.mubr.f32.mxu0 0.0
  %6170 = vmatmul.mubr.f32.gmra.mxu0 %v6017
  %v6171 = vpop.f32.mrf.mxu0
  %v6172 = vadd.f32 0.0, %v6171
  %v6173 = vpop.f32.mrf.mxu0
  %6174 = vmatprep.mubr.f32.mxu0 0.0
  %6175 = vmatmul.mubr.f32.gmra.mxu0 %v6020
  %v6176 = vpop.f32.mrf.mxu0
  %v6177 = vadd.f32 0.0, %v6176
  %v6178 = vpop.f32.mrf.mxu0
  %6179 = vmatprep.mubr.f32.mxu0 0.0
  %6180 = vmatmul.mubr.f32.gmra.mxu0 %v6023
  %v6181 = vpop.f32.mrf.mxu0
  %v6182 = vadd.f32 0.0, %v6181
  %v6183 = vpop.f32.mrf.mxu0
  %6184 = vmatprep.mubr.f32.mxu0 0.0
  %6185 = vmatmul.mubr.f32.gmra.mxu0 %v6026
  %v6186 = vpop.f32.mrf.mxu0
  %v6187 = vadd.f32 0.0, %v6186
  %v6188 = vpop.f32.mrf.mxu0
  %6189 = vmatprep.mubr.f32.mxu0 0.0
  %6190 = vmatmul.mubr.f32.gmra.mxu0 %v6029
  %v6191 = vpop.f32.mrf.mxu0
  %v6192 = vadd.f32 0.0, %v6191
  %v6193 = vpop.f32.mrf.mxu0
  %6194 = vmatprep.mubr.f32.mxu0 0.0
  %6195 = vmatmul.mubr.f32.gmra.mxu0 %v6032
  %v6196 = vpop.f32.mrf.mxu0
  %v6197 = vadd.f32 0.0, %v6196
  %v6198 = vpop.f32.mrf.mxu0
  %6199 = vmatprep.mubr.f32.mxu0 0.0
  %6200 = vmatmul.mubr.f32.gmra.mxu0 %v6035
  %v6201 = vpop.f32.mrf.mxu0
  %v6202 = vadd.f32 0.0, %v6201
  %v6203 = vpop.f32.mrf.mxu0
  %6204 = vmatprep.mubr.f32.mxu0 0.0
  %6205 = vmatmul.mubr.f32.gmra.mxu0 %v6038
  %v6206 = vpop.f32.mrf.mxu0
  %v6207 = vadd.f32 0.0, %v6206
  %v6208 = vpop.f32.mrf.mxu0
  %6209 = vmatprep.mubr.f32.mxu0 0.0
  %6210 = vmatmul.mubr.f32.gmra.mxu0 %v6041
  %v6211 = vpop.f32.mrf.mxu0
  %v6212 = vadd.f32 0.0, %v6211
  %v6213 = vpop.f32.mrf.mxu0
  %6214 = vmatprep.mubr.f32.mxu0 0.0
  %6215 = vmatmul.mubr.f32.gmra.mxu0 %v6044
  %v6216 = vpop.f32.mrf.mxu0
  %v6217 = vadd.f32 0.0, %v6216
  %v6218 = vpop.f32.mrf.mxu0
  %6219 = vmatprep.mubr.f32.mxu0 0.0
  %6220 = vmatmul.mubr.f32.gmra.mxu0 %v6047
  %v6221 = vpop.f32.mrf.mxu0
  %v6222 = vadd.f32 0.0, %v6221
  %v6223 = vpop.f32.mrf.mxu0
  %6224 = vmatprep.mubr.f32.mxu0 0.0
  %6225 = vmatmul.mubr.f32.gmra.mxu0 %v6050
  %v6226 = vpop.f32.mrf.mxu0
  %v6227 = vadd.f32 0.0, %v6226
  %v6228 = vpop.f32.mrf.mxu0
  %6229 = vmatprep.mubr.f32.mxu0 0.0
  %6230 = vmatmul.mubr.f32.gmra.mxu0 %v6053
  %v6231 = vpop.f32.mrf.mxu0
  %v6232 = vadd.f32 0.0, %v6231
  %v6233 = vpop.f32.mrf.mxu0
  %6234 = vmatprep.mubr.f32.mxu0 0.0
  %6235 = vmatmul.mubr.f32.gmra.mxu0 %v6056
  %v6236 = vpop.f32.mrf.mxu0
  %v6237 = vadd.f32 0.0, %v6236
  %v6238 = vpop.f32.mrf.mxu0
  %6239 = vmatprep.mubr.f32.mxu0 0.0
  %6240 = vmatmul.mubr.f32.gmra.mxu0 %v6059
  %v6241 = vpop.f32.mrf.mxu0
  %v6242 = vadd.f32 0.0, %v6241
  %v6243 = vpop.f32.mrf.mxu0
  %6244 = vmatprep.mubr.f32.mxu0 0.0
  %6245 = vmatmul.mubr.f32.gmra.mxu0 %v6062
  %v6246 = vpop.f32.mrf.mxu0
  %v6247 = vadd.f32 0.0, %v6246
  %v6248 = vpop.f32.mrf.mxu0
  %6249 = vmatprep.mubr.f32.mxu0 0.0
  %6250 = vmatmul.mubr.f32.gmra.mxu0 %v6065
  %v6251 = vpop.f32.mrf.mxu0
  %v6252 = vadd.f32 0.0, %v6251
  %v6253 = vpop.f32.mrf.mxu0
  %6254 = vmatprep.mubr.f32.mxu0 0.0
  %6255 = vmatmul.mubr.f32.gmra.mxu0 %v6068
  %v6256 = vpop.f32.mrf.mxu0
  %v6257 = vadd.f32 0.0, %v6256
  %v6258 = vpop.f32.mrf.mxu0
  %6259 = vdwg.mxu0
  %v6260 = vadd.f32 %v5934, %v6137
  %v6261 = vadd.f32 %v5935, %v6142
  %v6262 = vadd.f32 %v5936, %v6147
  %v6263 = vadd.f32 %v5937, %v6152
  %v6264 = vadd.f32 %v5938, %v6157
  %v6265 = vadd.f32 %v5939, %v6162
  %v6266 = vadd.f32 %v5940, %v6167
  %v6267 = vadd.f32 %v5941, %v6172
  %v6268 = vadd.f32 %v5942, %v6177
  %v6269 = vadd.f32 %v5943, %v6182
  %v6270 = vadd.f32 %v5944, %v6187
  %v6271 = vadd.f32 %v5945, %v6192
  %v6272 = vadd.f32 %v5946, %v6197
  %v6273 = vadd.f32 %v5947, %v6202
  %v6274 = vadd.f32 %v5948, %v6207
  %v6275 = vadd.f32 %v5949, %v6212
  %v6276 = vadd.f32 %v5950, %v6217
  %v6277 = vadd.f32 %v5951, %v6222
  %v6278 = vadd.f32 %v5952, %v6227
  %v6279 = vadd.f32 %v5953, %v6232
  %v6280 = vadd.f32 %v5954, %v6237
  %v6281 = vadd.f32 %v5955, %v6242
  %v6282 = vadd.f32 %v5956, %v6247
  %v6283 = vadd.f32 %v5957, %v6252
  %v6284 = vadd.f32 %v5958, %v6257
  %v6285 = vld [vmem:[#allocation2 + $0x10] sm:$0xff]
  %v6286 = vld [vmem:[#allocation2 + $0x18] sm:$0xff]
  %v6287 = vld [vmem:[#allocation2 + $0x20] sm:$0xff]
  %v6288 = vld [vmem:[#allocation2 + $0x28] sm:$0xff]
  %v6289 = vld [vmem:[#allocation2 + $0x30] sm:$0xff]
  %v6290 = vld [vmem:[#allocation2 + $0x38] sm:$0xff]
  %v6291 = vld [vmem:[#allocation2 + $0x40] sm:$0xff]
  %v6292 = vld [vmem:[#allocation2 + $0x48] sm:$0xff]
  %v6293 = vld [vmem:[#allocation2 + $0x50] sm:$0xff]
  %v6294 = vld [vmem:[#allocation2 + $0x58] sm:$0xff]
  %v6295 = vld [vmem:[#allocation2 + $0x60] sm:$0xff]
  %v6296 = vld [vmem:[#allocation2 + $0x68] sm:$0xff]
  %v6297 = vld [vmem:[#allocation2 + $0x70] sm:$0xff]
  %v6298 = vld [vmem:[#allocation2 + $0x78] sm:$0xff]
  %v6299 = vld [vmem:[#allocation2 + $0x80] sm:$0xff]
  %v6300 = vld [vmem:[#allocation2 + $0x88] sm:$0xff]
  %v6301 = vld [vmem:[#allocation2 + $0x90] sm:$0xff]
  %v6302 = vld [vmem:[#allocation2 + $0x98] sm:$0xff]
  %v6303 = vld [vmem:[#allocation2 + $0xa0] sm:$0xff]
  %v6304 = vld [vmem:[#allocation2 + $0xa8] sm:$0xff]
  %v6305 = vld [vmem:[#allocation2 + $0xb0] sm:$0xff]
  %v6306 = vld [vmem:[#allocation2 + $0xb8] sm:$0xff]
  %v6307 = vld [vmem:[#allocation2 + $0xc0] sm:$0xff]
  %v6308 = vld [vmem:[#allocation2 + $0xc8] sm:$0xff]
  %v6309 = vld [vmem:[#allocation2 + $0xd0] sm:$0xff]
  %s6310 = scalar_lea.vmem %s3, 320
  %v6311 = vld [vmem:[%s6310] sm:$0xff]
  %v6312 = vld [vmem:[%s6310 + $0x8] sm:$0xff]
  %v6313 = vld [vmem:[%s6310 + $0x10] sm:$0xff]
  %v6314 = vld [vmem:[%s6310 + $0x18] sm:$0xff]
  %v6315 = vld [vmem:[%s6310 + $0x20] sm:$0xff]
  %v6316 = vld [vmem:[%s6310 + $0x28] sm:$0xff]
  %v6317 = vld [vmem:[%s6310 + $0x30] sm:$0xff]
  %v6318 = vld [vmem:[%s6310 + $0x38] sm:$0xff]
  %v6319 = vld [vmem:[%s6310 + $0x40] sm:$0xff]
  %v6320 = vld [vmem:[%s6310 + $0x48] sm:$0xff]
  %v6322 = vsel %vm4927, %v6285, 0
  %v6325 = vsel %vm4927, %v6286, 0
  %v6328 = vsel %vm4927, %v6287, 0
  %v6331 = vsel %vm4927, %v6288, 0
  %v6334 = vsel %vm4927, %v6289, 0
  %v6337 = vsel %vm4927, %v6290, 0
  %v6340 = vsel %vm4927, %v6291, 0
  %v6343 = vsel %vm4927, %v6292, 0
  %v6346 = vsel %vm4927, %v6293, 0
  %v6349 = vsel %vm4927, %v6294, 0
  %v6352 = vsel %vm4927, %v6295, 0
  %v6355 = vsel %vm4927, %v6296, 0
  %v6358 = vsel %vm4927, %v6297, 0
  %v6361 = vsel %vm4927, %v6298, 0
  %v6364 = vsel %vm4927, %v6299, 0
  %v6367 = vsel %vm4927, %v6300, 0
  %v6370 = vsel %vm4927, %v6301, 0
  %v6373 = vsel %vm4927, %v6302, 0
  %v6376 = vsel %vm4927, %v6303, 0
  %v6379 = vsel %vm4927, %v6304, 0
  %v6382 = vsel %vm4927, %v6305, 0
  %v6385 = vsel %vm4927, %v6306, 0
  %v6388 = vsel %vm4927, %v6307, 0
  %v6391 = vsel %vm4927, %v6308, 0
  %v6394 = vsel %vm4927, %v6309, 0
  %6396 = vmatprep.subr.mxu0 0.0
  %6397 = vmatpush1.msra.mxu0 0.0
  %6398 = vmatprep.subr.mxu0 0.0
  %6399 = vmatpush1.msra.mxu0 0.0
  %6400 = vmatprep.subr.mxu0 0.0
  %6401 = vmatpush1.msra.mxu0 0.0
  %6402 = vmatprep.subr.mxu0 0.0
  %6403 = vmatpush1.msra.mxu0 0.0
  %6404 = vmatprep.subr.mxu0 0.0
  %6405 = vmatpush1.msra.mxu0 0.0
  %6406 = vmatprep.subr.mxu0 0.0
  %6407 = vmatpush1.msra.mxu0 0.0
  %6408 = vmatprep.subr.mxu0 0.0
  %6409 = vmatpush1.msra.mxu0 %v6320
  %6410 = vmatprep.subr.mxu0 0.0
  %6411 = vmatpush1.msra.mxu0 %v6319
  %6412 = vmatprep.subr.mxu0 0.0
  %6413 = vmatpush1.msra.mxu0 %v6318
  %6414 = vmatprep.subr.mxu0 0.0
  %6415 = vmatpush1.msra.mxu0 %v6317
  %6416 = vmatprep.subr.mxu0 0.0
  %6417 = vmatpush1.msra.mxu0 %v6316
  %6418 = vmatprep.subr.mxu0 0.0
  %6419 = vmatpush1.msra.mxu0 %v6315
  %6420 = vmatprep.subr.mxu0 0.0
  %6421 = vmatpush1.msra.mxu0 %v6314
  %6422 = vmatprep.subr.mxu0 0.0
  %6423 = vmatpush1.msra.mxu0 %v6313
  %6424 = vmatprep.subr.mxu0 0.0
  %6425 = vmatpush1.msra.mxu0 %v6312
  %6426 = vmatprep.subr.mxu0 0.0
  %6427 = vmatpush1.msra.mxu0 %v6311
  %6428 = vmatprep.subr.mxu0 0.0
  %6429 = vmatpush2.msra.mxu0 0.0
  %6430 = vmatprep.subr.mxu0 0.0
  %6431 = vmatpush2.msra.mxu0 0.0
  %6432 = vmatprep.subr.mxu0 0.0
  %6433 = vmatpush2.msra.mxu0 0.0
  %6434 = vmatprep.subr.mxu0 0.0
  %6435 = vmatpush2.msra.mxu0 0.0
  %6436 = vmatprep.subr.mxu0 0.0
  %6437 = vmatpush2.msra.mxu0 0.0
  %6438 = vmatprep.subr.mxu0 0.0
  %6439 = vmatpush2.msra.mxu0 0.0
  %6440 = vmatprep.subr.mxu0 0.0
  %6441 = vmatpush2.msra.mxu0 0.0
  %6442 = vmatprep.subr.mxu0 0.0
  %6443 = vmatpush2.msra.mxu0 0.0
  %6444 = vmatprep.subr.mxu0 0.0
  %6445 = vmatpush2.msra.mxu0 0.0
  %6446 = vmatprep.subr.mxu0 0.0
  %6447 = vmatpush2.msra.mxu0 0.0
  %6448 = vmatprep.subr.mxu0 0.0
  %6449 = vmatpush2.msra.mxu0 0.0
  %6450 = vmatprep.subr.mxu0 0.0
  %6451 = vmatpush2.msra.mxu0 0.0
  %6452 = vmatprep.subr.mxu0 0.0
  %6453 = vmatpush2.msra.mxu0 0.0
  %6454 = vmatprep.subr.mxu0 0.0
  %6455 = vmatpush2.msra.mxu0 0.0
  %6456 = vmatprep.subr.mxu0 0.0
  %6457 = vmatpush2.msra.mxu0 0.0
  %6458 = vmatprep.subr.mxu0 0.0
  %6459 = vmatpush2.msra.mxu0 0.0
  %6460 = vmatprep.mubr.f32.mxu0 0.0
  %6461 = vmatmul.mubr.f32.gmra.mxu0 %v6322
  %v6462 = vpop.f32.mrf.mxu0
  %v6463 = vadd.f32 0.0, %v6462
  %v6464 = vpop.f32.mrf.mxu0
  %6465 = vmatprep.mubr.f32.mxu0 0.0
  %6466 = vmatmul.mubr.f32.gmra.mxu0 %v6325
  %v6467 = vpop.f32.mrf.mxu0
  %v6468 = vadd.f32 0.0, %v6467
  %v6469 = vpop.f32.mrf.mxu0
  %6470 = vmatprep.mubr.f32.mxu0 0.0
  %6471 = vmatmul.mubr.f32.gmra.mxu0 %v6328
  %v6472 = vpop.f32.mrf.mxu0
  %v6473 = vadd.f32 0.0, %v6472
  %v6474 = vpop.f32.mrf.mxu0
  %6475 = vmatprep.mubr.f32.mxu0 0.0
  %6476 = vmatmul.mubr.f32.gmra.mxu0 %v6331
  %v6477 = vpop.f32.mrf.mxu0
  %v6478 = vadd.f32 0.0, %v6477
  %v6479 = vpop.f32.mrf.mxu0
  %6480 = vmatprep.mubr.f32.mxu0 0.0
  %6481 = vmatmul.mubr.f32.gmra.mxu0 %v6334
  %v6482 = vpop.f32.mrf.mxu0
  %v6483 = vadd.f32 0.0, %v6482
  %v6484 = vpop.f32.mrf.mxu0
  %6485 = vmatprep.mubr.f32.mxu0 0.0
  %6486 = vmatmul.mubr.f32.gmra.mxu0 %v6337
  %v6487 = vpop.f32.mrf.mxu0
  %v6488 = vadd.f32 0.0, %v6487
  %v6489 = vpop.f32.mrf.mxu0
  %6490 = vmatprep.mubr.f32.mxu0 0.0
  %6491 = vmatmul.mubr.f32.gmra.mxu0 %v6340
  %v6492 = vpop.f32.mrf.mxu0
  %v6493 = vadd.f32 0.0, %v6492
  %v6494 = vpop.f32.mrf.mxu0
  %6495 = vmatprep.mubr.f32.mxu0 0.0
  %6496 = vmatmul.mubr.f32.gmra.mxu0 %v6343
  %v6497 = vpop.f32.mrf.mxu0
  %v6498 = vadd.f32 0.0, %v6497
  %v6499 = vpop.f32.mrf.mxu0
  %6500 = vmatprep.mubr.f32.mxu0 0.0
  %6501 = vmatmul.mubr.f32.gmra.mxu0 %v6346
  %v6502 = vpop.f32.mrf.mxu0
  %v6503 = vadd.f32 0.0, %v6502
  %v6504 = vpop.f32.mrf.mxu0
  %6505 = vmatprep.mubr.f32.mxu0 0.0
  %6506 = vmatmul.mubr.f32.gmra.mxu0 %v6349
  %v6507 = vpop.f32.mrf.mxu0
  %v6508 = vadd.f32 0.0, %v6507
  %v6509 = vpop.f32.mrf.mxu0
  %6510 = vmatprep.mubr.f32.mxu0 0.0
  %6511 = vmatmul.mubr.f32.gmra.mxu0 %v6352
  %v6512 = vpop.f32.mrf.mxu0
  %v6513 = vadd.f32 0.0, %v6512
  %v6514 = vpop.f32.mrf.mxu0
  %6515 = vmatprep.mubr.f32.mxu0 0.0
  %6516 = vmatmul.mubr.f32.gmra.mxu0 %v6355
  %v6517 = vpop.f32.mrf.mxu0
  %v6518 = vadd.f32 0.0, %v6517
  %v6519 = vpop.f32.mrf.mxu0
  %6520 = vmatprep.mubr.f32.mxu0 0.0
  %6521 = vmatmul.mubr.f32.gmra.mxu0 %v6358
  %v6522 = vpop.f32.mrf.mxu0
  %v6523 = vadd.f32 0.0, %v6522
  %v6524 = vpop.f32.mrf.mxu0
  %6525 = vmatprep.mubr.f32.mxu0 0.0
  %6526 = vmatmul.mubr.f32.gmra.mxu0 %v6361
  %v6527 = vpop.f32.mrf.mxu0
  %v6528 = vadd.f32 0.0, %v6527
  %v6529 = vpop.f32.mrf.mxu0
  %6530 = vmatprep.mubr.f32.mxu0 0.0
  %6531 = vmatmul.mubr.f32.gmra.mxu0 %v6364
  %v6532 = vpop.f32.mrf.mxu0
  %v6533 = vadd.f32 0.0, %v6532
  %v6534 = vpop.f32.mrf.mxu0
  %6535 = vmatprep.mubr.f32.mxu0 0.0
  %6536 = vmatmul.mubr.f32.gmra.mxu0 %v6367
  %v6537 = vpop.f32.mrf.mxu0
  %v6538 = vadd.f32 0.0, %v6537
  %v6539 = vpop.f32.mrf.mxu0
  %6540 = vmatprep.mubr.f32.mxu0 0.0
  %6541 = vmatmul.mubr.f32.gmra.mxu0 %v6370
  %v6542 = vpop.f32.mrf.mxu0
  %v6543 = vadd.f32 0.0, %v6542
  %v6544 = vpop.f32.mrf.mxu0
  %6545 = vmatprep.mubr.f32.mxu0 0.0
  %6546 = vmatmul.mubr.f32.gmra.mxu0 %v6373
  %v6547 = vpop.f32.mrf.mxu0
  %v6548 = vadd.f32 0.0, %v6547
  %v6549 = vpop.f32.mrf.mxu0
  %6550 = vmatprep.mubr.f32.mxu0 0.0
  %6551 = vmatmul.mubr.f32.gmra.mxu0 %v6376
  %v6552 = vpop.f32.mrf.mxu0
  %v6553 = vadd.f32 0.0, %v6552
  %v6554 = vpop.f32.mrf.mxu0
  %6555 = vmatprep.mubr.f32.mxu0 0.0
  %6556 = vmatmul.mubr.f32.gmra.mxu0 %v6379
  %v6557 = vpop.f32.mrf.mxu0
  %v6558 = vadd.f32 0.0, %v6557
  %v6559 = vpop.f32.mrf.mxu0
  %6560 = vmatprep.mubr.f32.mxu0 0.0
  %6561 = vmatmul.mubr.f32.gmra.mxu0 %v6382
  %v6562 = vpop.f32.mrf.mxu0
  %v6563 = vadd.f32 0.0, %v6562
  %v6564 = vpop.f32.mrf.mxu0
  %6565 = vmatprep.mubr.f32.mxu0 0.0
  %6566 = vmatmul.mubr.f32.gmra.mxu0 %v6385
  %v6567 = vpop.f32.mrf.mxu0
  %v6568 = vadd.f32 0.0, %v6567
  %v6569 = vpop.f32.mrf.mxu0
  %6570 = vmatprep.mubr.f32.mxu0 0.0
  %6571 = vmatmul.mubr.f32.gmra.mxu0 %v6388
  %v6572 = vpop.f32.mrf.mxu0
  %v6573 = vadd.f32 0.0, %v6572
  %v6574 = vpop.f32.mrf.mxu0
  %6575 = vmatprep.mubr.f32.mxu0 0.0
  %6576 = vmatmul.mubr.f32.gmra.mxu0 %v6391
  %v6577 = vpop.f32.mrf.mxu0
  %v6578 = vadd.f32 0.0, %v6577
  %v6579 = vpop.f32.mrf.mxu0
  %6580 = vmatprep.mubr.f32.mxu0 0.0
  %6581 = vmatmul.mubr.f32.gmra.mxu0 %v6394
  %v6582 = vpop.f32.mrf.mxu0
  %v6583 = vadd.f32 0.0, %v6582
  %v6584 = vpop.f32.mrf.mxu0
  %6585 = vdwg.mxu0
  %v6586 = vadd.f32 %v6260, %v6463
  %v6587 = vadd.f32 %v6261, %v6468
  %v6588 = vadd.f32 %v6262, %v6473
  %v6589 = vadd.f32 %v6263, %v6478
  %v6590 = vadd.f32 %v6264, %v6483
  %v6591 = vadd.f32 %v6265, %v6488
  %v6592 = vadd.f32 %v6266, %v6493
  %v6593 = vadd.f32 %v6267, %v6498
  %v6594 = vadd.f32 %v6268, %v6503
  %v6595 = vadd.f32 %v6269, %v6508
  %v6596 = vadd.f32 %v6270, %v6513
  %v6597 = vadd.f32 %v6271, %v6518
  %v6598 = vadd.f32 %v6272, %v6523
  %v6599 = vadd.f32 %v6273, %v6528
  %v6600 = vadd.f32 %v6274, %v6533
  %v6601 = vadd.f32 %v6275, %v6538
  %v6602 = vadd.f32 %v6276, %v6543
  %v6603 = vadd.f32 %v6277, %v6548
  %v6604 = vadd.f32 %v6278, %v6553
  %v6605 = vadd.f32 %v6279, %v6558
  %v6606 = vadd.f32 %v6280, %v6563
  %v6607 = vadd.f32 %v6281, %v6568
  %v6608 = vadd.f32 %v6282, %v6573
  %v6609 = vadd.f32 %v6283, %v6578
  %v6610 = vadd.f32 %v6284, %v6583
  %v6611 = vld [vmem:[#allocation2 + $0x11] sm:$0xff]
  %v6612 = vld [vmem:[#allocation2 + $0x19] sm:$0xff]
  %v6613 = vld [vmem:[#allocation2 + $0x21] sm:$0xff]
  %v6614 = vld [vmem:[#allocation2 + $0x29] sm:$0xff]
  %v6615 = vld [vmem:[#allocation2 + $0x31] sm:$0xff]
  %v6616 = vld [vmem:[#allocation2 + $0x39] sm:$0xff]
  %v6617 = vld [vmem:[#allocation2 + $0x41] sm:$0xff]
  %v6618 = vld [vmem:[#allocation2 + $0x49] sm:$0xff]
  %v6619 = vld [vmem:[#allocation2 + $0x51] sm:$0xff]
  %v6620 = vld [vmem:[#allocation2 + $0x59] sm:$0xff]
  %v6621 = vld [vmem:[#allocation2 + $0x61] sm:$0xff]
  %v6622 = vld [vmem:[#allocation2 + $0x69] sm:$0xff]
  %v6623 = vld [vmem:[#allocation2 + $0x71] sm:$0xff]
  %v6624 = vld [vmem:[#allocation2 + $0x79] sm:$0xff]
  %v6625 = vld [vmem:[#allocation2 + $0x81] sm:$0xff]
  %v6626 = vld [vmem:[#allocation2 + $0x89] sm:$0xff]
  %v6627 = vld [vmem:[#allocation2 + $0x91] sm:$0xff]
  %v6628 = vld [vmem:[#allocation2 + $0x99] sm:$0xff]
  %v6629 = vld [vmem:[#allocation2 + $0xa1] sm:$0xff]
  %v6630 = vld [vmem:[#allocation2 + $0xa9] sm:$0xff]
  %v6631 = vld [vmem:[#allocation2 + $0xb1] sm:$0xff]
  %v6632 = vld [vmem:[#allocation2 + $0xb9] sm:$0xff]
  %v6633 = vld [vmem:[#allocation2 + $0xc1] sm:$0xff]
  %v6634 = vld [vmem:[#allocation2 + $0xc9] sm:$0xff]
  %v6635 = vld [vmem:[#allocation2 + $0xd1] sm:$0xff]
  %s6636 = scalar_lea.vmem %s3, 400
  %v6637 = vld [vmem:[%s6636] sm:$0xff]
  %v6638 = vld [vmem:[%s6636 + $0x8] sm:$0xff]
  %v6639 = vld [vmem:[%s6636 + $0x10] sm:$0xff]
  %v6640 = vld [vmem:[%s6636 + $0x18] sm:$0xff]
  %v6641 = vld [vmem:[%s6636 + $0x20] sm:$0xff]
  %v6642 = vld [vmem:[%s6636 + $0x28] sm:$0xff]
  %v6643 = vld [vmem:[%s6636 + $0x30] sm:$0xff]
  %v6644 = vld [vmem:[%s6636 + $0x38] sm:$0xff]
  %v6645 = vld [vmem:[%s6636 + $0x40] sm:$0xff]
  %v6646 = vld [vmem:[%s6636 + $0x48] sm:$0xff]
  %v6648 = vsel %vm4927, %v6611, 0
  %v6651 = vsel %vm4927, %v6612, 0
  %v6654 = vsel %vm4927, %v6613, 0
  %v6657 = vsel %vm4927, %v6614, 0
  %v6660 = vsel %vm4927, %v6615, 0
  %v6663 = vsel %vm4927, %v6616, 0
  %v6666 = vsel %vm4927, %v6617, 0
  %v6669 = vsel %vm4927, %v6618, 0
  %v6672 = vsel %vm4927, %v6619, 0
  %v6675 = vsel %vm4927, %v6620, 0
  %v6678 = vsel %vm4927, %v6621, 0
  %v6681 = vsel %vm4927, %v6622, 0
  %v6684 = vsel %vm4927, %v6623, 0
  %v6687 = vsel %vm4927, %v6624, 0
  %v6690 = vsel %vm4927, %v6625, 0
  %v6693 = vsel %vm4927, %v6626, 0
  %v6696 = vsel %vm4927, %v6627, 0
  %v6699 = vsel %vm4927, %v6628, 0
  %v6702 = vsel %vm4927, %v6629, 0
  %v6705 = vsel %vm4927, %v6630, 0
  %v6708 = vsel %vm4927, %v6631, 0
  %v6711 = vsel %vm4927, %v6632, 0
  %v6714 = vsel %vm4927, %v6633, 0
  %v6717 = vsel %vm4927, %v6634, 0
  %v6720 = vsel %vm4927, %v6635, 0
  %6722 = vmatprep.subr.mxu0 0.0
  %6723 = vmatpush1.msra.mxu0 0.0
  %6724 = vmatprep.subr.mxu0 0.0
  %6725 = vmatpush1.msra.mxu0 0.0
  %6726 = vmatprep.subr.mxu0 0.0
  %6727 = vmatpush1.msra.mxu0 0.0
  %6728 = vmatprep.subr.mxu0 0.0
  %6729 = vmatpush1.msra.mxu0 0.0
  %6730 = vmatprep.subr.mxu0 0.0
  %6731 = vmatpush1.msra.mxu0 0.0
  %6732 = vmatprep.subr.mxu0 0.0
  %6733 = vmatpush1.msra.mxu0 0.0
  %6734 = vmatprep.subr.mxu0 0.0
  %6735 = vmatpush1.msra.mxu0 %v6646
  %6736 = vmatprep.subr.mxu0 0.0
  %6737 = vmatpush1.msra.mxu0 %v6645
  %6738 = vmatprep.subr.mxu0 0.0
  %6739 = vmatpush1.msra.mxu0 %v6644
  %6740 = vmatprep.subr.mxu0 0.0
  %6741 = vmatpush1.msra.mxu0 %v6643
  %6742 = vmatprep.subr.mxu0 0.0
  %6743 = vmatpush1.msra.mxu0 %v6642
  %6744 = vmatprep.subr.mxu0 0.0
  %6745 = vmatpush1.msra.mxu0 %v6641
  %6746 = vmatprep.subr.mxu0 0.0
  %6747 = vmatpush1.msra.mxu0 %v6640
  %6748 = vmatprep.subr.mxu0 0.0
  %6749 = vmatpush1.msra.mxu0 %v6639
  %6750 = vmatprep.subr.mxu0 0.0
  %6751 = vmatpush1.msra.mxu0 %v6638
  %6752 = vmatprep.subr.mxu0 0.0
  %6753 = vmatpush1.msra.mxu0 %v6637
  %6754 = vmatprep.subr.mxu0 0.0
  %6755 = vmatpush2.msra.mxu0 0.0
  %6756 = vmatprep.subr.mxu0 0.0
  %6757 = vmatpush2.msra.mxu0 0.0
  %6758 = vmatprep.subr.mxu0 0.0
  %6759 = vmatpush2.msra.mxu0 0.0
  %6760 = vmatprep.subr.mxu0 0.0
  %6761 = vmatpush2.msra.mxu0 0.0
  %6762 = vmatprep.subr.mxu0 0.0
  %6763 = vmatpush2.msra.mxu0 0.0
  %6764 = vmatprep.subr.mxu0 0.0
  %6765 = vmatpush2.msra.mxu0 0.0
  %6766 = vmatprep.subr.mxu0 0.0
  %6767 = vmatpush2.msra.mxu0 0.0
  %6768 = vmatprep.subr.mxu0 0.0
  %6769 = vmatpush2.msra.mxu0 0.0
  %6770 = vmatprep.subr.mxu0 0.0
  %6771 = vmatpush2.msra.mxu0 0.0
  %6772 = vmatprep.subr.mxu0 0.0
  %6773 = vmatpush2.msra.mxu0 0.0
  %6774 = vmatprep.subr.mxu0 0.0
  %6775 = vmatpush2.msra.mxu0 0.0
  %6776 = vmatprep.subr.mxu0 0.0
  %6777 = vmatpush2.msra.mxu0 0.0
  %6778 = vmatprep.subr.mxu0 0.0
  %6779 = vmatpush2.msra.mxu0 0.0
  %6780 = vmatprep.subr.mxu0 0.0
  %6781 = vmatpush2.msra.mxu0 0.0
  %6782 = vmatprep.subr.mxu0 0.0
  %6783 = vmatpush2.msra.mxu0 0.0
  %6784 = vmatprep.subr.mxu0 0.0
  %6785 = vmatpush2.msra.mxu0 0.0
  %6786 = vmatprep.mubr.f32.mxu0 0.0
  %6787 = vmatmul.mubr.f32.gmra.mxu0 %v6648
  %v6788 = vpop.f32.mrf.mxu0
  %v6789 = vadd.f32 0.0, %v6788
  %v6790 = vpop.f32.mrf.mxu0
  %6791 = vmatprep.mubr.f32.mxu0 0.0
  %6792 = vmatmul.mubr.f32.gmra.mxu0 %v6651
  %v6793 = vpop.f32.mrf.mxu0
  %v6794 = vadd.f32 0.0, %v6793
  %v6795 = vpop.f32.mrf.mxu0
  %6796 = vmatprep.mubr.f32.mxu0 0.0
  %6797 = vmatmul.mubr.f32.gmra.mxu0 %v6654
  %v6798 = vpop.f32.mrf.mxu0
  %v6799 = vadd.f32 0.0, %v6798
  %v6800 = vpop.f32.mrf.mxu0
  %6801 = vmatprep.mubr.f32.mxu0 0.0
  %6802 = vmatmul.mubr.f32.gmra.mxu0 %v6657
  %v6803 = vpop.f32.mrf.mxu0
  %v6804 = vadd.f32 0.0, %v6803
  %v6805 = vpop.f32.mrf.mxu0
  %6806 = vmatprep.mubr.f32.mxu0 0.0
  %6807 = vmatmul.mubr.f32.gmra.mxu0 %v6660
  %v6808 = vpop.f32.mrf.mxu0
  %v6809 = vadd.f32 0.0, %v6808
  %v6810 = vpop.f32.mrf.mxu0
  %6811 = vmatprep.mubr.f32.mxu0 0.0
  %6812 = vmatmul.mubr.f32.gmra.mxu0 %v6663
  %v6813 = vpop.f32.mrf.mxu0
  %v6814 = vadd.f32 0.0, %v6813
  %v6815 = vpop.f32.mrf.mxu0
  %6816 = vmatprep.mubr.f32.mxu0 0.0
  %6817 = vmatmul.mubr.f32.gmra.mxu0 %v6666
  %v6818 = vpop.f32.mrf.mxu0
  %v6819 = vadd.f32 0.0, %v6818
  %v6820 = vpop.f32.mrf.mxu0
  %6821 = vmatprep.mubr.f32.mxu0 0.0
  %6822 = vmatmul.mubr.f32.gmra.mxu0 %v6669
  %v6823 = vpop.f32.mrf.mxu0
  %v6824 = vadd.f32 0.0, %v6823
  %v6825 = vpop.f32.mrf.mxu0
  %6826 = vmatprep.mubr.f32.mxu0 0.0
  %6827 = vmatmul.mubr.f32.gmra.mxu0 %v6672
  %v6828 = vpop.f32.mrf.mxu0
  %v6829 = vadd.f32 0.0, %v6828
  %v6830 = vpop.f32.mrf.mxu0
  %6831 = vmatprep.mubr.f32.mxu0 0.0
  %6832 = vmatmul.mubr.f32.gmra.mxu0 %v6675
  %v6833 = vpop.f32.mrf.mxu0
  %v6834 = vadd.f32 0.0, %v6833
  %v6835 = vpop.f32.mrf.mxu0
  %6836 = vmatprep.mubr.f32.mxu0 0.0
  %6837 = vmatmul.mubr.f32.gmra.mxu0 %v6678
  %v6838 = vpop.f32.mrf.mxu0
  %v6839 = vadd.f32 0.0, %v6838
  %v6840 = vpop.f32.mrf.mxu0
  %6841 = vmatprep.mubr.f32.mxu0 0.0
  %6842 = vmatmul.mubr.f32.gmra.mxu0 %v6681
  %v6843 = vpop.f32.mrf.mxu0
  %v6844 = vadd.f32 0.0, %v6843
  %v6845 = vpop.f32.mrf.mxu0
  %6846 = vmatprep.mubr.f32.mxu0 0.0
  %6847 = vmatmul.mubr.f32.gmra.mxu0 %v6684
  %v6848 = vpop.f32.mrf.mxu0
  %v6849 = vadd.f32 0.0, %v6848
  %v6850 = vpop.f32.mrf.mxu0
  %6851 = vmatprep.mubr.f32.mxu0 0.0
  %6852 = vmatmul.mubr.f32.gmra.mxu0 %v6687
  %v6853 = vpop.f32.mrf.mxu0
  %v6854 = vadd.f32 0.0, %v6853
  %v6855 = vpop.f32.mrf.mxu0
  %6856 = vmatprep.mubr.f32.mxu0 0.0
  %6857 = vmatmul.mubr.f32.gmra.mxu0 %v6690
  %v6858 = vpop.f32.mrf.mxu0
  %v6859 = vadd.f32 0.0, %v6858
  %v6860 = vpop.f32.mrf.mxu0
  %6861 = vmatprep.mubr.f32.mxu0 0.0
  %6862 = vmatmul.mubr.f32.gmra.mxu0 %v6693
  %v6863 = vpop.f32.mrf.mxu0
  %v6864 = vadd.f32 0.0, %v6863
  %v6865 = vpop.f32.mrf.mxu0
  %6866 = vmatprep.mubr.f32.mxu0 0.0
  %6867 = vmatmul.mubr.f32.gmra.mxu0 %v6696
  %v6868 = vpop.f32.mrf.mxu0
  %v6869 = vadd.f32 0.0, %v6868
  %v6870 = vpop.f32.mrf.mxu0
  %6871 = vmatprep.mubr.f32.mxu0 0.0
  %6872 = vmatmul.mubr.f32.gmra.mxu0 %v6699
  %v6873 = vpop.f32.mrf.mxu0
  %v6874 = vadd.f32 0.0, %v6873
  %v6875 = vpop.f32.mrf.mxu0
  %6876 = vmatprep.mubr.f32.mxu0 0.0
  %6877 = vmatmul.mubr.f32.gmra.mxu0 %v6702
  %v6878 = vpop.f32.mrf.mxu0
  %v6879 = vadd.f32 0.0, %v6878
  %v6880 = vpop.f32.mrf.mxu0
  %6881 = vmatprep.mubr.f32.mxu0 0.0
  %6882 = vmatmul.mubr.f32.gmra.mxu0 %v6705
  %v6883 = vpop.f32.mrf.mxu0
  %v6884 = vadd.f32 0.0, %v6883
  %v6885 = vpop.f32.mrf.mxu0
  %6886 = vmatprep.mubr.f32.mxu0 0.0
  %6887 = vmatmul.mubr.f32.gmra.mxu0 %v6708
  %v6888 = vpop.f32.mrf.mxu0
  %v6889 = vadd.f32 0.0, %v6888
  %v6890 = vpop.f32.mrf.mxu0
  %6891 = vmatprep.mubr.f32.mxu0 0.0
  %6892 = vmatmul.mubr.f32.gmra.mxu0 %v6711
  %v6893 = vpop.f32.mrf.mxu0
  %v6894 = vadd.f32 0.0, %v6893
  %v6895 = vpop.f32.mrf.mxu0
  %6896 = vmatprep.mubr.f32.mxu0 0.0
  %6897 = vmatmul.mubr.f32.gmra.mxu0 %v6714
  %v6898 = vpop.f32.mrf.mxu0
  %v6899 = vadd.f32 0.0, %v6898
  %v6900 = vpop.f32.mrf.mxu0
  %6901 = vmatprep.mubr.f32.mxu0 0.0
  %6902 = vmatmul.mubr.f32.gmra.mxu0 %v6717
  %v6903 = vpop.f32.mrf.mxu0
  %v6904 = vadd.f32 0.0, %v6903
  %v6905 = vpop.f32.mrf.mxu0
  %6906 = vmatprep.mubr.f32.mxu0 0.0
  %6907 = vmatmul.mubr.f32.gmra.mxu0 %v6720
  %v6908 = vpop.f32.mrf.mxu0
  %v6909 = vadd.f32 0.0, %v6908
  %v6910 = vpop.f32.mrf.mxu0
  %6911 = vdwg.mxu0
  %v6912 = vadd.f32 %v6586, %v6789
  %v6913 = vadd.f32 %v6587, %v6794
  %v6914 = vadd.f32 %v6588, %v6799
  %v6915 = vadd.f32 %v6589, %v6804
  %v6916 = vadd.f32 %v6590, %v6809
  %v6917 = vadd.f32 %v6591, %v6814
  %v6918 = vadd.f32 %v6592, %v6819
  %v6919 = vadd.f32 %v6593, %v6824
  %v6920 = vadd.f32 %v6594, %v6829
  %v6921 = vadd.f32 %v6595, %v6834
  %v6922 = vadd.f32 %v6596, %v6839
  %v6923 = vadd.f32 %v6597, %v6844
  %v6924 = vadd.f32 %v6598, %v6849
  %v6925 = vadd.f32 %v6599, %v6854
  %v6926 = vadd.f32 %v6600, %v6859
  %v6927 = vadd.f32 %v6601, %v6864
  %v6928 = vadd.f32 %v6602, %v6869
  %v6929 = vadd.f32 %v6603, %v6874
  %v6930 = vadd.f32 %v6604, %v6879
  %v6931 = vadd.f32 %v6605, %v6884
  %v6932 = vadd.f32 %v6606, %v6889
  %v6933 = vadd.f32 %v6607, %v6894
  %v6934 = vadd.f32 %v6608, %v6899
  %v6935 = vadd.f32 %v6609, %v6904
  %v6936 = vadd.f32 %v6610, %v6909
  %v6937 = vld [vmem:[#allocation2 + $0x19] sm:$0xff]
  %v6938 = vld [vmem:[#allocation2 + $0x21] sm:$0xff]
  %v6939 = vld [vmem:[#allocation2 + $0x29] sm:$0xff]
  %v6940 = vld [vmem:[#allocation2 + $0x31] sm:$0xff]
  %v6941 = vld [vmem:[#allocation2 + $0x39] sm:$0xff]
  %v6942 = vld [vmem:[#allocation2 + $0x41] sm:$0xff]
  %v6943 = vld [vmem:[#allocation2 + $0x49] sm:$0xff]
  %v6944 = vld [vmem:[#allocation2 + $0x51] sm:$0xff]
  %v6945 = vld [vmem:[#allocation2 + $0x59] sm:$0xff]
  %v6946 = vld [vmem:[#allocation2 + $0x61] sm:$0xff]
  %v6947 = vld [vmem:[#allocation2 + $0x69] sm:$0xff]
  %v6948 = vld [vmem:[#allocation2 + $0x71] sm:$0xff]
  %v6949 = vld [vmem:[#allocation2 + $0x79] sm:$0xff]
  %v6950 = vld [vmem:[#allocation2 + $0x81] sm:$0xff]
  %v6951 = vld [vmem:[#allocation2 + $0x89] sm:$0xff]
  %v6952 = vld [vmem:[#allocation2 + $0x91] sm:$0xff]
  %v6953 = vld [vmem:[#allocation2 + $0x99] sm:$0xff]
  %v6954 = vld [vmem:[#allocation2 + $0xa1] sm:$0xff]
  %v6955 = vld [vmem:[#allocation2 + $0xa9] sm:$0xff]
  %v6956 = vld [vmem:[#allocation2 + $0xb1] sm:$0xff]
  %v6957 = vld [vmem:[#allocation2 + $0xb9] sm:$0xff]
  %v6958 = vld [vmem:[#allocation2 + $0xc1] sm:$0xff]
  %v6959 = vld [vmem:[#allocation2 + $0xc9] sm:$0xff]
  %v6960 = vld [vmem:[#allocation2 + $0xd1] sm:$0xff]
  %v6961 = vld [vmem:[#allocation2 + $0xd9] sm:$0xff]
  %s6962 = scalar_lea.vmem %s3, 480
  %v6963 = vld [vmem:[%s6962] sm:$0xff]
  %v6964 = vld [vmem:[%s6962 + $0x8] sm:$0xff]
  %v6965 = vld [vmem:[%s6962 + $0x10] sm:$0xff]
  %v6966 = vld [vmem:[%s6962 + $0x18] sm:$0xff]
  %v6967 = vld [vmem:[%s6962 + $0x20] sm:$0xff]
  %v6968 = vld [vmem:[%s6962 + $0x28] sm:$0xff]
  %v6969 = vld [vmem:[%s6962 + $0x30] sm:$0xff]
  %v6970 = vld [vmem:[%s6962 + $0x38] sm:$0xff]
  %v6971 = vld [vmem:[%s6962 + $0x40] sm:$0xff]
  %v6972 = vld [vmem:[%s6962 + $0x48] sm:$0xff]
  %v6974 = vsel %vm4927, %v6937, 0
  %v6977 = vsel %vm4927, %v6938, 0
  %v6980 = vsel %vm4927, %v6939, 0
  %v6983 = vsel %vm4927, %v6940, 0
  %v6986 = vsel %vm4927, %v6941, 0
  %v6989 = vsel %vm4927, %v6942, 0
  %v6992 = vsel %vm4927, %v6943, 0
  %v6995 = vsel %vm4927, %v6944, 0
  %v6998 = vsel %vm4927, %v6945, 0
  %v7001 = vsel %vm4927, %v6946, 0
  %v7004 = vsel %vm4927, %v6947, 0
  %v7007 = vsel %vm4927, %v6948, 0
  %v7010 = vsel %vm4927, %v6949, 0
  %v7013 = vsel %vm4927, %v6950, 0
  %v7016 = vsel %vm4927, %v6951, 0
  %v7019 = vsel %vm4927, %v6952, 0
  %v7022 = vsel %vm4927, %v6953, 0
  %v7025 = vsel %vm4927, %v6954, 0
  %v7028 = vsel %vm4927, %v6955, 0
  %v7031 = vsel %vm4927, %v6956, 0
  %v7034 = vsel %vm4927, %v6957, 0
  %v7037 = vsel %vm4927, %v6958, 0
  %v7040 = vsel %vm4927, %v6959, 0
  %v7043 = vsel %vm4927, %v6960, 0
  %v7046 = vsel %vm4927, %v6961, 0
  %7048 = vmatprep.subr.mxu0 0.0
  %7049 = vmatpush1.msra.mxu0 0.0
  %7050 = vmatprep.subr.mxu0 0.0
  %7051 = vmatpush1.msra.mxu0 0.0
  %7052 = vmatprep.subr.mxu0 0.0
  %7053 = vmatpush1.msra.mxu0 0.0
  %7054 = vmatprep.subr.mxu0 0.0
  %7055 = vmatpush1.msra.mxu0 0.0
  %7056 = vmatprep.subr.mxu0 0.0
  %7057 = vmatpush1.msra.mxu0 0.0
  %7058 = vmatprep.subr.mxu0 0.0
  %7059 = vmatpush1.msra.mxu0 0.0
  %7060 = vmatprep.subr.mxu0 0.0
  %7061 = vmatpush1.msra.mxu0 %v6972
  %7062 = vmatprep.subr.mxu0 0.0
  %7063 = vmatpush1.msra.mxu0 %v6971
  %7064 = vmatprep.subr.mxu0 0.0
  %7065 = vmatpush1.msra.mxu0 %v6970
  %7066 = vmatprep.subr.mxu0 0.0
  %7067 = vmatpush1.msra.mxu0 %v6969
  %7068 = vmatprep.subr.mxu0 0.0
  %7069 = vmatpush1.msra.mxu0 %v6968
  %7070 = vmatprep.subr.mxu0 0.0
  %7071 = vmatpush1.msra.mxu0 %v6967
  %7072 = vmatprep.subr.mxu0 0.0
  %7073 = vmatpush1.msra.mxu0 %v6966
  %7074 = vmatprep.subr.mxu0 0.0
  %7075 = vmatpush1.msra.mxu0 %v6965
  %7076 = vmatprep.subr.mxu0 0.0
  %7077 = vmatpush1.msra.mxu0 %v6964
  %7078 = vmatprep.subr.mxu0 0.0
  %7079 = vmatpush1.msra.mxu0 %v6963
  %7080 = vmatprep.subr.mxu0 0.0
  %7081 = vmatpush2.msra.mxu0 0.0
  %7082 = vmatprep.subr.mxu0 0.0
  %7083 = vmatpush2.msra.mxu0 0.0
  %7084 = vmatprep.subr.mxu0 0.0
  %7085 = vmatpush2.msra.mxu0 0.0
  %7086 = vmatprep.subr.mxu0 0.0
  %7087 = vmatpush2.msra.mxu0 0.0
  %7088 = vmatprep.subr.mxu0 0.0
  %7089 = vmatpush2.msra.mxu0 0.0
  %7090 = vmatprep.subr.mxu0 0.0
  %7091 = vmatpush2.msra.mxu0 0.0
  %7092 = vmatprep.subr.mxu0 0.0
  %7093 = vmatpush2.msra.mxu0 0.0
  %7094 = vmatprep.subr.mxu0 0.0
  %7095 = vmatpush2.msra.mxu0 0.0
  %7096 = vmatprep.subr.mxu0 0.0
  %7097 = vmatpush2.msra.mxu0 0.0
  %7098 = vmatprep.subr.mxu0 0.0
  %7099 = vmatpush2.msra.mxu0 0.0
  %7100 = vmatprep.subr.mxu0 0.0
  %7101 = vmatpush2.msra.mxu0 0.0
  %7102 = vmatprep.subr.mxu0 0.0
  %7103 = vmatpush2.msra.mxu0 0.0
  %7104 = vmatprep.subr.mxu0 0.0
  %7105 = vmatpush2.msra.mxu0 0.0
  %7106 = vmatprep.subr.mxu0 0.0
  %7107 = vmatpush2.msra.mxu0 0.0
  %7108 = vmatprep.subr.mxu0 0.0
  %7109 = vmatpush2.msra.mxu0 0.0
  %7110 = vmatprep.subr.mxu0 0.0
  %7111 = vmatpush2.msra.mxu0 0.0
  %7112 = vmatprep.mubr.f32.mxu0 0.0
  %7113 = vmatmul.mubr.f32.gmra.mxu0 %v6974
  %v7114 = vpop.f32.mrf.mxu0
  %v7115 = vadd.f32 0.0, %v7114
  %v7116 = vpop.f32.mrf.mxu0
  %7117 = vmatprep.mubr.f32.mxu0 0.0
  %7118 = vmatmul.mubr.f32.gmra.mxu0 %v6977
  %v7119 = vpop.f32.mrf.mxu0
  %v7120 = vadd.f32 0.0, %v7119
  %v7121 = vpop.f32.mrf.mxu0
  %7122 = vmatprep.mubr.f32.mxu0 0.0
  %7123 = vmatmul.mubr.f32.gmra.mxu0 %v6980
  %v7124 = vpop.f32.mrf.mxu0
  %v7125 = vadd.f32 0.0, %v7124
  %v7126 = vpop.f32.mrf.mxu0
  %7127 = vmatprep.mubr.f32.mxu0 0.0
  %7128 = vmatmul.mubr.f32.gmra.mxu0 %v6983
  %v7129 = vpop.f32.mrf.mxu0
  %v7130 = vadd.f32 0.0, %v7129
  %v7131 = vpop.f32.mrf.mxu0
  %7132 = vmatprep.mubr.f32.mxu0 0.0
  %7133 = vmatmul.mubr.f32.gmra.mxu0 %v6986
  %v7134 = vpop.f32.mrf.mxu0
  %v7135 = vadd.f32 0.0, %v7134
  %v7136 = vpop.f32.mrf.mxu0
  %7137 = vmatprep.mubr.f32.mxu0 0.0
  %7138 = vmatmul.mubr.f32.gmra.mxu0 %v6989
  %v7139 = vpop.f32.mrf.mxu0
  %v7140 = vadd.f32 0.0, %v7139
  %v7141 = vpop.f32.mrf.mxu0
  %7142 = vmatprep.mubr.f32.mxu0 0.0
  %7143 = vmatmul.mubr.f32.gmra.mxu0 %v6992
  %v7144 = vpop.f32.mrf.mxu0
  %v7145 = vadd.f32 0.0, %v7144
  %v7146 = vpop.f32.mrf.mxu0
  %7147 = vmatprep.mubr.f32.mxu0 0.0
  %7148 = vmatmul.mubr.f32.gmra.mxu0 %v6995
  %v7149 = vpop.f32.mrf.mxu0
  %v7150 = vadd.f32 0.0, %v7149
  %v7151 = vpop.f32.mrf.mxu0
  %7152 = vmatprep.mubr.f32.mxu0 0.0
  %7153 = vmatmul.mubr.f32.gmra.mxu0 %v6998
  %v7154 = vpop.f32.mrf.mxu0
  %v7155 = vadd.f32 0.0, %v7154
  %v7156 = vpop.f32.mrf.mxu0
  %7157 = vmatprep.mubr.f32.mxu0 0.0
  %7158 = vmatmul.mubr.f32.gmra.mxu0 %v7001
  %v7159 = vpop.f32.mrf.mxu0
  %v7160 = vadd.f32 0.0, %v7159
  %v7161 = vpop.f32.mrf.mxu0
  %7162 = vmatprep.mubr.f32.mxu0 0.0
  %7163 = vmatmul.mubr.f32.gmra.mxu0 %v7004
  %v7164 = vpop.f32.mrf.mxu0
  %v7165 = vadd.f32 0.0, %v7164
  %v7166 = vpop.f32.mrf.mxu0
  %7167 = vmatprep.mubr.f32.mxu0 0.0
  %7168 = vmatmul.mubr.f32.gmra.mxu0 %v7007
  %v7169 = vpop.f32.mrf.mxu0
  %v7170 = vadd.f32 0.0, %v7169
  %v7171 = vpop.f32.mrf.mxu0
  %7172 = vmatprep.mubr.f32.mxu0 0.0
  %7173 = vmatmul.mubr.f32.gmra.mxu0 %v7010
  %v7174 = vpop.f32.mrf.mxu0
  %v7175 = vadd.f32 0.0, %v7174
  %v7176 = vpop.f32.mrf.mxu0
  %7177 = vmatprep.mubr.f32.mxu0 0.0
  %7178 = vmatmul.mubr.f32.gmra.mxu0 %v7013
  %v7179 = vpop.f32.mrf.mxu0
  %v7180 = vadd.f32 0.0, %v7179
  %v7181 = vpop.f32.mrf.mxu0
  %7182 = vmatprep.mubr.f32.mxu0 0.0
  %7183 = vmatmul.mubr.f32.gmra.mxu0 %v7016
  %v7184 = vpop.f32.mrf.mxu0
  %v7185 = vadd.f32 0.0, %v7184
  %v7186 = vpop.f32.mrf.mxu0
  %7187 = vmatprep.mubr.f32.mxu0 0.0
  %7188 = vmatmul.mubr.f32.gmra.mxu0 %v7019
  %v7189 = vpop.f32.mrf.mxu0
  %v7190 = vadd.f32 0.0, %v7189
  %v7191 = vpop.f32.mrf.mxu0
  %7192 = vmatprep.mubr.f32.mxu0 0.0
  %7193 = vmatmul.mubr.f32.gmra.mxu0 %v7022
  %v7194 = vpop.f32.mrf.mxu0
  %v7195 = vadd.f32 0.0, %v7194
  %v7196 = vpop.f32.mrf.mxu0
  %7197 = vmatprep.mubr.f32.mxu0 0.0
  %7198 = vmatmul.mubr.f32.gmra.mxu0 %v7025
  %v7199 = vpop.f32.mrf.mxu0
  %v7200 = vadd.f32 0.0, %v7199
  %v7201 = vpop.f32.mrf.mxu0
  %7202 = vmatprep.mubr.f32.mxu0 0.0
  %7203 = vmatmul.mubr.f32.gmra.mxu0 %v7028
  %v7204 = vpop.f32.mrf.mxu0
  %v7205 = vadd.f32 0.0, %v7204
  %v7206 = vpop.f32.mrf.mxu0
  %7207 = vmatprep.mubr.f32.mxu0 0.0
  %7208 = vmatmul.mubr.f32.gmra.mxu0 %v7031
  %v7209 = vpop.f32.mrf.mxu0
  %v7210 = vadd.f32 0.0, %v7209
  %v7211 = vpop.f32.mrf.mxu0
  %7212 = vmatprep.mubr.f32.mxu0 0.0
  %7213 = vmatmul.mubr.f32.gmra.mxu0 %v7034
  %v7214 = vpop.f32.mrf.mxu0
  %v7215 = vadd.f32 0.0, %v7214
  %v7216 = vpop.f32.mrf.mxu0
  %7217 = vmatprep.mubr.f32.mxu0 0.0
  %7218 = vmatmul.mubr.f32.gmra.mxu0 %v7037
  %v7219 = vpop.f32.mrf.mxu0
  %v7220 = vadd.f32 0.0, %v7219
  %v7221 = vpop.f32.mrf.mxu0
  %7222 = vmatprep.mubr.f32.mxu0 0.0
  %7223 = vmatmul.mubr.f32.gmra.mxu0 %v7040
  %v7224 = vpop.f32.mrf.mxu0
  %v7225 = vadd.f32 0.0, %v7224
  %v7226 = vpop.f32.mrf.mxu0
  %7227 = vmatprep.mubr.f32.mxu0 0.0
  %7228 = vmatmul.mubr.f32.gmra.mxu0 %v7043
  %v7229 = vpop.f32.mrf.mxu0
  %v7230 = vadd.f32 0.0, %v7229
  %v7231 = vpop.f32.mrf.mxu0
  %7232 = vmatprep.mubr.f32.mxu0 0.0
  %7233 = vmatmul.mubr.f32.gmra.mxu0 %v7046
  %v7234 = vpop.f32.mrf.mxu0
  %v7235 = vadd.f32 0.0, %v7234
  %v7236 = vpop.f32.mrf.mxu0
  %7237 = vdwg.mxu0
  %v7238 = vadd.f32 %v6912, %v7115
  %v7239 = vadd.f32 %v6913, %v7120
  %v7240 = vadd.f32 %v6914, %v7125
  %v7241 = vadd.f32 %v6915, %v7130
  %v7242 = vadd.f32 %v6916, %v7135
  %v7243 = vadd.f32 %v6917, %v7140
  %v7244 = vadd.f32 %v6918, %v7145
  %v7245 = vadd.f32 %v6919, %v7150
  %v7246 = vadd.f32 %v6920, %v7155
  %v7247 = vadd.f32 %v6921, %v7160
  %v7248 = vadd.f32 %v6922, %v7165
  %v7249 = vadd.f32 %v6923, %v7170
  %v7250 = vadd.f32 %v6924, %v7175
  %v7251 = vadd.f32 %v6925, %v7180
  %v7252 = vadd.f32 %v6926, %v7185
  %v7253 = vadd.f32 %v6927, %v7190
  %v7254 = vadd.f32 %v6928, %v7195
  %v7255 = vadd.f32 %v6929, %v7200
  %v7256 = vadd.f32 %v6930, %v7205
  %v7257 = vadd.f32 %v6931, %v7210
  %v7258 = vadd.f32 %v6932, %v7215
  %v7259 = vadd.f32 %v6933, %v7220
  %v7260 = vadd.f32 %v6934, %v7225
  %v7261 = vadd.f32 %v6935, %v7230
  %v7262 = vadd.f32 %v6936, %v7235
  %v7263 = vld [vmem:[#allocation2 + $0x1a] sm:$0xff]
  %v7264 = vld [vmem:[#allocation2 + $0x22] sm:$0xff]
  %v7265 = vld [vmem:[#allocation2 + $0x2a] sm:$0xff]
  %v7266 = vld [vmem:[#allocation2 + $0x32] sm:$0xff]
  %v7267 = vld [vmem:[#allocation2 + $0x3a] sm:$0xff]
  %v7268 = vld [vmem:[#allocation2 + $0x42] sm:$0xff]
  %v7269 = vld [vmem:[#allocation2 + $0x4a] sm:$0xff]
  %v7270 = vld [vmem:[#allocation2 + $0x52] sm:$0xff]
  %v7271 = vld [vmem:[#allocation2 + $0x5a] sm:$0xff]
  %v7272 = vld [vmem:[#allocation2 + $0x62] sm:$0xff]
  %v7273 = vld [vmem:[#allocation2 + $0x6a] sm:$0xff]
  %v7274 = vld [vmem:[#allocation2 + $0x72] sm:$0xff]
  %v7275 = vld [vmem:[#allocation2 + $0x7a] sm:$0xff]
  %v7276 = vld [vmem:[#allocation2 + $0x82] sm:$0xff]
  %v7277 = vld [vmem:[#allocation2 + $0x8a] sm:$0xff]
  %v7278 = vld [vmem:[#allocation2 + $0x92] sm:$0xff]
  %v7279 = vld [vmem:[#allocation2 + $0x9a] sm:$0xff]
  %v7280 = vld [vmem:[#allocation2 + $0xa2] sm:$0xff]
  %v7281 = vld [vmem:[#allocation2 + $0xaa] sm:$0xff]
  %v7282 = vld [vmem:[#allocation2 + $0xb2] sm:$0xff]
  %v7283 = vld [vmem:[#allocation2 + $0xba] sm:$0xff]
  %v7284 = vld [vmem:[#allocation2 + $0xc2] sm:$0xff]
  %v7285 = vld [vmem:[#allocation2 + $0xca] sm:$0xff]
  %v7286 = vld [vmem:[#allocation2 + $0xd2] sm:$0xff]
  %v7287 = vld [vmem:[#allocation2 + $0xda] sm:$0xff]
  %s7288 = scalar_lea.vmem %s3, 560
  %v7289 = vld [vmem:[%s7288] sm:$0xff]
  %v7290 = vld [vmem:[%s7288 + $0x8] sm:$0xff]
  %v7291 = vld [vmem:[%s7288 + $0x10] sm:$0xff]
  %v7292 = vld [vmem:[%s7288 + $0x18] sm:$0xff]
  %v7293 = vld [vmem:[%s7288 + $0x20] sm:$0xff]
  %v7294 = vld [vmem:[%s7288 + $0x28] sm:$0xff]
  %v7295 = vld [vmem:[%s7288 + $0x30] sm:$0xff]
  %v7296 = vld [vmem:[%s7288 + $0x38] sm:$0xff]
  %v7297 = vld [vmem:[%s7288 + $0x40] sm:$0xff]
  %v7298 = vld [vmem:[%s7288 + $0x48] sm:$0xff]
  %v7300 = vsel %vm4927, %v7263, 0
  %v7303 = vsel %vm4927, %v7264, 0
  %v7306 = vsel %vm4927, %v7265, 0
  %v7309 = vsel %vm4927, %v7266, 0
  %v7312 = vsel %vm4927, %v7267, 0
  %v7315 = vsel %vm4927, %v7268, 0
  %v7318 = vsel %vm4927, %v7269, 0
  %v7321 = vsel %vm4927, %v7270, 0
  %v7324 = vsel %vm4927, %v7271, 0
  %v7327 = vsel %vm4927, %v7272, 0
  %v7330 = vsel %vm4927, %v7273, 0
  %v7333 = vsel %vm4927, %v7274, 0
  %v7336 = vsel %vm4927, %v7275, 0
  %v7339 = vsel %vm4927, %v7276, 0
  %v7342 = vsel %vm4927, %v7277, 0
  %v7345 = vsel %vm4927, %v7278, 0
  %v7348 = vsel %vm4927, %v7279, 0
  %v7351 = vsel %vm4927, %v7280, 0
  %v7354 = vsel %vm4927, %v7281, 0
  %v7357 = vsel %vm4927, %v7282, 0
  %v7360 = vsel %vm4927, %v7283, 0
  %v7363 = vsel %vm4927, %v7284, 0
  %v7366 = vsel %vm4927, %v7285, 0
  %v7369 = vsel %vm4927, %v7286, 0
  %v7372 = vsel %vm4927, %v7287, 0
  %7374 = vmatprep.subr.mxu0 0.0
  %7375 = vmatpush1.msra.mxu0 0.0
  %7376 = vmatprep.subr.mxu0 0.0
  %7377 = vmatpush1.msra.mxu0 0.0
  %7378 = vmatprep.subr.mxu0 0.0
  %7379 = vmatpush1.msra.mxu0 0.0
  %7380 = vmatprep.subr.mxu0 0.0
  %7381 = vmatpush1.msra.mxu0 0.0
  %7382 = vmatprep.subr.mxu0 0.0
  %7383 = vmatpush1.msra.mxu0 0.0
  %7384 = vmatprep.subr.mxu0 0.0
  %7385 = vmatpush1.msra.mxu0 0.0
  %7386 = vmatprep.subr.mxu0 0.0
  %7387 = vmatpush1.msra.mxu0 %v7298
  %7388 = vmatprep.subr.mxu0 0.0
  %7389 = vmatpush1.msra.mxu0 %v7297
  %7390 = vmatprep.subr.mxu0 0.0
  %7391 = vmatpush1.msra.mxu0 %v7296
  %7392 = vmatprep.subr.mxu0 0.0
  %7393 = vmatpush1.msra.mxu0 %v7295
  %7394 = vmatprep.subr.mxu0 0.0
  %7395 = vmatpush1.msra.mxu0 %v7294
  %7396 = vmatprep.subr.mxu0 0.0
  %7397 = vmatpush1.msra.mxu0 %v7293
  %7398 = vmatprep.subr.mxu0 0.0
  %7399 = vmatpush1.msra.mxu0 %v7292
  %7400 = vmatprep.subr.mxu0 0.0
  %7401 = vmatpush1.msra.mxu0 %v7291
  %7402 = vmatprep.subr.mxu0 0.0
  %7403 = vmatpush1.msra.mxu0 %v7290
  %7404 = vmatprep.subr.mxu0 0.0
  %7405 = vmatpush1.msra.mxu0 %v7289
  %7406 = vmatprep.subr.mxu0 0.0
  %7407 = vmatpush2.msra.mxu0 0.0
  %7408 = vmatprep.subr.mxu0 0.0
  %7409 = vmatpush2.msra.mxu0 0.0
  %7410 = vmatprep.subr.mxu0 0.0
  %7411 = vmatpush2.msra.mxu0 0.0
  %7412 = vmatprep.subr.mxu0 0.0
  %7413 = vmatpush2.msra.mxu0 0.0
  %7414 = vmatprep.subr.mxu0 0.0
  %7415 = vmatpush2.msra.mxu0 0.0
  %7416 = vmatprep.subr.mxu0 0.0
  %7417 = vmatpush2.msra.mxu0 0.0
  %7418 = vmatprep.subr.mxu0 0.0
  %7419 = vmatpush2.msra.mxu0 0.0
  %7420 = vmatprep.subr.mxu0 0.0
  %7421 = vmatpush2.msra.mxu0 0.0
  %7422 = vmatprep.subr.mxu0 0.0
  %7423 = vmatpush2.msra.mxu0 0.0
  %7424 = vmatprep.subr.mxu0 0.0
  %7425 = vmatpush2.msra.mxu0 0.0
  %7426 = vmatprep.subr.mxu0 0.0
  %7427 = vmatpush2.msra.mxu0 0.0
  %7428 = vmatprep.subr.mxu0 0.0
  %7429 = vmatpush2.msra.mxu0 0.0
  %7430 = vmatprep.subr.mxu0 0.0
  %7431 = vmatpush2.msra.mxu0 0.0
  %7432 = vmatprep.subr.mxu0 0.0
  %7433 = vmatpush2.msra.mxu0 0.0
  %7434 = vmatprep.subr.mxu0 0.0
  %7435 = vmatpush2.msra.mxu0 0.0
  %7436 = vmatprep.subr.mxu0 0.0
  %7437 = vmatpush2.msra.mxu0 0.0
  %7438 = vmatprep.mubr.f32.mxu0 0.0
  %7439 = vmatmul.mubr.f32.gmra.mxu0 %v7300
  %v7440 = vpop.f32.mrf.mxu0
  %v7441 = vadd.f32 0.0, %v7440
  %v7442 = vpop.f32.mrf.mxu0
  %7443 = vmatprep.mubr.f32.mxu0 0.0
  %7444 = vmatmul.mubr.f32.gmra.mxu0 %v7303
  %v7445 = vpop.f32.mrf.mxu0
  %v7446 = vadd.f32 0.0, %v7445
  %v7447 = vpop.f32.mrf.mxu0
  %7448 = vmatprep.mubr.f32.mxu0 0.0
  %7449 = vmatmul.mubr.f32.gmra.mxu0 %v7306
  %v7450 = vpop.f32.mrf.mxu0
  %v7451 = vadd.f32 0.0, %v7450
  %v7452 = vpop.f32.mrf.mxu0
  %7453 = vmatprep.mubr.f32.mxu0 0.0
  %7454 = vmatmul.mubr.f32.gmra.mxu0 %v7309
  %v7455 = vpop.f32.mrf.mxu0
  %v7456 = vadd.f32 0.0, %v7455
  %v7457 = vpop.f32.mrf.mxu0
  %7458 = vmatprep.mubr.f32.mxu0 0.0
  %7459 = vmatmul.mubr.f32.gmra.mxu0 %v7312
  %v7460 = vpop.f32.mrf.mxu0
  %v7461 = vadd.f32 0.0, %v7460
  %v7462 = vpop.f32.mrf.mxu0
  %7463 = vmatprep.mubr.f32.mxu0 0.0
  %7464 = vmatmul.mubr.f32.gmra.mxu0 %v7315
  %v7465 = vpop.f32.mrf.mxu0
  %v7466 = vadd.f32 0.0, %v7465
  %v7467 = vpop.f32.mrf.mxu0
  %7468 = vmatprep.mubr.f32.mxu0 0.0
  %7469 = vmatmul.mubr.f32.gmra.mxu0 %v7318
  %v7470 = vpop.f32.mrf.mxu0
  %v7471 = vadd.f32 0.0, %v7470
  %v7472 = vpop.f32.mrf.mxu0
  %7473 = vmatprep.mubr.f32.mxu0 0.0
  %7474 = vmatmul.mubr.f32.gmra.mxu0 %v7321
  %v7475 = vpop.f32.mrf.mxu0
  %v7476 = vadd.f32 0.0, %v7475
  %v7477 = vpop.f32.mrf.mxu0
  %7478 = vmatprep.mubr.f32.mxu0 0.0
  %7479 = vmatmul.mubr.f32.gmra.mxu0 %v7324
  %v7480 = vpop.f32.mrf.mxu0
  %v7481 = vadd.f32 0.0, %v7480
  %v7482 = vpop.f32.mrf.mxu0
  %7483 = vmatprep.mubr.f32.mxu0 0.0
  %7484 = vmatmul.mubr.f32.gmra.mxu0 %v7327
  %v7485 = vpop.f32.mrf.mxu0
  %v7486 = vadd.f32 0.0, %v7485
  %v7487 = vpop.f32.mrf.mxu0
  %7488 = vmatprep.mubr.f32.mxu0 0.0
  %7489 = vmatmul.mubr.f32.gmra.mxu0 %v7330
  %v7490 = vpop.f32.mrf.mxu0
  %v7491 = vadd.f32 0.0, %v7490
  %v7492 = vpop.f32.mrf.mxu0
  %7493 = vmatprep.mubr.f32.mxu0 0.0
  %7494 = vmatmul.mubr.f32.gmra.mxu0 %v7333
  %v7495 = vpop.f32.mrf.mxu0
  %v7496 = vadd.f32 0.0, %v7495
  %v7497 = vpop.f32.mrf.mxu0
  %7498 = vmatprep.mubr.f32.mxu0 0.0
  %7499 = vmatmul.mubr.f32.gmra.mxu0 %v7336
  %v7500 = vpop.f32.mrf.mxu0
  %v7501 = vadd.f32 0.0, %v7500
  %v7502 = vpop.f32.mrf.mxu0
  %7503 = vmatprep.mubr.f32.mxu0 0.0
  %7504 = vmatmul.mubr.f32.gmra.mxu0 %v7339
  %v7505 = vpop.f32.mrf.mxu0
  %v7506 = vadd.f32 0.0, %v7505
  %v7507 = vpop.f32.mrf.mxu0
  %7508 = vmatprep.mubr.f32.mxu0 0.0
  %7509 = vmatmul.mubr.f32.gmra.mxu0 %v7342
  %v7510 = vpop.f32.mrf.mxu0
  %v7511 = vadd.f32 0.0, %v7510
  %v7512 = vpop.f32.mrf.mxu0
  %7513 = vmatprep.mubr.f32.mxu0 0.0
  %7514 = vmatmul.mubr.f32.gmra.mxu0 %v7345
  %v7515 = vpop.f32.mrf.mxu0
  %v7516 = vadd.f32 0.0, %v7515
  %v7517 = vpop.f32.mrf.mxu0
  %7518 = vmatprep.mubr.f32.mxu0 0.0
  %7519 = vmatmul.mubr.f32.gmra.mxu0 %v7348
  %v7520 = vpop.f32.mrf.mxu0
  %v7521 = vadd.f32 0.0, %v7520
  %v7522 = vpop.f32.mrf.mxu0
  %7523 = vmatprep.mubr.f32.mxu0 0.0
  %7524 = vmatmul.mubr.f32.gmra.mxu0 %v7351
  %v7525 = vpop.f32.mrf.mxu0
  %v7526 = vadd.f32 0.0, %v7525
  %v7527 = vpop.f32.mrf.mxu0
  %7528 = vmatprep.mubr.f32.mxu0 0.0
  %7529 = vmatmul.mubr.f32.gmra.mxu0 %v7354
  %v7530 = vpop.f32.mrf.mxu0
  %v7531 = vadd.f32 0.0, %v7530
  %v7532 = vpop.f32.mrf.mxu0
  %7533 = vmatprep.mubr.f32.mxu0 0.0
  %7534 = vmatmul.mubr.f32.gmra.mxu0 %v7357
  %v7535 = vpop.f32.mrf.mxu0
  %v7536 = vadd.f32 0.0, %v7535
  %v7537 = vpop.f32.mrf.mxu0
  %7538 = vmatprep.mubr.f32.mxu0 0.0
  %7539 = vmatmul.mubr.f32.gmra.mxu0 %v7360
  %v7540 = vpop.f32.mrf.mxu0
  %v7541 = vadd.f32 0.0, %v7540
  %v7542 = vpop.f32.mrf.mxu0
  %7543 = vmatprep.mubr.f32.mxu0 0.0
  %7544 = vmatmul.mubr.f32.gmra.mxu0 %v7363
  %v7545 = vpop.f32.mrf.mxu0
  %v7546 = vadd.f32 0.0, %v7545
  %v7547 = vpop.f32.mrf.mxu0
  %7548 = vmatprep.mubr.f32.mxu0 0.0
  %7549 = vmatmul.mubr.f32.gmra.mxu0 %v7366
  %v7550 = vpop.f32.mrf.mxu0
  %v7551 = vadd.f32 0.0, %v7550
  %v7552 = vpop.f32.mrf.mxu0
  %7553 = vmatprep.mubr.f32.mxu0 0.0
  %7554 = vmatmul.mubr.f32.gmra.mxu0 %v7369
  %v7555 = vpop.f32.mrf.mxu0
  %v7556 = vadd.f32 0.0, %v7555
  %v7557 = vpop.f32.mrf.mxu0
  %7558 = vmatprep.mubr.f32.mxu0 0.0
  %7559 = vmatmul.mubr.f32.gmra.mxu0 %v7372
  %v7560 = vpop.f32.mrf.mxu0
  %v7561 = vadd.f32 0.0, %v7560
  %v7562 = vpop.f32.mrf.mxu0
  %7563 = vdwg.mxu0
  %v7564 = vadd.f32 %v7238, %v7441
  %v7565 = vadd.f32 %v7239, %v7446
  %v7566 = vadd.f32 %v7240, %v7451
  %v7567 = vadd.f32 %v7241, %v7456
  %v7568 = vadd.f32 %v7242, %v7461
  %v7569 = vadd.f32 %v7243, %v7466
  %v7570 = vadd.f32 %v7244, %v7471
  %v7571 = vadd.f32 %v7245, %v7476
  %v7572 = vadd.f32 %v7246, %v7481
  %v7573 = vadd.f32 %v7247, %v7486
  %v7574 = vadd.f32 %v7248, %v7491
  %v7575 = vadd.f32 %v7249, %v7496
  %v7576 = vadd.f32 %v7250, %v7501
  %v7577 = vadd.f32 %v7251, %v7506
  %v7578 = vadd.f32 %v7252, %v7511
  %v7579 = vadd.f32 %v7253, %v7516
  %v7580 = vadd.f32 %v7254, %v7521
  %v7581 = vadd.f32 %v7255, %v7526
  %v7582 = vadd.f32 %v7256, %v7531
  %v7583 = vadd.f32 %v7257, %v7536
  %v7584 = vadd.f32 %v7258, %v7541
  %v7585 = vadd.f32 %v7259, %v7546
  %v7586 = vadd.f32 %v7260, %v7551
  %v7587 = vadd.f32 %v7261, %v7556
  %v7588 = vadd.f32 %v7262, %v7561
  %v7589 = vld [vmem:[#allocation2 + $0x1b] sm:$0xff]
  %v7590 = vld [vmem:[#allocation2 + $0x23] sm:$0xff]
  %v7591 = vld [vmem:[#allocation2 + $0x2b] sm:$0xff]
  %v7592 = vld [vmem:[#allocation2 + $0x33] sm:$0xff]
  %v7593 = vld [vmem:[#allocation2 + $0x3b] sm:$0xff]
  %v7594 = vld [vmem:[#allocation2 + $0x43] sm:$0xff]
  %v7595 = vld [vmem:[#allocation2 + $0x4b] sm:$0xff]
  %v7596 = vld [vmem:[#allocation2 + $0x53] sm:$0xff]
  %v7597 = vld [vmem:[#allocation2 + $0x5b] sm:$0xff]
  %v7598 = vld [vmem:[#allocation2 + $0x63] sm:$0xff]
  %v7599 = vld [vmem:[#allocation2 + $0x6b] sm:$0xff]
  %v7600 = vld [vmem:[#allocation2 + $0x73] sm:$0xff]
  %v7601 = vld [vmem:[#allocation2 + $0x7b] sm:$0xff]
  %v7602 = vld [vmem:[#allocation2 + $0x83] sm:$0xff]
  %v7603 = vld [vmem:[#allocation2 + $0x8b] sm:$0xff]
  %v7604 = vld [vmem:[#allocation2 + $0x93] sm:$0xff]
  %v7605 = vld [vmem:[#allocation2 + $0x9b] sm:$0xff]
  %v7606 = vld [vmem:[#allocation2 + $0xa3] sm:$0xff]
  %v7607 = vld [vmem:[#allocation2 + $0xab] sm:$0xff]
  %v7608 = vld [vmem:[#allocation2 + $0xb3] sm:$0xff]
  %v7609 = vld [vmem:[#allocation2 + $0xbb] sm:$0xff]
  %v7610 = vld [vmem:[#allocation2 + $0xc3] sm:$0xff]
  %v7611 = vld [vmem:[#allocation2 + $0xcb] sm:$0xff]
  %v7612 = vld [vmem:[#allocation2 + $0xd3] sm:$0xff]
  %v7613 = vld [vmem:[#allocation2 + $0xdb] sm:$0xff]
  %s7614 = scalar_lea.vmem %s3, 640
  %v7615 = vld [vmem:[%s7614] sm:$0xff]
  %v7616 = vld [vmem:[%s7614 + $0x8] sm:$0xff]
  %v7617 = vld [vmem:[%s7614 + $0x10] sm:$0xff]
  %v7618 = vld [vmem:[%s7614 + $0x18] sm:$0xff]
  %v7619 = vld [vmem:[%s7614 + $0x20] sm:$0xff]
  %v7620 = vld [vmem:[%s7614 + $0x28] sm:$0xff]
  %v7621 = vld [vmem:[%s7614 + $0x30] sm:$0xff]
  %v7622 = vld [vmem:[%s7614 + $0x38] sm:$0xff]
  %v7623 = vld [vmem:[%s7614 + $0x40] sm:$0xff]
  %v7624 = vld [vmem:[%s7614 + $0x48] sm:$0xff]
  %v7626 = vsel %vm4927, %v7589, 0
  %v7629 = vsel %vm4927, %v7590, 0
  %v7632 = vsel %vm4927, %v7591, 0
  %v7635 = vsel %vm4927, %v7592, 0
  %v7638 = vsel %vm4927, %v7593, 0
  %v7641 = vsel %vm4927, %v7594, 0
  %v7644 = vsel %vm4927, %v7595, 0
  %v7647 = vsel %vm4927, %v7596, 0
  %v7650 = vsel %vm4927, %v7597, 0
  %v7653 = vsel %vm4927, %v7598, 0
  %v7656 = vsel %vm4927, %v7599, 0
  %v7659 = vsel %vm4927, %v7600, 0
  %v7662 = vsel %vm4927, %v7601, 0
  %v7665 = vsel %vm4927, %v7602, 0
  %v7668 = vsel %vm4927, %v7603, 0
  %v7671 = vsel %vm4927, %v7604, 0
  %v7674 = vsel %vm4927, %v7605, 0
  %v7677 = vsel %vm4927, %v7606, 0
  %v7680 = vsel %vm4927, %v7607, 0
  %v7683 = vsel %vm4927, %v7608, 0
  %v7686 = vsel %vm4927, %v7609, 0
  %v7689 = vsel %vm4927, %v7610, 0
  %v7692 = vsel %vm4927, %v7611, 0
  %v7695 = vsel %vm4927, %v7612, 0
  %v7698 = vsel %vm4927, %v7613, 0
  %7700 = vmatprep.subr.mxu0 0.0
  %7701 = vmatpush1.msra.mxu0 0.0
  %7702 = vmatprep.subr.mxu0 0.0
  %7703 = vmatpush1.msra.mxu0 0.0
  %7704 = vmatprep.subr.mxu0 0.0
  %7705 = vmatpush1.msra.mxu0 0.0
  %7706 = vmatprep.subr.mxu0 0.0
  %7707 = vmatpush1.msra.mxu0 0.0
  %7708 = vmatprep.subr.mxu0 0.0
  %7709 = vmatpush1.msra.mxu0 0.0
  %7710 = vmatprep.subr.mxu0 0.0
  %7711 = vmatpush1.msra.mxu0 0.0
  %7712 = vmatprep.subr.mxu0 0.0
  %7713 = vmatpush1.msra.mxu0 %v7624
  %7714 = vmatprep.subr.mxu0 0.0
  %7715 = vmatpush1.msra.mxu0 %v7623
  %7716 = vmatprep.subr.mxu0 0.0
  %7717 = vmatpush1.msra.mxu0 %v7622
  %7718 = vmatprep.subr.mxu0 0.0
  %7719 = vmatpush1.msra.mxu0 %v7621
  %7720 = vmatprep.subr.mxu0 0.0
  %7721 = vmatpush1.msra.mxu0 %v7620
  %7722 = vmatprep.subr.mxu0 0.0
  %7723 = vmatpush1.msra.mxu0 %v7619
  %7724 = vmatprep.subr.mxu0 0.0
  %7725 = vmatpush1.msra.mxu0 %v7618
  %7726 = vmatprep.subr.mxu0 0.0
  %7727 = vmatpush1.msra.mxu0 %v7617
  %7728 = vmatprep.subr.mxu0 0.0
  %7729 = vmatpush1.msra.mxu0 %v7616
  %7730 = vmatprep.subr.mxu0 0.0
  %7731 = vmatpush1.msra.mxu0 %v7615
  %7732 = vmatprep.subr.mxu0 0.0
  %7733 = vmatpush2.msra.mxu0 0.0
  %7734 = vmatprep.subr.mxu0 0.0
  %7735 = vmatpush2.msra.mxu0 0.0
  %7736 = vmatprep.subr.mxu0 0.0
  %7737 = vmatpush2.msra.mxu0 0.0
  %7738 = vmatprep.subr.mxu0 0.0
  %7739 = vmatpush2.msra.mxu0 0.0
  %7740 = vmatprep.subr.mxu0 0.0
  %7741 = vmatpush2.msra.mxu0 0.0
  %7742 = vmatprep.subr.mxu0 0.0
  %7743 = vmatpush2.msra.mxu0 0.0
  %7744 = vmatprep.subr.mxu0 0.0
  %7745 = vmatpush2.msra.mxu0 0.0
  %7746 = vmatprep.subr.mxu0 0.0
  %7747 = vmatpush2.msra.mxu0 0.0
  %7748 = vmatprep.subr.mxu0 0.0
  %7749 = vmatpush2.msra.mxu0 0.0
  %7750 = vmatprep.subr.mxu0 0.0
  %7751 = vmatpush2.msra.mxu0 0.0
  %7752 = vmatprep.subr.mxu0 0.0
  %7753 = vmatpush2.msra.mxu0 0.0
  %7754 = vmatprep.subr.mxu0 0.0
  %7755 = vmatpush2.msra.mxu0 0.0
  %7756 = vmatprep.subr.mxu0 0.0
  %7757 = vmatpush2.msra.mxu0 0.0
  %7758 = vmatprep.subr.mxu0 0.0
  %7759 = vmatpush2.msra.mxu0 0.0
  %7760 = vmatprep.subr.mxu0 0.0
  %7761 = vmatpush2.msra.mxu0 0.0
  %7762 = vmatprep.subr.mxu0 0.0
  %7763 = vmatpush2.msra.mxu0 0.0
  %7764 = vmatprep.mubr.f32.mxu0 0.0
  %7765 = vmatmul.mubr.f32.gmra.mxu0 %v7626
  %v7766 = vpop.f32.mrf.mxu0
  %v7767 = vadd.f32 0.0, %v7766
  %v7768 = vpop.f32.mrf.mxu0
  %7769 = vmatprep.mubr.f32.mxu0 0.0
  %7770 = vmatmul.mubr.f32.gmra.mxu0 %v7629
  %v7771 = vpop.f32.mrf.mxu0
  %v7772 = vadd.f32 0.0, %v7771
  %v7773 = vpop.f32.mrf.mxu0
  %7774 = vmatprep.mubr.f32.mxu0 0.0
  %7775 = vmatmul.mubr.f32.gmra.mxu0 %v7632
  %v7776 = vpop.f32.mrf.mxu0
  %v7777 = vadd.f32 0.0, %v7776
  %v7778 = vpop.f32.mrf.mxu0
  %7779 = vmatprep.mubr.f32.mxu0 0.0
  %7780 = vmatmul.mubr.f32.gmra.mxu0 %v7635
  %v7781 = vpop.f32.mrf.mxu0
  %v7782 = vadd.f32 0.0, %v7781
  %v7783 = vpop.f32.mrf.mxu0
  %7784 = vmatprep.mubr.f32.mxu0 0.0
  %7785 = vmatmul.mubr.f32.gmra.mxu0 %v7638
  %v7786 = vpop.f32.mrf.mxu0
  %v7787 = vadd.f32 0.0, %v7786
  %v7788 = vpop.f32.mrf.mxu0
  %7789 = vmatprep.mubr.f32.mxu0 0.0
  %7790 = vmatmul.mubr.f32.gmra.mxu0 %v7641
  %v7791 = vpop.f32.mrf.mxu0
  %v7792 = vadd.f32 0.0, %v7791
  %v7793 = vpop.f32.mrf.mxu0
  %7794 = vmatprep.mubr.f32.mxu0 0.0
  %7795 = vmatmul.mubr.f32.gmra.mxu0 %v7644
  %v7796 = vpop.f32.mrf.mxu0
  %v7797 = vadd.f32 0.0, %v7796
  %v7798 = vpop.f32.mrf.mxu0
  %7799 = vmatprep.mubr.f32.mxu0 0.0
  %7800 = vmatmul.mubr.f32.gmra.mxu0 %v7647
  %v7801 = vpop.f32.mrf.mxu0
  %v7802 = vadd.f32 0.0, %v7801
  %v7803 = vpop.f32.mrf.mxu0
  %7804 = vmatprep.mubr.f32.mxu0 0.0
  %7805 = vmatmul.mubr.f32.gmra.mxu0 %v7650
  %v7806 = vpop.f32.mrf.mxu0
  %v7807 = vadd.f32 0.0, %v7806
  %v7808 = vpop.f32.mrf.mxu0
  %7809 = vmatprep.mubr.f32.mxu0 0.0
  %7810 = vmatmul.mubr.f32.gmra.mxu0 %v7653
  %v7811 = vpop.f32.mrf.mxu0
  %v7812 = vadd.f32 0.0, %v7811
  %v7813 = vpop.f32.mrf.mxu0
  %7814 = vmatprep.mubr.f32.mxu0 0.0
  %7815 = vmatmul.mubr.f32.gmra.mxu0 %v7656
  %v7816 = vpop.f32.mrf.mxu0
  %v7817 = vadd.f32 0.0, %v7816
  %v7818 = vpop.f32.mrf.mxu0
  %7819 = vmatprep.mubr.f32.mxu0 0.0
  %7820 = vmatmul.mubr.f32.gmra.mxu0 %v7659
  %v7821 = vpop.f32.mrf.mxu0
  %v7822 = vadd.f32 0.0, %v7821
  %v7823 = vpop.f32.mrf.mxu0
  %7824 = vmatprep.mubr.f32.mxu0 0.0
  %7825 = vmatmul.mubr.f32.gmra.mxu0 %v7662
  %v7826 = vpop.f32.mrf.mxu0
  %v7827 = vadd.f32 0.0, %v7826
  %v7828 = vpop.f32.mrf.mxu0
  %7829 = vmatprep.mubr.f32.mxu0 0.0
  %7830 = vmatmul.mubr.f32.gmra.mxu0 %v7665
  %v7831 = vpop.f32.mrf.mxu0
  %v7832 = vadd.f32 0.0, %v7831
  %v7833 = vpop.f32.mrf.mxu0
  %7834 = vmatprep.mubr.f32.mxu0 0.0
  %7835 = vmatmul.mubr.f32.gmra.mxu0 %v7668
  %v7836 = vpop.f32.mrf.mxu0
  %v7837 = vadd.f32 0.0, %v7836
  %v7838 = vpop.f32.mrf.mxu0
  %7839 = vmatprep.mubr.f32.mxu0 0.0
  %7840 = vmatmul.mubr.f32.gmra.mxu0 %v7671
  %v7841 = vpop.f32.mrf.mxu0
  %v7842 = vadd.f32 0.0, %v7841
  %v7843 = vpop.f32.mrf.mxu0
  %7844 = vmatprep.mubr.f32.mxu0 0.0
  %7845 = vmatmul.mubr.f32.gmra.mxu0 %v7674
  %v7846 = vpop.f32.mrf.mxu0
  %v7847 = vadd.f32 0.0, %v7846
  %v7848 = vpop.f32.mrf.mxu0
  %7849 = vmatprep.mubr.f32.mxu0 0.0
  %7850 = vmatmul.mubr.f32.gmra.mxu0 %v7677
  %v7851 = vpop.f32.mrf.mxu0
  %v7852 = vadd.f32 0.0, %v7851
  %v7853 = vpop.f32.mrf.mxu0
  %7854 = vmatprep.mubr.f32.mxu0 0.0
  %7855 = vmatmul.mubr.f32.gmra.mxu0 %v7680
  %v7856 = vpop.f32.mrf.mxu0
  %v7857 = vadd.f32 0.0, %v7856
  %v7858 = vpop.f32.mrf.mxu0
  %7859 = vmatprep.mubr.f32.mxu0 0.0
  %7860 = vmatmul.mubr.f32.gmra.mxu0 %v7683
  %v7861 = vpop.f32.mrf.mxu0
  %v7862 = vadd.f32 0.0, %v7861
  %v7863 = vpop.f32.mrf.mxu0
  %7864 = vmatprep.mubr.f32.mxu0 0.0
  %7865 = vmatmul.mubr.f32.gmra.mxu0 %v7686
  %v7866 = vpop.f32.mrf.mxu0
  %v7867 = vadd.f32 0.0, %v7866
  %v7868 = vpop.f32.mrf.mxu0
  %7869 = vmatprep.mubr.f32.mxu0 0.0
  %7870 = vmatmul.mubr.f32.gmra.mxu0 %v7689
  %v7871 = vpop.f32.mrf.mxu0
  %v7872 = vadd.f32 0.0, %v7871
  %v7873 = vpop.f32.mrf.mxu0
  %7874 = vmatprep.mubr.f32.mxu0 0.0
  %7875 = vmatmul.mubr.f32.gmra.mxu0 %v7692
  %v7876 = vpop.f32.mrf.mxu0
  %v7877 = vadd.f32 0.0, %v7876
  %v7878 = vpop.f32.mrf.mxu0
  %7879 = vmatprep.mubr.f32.mxu0 0.0
  %7880 = vmatmul.mubr.f32.gmra.mxu0 %v7695
  %v7881 = vpop.f32.mrf.mxu0
  %v7882 = vadd.f32 0.0, %v7881
  %v7883 = vpop.f32.mrf.mxu0
  %7884 = vmatprep.mubr.f32.mxu0 0.0
  %7885 = vmatmul.mubr.f32.gmra.mxu0 %v7698
  %v7886 = vpop.f32.mrf.mxu0
  %v7887 = vadd.f32 0.0, %v7886
  %v7888 = vpop.f32.mrf.mxu0
  %7889 = vdwg.mxu0
  %v7890 = vadd.f32 %v7564, %v7767
  %v7891 = vadd.f32 %v7565, %v7772
  %v7892 = vadd.f32 %v7566, %v7777
  %v7893 = vadd.f32 %v7567, %v7782
  %v7894 = vadd.f32 %v7568, %v7787
  %v7895 = vadd.f32 %v7569, %v7792
  %v7896 = vadd.f32 %v7570, %v7797
  %v7897 = vadd.f32 %v7571, %v7802
  %v7898 = vadd.f32 %v7572, %v7807
  %v7899 = vadd.f32 %v7573, %v7812
  %v7900 = vadd.f32 %v7574, %v7817
  %v7901 = vadd.f32 %v7575, %v7822
  %v7902 = vadd.f32 %v7576, %v7827
  %v7903 = vadd.f32 %v7577, %v7832
  %v7904 = vadd.f32 %v7578, %v7837
  %v7905 = vadd.f32 %v7579, %v7842
  %v7906 = vadd.f32 %v7580, %v7847
  %v7907 = vadd.f32 %v7581, %v7852
  %v7908 = vadd.f32 %v7582, %v7857
  %v7909 = vadd.f32 %v7583, %v7862
  %v7910 = vadd.f32 %v7584, %v7867
  %v7911 = vadd.f32 %v7585, %v7872
  %v7912 = vadd.f32 %v7586, %v7877
  %v7913 = vadd.f32 %v7587, %v7882
  %v7914 = vadd.f32 %v7588, %v7887
  %v7915 = vld [vmem:[%s5] sm:$0x1]
  %v7917 = vlaneseq
  %v7918 = vshrl.u32 %v7917, 7
  %v7919 = vsub.s32 0, %v7918
  %v7920 = vrot.slane %v7915, %v7919
  %v7922 = vadd.f32 %v7890, %v7920
  %v7923 = vadd.f32 %v7891, %v7920
  %v7924 = vadd.f32 %v7892, %v7920
  %v7925 = vadd.f32 %v7893, %v7920
  %v7926 = vadd.f32 %v7894, %v7920
  %v7927 = vadd.f32 %v7895, %v7920
  %v7928 = vadd.f32 %v7896, %v7920
  %v7929 = vadd.f32 %v7897, %v7920
  %v7930 = vadd.f32 %v7898, %v7920
  %v7931 = vadd.f32 %v7899, %v7920
  %v7932 = vadd.f32 %v7900, %v7920
  %v7933 = vadd.f32 %v7901, %v7920
  %v7934 = vadd.f32 %v7902, %v7920
  %v7935 = vadd.f32 %v7903, %v7920
  %v7936 = vadd.f32 %v7904, %v7920
  %v7937 = vadd.f32 %v7905, %v7920
  %v7938 = vadd.f32 %v7906, %v7920
  %v7939 = vadd.f32 %v7907, %v7920
  %v7940 = vadd.f32 %v7908, %v7920
  %v7941 = vadd.f32 %v7909, %v7920
  %v7942 = vadd.f32 %v7910, %v7920
  %v7943 = vadd.f32 %v7911, %v7920
  %v7944 = vadd.f32 %v7912, %v7920
  %v7945 = vadd.f32 %v7913, %v7920
  %v7946 = vadd.f32 %v7914, %v7920
  %v7947 = vmax.f32 %v7922, 0.0
  %v7948 = vmax.f32 %v7923, 0.0
  %v7949 = vmax.f32 %v7924, 0.0
  %v7950 = vmax.f32 %v7925, 0.0
  %v7951 = vmax.f32 %v7926, 0.0
  %v7952 = vmax.f32 %v7927, 0.0
  %v7953 = vmax.f32 %v7928, 0.0
  %v7954 = vmax.f32 %v7929, 0.0
  %v7955 = vmax.f32 %v7930, 0.0
  %v7956 = vmax.f32 %v7931, 0.0
  %v7957 = vmax.f32 %v7932, 0.0
  %v7958 = vmax.f32 %v7933, 0.0
  %v7959 = vmax.f32 %v7934, 0.0
  %v7960 = vmax.f32 %v7935, 0.0
  %v7961 = vmax.f32 %v7936, 0.0
  %v7962 = vmax.f32 %v7937, 0.0
  %v7963 = vmax.f32 %v7938, 0.0
  %v7964 = vmax.f32 %v7939, 0.0
  %v7965 = vmax.f32 %v7940, 0.0
  %v7966 = vmax.f32 %v7941, 0.0
  %v7967 = vmax.f32 %v7942, 0.0
  %v7968 = vmax.f32 %v7943, 0.0
  %v7969 = vmax.f32 %v7944, 0.0
  %v7970 = vmax.f32 %v7945, 0.0
  %v7971 = vmax.f32 %v7946, 0.0
  %7972 = vst.msk [vmem:[#allocation3] sm:$0xff] %vm4927, 0.0
  %7973 = vst.msk [vmem:[#allocation3 + $0x8] sm:$0xff] %vm4927, 0.0
  %7974 = vst.msk [vmem:[#allocation3 + $0x10] sm:$0xff] %vm4927, 0.0
  %7975 = vst.msk [vmem:[#allocation3 + $0x18] sm:$0xff] %vm4927, 0.0
  %7976 = vst.msk [vmem:[#allocation3 + $0x20] sm:$0xff] %vm4927, 0.0
  %7977 = vst.msk [vmem:[#allocation3 + $0x28] sm:$0xff] %vm4927, 0.0
  %7978 = vst.msk [vmem:[#allocation3 + $0x30] sm:$0xff] %vm4927, 0.0
  %7979 = vst.msk [vmem:[#allocation3 + $0x38] sm:$0xff] %vm4927, 0.0
  %7980 = vst.msk [vmem:[#allocation3 + $0x40] sm:$0xff] %vm4927, 0.0
  %7981 = vst.msk [vmem:[#allocation3 + $0x48] sm:$0xff] %vm4927, 0.0
  %7982 = vst.msk [vmem:[#allocation3 + $0x50] sm:$0xff] %vm4927, 0.0
  %7983 = vst.msk [vmem:[#allocation3 + $0x58] sm:$0xff] %vm4927, 0.0
  %7984 = vst.msk [vmem:[#allocation3 + $0x60] sm:$0xff] %vm4927, 0.0
  %7985 = vst.msk [vmem:[#allocation3 + $0x68] sm:$0xff] %vm4927, 0.0
  %7986 = vst.msk [vmem:[#allocation3 + $0x70] sm:$0xff] %vm4927, 0.0
  %7987 = vst.msk [vmem:[#allocation3 + $0x78] sm:$0xff] %vm4927, 0.0
  %7988 = vst.msk [vmem:[#allocation3 + $0x80] sm:$0xff] %vm4927, 0.0
  %7989 = vst.msk [vmem:[#allocation3 + $0x88] sm:$0xff] %vm4927, 0.0
  %7990 = vst.msk [vmem:[#allocation3 + $0x90] sm:$0xff] %vm4927, 0.0
  %7991 = vst.msk [vmem:[#allocation3 + $0x98] sm:$0xff] %vm4927, 0.0
  %7992 = vst.msk [vmem:[#allocation3 + $0xa0] sm:$0xff] %vm4927, 0.0
  %7993 = vst.msk [vmem:[#allocation3 + $0xa8] sm:$0xff] %vm4927, 0.0
  %7994 = vst.msk [vmem:[#allocation3 + $0xb0] sm:$0xff] %vm4927, 0.0
  %7995 = vst.msk [vmem:[#allocation3 + $0xb8] sm:$0xff] %vm4927, 0.0
  %7996 = vst.msk [vmem:[#allocation3 + $0xc0] sm:$0xff] %vm4927, 0.0
  %7997 = vst.msk [vmem:[#allocation3 + $0xc8] sm:$0xff] %vm4927, 0.0
  %7998 = vst.msk [vmem:[#allocation3 + $0xd0] sm:$0xff] %vm4927, 0.0
  %7999 = vst.msk [vmem:[#allocation3 + $0xd8] sm:$0xff] %vm4927, 0.0
  %8000 = vst.msk [vmem:[#allocation3 + $0xe0] sm:$0xff] %vm4927, 0.0
  %8001 = vst.msk [vmem:[#allocation3 + $0x10] sm:$0xff] %vm4927, %v7947
  %8002 = vst.msk [vmem:[#allocation3 + $0x18] sm:$0xff] %vm4927, %v7948
  %8003 = vst.msk [vmem:[#allocation3 + $0x20] sm:$0xff] %vm4927, %v7949
  %8004 = vst.msk [vmem:[#allocation3 + $0x28] sm:$0xff] %vm4927, %v7950
  %8005 = vst.msk [vmem:[#allocation3 + $0x30] sm:$0xff] %vm4927, %v7951
  %8006 = vst.msk [vmem:[#allocation3 + $0x38] sm:$0xff] %vm4927, %v7952
  %8007 = vst.msk [vmem:[#allocation3 + $0x40] sm:$0xff] %vm4927, %v7953
  %8008 = vst.msk [vmem:[#allocation3 + $0x48] sm:$0xff] %vm4927, %v7954
  %8009 = vst.msk [vmem:[#allocation3 + $0x50] sm:$0xff] %vm4927, %v7955
  %8010 = vst.msk [vmem:[#allocation3 + $0x58] sm:$0xff] %vm4927, %v7956
  %8011 = vst.msk [vmem:[#allocation3 + $0x60] sm:$0xff] %vm4927, %v7957
  %8012 = vst.msk [vmem:[#allocation3 + $0x68] sm:$0xff] %vm4927, %v7958
  %8013 = vst.msk [vmem:[#allocation3 + $0x70] sm:$0xff] %vm4927, %v7959
  %8014 = vst.msk [vmem:[#allocation3 + $0x78] sm:$0xff] %vm4927, %v7960
  %8015 = vst.msk [vmem:[#allocation3 + $0x80] sm:$0xff] %vm4927, %v7961
  %8016 = vst.msk [vmem:[#allocation3 + $0x88] sm:$0xff] %vm4927, %v7962
  %8017 = vst.msk [vmem:[#allocation3 + $0x90] sm:$0xff] %vm4927, %v7963
  %8018 = vst.msk [vmem:[#allocation3 + $0x98] sm:$0xff] %vm4927, %v7964
  %8019 = vst.msk [vmem:[#allocation3 + $0xa0] sm:$0xff] %vm4927, %v7965
  %8020 = vst.msk [vmem:[#allocation3 + $0xa8] sm:$0xff] %vm4927, %v7966
  %8021 = vst.msk [vmem:[#allocation3 + $0xb0] sm:$0xff] %vm4927, %v7967
  %8022 = vst.msk [vmem:[#allocation3 + $0xb8] sm:$0xff] %vm4927, %v7968
  %8023 = vst.msk [vmem:[#allocation3 + $0xc0] sm:$0xff] %vm4927, %v7969
  %8024 = vst.msk [vmem:[#allocation3 + $0xc8] sm:$0xff] %vm4927, %v7970
  %8025 = vst.msk [vmem:[#allocation3 + $0xd0] sm:$0xff] %vm4927, %v7971
  %v8026 = vld [vmem:[%s7] sm:$0xff]
  %v8027 = vld [vmem:[%s7 + $0x8] sm:$0xff]
  %v8028 = vld [vmem:[%s7 + $0x10] sm:$0xff]
  %v8029 = vld [vmem:[%s7 + $0x18] sm:$0xff]
  %v8030 = vld [vmem:[%s7 + $0x20] sm:$0xff]
  %v8031 = vld [vmem:[%s7 + $0x28] sm:$0xff]
  %v8032 = vld [vmem:[%s7 + $0x30] sm:$0xff]
  %v8033 = vld [vmem:[%s7 + $0x38] sm:$0xff]
  %v8034 = vld [vmem:[%s0 + $0x10] sm:$0xff]
  %v8035 = vld [vmem:[%s0 + $0x18] sm:$0xff]
  %v8036 = vld [vmem:[%s0 + $0x20] sm:$0xff]
  %v8037 = vld [vmem:[%s0 + $0x28] sm:$0xff]
  %v8038 = vld [vmem:[%s0 + $0x30] sm:$0xff]
  %v8039 = vld [vmem:[%s0 + $0x38] sm:$0xff]
  %v8040 = vld [vmem:[%s0 + $0x40] sm:$0xff]
  %v8041 = vld [vmem:[%s0 + $0x48] sm:$0xff]
  %v8042 = vld [vmem:[%s0 + $0x50] sm:$0xff]
  %v8043 = vld [vmem:[%s0 + $0x58] sm:$0xff]
  %v8044 = vld [vmem:[%s0 + $0x60] sm:$0xff]
  %v8045 = vld [vmem:[%s0 + $0x68] sm:$0xff]
  %v8046 = vld [vmem:[%s0 + $0x70] sm:$0xff]
  %v8047 = vld [vmem:[%s0 + $0x78] sm:$0xff]
  %v8048 = vld [vmem:[%s0 + $0x80] sm:$0xff]
  %v8049 = vld [vmem:[%s0 + $0x88] sm:$0xff]
  %v8050 = vld [vmem:[%s0 + $0x90] sm:$0xff]
  %v8051 = vld [vmem:[%s0 + $0x98] sm:$0xff]
  %v8052 = vld [vmem:[%s0 + $0xa0] sm:$0xff]
  %v8053 = vld [vmem:[%s0 + $0xa8] sm:$0xff]
  %v8054 = vld [vmem:[%s0 + $0xb0] sm:$0xff]
  %v8055 = vld [vmem:[%s0 + $0xb8] sm:$0xff]
  %v8056 = vld [vmem:[%s0 + $0xc0] sm:$0xff]
  %v8057 = vld [vmem:[%s0 + $0xc8] sm:$0xff]
  %v8058 = vld [vmem:[%s0 + $0xd0] sm:$0xff]
  %v8059 = vld [vmem:[%s0 + $0x11] sm:$0xff]
  %v8060 = vld [vmem:[%s0 + $0x19] sm:$0xff]
  %v8061 = vld [vmem:[%s0 + $0x21] sm:$0xff]
  %v8062 = vld [vmem:[%s0 + $0x29] sm:$0xff]
  %v8063 = vld [vmem:[%s0 + $0x31] sm:$0xff]
  %v8064 = vld [vmem:[%s0 + $0x39] sm:$0xff]
  %v8065 = vld [vmem:[%s0 + $0x41] sm:$0xff]
  %v8066 = vld [vmem:[%s0 + $0x49] sm:$0xff]
  %v8067 = vld [vmem:[%s0 + $0x51] sm:$0xff]
  %v8068 = vld [vmem:[%s0 + $0x59] sm:$0xff]
  %v8069 = vld [vmem:[%s0 + $0x61] sm:$0xff]
  %v8070 = vld [vmem:[%s0 + $0x69] sm:$0xff]
  %v8071 = vld [vmem:[%s0 + $0x71] sm:$0xff]
  %v8072 = vld [vmem:[%s0 + $0x79] sm:$0xff]
  %v8073 = vld [vmem:[%s0 + $0x81] sm:$0xff]
  %v8074 = vld [vmem:[%s0 + $0x89] sm:$0xff]
  %v8075 = vld [vmem:[%s0 + $0x91] sm:$0xff]
  %v8076 = vld [vmem:[%s0 + $0x99] sm:$0xff]
  %v8077 = vld [vmem:[%s0 + $0xa1] sm:$0xff]
  %v8078 = vld [vmem:[%s0 + $0xa9] sm:$0xff]
  %v8079 = vld [vmem:[%s0 + $0xb1] sm:$0xff]
  %v8080 = vld [vmem:[%s0 + $0xb9] sm:$0xff]
  %v8081 = vld [vmem:[%s0 + $0xc1] sm:$0xff]
  %v8082 = vld [vmem:[%s0 + $0xc9] sm:$0xff]
  %v8083 = vld [vmem:[%s0 + $0xd1] sm:$0xff]
  %v8084 = vmax.f32 %v8034, %v8059
  %v8085 = vmax.f32 %v8035, %v8060
  %v8086 = vmax.f32 %v8036, %v8061
  %v8087 = vmax.f32 %v8037, %v8062
  %v8088 = vmax.f32 %v8038, %v8063
  %v8089 = vmax.f32 %v8039, %v8064
  %v8090 = vmax.f32 %v8040, %v8065
  %v8091 = vmax.f32 %v8041, %v8066
  %v8092 = vmax.f32 %v8042, %v8067
  %v8093 = vmax.f32 %v8043, %v8068
  %v8094 = vmax.f32 %v8044, %v8069
  %v8095 = vmax.f32 %v8045, %v8070
  %v8096 = vmax.f32 %v8046, %v8071
  %v8097 = vmax.f32 %v8047, %v8072
  %v8098 = vmax.f32 %v8048, %v8073
  %v8099 = vmax.f32 %v8049, %v8074
  %v8100 = vmax.f32 %v8050, %v8075
  %v8101 = vmax.f32 %v8051, %v8076
  %v8102 = vmax.f32 %v8052, %v8077
  %v8103 = vmax.f32 %v8053, %v8078
  %v8104 = vmax.f32 %v8054, %v8079
  %v8105 = vmax.f32 %v8055, %v8080
  %v8106 = vmax.f32 %v8056, %v8081
  %v8107 = vmax.f32 %v8057, %v8082
  %v8108 = vmax.f32 %v8058, %v8083
  %v8109 = vld [vmem:[%s0 + $0x1a] sm:$0xff]
  %v8110 = vld [vmem:[%s0 + $0x22] sm:$0xff]
  %v8111 = vld [vmem:[%s0 + $0x2a] sm:$0xff]
  %v8112 = vld [vmem:[%s0 + $0x32] sm:$0xff]
  %v8113 = vld [vmem:[%s0 + $0x3a] sm:$0xff]
  %v8114 = vld [vmem:[%s0 + $0x42] sm:$0xff]
  %v8115 = vld [vmem:[%s0 + $0x4a] sm:$0xff]
  %v8116 = vld [vmem:[%s0 + $0x52] sm:$0xff]
  %v8117 = vld [vmem:[%s0 + $0x5a] sm:$0xff]
  %v8118 = vld [vmem:[%s0 + $0x62] sm:$0xff]
  %v8119 = vld [vmem:[%s0 + $0x6a] sm:$0xff]
  %v8120 = vld [vmem:[%s0 + $0x72] sm:$0xff]
  %v8121 = vld [vmem:[%s0 + $0x7a] sm:$0xff]
  %v8122 = vld [vmem:[%s0 + $0x82] sm:$0xff]
  %v8123 = vld [vmem:[%s0 + $0x8a] sm:$0xff]
  %v8124 = vld [vmem:[%s0 + $0x92] sm:$0xff]
  %v8125 = vld [vmem:[%s0 + $0x9a] sm:$0xff]
  %v8126 = vld [vmem:[%s0 + $0xa2] sm:$0xff]
  %v8127 = vld [vmem:[%s0 + $0xaa] sm:$0xff]
  %v8128 = vld [vmem:[%s0 + $0xb2] sm:$0xff]
  %v8129 = vld [vmem:[%s0 + $0xba] sm:$0xff]
  %v8130 = vld [vmem:[%s0 + $0xc2] sm:$0xff]
  %v8131 = vld [vmem:[%s0 + $0xca] sm:$0xff]
  %v8132 = vld [vmem:[%s0 + $0xd2] sm:$0xff]
  %v8133 = vld [vmem:[%s0 + $0xda] sm:$0xff]
  %v8134 = vld [vmem:[%s0 + $0x1b] sm:$0xff]
  %v8135 = vld [vmem:[%s0 + $0x23] sm:$0xff]
  %v8136 = vld [vmem:[%s0 + $0x2b] sm:$0xff]
  %v8137 = vld [vmem:[%s0 + $0x33] sm:$0xff]
  %v8138 = vld [vmem:[%s0 + $0x3b] sm:$0xff]
  %v8139 = vld [vmem:[%s0 + $0x43] sm:$0xff]
  %v8140 = vld [vmem:[%s0 + $0x4b] sm:$0xff]
  %v8141 = vld [vmem:[%s0 + $0x53] sm:$0xff]
  %v8142 = vld [vmem:[%s0 + $0x5b] sm:$0xff]
  %v8143 = vld [vmem:[%s0 + $0x63] sm:$0xff]
  %v8144 = vld [vmem:[%s0 + $0x6b] sm:$0xff]
  %v8145 = vld [vmem:[%s0 + $0x73] sm:$0xff]
  %v8146 = vld [vmem:[%s0 + $0x7b] sm:$0xff]
  %v8147 = vld [vmem:[%s0 + $0x83] sm:$0xff]
  %v8148 = vld [vmem:[%s0 + $0x8b] sm:$0xff]
  %v8149 = vld [vmem:[%s0 + $0x93] sm:$0xff]
  %v8150 = vld [vmem:[%s0 + $0x9b] sm:$0xff]
  %v8151 = vld [vmem:[%s0 + $0xa3] sm:$0xff]
  %v8152 = vld [vmem:[%s0 + $0xab] sm:$0xff]
  %v8153 = vld [vmem:[%s0 + $0xb3] sm:$0xff]
  %v8154 = vld [vmem:[%s0 + $0xbb] sm:$0xff]
  %v8155 = vld [vmem:[%s0 + $0xc3] sm:$0xff]
  %v8156 = vld [vmem:[%s0 + $0xcb] sm:$0xff]
  %v8157 = vld [vmem:[%s0 + $0xd3] sm:$0xff]
  %v8158 = vld [vmem:[%s0 + $0xdb] sm:$0xff]
  %v8159 = vmax.f32 %v8109, %v8134
  %v8160 = vmax.f32 %v8110, %v8135
  %v8161 = vmax.f32 %v8111, %v8136
  %v8162 = vmax.f32 %v8112, %v8137
  %v8163 = vmax.f32 %v8113, %v8138
  %v8164 = vmax.f32 %v8114, %v8139
  %v8165 = vmax.f32 %v8115, %v8140
  %v8166 = vmax.f32 %v8116, %v8141
  %v8167 = vmax.f32 %v8117, %v8142
  %v8168 = vmax.f32 %v8118, %v8143
  %v8169 = vmax.f32 %v8119, %v8144
  %v8170 = vmax.f32 %v8120, %v8145
  %v8171 = vmax.f32 %v8121, %v8146
  %v8172 = vmax.f32 %v8122, %v8147
  %v8173 = vmax.f32 %v8123, %v8148
  %v8174 = vmax.f32 %v8124, %v8149
  %v8175 = vmax.f32 %v8125, %v8150
  %v8176 = vmax.f32 %v8126, %v8151
  %v8177 = vmax.f32 %v8127, %v8152
  %v8178 = vmax.f32 %v8128, %v8153
  %v8179 = vmax.f32 %v8129, %v8154
  %v8180 = vmax.f32 %v8130, %v8155
  %v8181 = vmax.f32 %v8131, %v8156
  %v8182 = vmax.f32 %v8132, %v8157
  %v8183 = vmax.f32 %v8133, %v8158
  %v8184 = vmax.f32 %v8084, %v8159
  %v8185 = vmax.f32 %v8085, %v8160
  %v8186 = vmax.f32 %v8086, %v8161
  %v8187 = vmax.f32 %v8087, %v8162
  %v8188 = vmax.f32 %v8088, %v8163
  %v8189 = vmax.f32 %v8089, %v8164
  %v8190 = vmax.f32 %v8090, %v8165
  %v8191 = vmax.f32 %v8091, %v8166
  %v8192 = vmax.f32 %v8092, %v8167
  %v8193 = vmax.f32 %v8093, %v8168
  %v8194 = vmax.f32 %v8094, %v8169
  %v8195 = vmax.f32 %v8095, %v8170
  %v8196 = vmax.f32 %v8096, %v8171
  %v8197 = vmax.f32 %v8097, %v8172
  %v8198 = vmax.f32 %v8098, %v8173
  %v8199 = vmax.f32 %v8099, %v8174
  %v8200 = vmax.f32 %v8100, %v8175
  %v8201 = vmax.f32 %v8101, %v8176
  %v8202 = vmax.f32 %v8102, %v8177
  %v8203 = vmax.f32 %v8103, %v8178
  %v8204 = vmax.f32 %v8104, %v8179
  %v8205 = vmax.f32 %v8105, %v8180
  %v8206 = vmax.f32 %v8106, %v8181
  %v8207 = vmax.f32 %v8107, %v8182
  %v8208 = vmax.f32 %v8108, %v8183
  %vm8209 = vcmask 588800
  %v8211 = vsel %vm8209, %v8027, 0
  %v8214 = vsel %vm8209, %v8029, 0
  %v8217 = vsel %vm8209, %v8031, 0
  %v8220 = vsel %vm8209, %v8033, 0
  %8222 = vmatprep.subr.mxu0 0.0
  %8223 = vmatpush1.msra.mxu0 %v8199
  %8224 = vmatprep.subr.mxu0 0.0
  %8225 = vmatpush1.msra.mxu0 %v8198
  %8226 = vmatprep.subr.mxu0 0.0
  %8227 = vmatpush1.msra.mxu0 %v8197
  %8228 = vmatprep.subr.mxu0 0.0
  %8229 = vmatpush1.msra.mxu0 %v8196
  %8230 = vmatprep.subr.mxu0 0.0
  %8231 = vmatpush1.msra.mxu0 %v8195
  %8232 = vmatprep.subr.mxu0 0.0
  %8233 = vmatpush1.msra.mxu0 %v8194
  %8234 = vmatprep.subr.mxu0 0.0
  %8235 = vmatpush1.msra.mxu0 %v8193
  %8236 = vmatprep.subr.mxu0 0.0
  %8237 = vmatpush1.msra.mxu0 %v8192
  %8238 = vmatprep.subr.mxu0 0.0
  %8239 = vmatpush1.msra.mxu0 %v8191
  %8240 = vmatprep.subr.mxu0 0.0
  %8241 = vmatpush1.msra.mxu0 %v8190
  %8242 = vmatprep.subr.mxu0 0.0
  %8243 = vmatpush1.msra.mxu0 %v8189
  %8244 = vmatprep.subr.mxu0 0.0
  %8245 = vmatpush1.msra.mxu0 %v8188
  %8246 = vmatprep.subr.mxu0 0.0
  %8247 = vmatpush1.msra.mxu0 %v8187
  %8248 = vmatprep.subr.mxu0 0.0
  %8249 = vmatpush1.msra.mxu0 %v8186
  %8250 = vmatprep.subr.mxu0 0.0
  %8251 = vmatpush1.msra.mxu0 %v8185
  %8252 = vmatprep.subr.mxu0 0.0
  %8253 = vmatpush1.msra.mxu0 %v8184
  %8254 = vmatprep.subr.mxu0 0.0
  %8255 = vmatpush2.msra.mxu0 0.0
  %8256 = vmatprep.subr.mxu0 0.0
  %8257 = vmatpush2.msra.mxu0 0.0
  %8258 = vmatprep.subr.mxu0 0.0
  %8259 = vmatpush2.msra.mxu0 0.0
  %8260 = vmatprep.subr.mxu0 0.0
  %8261 = vmatpush2.msra.mxu0 0.0
  %8262 = vmatprep.subr.mxu0 0.0
  %8263 = vmatpush2.msra.mxu0 0.0
  %8264 = vmatprep.subr.mxu0 0.0
  %8265 = vmatpush2.msra.mxu0 0.0
  %8266 = vmatprep.subr.mxu0 0.0
  %8267 = vmatpush2.msra.mxu0 0.0
  %8268 = vmatprep.subr.mxu0 0.0
  %8269 = vmatpush2.msra.mxu0 %v8208
  %8270 = vmatprep.subr.mxu0 0.0
  %8271 = vmatpush2.msra.mxu0 %v8207
  %8272 = vmatprep.subr.mxu0 0.0
  %8273 = vmatpush2.msra.mxu0 %v8206
  %8274 = vmatprep.subr.mxu0 0.0
  %8275 = vmatpush2.msra.mxu0 %v8205
  %8276 = vmatprep.subr.mxu0 0.0
  %8277 = vmatpush2.msra.mxu0 %v8204
  %8278 = vmatprep.subr.mxu0 0.0
  %8279 = vmatpush2.msra.mxu0 %v8203
  %8280 = vmatprep.subr.mxu0 0.0
  %8281 = vmatpush2.msra.mxu0 %v8202
  %8282 = vmatprep.subr.mxu0 0.0
  %8283 = vmatpush2.msra.mxu0 %v8201
  %8284 = vmatprep.subr.mxu0 0.0
  %8285 = vmatpush2.msra.mxu0 %v8200
  %8286 = vmatprep.mubr.f32.mxu0 %v8211
  %8287 = vmatmul.mubr.f32.gmra.mxu0 %v8026
  %v8288 = vpop.f32.mrf.mxu0
  %v8289 = vadd.f32 0.0, %v8288
  %v8290 = vpop.f32.mrf.mxu0
  %8291 = vmatprep.mubr.f32.mxu0 %v8214
  %8292 = vmatmul.mubr.f32.gmra.mxu0 %v8028
  %v8293 = vpop.f32.mrf.mxu0
  %v8294 = vadd.f32 0.0, %v8293
  %v8295 = vpop.f32.mrf.mxu0
  %8296 = vmatprep.mubr.f32.mxu0 %v8217
  %8297 = vmatmul.mubr.f32.gmra.mxu0 %v8030
  %v8298 = vpop.f32.mrf.mxu0
  %v8299 = vadd.f32 0.0, %v8298
  %v8300 = vpop.f32.mrf.mxu0
  %8301 = vmatprep.mubr.f32.mxu0 %v8220
  %8302 = vmatmul.mubr.f32.gmra.mxu0 %v8032
  %v8303 = vpop.f32.mrf.mxu0
  %v8304 = vadd.f32 0.0, %v8303
  %v8305 = vpop.f32.mrf.mxu0
  %8306 = vdwg.mxu0
  %8311 = vrot.lane.b32.xlu0 %v8289, 124
  %v8312 = vpop.permute.xlu0 %8311
  %8313 = vrot.lane.b32.xlu0 %v8294, 124
  %v8314 = vpop.permute.xlu0 %8313
  %8315 = vrot.lane.b32.xlu0 %v8299, 124
  %v8316 = vpop.permute.xlu0 %8315
  %8317 = vrot.lane.b32.xlu0 %v8304, 124
  %v8318 = vpop.permute.xlu0 %8317
  %v8323 = vmax.f32 %v8289, %v8312
  %v8324 = vmax.f32 %v8294, %v8314
  %v8325 = vmax.f32 %v8299, %v8316
  %v8326 = vmax.f32 %v8304, %v8318
  %8331 = vrot.lane.b32.xlu0 %v8323, 124
  %v8332 = vpop.permute.xlu0 %8331
  %8333 = vrot.lane.b32.xlu0 %v8324, 124
  %v8334 = vpop.permute.xlu0 %8333
  %8335 = vrot.lane.b32.xlu0 %v8325, 124
  %v8336 = vpop.permute.xlu0 %8335
  %8337 = vrot.lane.b32.xlu0 %v8326, 124
  %v8338 = vpop.permute.xlu0 %8337
  %vm8343 = vcmask 31744
  %8344 = vst.msk [vmem:[#allocation4] sm:$0xff] %vm8343, %v8332
  %8345 = vst.msk [vmem:[#allocation4 + $0x8] sm:$0xff] %vm8343, %v8334
  %8346 = vst.msk [vmem:[#allocation4 + $0x10] sm:$0xff] %vm8343, %v8336
  %8347 = vst.msk [vmem:[#allocation4 + $0x18] sm:$0xff] %vm8343, %v8338
  %8348 = vrot.lane.b32.xlu0 %v8323, 120
  %v8349 = vpop.permute.xlu0 %8348
  %8350 = vrot.lane.b32.xlu0 %v8324, 120
  %v8351 = vpop.permute.xlu0 %8350
  %8352 = vrot.lane.b32.xlu0 %v8325, 120
  %v8353 = vpop.permute.xlu0 %8352
  %8354 = vrot.lane.b32.xlu0 %v8326, 120
  %v8355 = vpop.permute.xlu0 %8354
  %vm8360 = vcmask 64544
  %8361 = vst.msk [vmem:[#allocation4] sm:$0xff] %vm8360, %v8349
  %8362 = vst.msk [vmem:[#allocation4 + $0x8] sm:$0xff] %vm8360, %v8351
  %8363 = vst.msk [vmem:[#allocation4 + $0x10] sm:$0xff] %vm8360, %v8353
  %8364 = vst.msk [vmem:[#allocation4 + $0x18] sm:$0xff] %vm8360, %v8355
  %8365 = vrot.lane.b32.xlu0 %v8323, 116
  %v8366 = vpop.permute.xlu0 %8365
  %8367 = vrot.lane.b32.xlu0 %v8324, 116
  %v8368 = vpop.permute.xlu0 %8367
  %8369 = vrot.lane.b32.xlu0 %v8325, 116
  %v8370 = vpop.permute.xlu0 %8369
  %8371 = vrot.lane.b32.xlu0 %v8326, 116
  %v8372 = vpop.permute.xlu0 %8371
  %vm8377 = vcmask 97344
  %8378 = vst.msk [vmem:[#allocation4] sm:$0xff] %vm8377, %v8366
  %8379 = vst.msk [vmem:[#allocation4 + $0x8] sm:$0xff] %vm8377, %v8368
  %8380 = vst.msk [vmem:[#allocation4 + $0x10] sm:$0xff] %vm8377, %v8370
  %8381 = vst.msk [vmem:[#allocation4 + $0x18] sm:$0xff] %vm8377, %v8372
  %8382 = vrot.lane.b32.xlu0 %v8323, 112
  %v8383 = vpop.permute.xlu0 %8382
  %8384 = vrot.lane.b32.xlu0 %v8324, 112
  %v8385 = vpop.permute.xlu0 %8384
  %8386 = vrot.lane.b32.xlu0 %v8325, 112
  %v8387 = vpop.permute.xlu0 %8386
  %8388 = vrot.lane.b32.xlu0 %v8326, 112
  %v8389 = vpop.permute.xlu0 %8388
  %vm8394 = vcmask 130144
  %8395 = vst.msk [vmem:[#allocation4] sm:$0xff] %vm8394, %v8383
  %8396 = vst.msk [vmem:[#allocation4 + $0x8] sm:$0xff] %vm8394, %v8385
  %8397 = vst.msk [vmem:[#allocation4 + $0x10] sm:$0xff] %vm8394, %v8387
  %8398 = vst.msk [vmem:[#allocation4 + $0x18] sm:$0xff] %vm8394, %v8389
  %v8399 = vld [vmem:[#allocation2 + $0x10] sm:$0xff]
  %v8400 = vld [vmem:[#allocation2 + $0x18] sm:$0xff]
  %v8401 = vld [vmem:[#allocation2 + $0x20] sm:$0xff]
  %v8402 = vld [vmem:[#allocation2 + $0x28] sm:$0xff]
  %v8403 = vld [vmem:[#allocation2 + $0x30] sm:$0xff]
  %v8404 = vld [vmem:[#allocation2 + $0x38] sm:$0xff]
  %v8405 = vld [vmem:[#allocation2 + $0x40] sm:$0xff]
  %v8406 = vld [vmem:[#allocation2 + $0x48] sm:$0xff]
  %v8407 = vld [vmem:[#allocation2 + $0x50] sm:$0xff]
  %v8408 = vld [vmem:[#allocation2 + $0x58] sm:$0xff]
  %v8409 = vld [vmem:[#allocation2 + $0x60] sm:$0xff]
  %v8410 = vld [vmem:[#allocation2 + $0x68] sm:$0xff]
  %v8411 = vld [vmem:[#allocation2 + $0x70] sm:$0xff]
  %v8412 = vld [vmem:[#allocation2 + $0x78] sm:$0xff]
  %v8413 = vld [vmem:[#allocation2 + $0x80] sm:$0xff]
  %v8414 = vld [vmem:[#allocation2 + $0x88] sm:$0xff]
  %v8415 = vld [vmem:[#allocation2 + $0x90] sm:$0xff]
  %v8416 = vld [vmem:[#allocation2 + $0x98] sm:$0xff]
  %v8417 = vld [vmem:[#allocation2 + $0xa0] sm:$0xff]
  %v8418 = vld [vmem:[#allocation2 + $0xa8] sm:$0xff]
  %v8419 = vld [vmem:[#allocation2 + $0xb0] sm:$0xff]
  %v8420 = vld [vmem:[#allocation2 + $0xb8] sm:$0xff]
  %v8421 = vld [vmem:[#allocation2 + $0xc0] sm:$0xff]
  %v8422 = vld [vmem:[#allocation2 + $0xc8] sm:$0xff]
  %v8423 = vld [vmem:[#allocation2 + $0xd0] sm:$0xff]
  %v8424 = vld [vmem:[#allocation2 + $0x11] sm:$0xff]
  %v8425 = vld [vmem:[#allocation2 + $0x19] sm:$0xff]
  %v8426 = vld [vmem:[#allocation2 + $0x21] sm:$0xff]
  %v8427 = vld [vmem:[#allocation2 + $0x29] sm:$0xff]
  %v8428 = vld [vmem:[#allocation2 + $0x31] sm:$0xff]
  %v8429 = vld [vmem:[#allocation2 + $0x39] sm:$0xff]
  %v8430 = vld [vmem:[#allocation2 + $0x41] sm:$0xff]
  %v8431 = vld [vmem:[#allocation2 + $0x49] sm:$0xff]
  %v8432 = vld [vmem:[#allocation2 + $0x51] sm:$0xff]
  %v8433 = vld [vmem:[#allocation2 + $0x59] sm:$0xff]
  %v8434 = vld [vmem:[#allocation2 + $0x61] sm:$0xff]
  %v8435 = vld [vmem:[#allocation2 + $0x69] sm:$0xff]
  %v8436 = vld [vmem:[#allocation2 + $0x71] sm:$0xff]
  %v8437 = vld [vmem:[#allocation2 + $0x79] sm:$0xff]
  %v8438 = vld [vmem:[#allocation2 + $0x81] sm:$0xff]
  %v8439 = vld [vmem:[#allocation2 + $0x89] sm:$0xff]
  %v8440 = vld [vmem:[#allocation2 + $0x91] sm:$0xff]
  %v8441 = vld [vmem:[#allocation2 + $0x99] sm:$0xff]
  %v8442 = vld [vmem:[#allocation2 + $0xa1] sm:$0xff]
  %v8443 = vld [vmem:[#allocation2 + $0xa9] sm:$0xff]
  %v8444 = vld [vmem:[#allocation2 + $0xb1] sm:$0xff]
  %v8445 = vld [vmem:[#allocation2 + $0xb9] sm:$0xff]
  %v8446 = vld [vmem:[#allocation2 + $0xc1] sm:$0xff]
  %v8447 = vld [vmem:[#allocation2 + $0xc9] sm:$0xff]
  %v8448 = vld [vmem:[#allocation2 + $0xd1] sm:$0xff]
  %v8449 = vmax.f32 %v8399, %v8424
  %v8450 = vmax.f32 %v8400, %v8425
  %v8451 = vmax.f32 %v8401, %v8426
  %v8452 = vmax.f32 %v8402, %v8427
  %v8453 = vmax.f32 %v8403, %v8428
  %v8454 = vmax.f32 %v8404, %v8429
  %v8455 = vmax.f32 %v8405, %v8430
  %v8456 = vmax.f32 %v8406, %v8431
  %v8457 = vmax.f32 %v8407, %v8432
  %v8458 = vmax.f32 %v8408, %v8433
  %v8459 = vmax.f32 %v8409, %v8434
  %v8460 = vmax.f32 %v8410, %v8435
  %v8461 = vmax.f32 %v8411, %v8436
  %v8462 = vmax.f32 %v8412, %v8437
  %v8463 = vmax.f32 %v8413, %v8438
  %v8464 = vmax.f32 %v8414, %v8439
  %v8465 = vmax.f32 %v8415, %v8440
  %v8466 = vmax.f32 %v8416, %v8441
  %v8467 = vmax.f32 %v8417, %v8442
  %v8468 = vmax.f32 %v8418, %v8443
  %v8469 = vmax.f32 %v8419, %v8444
  %v8470 = vmax.f32 %v8420, %v8445
  %v8471 = vmax.f32 %v8421, %v8446
  %v8472 = vmax.f32 %v8422, %v8447
  %v8473 = vmax.f32 %v8423, %v8448
  %v8474 = vld [vmem:[#allocation2 + $0x1a] sm:$0xff]
  %v8475 = vld [vmem:[#allocation2 + $0x22] sm:$0xff]
  %v8476 = vld [vmem:[#allocation2 + $0x2a] sm:$0xff]
  %v8477 = vld [vmem:[#allocation2 + $0x32] sm:$0xff]
  %v8478 = vld [vmem:[#allocation2 + $0x3a] sm:$0xff]
  %v8479 = vld [vmem:[#allocation2 + $0x42] sm:$0xff]
  %v8480 = vld [vmem:[#allocation2 + $0x4a] sm:$0xff]
  %v8481 = vld [vmem:[#allocation2 + $0x52] sm:$0xff]
  %v8482 = vld [vmem:[#allocation2 + $0x5a] sm:$0xff]
  %v8483 = vld [vmem:[#allocation2 + $0x62] sm:$0xff]
  %v8484 = vld [vmem:[#allocation2 + $0x6a] sm:$0xff]
  %v8485 = vld [vmem:[#allocation2 + $0x72] sm:$0xff]
  %v8486 = vld [vmem:[#allocation2 + $0x7a] sm:$0xff]
  %v8487 = vld [vmem:[#allocation2 + $0x82] sm:$0xff]
  %v8488 = vld [vmem:[#allocation2 + $0x8a] sm:$0xff]
  %v8489 = vld [vmem:[#allocation2 + $0x92] sm:$0xff]
  %v8490 = vld [vmem:[#allocation2 + $0x9a] sm:$0xff]
  %v8491 = vld [vmem:[#allocation2 + $0xa2] sm:$0xff]
  %v8492 = vld [vmem:[#allocation2 + $0xaa] sm:$0xff]
  %v8493 = vld [vmem:[#allocation2 + $0xb2] sm:$0xff]
  %v8494 = vld [vmem:[#allocation2 + $0xba] sm:$0xff]
  %v8495 = vld [vmem:[#allocation2 + $0xc2] sm:$0xff]
  %v8496 = vld [vmem:[#allocation2 + $0xca] sm:$0xff]
  %v8497 = vld [vmem:[#allocation2 + $0xd2] sm:$0xff]
  %v8498 = vld [vmem:[#allocation2 + $0xda] sm:$0xff]
  %v8499 = vld [vmem:[#allocation2 + $0x1b] sm:$0xff]
  %v8500 = vld [vmem:[#allocation2 + $0x23] sm:$0xff]
  %v8501 = vld [vmem:[#allocation2 + $0x2b] sm:$0xff]
  %v8502 = vld [vmem:[#allocation2 + $0x33] sm:$0xff]
  %v8503 = vld [vmem:[#allocation2 + $0x3b] sm:$0xff]
  %v8504 = vld [vmem:[#allocation2 + $0x43] sm:$0xff]
  %v8505 = vld [vmem:[#allocation2 + $0x4b] sm:$0xff]
  %v8506 = vld [vmem:[#allocation2 + $0x53] sm:$0xff]
  %v8507 = vld [vmem:[#allocation2 + $0x5b] sm:$0xff]
  %v8508 = vld [vmem:[#allocation2 + $0x63] sm:$0xff]
  %v8509 = vld [vmem:[#allocation2 + $0x6b] sm:$0xff]
  %v8510 = vld [vmem:[#allocation2 + $0x73] sm:$0xff]
  %v8511 = vld [vmem:[#allocation2 + $0x7b] sm:$0xff]
  %v8512 = vld [vmem:[#allocation2 + $0x83] sm:$0xff]
  %v8513 = vld [vmem:[#allocation2 + $0x8b] sm:$0xff]
  %v8514 = vld [vmem:[#allocation2 + $0x93] sm:$0xff]
  %v8515 = vld [vmem:[#allocation2 + $0x9b] sm:$0xff]
  %v8516 = vld [vmem:[#allocation2 + $0xa3] sm:$0xff]
  %v8517 = vld [vmem:[#allocation2 + $0xab] sm:$0xff]
  %v8518 = vld [vmem:[#allocation2 + $0xb3] sm:$0xff]
  %v8519 = vld [vmem:[#allocation2 + $0xbb] sm:$0xff]
  %v8520 = vld [vmem:[#allocation2 + $0xc3] sm:$0xff]
  %v8521 = vld [vmem:[#allocation2 + $0xcb] sm:$0xff]
  %v8522 = vld [vmem:[#allocation2 + $0xd3] sm:$0xff]
  %v8523 = vld [vmem:[#allocation2 + $0xdb] sm:$0xff]
  %v8524 = vmax.f32 %v8474, %v8499
  %v8525 = vmax.f32 %v8475, %v8500
  %v8526 = vmax.f32 %v8476, %v8501
  %v8527 = vmax.f32 %v8477, %v8502
  %v8528 = vmax.f32 %v8478, %v8503
  %v8529 = vmax.f32 %v8479, %v8504
  %v8530 = vmax.f32 %v8480, %v8505
  %v8531 = vmax.f32 %v8481, %v8506
  %v8532 = vmax.f32 %v8482, %v8507
  %v8533 = vmax.f32 %v8483, %v8508
  %v8534 = vmax.f32 %v8484, %v8509
  %v8535 = vmax.f32 %v8485, %v8510
  %v8536 = vmax.f32 %v8486, %v8511
  %v8537 = vmax.f32 %v8487, %v8512
  %v8538 = vmax.f32 %v8488, %v8513
  %v8539 = vmax.f32 %v8489, %v8514
  %v8540 = vmax.f32 %v8490, %v8515
  %v8541 = vmax.f32 %v8491, %v8516
  %v8542 = vmax.f32 %v8492, %v8517
  %v8543 = vmax.f32 %v8493, %v8518
  %v8544 = vmax.f32 %v8494, %v8519
  %v8545 = vmax.f32 %v8495, %v8520
  %v8546 = vmax.f32 %v8496, %v8521
  %v8547 = vmax.f32 %v8497, %v8522
  %v8548 = vmax.f32 %v8498, %v8523
  %v8549 = vmax.f32 %v8449, %v8524
  %v8550 = vmax.f32 %v8450, %v8525
  %v8551 = vmax.f32 %v8451, %v8526
  %v8552 = vmax.f32 %v8452, %v8527
  %v8553 = vmax.f32 %v8453, %v8528
  %v8554 = vmax.f32 %v8454, %v8529
  %v8555 = vmax.f32 %v8455, %v8530
  %v8556 = vmax.f32 %v8456, %v8531
  %v8557 = vmax.f32 %v8457, %v8532
  %v8558 = vmax.f32 %v8458, %v8533
  %v8559 = vmax.f32 %v8459, %v8534
  %v8560 = vmax.f32 %v8460, %v8535
  %v8561 = vmax.f32 %v8461, %v8536
  %v8562 = vmax.f32 %v8462, %v8537
  %v8563 = vmax.f32 %v8463, %v8538
  %v8564 = vmax.f32 %v8464, %v8539
  %v8565 = vmax.f32 %v8465, %v8540
  %v8566 = vmax.f32 %v8466, %v8541
  %v8567 = vmax.f32 %v8467, %v8542
  %v8568 = vmax.f32 %v8468, %v8543
  %v8569 = vmax.f32 %v8469, %v8544
  %v8570 = vmax.f32 %v8470, %v8545
  %v8571 = vmax.f32 %v8471, %v8546
  %v8572 = vmax.f32 %v8472, %v8547
  %v8573 = vmax.f32 %v8473, %v8548
  %8574 = vmatprep.subr.mxu0 0.0
  %8575 = vmatpush1.msra.mxu0 %v8564
  %8576 = vmatprep.subr.mxu0 0.0
  %8577 = vmatpush1.msra.mxu0 %v8563
  %8578 = vmatprep.subr.mxu0 0.0
  %8579 = vmatpush1.msra.mxu0 %v8562
  %8580 = vmatprep.subr.mxu0 0.0
  %8581 = vmatpush1.msra.mxu0 %v8561
  %8582 = vmatprep.subr.mxu0 0.0
  %8583 = vmatpush1.msra.mxu0 %v8560
  %8584 = vmatprep.subr.mxu0 0.0
  %8585 = vmatpush1.msra.mxu0 %v8559
  %8586 = vmatprep.subr.mxu0 0.0
  %8587 = vmatpush1.msra.mxu0 %v8558
  %8588 = vmatprep.subr.mxu0 0.0
  %8589 = vmatpush1.msra.mxu0 %v8557
  %8590 = vmatprep.subr.mxu0 0.0
  %8591 = vmatpush1.msra.mxu0 %v8556
  %8592 = vmatprep.subr.mxu0 0.0
  %8593 = vmatpush1.msra.mxu0 %v8555
  %8594 = vmatprep.subr.mxu0 0.0
  %8595 = vmatpush1.msra.mxu0 %v8554
  %8596 = vmatprep.subr.mxu0 0.0
  %8597 = vmatpush1.msra.mxu0 %v8553
  %8598 = vmatprep.subr.mxu0 0.0
  %8599 = vmatpush1.msra.mxu0 %v8552
  %8600 = vmatprep.subr.mxu0 0.0
  %8601 = vmatpush1.msra.mxu0 %v8551
  %8602 = vmatprep.subr.mxu0 0.0
  %8603 = vmatpush1.msra.mxu0 %v8550
  %8604 = vmatprep.subr.mxu0 0.0
  %8605 = vmatpush1.msra.mxu0 %v8549
  %8606 = vmatprep.subr.mxu0 0.0
  %8607 = vmatpush2.msra.mxu0 0.0
  %8608 = vmatprep.subr.mxu0 0.0
  %8609 = vmatpush2.msra.mxu0 0.0
  %8610 = vmatprep.subr.mxu0 0.0
  %8611 = vmatpush2.msra.mxu0 0.0
  %8612 = vmatprep.subr.mxu0 0.0
  %8613 = vmatpush2.msra.mxu0 0.0
  %8614 = vmatprep.subr.mxu0 0.0
  %8615 = vmatpush2.msra.mxu0 0.0
  %8616 = vmatprep.subr.mxu0 0.0
  %8617 = vmatpush2.msra.mxu0 0.0
  %8618 = vmatprep.subr.mxu0 0.0
  %8619 = vmatpush2.msra.mxu0 0.0
  %8620 = vmatprep.subr.mxu0 0.0
  %8621 = vmatpush2.msra.mxu0 %v8573
  %8622 = vmatprep.subr.mxu0 0.0
  %8623 = vmatpush2.msra.mxu0 %v8572
  %8624 = vmatprep.subr.mxu0 0.0
  %8625 = vmatpush2.msra.mxu0 %v8571
  %8626 = vmatprep.subr.mxu0 0.0
  %8627 = vmatpush2.msra.mxu0 %v8570
  %8628 = vmatprep.subr.mxu0 0.0
  %8629 = vmatpush2.msra.mxu0 %v8569
  %8630 = vmatprep.subr.mxu0 0.0
  %8631 = vmatpush2.msra.mxu0 %v8568
  %8632 = vmatprep.subr.mxu0 0.0
  %8633 = vmatpush2.msra.mxu0 %v8567
  %8634 = vmatprep.subr.mxu0 0.0
  %8635 = vmatpush2.msra.mxu0 %v8566
  %8636 = vmatprep.subr.mxu0 0.0
  %8637 = vmatpush2.msra.mxu0 %v8565
  %8638 = vmatprep.mubr.f32.mxu0 %v8211
  %8639 = vmatmul.mubr.f32.gmra.mxu0 %v8026
  %v8640 = vpop.f32.mrf.mxu0
  %v8641 = vadd.f32 0.0, %v8640
  %v8642 = vpop.f32.mrf.mxu0
  %8643 = vmatprep.mubr.f32.mxu0 %v8214
  %8644 = vmatmul.mubr.f32.gmra.mxu0 %v8028
  %v8645 = vpop.f32.mrf.mxu0
  %v8646 = vadd.f32 0.0, %v8645
  %v8647 = vpop.f32.mrf.mxu0
  %8648 = vmatprep.mubr.f32.mxu0 %v8217
  %8649 = vmatmul.mubr.f32.gmra.mxu0 %v8030
  %v8650 = vpop.f32.mrf.mxu0
  %v8651 = vadd.f32 0.0, %v8650
  %v8652 = vpop.f32.mrf.mxu0
  %8653 = vmatprep.mubr.f32.mxu0 %v8220
  %8654 = vmatmul.mubr.f32.gmra.mxu0 %v8032
  %v8655 = vpop.f32.mrf.mxu0
  %v8656 = vadd.f32 0.0, %v8655
  %v8657 = vpop.f32.mrf.mxu0
  %8658 = vdwg.mxu0
  %8663 = vrot.lane.b32.xlu0 %v8641, 120
  %v8664 = vpop.permute.xlu0 %8663
  %8665 = vrot.lane.b32.xlu0 %v8646, 120
  %v8666 = vpop.permute.xlu0 %8665
  %8667 = vrot.lane.b32.xlu0 %v8651, 120
  %v8668 = vpop.permute.xlu0 %8667
  %8669 = vrot.lane.b32.xlu0 %v8656, 120
  %v8670 = vpop.permute.xlu0 %8669
  %v8675 = vmax.f32 %v8641, %v8664
  %v8676 = vmax.f32 %v8646, %v8666
  %v8677 = vmax.f32 %v8651, %v8668
  %v8678 = vmax.f32 %v8656, %v8670
  %8683 = vrot.lane.b32.xlu0 %v8675, 8
  %v8684 = vpop.permute.xlu0 %8683
  %8685 = vrot.lane.b32.xlu0 %v8676, 8
  %v8686 = vpop.permute.xlu0 %8685
  %8687 = vrot.lane.b32.xlu0 %v8677, 8
  %v8688 = vpop.permute.xlu0 %8687
  %8689 = vrot.lane.b32.xlu0 %v8678, 8
  %v8690 = vpop.permute.xlu0 %8689
  %vm8695 = vcmask 195712
  %8696 = vst.msk [vmem:[#allocation4] sm:$0xff] %vm8695, %v8684
  %8697 = vst.msk [vmem:[#allocation4 + $0x8] sm:$0xff] %vm8695, %v8686
  %8698 = vst.msk [vmem:[#allocation4 + $0x10] sm:$0xff] %vm8695, %v8688
  %8699 = vst.msk [vmem:[#allocation4 + $0x18] sm:$0xff] %vm8695, %v8690
  %vm8700 = vcmask 261312
  %8701 = vst.msk [vmem:[#allocation4] sm:$0xff] %vm8700, %v8675
  %8702 = vst.msk [vmem:[#allocation4 + $0x8] sm:$0xff] %vm8700, %v8676
  %8703 = vst.msk [vmem:[#allocation4 + $0x10] sm:$0xff] %vm8700, %v8677
  %8704 = vst.msk [vmem:[#allocation4 + $0x18] sm:$0xff] %vm8700, %v8678
  %8705 = vrot.lane.b32.xlu0 %v8675, 120
  %v8706 = vpop.permute.xlu0 %8705
  %8707 = vrot.lane.b32.xlu0 %v8676, 120
  %v8708 = vpop.permute.xlu0 %8707
  %8709 = vrot.lane.b32.xlu0 %v8677, 120
  %v8710 = vpop.permute.xlu0 %8709
  %8711 = vrot.lane.b32.xlu0 %v8678, 120
  %v8712 = vpop.permute.xlu0 %8711
  %vm8717 = vcmask 326912
  %8718 = vst.msk [vmem:[#allocation4] sm:$0xff] %vm8717, %v8706
  %8719 = vst.msk [vmem:[#allocation4 + $0x8] sm:$0xff] %vm8717, %v8708
  %8720 = vst.msk [vmem:[#allocation4 + $0x10] sm:$0xff] %vm8717, %v8710
  %8721 = vst.msk [vmem:[#allocation4 + $0x18] sm:$0xff] %vm8717, %v8712
  %8722 = vrot.lane.b32.xlu0 %v8675, 112
  %v8723 = vpop.permute.xlu0 %8722
  %8724 = vrot.lane.b32.xlu0 %v8676, 112
  %v8725 = vpop.permute.xlu0 %8724
  %8726 = vrot.lane.b32.xlu0 %v8677, 112
  %v8727 = vpop.permute.xlu0 %8726
  %8728 = vrot.lane.b32.xlu0 %v8678, 112
  %v8729 = vpop.permute.xlu0 %8728
  %vm8734 = vcmask 392512
  %8735 = vst.msk [vmem:[#allocation4] sm:$0xff] %vm8734, %v8723
  %8736 = vst.msk [vmem:[#allocation4 + $0x8] sm:$0xff] %vm8734, %v8725
  %8737 = vst.msk [vmem:[#allocation4 + $0x10] sm:$0xff] %vm8734, %v8727
  %8738 = vst.msk [vmem:[#allocation4 + $0x18] sm:$0xff] %vm8734, %v8729
  %v8739 = vld [vmem:[#allocation3 + $0x10] sm:$0xff]
  %v8740 = vld [vmem:[#allocation3 + $0x18] sm:$0xff]
  %v8741 = vld [vmem:[#allocation3 + $0x20] sm:$0xff]
  %v8742 = vld [vmem:[#allocation3 + $0x28] sm:$0xff]
  %v8743 = vld [vmem:[#allocation3 + $0x30] sm:$0xff]
  %v8744 = vld [vmem:[#allocation3 + $0x38] sm:$0xff]
  %v8745 = vld [vmem:[#allocation3 + $0x40] sm:$0xff]
  %v8746 = vld [vmem:[#allocation3 + $0x48] sm:$0xff]
  %v8747 = vld [vmem:[#allocation3 + $0x50] sm:$0xff]
  %v8748 = vld [vmem:[#allocation3 + $0x58] sm:$0xff]
  %v8749 = vld [vmem:[#allocation3 + $0x60] sm:$0xff]
  %v8750 = vld [vmem:[#allocation3 + $0x68] sm:$0xff]
  %v8751 = vld [vmem:[#allocation3 + $0x70] sm:$0xff]
  %v8752 = vld [vmem:[#allocation3 + $0x78] sm:$0xff]
  %v8753 = vld [vmem:[#allocation3 + $0x80] sm:$0xff]
  %v8754 = vld [vmem:[#allocation3 + $0x88] sm:$0xff]
  %v8755 = vld [vmem:[#allocation3 + $0x90] sm:$0xff]
  %v8756 = vld [vmem:[#allocation3 + $0x98] sm:$0xff]
  %v8757 = vld [vmem:[#allocation3 + $0xa0] sm:$0xff]
  %v8758 = vld [vmem:[#allocation3 + $0xa8] sm:$0xff]
  %v8759 = vld [vmem:[#allocation3 + $0xb0] sm:$0xff]
  %v8760 = vld [vmem:[#allocation3 + $0xb8] sm:$0xff]
  %v8761 = vld [vmem:[#allocation3 + $0xc0] sm:$0xff]
  %v8762 = vld [vmem:[#allocation3 + $0xc8] sm:$0xff]
  %v8763 = vld [vmem:[#allocation3 + $0xd0] sm:$0xff]
  %v8764 = vld [vmem:[#allocation3 + $0x11] sm:$0xff]
  %v8765 = vld [vmem:[#allocation3 + $0x19] sm:$0xff]
  %v8766 = vld [vmem:[#allocation3 + $0x21] sm:$0xff]
  %v8767 = vld [vmem:[#allocation3 + $0x29] sm:$0xff]
  %v8768 = vld [vmem:[#allocation3 + $0x31] sm:$0xff]
  %v8769 = vld [vmem:[#allocation3 + $0x39] sm:$0xff]
  %v8770 = vld [vmem:[#allocation3 + $0x41] sm:$0xff]
  %v8771 = vld [vmem:[#allocation3 + $0x49] sm:$0xff]
  %v8772 = vld [vmem:[#allocation3 + $0x51] sm:$0xff]
  %v8773 = vld [vmem:[#allocation3 + $0x59] sm:$0xff]
  %v8774 = vld [vmem:[#allocation3 + $0x61] sm:$0xff]
  %v8775 = vld [vmem:[#allocation3 + $0x69] sm:$0xff]
  %v8776 = vld [vmem:[#allocation3 + $0x71] sm:$0xff]
  %v8777 = vld [vmem:[#allocation3 + $0x79] sm:$0xff]
  %v8778 = vld [vmem:[#allocation3 + $0x81] sm:$0xff]
  %v8779 = vld [vmem:[#allocation3 + $0x89] sm:$0xff]
  %v8780 = vld [vmem:[#allocation3 + $0x91] sm:$0xff]
  %v8781 = vld [vmem:[#allocation3 + $0x99] sm:$0xff]
  %v8782 = vld [vmem:[#allocation3 + $0xa1] sm:$0xff]
  %v8783 = vld [vmem:[#allocation3 + $0xa9] sm:$0xff]
  %v8784 = vld [vmem:[#allocation3 + $0xb1] sm:$0xff]
  %v8785 = vld [vmem:[#allocation3 + $0xb9] sm:$0xff]
  %v8786 = vld [vmem:[#allocation3 + $0xc1] sm:$0xff]
  %v8787 = vld [vmem:[#allocation3 + $0xc9] sm:$0xff]
  %v8788 = vld [vmem:[#allocation3 + $0xd1] sm:$0xff]
  %v8789 = vmax.f32 %v8739, %v8764
  %v8790 = vmax.f32 %v8740, %v8765
  %v8791 = vmax.f32 %v8741, %v8766
  %v8792 = vmax.f32 %v8742, %v8767
  %v8793 = vmax.f32 %v8743, %v8768
  %v8794 = vmax.f32 %v8744, %v8769
  %v8795 = vmax.f32 %v8745, %v8770
  %v8796 = vmax.f32 %v8746, %v8771
  %v8797 = vmax.f32 %v8747, %v8772
  %v8798 = vmax.f32 %v8748, %v8773
  %v8799 = vmax.f32 %v8749, %v8774
  %v8800 = vmax.f32 %v8750, %v8775
  %v8801 = vmax.f32 %v8751, %v8776
  %v8802 = vmax.f32 %v8752, %v8777
  %v8803 = vmax.f32 %v8753, %v8778
  %v8804 = vmax.f32 %v8754, %v8779
  %v8805 = vmax.f32 %v8755, %v8780
  %v8806 = vmax.f32 %v8756, %v8781
  %v8807 = vmax.f32 %v8757, %v8782
  %v8808 = vmax.f32 %v8758, %v8783
  %v8809 = vmax.f32 %v8759, %v8784
  %v8810 = vmax.f32 %v8760, %v8785
  %v8811 = vmax.f32 %v8761, %v8786
  %v8812 = vmax.f32 %v8762, %v8787
  %v8813 = vmax.f32 %v8763, %v8788
  %v8814 = vld [vmem:[#allocation3 + $0x1a] sm:$0xff]
  %v8815 = vld [vmem:[#allocation3 + $0x22] sm:$0xff]
  %v8816 = vld [vmem:[#allocation3 + $0x2a] sm:$0xff]
  %v8817 = vld [vmem:[#allocation3 + $0x32] sm:$0xff]
  %v8818 = vld [vmem:[#allocation3 + $0x3a] sm:$0xff]
  %v8819 = vld [vmem:[#allocation3 + $0x42] sm:$0xff]
  %v8820 = vld [vmem:[#allocation3 + $0x4a] sm:$0xff]
  %v8821 = vld [vmem:[#allocation3 + $0x52] sm:$0xff]
  %v8822 = vld [vmem:[#allocation3 + $0x5a] sm:$0xff]
  %v8823 = vld [vmem:[#allocation3 + $0x62] sm:$0xff]
  %v8824 = vld [vmem:[#allocation3 + $0x6a] sm:$0xff]
  %v8825 = vld [vmem:[#allocation3 + $0x72] sm:$0xff]
  %v8826 = vld [vmem:[#allocation3 + $0x7a] sm:$0xff]
  %v8827 = vld [vmem:[#allocation3 + $0x82] sm:$0xff]
  %v8828 = vld [vmem:[#allocation3 + $0x8a] sm:$0xff]
  %v8829 = vld [vmem:[#allocation3 + $0x92] sm:$0xff]
  %v8830 = vld [vmem:[#allocation3 + $0x9a] sm:$0xff]
  %v8831 = vld [vmem:[#allocation3 + $0xa2] sm:$0xff]
  %v8832 = vld [vmem:[#allocation3 + $0xaa] sm:$0xff]
  %v8833 = vld [vmem:[#allocation3 + $0xb2] sm:$0xff]
  %v8834 = vld [vmem:[#allocation3 + $0xba] sm:$0xff]
  %v8835 = vld [vmem:[#allocation3 + $0xc2] sm:$0xff]
  %v8836 = vld [vmem:[#allocation3 + $0xca] sm:$0xff]
  %v8837 = vld [vmem:[#allocation3 + $0xd2] sm:$0xff]
  %v8838 = vld [vmem:[#allocation3 + $0xda] sm:$0xff]
  %v8839 = vld [vmem:[#allocation3 + $0x1b] sm:$0xff]
  %v8840 = vld [vmem:[#allocation3 + $0x23] sm:$0xff]
  %v8841 = vld [vmem:[#allocation3 + $0x2b] sm:$0xff]
  %v8842 = vld [vmem:[#allocation3 + $0x33] sm:$0xff]
  %v8843 = vld [vmem:[#allocation3 + $0x3b] sm:$0xff]
  %v8844 = vld [vmem:[#allocation3 + $0x43] sm:$0xff]
  %v8845 = vld [vmem:[#allocation3 + $0x4b] sm:$0xff]
  %v8846 = vld [vmem:[#allocation3 + $0x53] sm:$0xff]
  %v8847 = vld [vmem:[#allocation3 + $0x5b] sm:$0xff]
  %v8848 = vld [vmem:[#allocation3 + $0x63] sm:$0xff]
  %v8849 = vld [vmem:[#allocation3 + $0x6b] sm:$0xff]
  %v8850 = vld [vmem:[#allocation3 + $0x73] sm:$0xff]
  %v8851 = vld [vmem:[#allocation3 + $0x7b] sm:$0xff]
  %v8852 = vld [vmem:[#allocation3 + $0x83] sm:$0xff]
  %v8853 = vld [vmem:[#allocation3 + $0x8b] sm:$0xff]
  %v8854 = vld [vmem:[#allocation3 + $0x93] sm:$0xff]
  %v8855 = vld [vmem:[#allocation3 + $0x9b] sm:$0xff]
  %v8856 = vld [vmem:[#allocation3 + $0xa3] sm:$0xff]
  %v8857 = vld [vmem:[#allocation3 + $0xab] sm:$0xff]
  %v8858 = vld [vmem:[#allocation3 + $0xb3] sm:$0xff]
  %v8859 = vld [vmem:[#allocation3 + $0xbb] sm:$0xff]
  %v8860 = vld [vmem:[#allocation3 + $0xc3] sm:$0xff]
  %v8861 = vld [vmem:[#allocation3 + $0xcb] sm:$0xff]
  %v8862 = vld [vmem:[#allocation3 + $0xd3] sm:$0xff]
  %v8863 = vld [vmem:[#allocation3 + $0xdb] sm:$0xff]
  %v8864 = vmax.f32 %v8814, %v8839
  %v8865 = vmax.f32 %v8815, %v8840
  %v8866 = vmax.f32 %v8816, %v8841
  %v8867 = vmax.f32 %v8817, %v8842
  %v8868 = vmax.f32 %v8818, %v8843
  %v8869 = vmax.f32 %v8819, %v8844
  %v8870 = vmax.f32 %v8820, %v8845
  %v8871 = vmax.f32 %v8821, %v8846
  %v8872 = vmax.f32 %v8822, %v8847
  %v8873 = vmax.f32 %v8823, %v8848
  %v8874 = vmax.f32 %v8824, %v8849
  %v8875 = vmax.f32 %v8825, %v8850
  %v8876 = vmax.f32 %v8826, %v8851
  %v8877 = vmax.f32 %v8827, %v8852
  %v8878 = vmax.f32 %v8828, %v8853
  %v8879 = vmax.f32 %v8829, %v8854
  %v8880 = vmax.f32 %v8830, %v8855
  %v8881 = vmax.f32 %v8831, %v8856
  %v8882 = vmax.f32 %v8832, %v8857
  %v8883 = vmax.f32 %v8833, %v8858
  %v8884 = vmax.f32 %v8834, %v8859
  %v8885 = vmax.f32 %v8835, %v8860
  %v8886 = vmax.f32 %v8836, %v8861
  %v8887 = vmax.f32 %v8837, %v8862
  %v8888 = vmax.f32 %v8838, %v8863
  %v8889 = vmax.f32 %v8789, %v8864
  %v8890 = vmax.f32 %v8790, %v8865
  %v8891 = vmax.f32 %v8791, %v8866
  %v8892 = vmax.f32 %v8792, %v8867
  %v8893 = vmax.f32 %v8793, %v8868
  %v8894 = vmax.f32 %v8794, %v8869
  %v8895 = vmax.f32 %v8795, %v8870
  %v8896 = vmax.f32 %v8796, %v8871
  %v8897 = vmax.f32 %v8797, %v8872
  %v8898 = vmax.f32 %v8798, %v8873
  %v8899 = vmax.f32 %v8799, %v8874
  %v8900 = vmax.f32 %v8800, %v8875
  %v8901 = vmax.f32 %v8801, %v8876
  %v8902 = vmax.f32 %v8802, %v8877
  %v8903 = vmax.f32 %v8803, %v8878
  %v8904 = vmax.f32 %v8804, %v8879
  %v8905 = vmax.f32 %v8805, %v8880
  %v8906 = vmax.f32 %v8806, %v8881
  %v8907 = vmax.f32 %v8807, %v8882
  %v8908 = vmax.f32 %v8808, %v8883
  %v8909 = vmax.f32 %v8809, %v8884
  %v8910 = vmax.f32 %v8810, %v8885
  %v8911 = vmax.f32 %v8811, %v8886
  %v8912 = vmax.f32 %v8812, %v8887
  %v8913 = vmax.f32 %v8813, %v8888
  %8914 = vmatprep.subr.mxu0 0.0
  %8915 = vmatpush1.msra.mxu0 %v8904
  %8916 = vmatprep.subr.mxu0 0.0
  %8917 = vmatpush1.msra.mxu0 %v8903
  %8918 = vmatprep.subr.mxu0 0.0
  %8919 = vmatpush1.msra.mxu0 %v8902
  %8920 = vmatprep.subr.mxu0 0.0
  %8921 = vmatpush1.msra.mxu0 %v8901
  %8922 = vmatprep.subr.mxu0 0.0
  %8923 = vmatpush1.msra.mxu0 %v8900
  %8924 = vmatprep.subr.mxu0 0.0
  %8925 = vmatpush1.msra.mxu0 %v8899
  %8926 = vmatprep.subr.mxu0 0.0
  %8927 = vmatpush1.msra.mxu0 %v8898
  %8928 = vmatprep.subr.mxu0 0.0
  %8929 = vmatpush1.msra.mxu0 %v8897
  %8930 = vmatprep.subr.mxu0 0.0
  %8931 = vmatpush1.msra.mxu0 %v8896
  %8932 = vmatprep.subr.mxu0 0.0
  %8933 = vmatpush1.msra.mxu0 %v8895
  %8934 = vmatprep.subr.mxu0 0.0
  %8935 = vmatpush1.msra.mxu0 %v8894
  %8936 = vmatprep.subr.mxu0 0.0
  %8937 = vmatpush1.msra.mxu0 %v8893
  %8938 = vmatprep.subr.mxu0 0.0
  %8939 = vmatpush1.msra.mxu0 %v8892
  %8940 = vmatprep.subr.mxu0 0.0
  %8941 = vmatpush1.msra.mxu0 %v8891
  %8942 = vmatprep.subr.mxu0 0.0
  %8943 = vmatpush1.msra.mxu0 %v8890
  %8944 = vmatprep.subr.mxu0 0.0
  %8945 = vmatpush1.msra.mxu0 %v8889
  %8946 = vmatprep.subr.mxu0 0.0
  %8947 = vmatpush2.msra.mxu0 0.0
  %8948 = vmatprep.subr.mxu0 0.0
  %8949 = vmatpush2.msra.mxu0 0.0
  %8950 = vmatprep.subr.mxu0 0.0
  %8951 = vmatpush2.msra.mxu0 0.0
  %8952 = vmatprep.subr.mxu0 0.0
  %8953 = vmatpush2.msra.mxu0 0.0
  %8954 = vmatprep.subr.mxu0 0.0
  %8955 = vmatpush2.msra.mxu0 0.0
  %8956 = vmatprep.subr.mxu0 0.0
  %8957 = vmatpush2.msra.mxu0 0.0
  %8958 = vmatprep.subr.mxu0 0.0
  %8959 = vmatpush2.msra.mxu0 0.0
  %8960 = vmatprep.subr.mxu0 0.0
  %8961 = vmatpush2.msra.mxu0 %v8913
  %8962 = vmatprep.subr.mxu0 0.0
  %8963 = vmatpush2.msra.mxu0 %v8912
  %8964 = vmatprep.subr.mxu0 0.0
  %8965 = vmatpush2.msra.mxu0 %v8911
  %8966 = vmatprep.subr.mxu0 0.0
  %8967 = vmatpush2.msra.mxu0 %v8910
  %8968 = vmatprep.subr.mxu0 0.0
  %8969 = vmatpush2.msra.mxu0 %v8909
  %8970 = vmatprep.subr.mxu0 0.0
  %8971 = vmatpush2.msra.mxu0 %v8908
  %8972 = vmatprep.subr.mxu0 0.0
  %8973 = vmatpush2.msra.mxu0 %v8907
  %8974 = vmatprep.subr.mxu0 0.0
  %8975 = vmatpush2.msra.mxu0 %v8906
  %8976 = vmatprep.subr.mxu0 0.0
  %8977 = vmatpush2.msra.mxu0 %v8905
  %8978 = vmatprep.mubr.f32.mxu0 %v8211
  %8979 = vmatmul.mubr.f32.gmra.mxu0 %v8026
  %v8980 = vpop.f32.mrf.mxu0
  %v8981 = vadd.f32 0.0, %v8980
  %v8982 = vpop.f32.mrf.mxu0
  %8983 = vmatprep.mubr.f32.mxu0 %v8214
  %8984 = vmatmul.mubr.f32.gmra.mxu0 %v8028
  %v8985 = vpop.f32.mrf.mxu0
  %v8986 = vadd.f32 0.0, %v8985
  %v8987 = vpop.f32.mrf.mxu0
  %8988 = vmatprep.mubr.f32.mxu0 %v8217
  %8989 = vmatmul.mubr.f32.gmra.mxu0 %v8030
  %v8990 = vpop.f32.mrf.mxu0
  %v8991 = vadd.f32 0.0, %v8990
  %v8992 = vpop.f32.mrf.mxu0
  %8993 = vmatprep.mubr.f32.mxu0 %v8220
  %8994 = vmatmul.mubr.f32.gmra.mxu0 %v8032
  %v8995 = vpop.f32.mrf.mxu0
  %v8996 = vadd.f32 0.0, %v8995
  %v8997 = vpop.f32.mrf.mxu0
  %8998 = vdwg.mxu0
  %9003 = vrot.lane.b32.xlu0 %v8981, 120
  %v9004 = vpop.permute.xlu0 %9003
  %9005 = vrot.lane.b32.xlu0 %v8986, 120
  %v9006 = vpop.permute.xlu0 %9005
  %9007 = vrot.lane.b32.xlu0 %v8991, 120
  %v9008 = vpop.permute.xlu0 %9007
  %9009 = vrot.lane.b32.xlu0 %v8996, 120
  %v9010 = vpop.permute.xlu0 %9009
  %v9015 = vmax.f32 %v8981, %v9004
  %v9016 = vmax.f32 %v8986, %v9006
  %v9017 = vmax.f32 %v8991, %v9008
  %v9018 = vmax.f32 %v8996, %v9010
  %9023 = vrot.lane.b32.xlu0 %v9015, 40
  %v9024 = vpop.permute.xlu0 %9023
  %9025 = vrot.lane.b32.xlu0 %v9016, 40
  %v9026 = vpop.permute.xlu0 %9025
  %9027 = vrot.lane.b32.xlu0 %v9017, 40
  %v9028 = vpop.permute.xlu0 %9027
  %9029 = vrot.lane.b32.xlu0 %v9018, 40
  %v9030 = vpop.permute.xlu0 %9029
  %vm9035 = vcmask 458112
  %9036 = vst.msk [vmem:[#allocation4] sm:$0xff] %vm9035, %v9024
  %9037 = vst.msk [vmem:[#allocation4 + $0x8] sm:$0xff] %vm9035, %v9026
  %9038 = vst.msk [vmem:[#allocation4 + $0x10] sm:$0xff] %vm9035, %v9028
  %9039 = vst.msk [vmem:[#allocation4 + $0x18] sm:$0xff] %vm9035, %v9030
  %9040 = vrot.lane.b32.xlu0 %v9015, 32
  %v9041 = vpop.permute.xlu0 %9040
  %9042 = vrot.lane.b32.xlu0 %v9016, 32
  %v9043 = vpop.permute.xlu0 %9042
  %9044 = vrot.lane.b32.xlu0 %v9017, 32
  %v9045 = vpop.permute.xlu0 %9044
  %9046 = vrot.lane.b32.xlu0 %v9018, 32
  %v9047 = vpop.permute.xlu0 %9046
  %vm9052 = vcmask 523712
  %9053 = vst.msk [vmem:[#allocation4] sm:$0xff] %vm9052, %v9041
  %9054 = vst.msk [vmem:[#allocation4 + $0x8] sm:$0xff] %vm9052, %v9043
  %9055 = vst.msk [vmem:[#allocation4 + $0x10] sm:$0xff] %vm9052, %v9045
  %9056 = vst.msk [vmem:[#allocation4 + $0x18] sm:$0xff] %vm9052, %v9047
  %9057 = vrot.lane.b32.xlu0 %v9015, 24
  %v9058 = vpop.permute.xlu0 %9057
  %9059 = vrot.lane.b32.xlu0 %v9016, 24
  %v9060 = vpop.permute.xlu0 %9059
  %9061 = vrot.lane.b32.xlu0 %v9017, 24
  %v9062 = vpop.permute.xlu0 %9061
  %9063 = vrot.lane.b32.xlu0 %v9018, 24
  %v9064 = vpop.permute.xlu0 %9063
  %vm9069 = vcmask 589312
  %9070 = vst.msk [vmem:[#allocation4] sm:$0xff] %vm9069, %v9058
  %9071 = vst.msk [vmem:[#allocation4 + $0x8] sm:$0xff] %vm9069, %v9060
  %9072 = vst.msk [vmem:[#allocation4 + $0x10] sm:$0xff] %vm9069, %v9062
  %9073 = vst.msk [vmem:[#allocation4 + $0x18] sm:$0xff] %vm9069, %v9064
  %9074 = vrot.lane.b32.xlu0 %v9015, 16
  %v9075 = vpop.permute.xlu0 %9074
  %9076 = vrot.lane.b32.xlu0 %v9016, 16
  %v9077 = vpop.permute.xlu0 %9076
  %9078 = vrot.lane.b32.xlu0 %v9017, 16
  %v9079 = vpop.permute.xlu0 %9078
  %9080 = vrot.lane.b32.xlu0 %v9018, 16
  %v9081 = vpop.permute.xlu0 %9080
  %vm9086 = vcmask 654912
  %9087 = vst.msk [vmem:[#allocation4] sm:$0xff] %vm9086, %v9075
  %9088 = vst.msk [vmem:[#allocation4 + $0x8] sm:$0xff] %vm9086, %v9077
  %9089 = vst.msk [vmem:[#allocation4 + $0x10] sm:$0xff] %vm9086, %v9079
  %9090 = vst.msk [vmem:[#allocation4 + $0x18] sm:$0xff] %vm9086, %v9081
  %v9091 = vld [vmem:[#allocation4] sm:$0x3]
  %v9092 = vld [vmem:[%s8] sm:$0xff]
  %v9093 = vld [vmem:[%s8 + $0x8] sm:$0xff]
  %v9094 = vld [vmem:[%s8 + $0x10] sm:$0xff]
  %v9095 = vld [vmem:[%s8 + $0x18] sm:$0xff]
  %v9096 = vld [vmem:[%s8 + $0x20] sm:$0xff]
  %v9097 = vld [vmem:[%s8 + $0x28] sm:$0xff]
  %v9098 = vld [vmem:[%s8 + $0x30] sm:$0xff]
  %v9099 = vld [vmem:[%s8 + $0x38] sm:$0xff]
  %v9100 = vld [vmem:[%s8 + $0x40] sm:$0xff]
  %v9101 = vld [vmem:[%s8 + $0x48] sm:$0xff]
  %v9102 = vld [vmem:[#allocation4 + $0x2] sm:$0x3]
  %v9103 = vld [vmem:[%s8 + $0x50] sm:$0xff]
  %v9104 = vld [vmem:[%s8 + $0x58] sm:$0xff]
  %v9105 = vld [vmem:[%s8 + $0x60] sm:$0xff]
  %v9106 = vld [vmem:[%s8 + $0x68] sm:$0xff]
  %v9107 = vld [vmem:[%s8 + $0x70] sm:$0xff]
  %v9108 = vld [vmem:[%s8 + $0x78] sm:$0xff]
  %v9109 = vld [vmem:[%s8 + $0x80] sm:$0xff]
  %v9110 = vld [vmem:[%s8 + $0x88] sm:$0xff]
  %v9111 = vld [vmem:[%s8 + $0x90] sm:$0xff]
  %v9112 = vld [vmem:[%s8 + $0x98] sm:$0xff]
  %v9114 = vsel %vm4927, %v9102, 0
  %9116 = vmatprep.subr.mxu0 0.0
  %9117 = vmatpush1.msra.mxu0 0.0
  %9118 = vmatprep.subr.mxu0 0.0
  %9119 = vmatpush1.msra.mxu0 0.0
  %9120 = vmatprep.subr.mxu0 0.0
  %9121 = vmatpush1.msra.mxu0 0.0
  %9122 = vmatprep.subr.mxu0 0.0
  %9123 = vmatpush1.msra.mxu0 0.0
  %9124 = vmatprep.subr.mxu0 0.0
  %9125 = vmatpush1.msra.mxu0 0.0
  %9126 = vmatprep.subr.mxu0 0.0
  %9127 = vmatpush1.msra.mxu0 0.0
  %9128 = vmatprep.subr.mxu0 0.0
  %9129 = vmatpush1.msra.mxu0 %v9112
  %9130 = vmatprep.subr.mxu0 0.0
  %9131 = vmatpush1.msra.mxu0 %v9111
  %9132 = vmatprep.subr.mxu0 0.0
  %9133 = vmatpush1.msra.mxu0 %v9110
  %9134 = vmatprep.subr.mxu0 0.0
  %9135 = vmatpush1.msra.mxu0 %v9109
  %9136 = vmatprep.subr.mxu0 0.0
  %9137 = vmatpush1.msra.mxu0 %v9108
  %9138 = vmatprep.subr.mxu0 0.0
  %9139 = vmatpush1.msra.mxu0 %v9107
  %9140 = vmatprep.subr.mxu0 0.0
  %9141 = vmatpush1.msra.mxu0 %v9106
  %9142 = vmatprep.subr.mxu0 0.0
  %9143 = vmatpush1.msra.mxu0 %v9105
  %9144 = vmatprep.subr.mxu0 0.0
  %9145 = vmatpush1.msra.mxu0 %v9104
  %9146 = vmatprep.subr.mxu0 0.0
  %9147 = vmatpush1.msra.mxu0 %v9103
  %9148 = vmatprep.subr.mxu0 0.0
  %9149 = vmatpush2.msra.mxu0 0.0
  %9150 = vmatprep.subr.mxu0 0.0
  %9151 = vmatpush2.msra.mxu0 0.0
  %9152 = vmatprep.subr.mxu0 0.0
  %9153 = vmatpush2.msra.mxu0 0.0
  %9154 = vmatprep.subr.mxu0 0.0
  %9155 = vmatpush2.msra.mxu0 0.0
  %9156 = vmatprep.subr.mxu0 0.0
  %9157 = vmatpush2.msra.mxu0 0.0
  %9158 = vmatprep.subr.mxu0 0.0
  %9159 = vmatpush2.msra.mxu0 0.0
  %9160 = vmatprep.subr.mxu0 0.0
  %9161 = vmatpush2.msra.mxu0 0.0
  %9162 = vmatprep.subr.mxu0 0.0
  %9163 = vmatpush2.msra.mxu0 0.0
  %9164 = vmatprep.subr.mxu0 0.0
  %9165 = vmatpush2.msra.mxu0 0.0
  %9166 = vmatprep.subr.mxu0 0.0
  %9167 = vmatpush2.msra.mxu0 0.0
  %9168 = vmatprep.subr.mxu0 0.0
  %9169 = vmatpush2.msra.mxu0 0.0
  %9170 = vmatprep.subr.mxu0 0.0
  %9171 = vmatpush2.msra.mxu0 0.0
  %9172 = vmatprep.subr.mxu0 0.0
  %9173 = vmatpush2.msra.mxu0 0.0
  %9174 = vmatprep.subr.mxu0 0.0
  %9175 = vmatpush2.msra.mxu0 0.0
  %9176 = vmatprep.subr.mxu0 0.0
  %9177 = vmatpush2.msra.mxu0 0.0
  %9178 = vmatprep.subr.mxu0 0.0
  %9179 = vmatpush2.msra.mxu0 0.0
  %9180 = vmatprep.mubr.f32.mxu0 0.0
  %9181 = vmatmul.mubr.f32.gmra.mxu0 %v9114
  %v9182 = vpop.f32.mrf.mxu0
  %v9183 = vadd.f32 0.0, %v9182
  %v9184 = vpop.f32.mrf.mxu0
  %9185 = vdwg.mxu0
  %v9187 = vsel %vm4927, %v9091, 0
  %9189 = vmatprep.subr.mxu0 0.0
  %9190 = vmatpush1.msra.mxu0 0.0
  %9191 = vmatprep.subr.mxu0 0.0
  %9192 = vmatpush1.msra.mxu0 0.0
  %9193 = vmatprep.subr.mxu0 0.0
  %9194 = vmatpush1.msra.mxu0 0.0
  %9195 = vmatprep.subr.mxu0 0.0
  %9196 = vmatpush1.msra.mxu0 0.0
  %9197 = vmatprep.subr.mxu0 0.0
  %9198 = vmatpush1.msra.mxu0 0.0
  %9199 = vmatprep.subr.mxu0 0.0
  %9200 = vmatpush1.msra.mxu0 0.0
  %9201 = vmatprep.subr.mxu0 0.0
  %9202 = vmatpush1.msra.mxu0 %v9101
  %9203 = vmatprep.subr.mxu0 0.0
  %9204 = vmatpush1.msra.mxu0 %v9100
  %9205 = vmatprep.subr.mxu0 0.0
  %9206 = vmatpush1.msra.mxu0 %v9099
  %9207 = vmatprep.subr.mxu0 0.0
  %9208 = vmatpush1.msra.mxu0 %v9098
  %9209 = vmatprep.subr.mxu0 0.0
  %9210 = vmatpush1.msra.mxu0 %v9097
  %9211 = vmatprep.subr.mxu0 0.0
  %9212 = vmatpush1.msra.mxu0 %v9096
  %9213 = vmatprep.subr.mxu0 0.0
  %9214 = vmatpush1.msra.mxu0 %v9095
  %9215 = vmatprep.subr.mxu0 0.0
  %9216 = vmatpush1.msra.mxu0 %v9094
  %9217 = vmatprep.subr.mxu0 0.0
  %9218 = vmatpush1.msra.mxu0 %v9093
  %9219 = vmatprep.subr.mxu0 0.0
  %9220 = vmatpush1.msra.mxu0 %v9092
  %9221 = vmatprep.subr.mxu0 0.0
  %9222 = vmatpush2.msra.mxu0 0.0
  %9223 = vmatprep.subr.mxu0 0.0
  %9224 = vmatpush2.msra.mxu0 0.0
  %9225 = vmatprep.subr.mxu0 0.0
  %9226 = vmatpush2.msra.mxu0 0.0
  %9227 = vmatprep.subr.mxu0 0.0
  %9228 = vmatpush2.msra.mxu0 0.0
  %9229 = vmatprep.subr.mxu0 0.0
  %9230 = vmatpush2.msra.mxu0 0.0
  %9231 = vmatprep.subr.mxu0 0.0
  %9232 = vmatpush2.msra.mxu0 0.0
  %9233 = vmatprep.subr.mxu0 0.0
  %9234 = vmatpush2.msra.mxu0 0.0
  %9235 = vmatprep.subr.mxu0 0.0
  %9236 = vmatpush2.msra.mxu0 0.0
  %9237 = vmatprep.subr.mxu0 0.0
  %9238 = vmatpush2.msra.mxu0 0.0
  %9239 = vmatprep.subr.mxu0 0.0
  %9240 = vmatpush2.msra.mxu0 0.0
  %9241 = vmatprep.subr.mxu0 0.0
  %9242 = vmatpush2.msra.mxu0 0.0
  %9243 = vmatprep.subr.mxu0 0.0
  %9244 = vmatpush2.msra.mxu0 0.0
  %9245 = vmatprep.subr.mxu0 0.0
  %9246 = vmatpush2.msra.mxu0 0.0
  %9247 = vmatprep.subr.mxu0 0.0
  %9248 = vmatpush2.msra.mxu0 0.0
  %9249 = vmatprep.subr.mxu0 0.0
  %9250 = vmatpush2.msra.mxu0 0.0
  %9251 = vmatprep.subr.mxu0 0.0
  %9252 = vmatpush2.msra.mxu0 0.0
  %9253 = vmatprep.mubr.f32.mxu0 0.0
  %9254 = vmatmul.mubr.f32.gmra.mxu0 %v9187
  %v9255 = vpop.f32.mrf.mxu0
  %v9256 = vadd.f32 %v9183, %v9255
  %v9257 = vpop.f32.mrf.mxu0
  %9258 = vdwg.mxu0
  %v9259 = vld [vmem:[#allocation4 + $0x4] sm:$0x3]
  %v9260 = vld [vmem:[%s8 + $0xa0] sm:$0xff]
  %v9261 = vld [vmem:[%s8 + $0xa8] sm:$0xff]
  %v9262 = vld [vmem:[%s8 + $0xb0] sm:$0xff]
  %v9263 = vld [vmem:[%s8 + $0xb8] sm:$0xff]
  %v9264 = vld [vmem:[%s8 + $0xc0] sm:$0xff]
  %v9265 = vld [vmem:[%s8 + $0xc8] sm:$0xff]
  %v9266 = vld [vmem:[%s8 + $0xd0] sm:$0xff]
  %v9267 = vld [vmem:[%s8 + $0xd8] sm:$0xff]
  %v9268 = vld [vmem:[%s8 + $0xe0] sm:$0xff]
  %v9269 = vld [vmem:[%s8 + $0xe8] sm:$0xff]
  %v9271 = vsel %vm4927, %v9259, 0
  %9273 = vmatprep.subr.mxu0 0.0
  %9274 = vmatpush1.msra.mxu0 0.0
  %9275 = vmatprep.subr.mxu0 0.0
  %9276 = vmatpush1.msra.mxu0 0.0
  %9277 = vmatprep.subr.mxu0 0.0
  %9278 = vmatpush1.msra.mxu0 0.0
  %9279 = vmatprep.subr.mxu0 0.0
  %9280 = vmatpush1.msra.mxu0 0.0
  %9281 = vmatprep.subr.mxu0 0.0
  %9282 = vmatpush1.msra.mxu0 0.0
  %9283 = vmatprep.subr.mxu0 0.0
  %9284 = vmatpush1.msra.mxu0 0.0
  %9285 = vmatprep.subr.mxu0 0.0
  %9286 = vmatpush1.msra.mxu0 %v9269
  %9287 = vmatprep.subr.mxu0 0.0
  %9288 = vmatpush1.msra.mxu0 %v9268
  %9289 = vmatprep.subr.mxu0 0.0
  %9290 = vmatpush1.msra.mxu0 %v9267
  %9291 = vmatprep.subr.mxu0 0.0
  %9292 = vmatpush1.msra.mxu0 %v9266
  %9293 = vmatprep.subr.mxu0 0.0
  %9294 = vmatpush1.msra.mxu0 %v9265
  %9295 = vmatprep.subr.mxu0 0.0
  %9296 = vmatpush1.msra.mxu0 %v9264
  %9297 = vmatprep.subr.mxu0 0.0
  %9298 = vmatpush1.msra.mxu0 %v9263
  %9299 = vmatprep.subr.mxu0 0.0
  %9300 = vmatpush1.msra.mxu0 %v9262
  %9301 = vmatprep.subr.mxu0 0.0
  %9302 = vmatpush1.msra.mxu0 %v9261
  %9303 = vmatprep.subr.mxu0 0.0
  %9304 = vmatpush1.msra.mxu0 %v9260
  %9305 = vmatprep.subr.mxu0 0.0
  %9306 = vmatpush2.msra.mxu0 0.0
  %9307 = vmatprep.subr.mxu0 0.0
  %9308 = vmatpush2.msra.mxu0 0.0
  %9309 = vmatprep.subr.mxu0 0.0
  %9310 = vmatpush2.msra.mxu0 0.0
  %9311 = vmatprep.subr.mxu0 0.0
  %9312 = vmatpush2.msra.mxu0 0.0
  %9313 = vmatprep.subr.mxu0 0.0
  %9314 = vmatpush2.msra.mxu0 0.0
  %9315 = vmatprep.subr.mxu0 0.0
  %9316 = vmatpush2.msra.mxu0 0.0
  %9317 = vmatprep.subr.mxu0 0.0
  %9318 = vmatpush2.msra.mxu0 0.0
  %9319 = vmatprep.subr.mxu0 0.0
  %9320 = vmatpush2.msra.mxu0 0.0
  %9321 = vmatprep.subr.mxu0 0.0
  %9322 = vmatpush2.msra.mxu0 0.0
  %9323 = vmatprep.subr.mxu0 0.0
  %9324 = vmatpush2.msra.mxu0 0.0
  %9325 = vmatprep.subr.mxu0 0.0
  %9326 = vmatpush2.msra.mxu0 0.0
  %9327 = vmatprep.subr.mxu0 0.0
  %9328 = vmatpush2.msra.mxu0 0.0
  %9329 = vmatprep.subr.mxu0 0.0
  %9330 = vmatpush2.msra.mxu0 0.0
  %9331 = vmatprep.subr.mxu0 0.0
  %9332 = vmatpush2.msra.mxu0 0.0
  %9333 = vmatprep.subr.mxu0 0.0
  %9334 = vmatpush2.msra.mxu0 0.0
  %9335 = vmatprep.subr.mxu0 0.0
  %9336 = vmatpush2.msra.mxu0 0.0
  %9337 = vmatprep.mubr.f32.mxu0 0.0
  %9338 = vmatmul.mubr.f32.gmra.mxu0 %v9271
  %v9339 = vpop.f32.mrf.mxu0
  %v9340 = vadd.f32 0.0, %v9339
  %v9341 = vpop.f32.mrf.mxu0
  %9342 = vdwg.mxu0
  %v9343 = vadd.f32 %v9256, %v9340
  %v9344 = vld [vmem:[#allocation4 + $0x6] sm:$0x3]
  %v9345 = vld [vmem:[%s8 + $0xf0] sm:$0xff]
  %v9346 = vld [vmem:[%s8 + $0xf8] sm:$0xff]
  %v9347 = vld [vmem:[%s8 + $0x100] sm:$0xff]
  %v9348 = vld [vmem:[%s8 + $0x108] sm:$0xff]
  %v9349 = vld [vmem:[%s8 + $0x110] sm:$0xff]
  %v9350 = vld [vmem:[%s8 + $0x118] sm:$0xff]
  %v9351 = vld [vmem:[%s8 + $0x120] sm:$0xff]
  %v9352 = vld [vmem:[%s8 + $0x128] sm:$0xff]
  %v9353 = vld [vmem:[%s8 + $0x130] sm:$0xff]
  %v9354 = vld [vmem:[%s8 + $0x138] sm:$0xff]
  %v9356 = vsel %vm4927, %v9344, 0
  %9358 = vmatprep.subr.mxu0 0.0
  %9359 = vmatpush1.msra.mxu0 0.0
  %9360 = vmatprep.subr.mxu0 0.0
  %9361 = vmatpush1.msra.mxu0 0.0
  %9362 = vmatprep.subr.mxu0 0.0
  %9363 = vmatpush1.msra.mxu0 0.0
  %9364 = vmatprep.subr.mxu0 0.0
  %9365 = vmatpush1.msra.mxu0 0.0
  %9366 = vmatprep.subr.mxu0 0.0
  %9367 = vmatpush1.msra.mxu0 0.0
  %9368 = vmatprep.subr.mxu0 0.0
  %9369 = vmatpush1.msra.mxu0 0.0
  %9370 = vmatprep.subr.mxu0 0.0
  %9371 = vmatpush1.msra.mxu0 %v9354
  %9372 = vmatprep.subr.mxu0 0.0
  %9373 = vmatpush1.msra.mxu0 %v9353
  %9374 = vmatprep.subr.mxu0 0.0
  %9375 = vmatpush1.msra.mxu0 %v9352
  %9376 = vmatprep.subr.mxu0 0.0
  %9377 = vmatpush1.msra.mxu0 %v9351
  %9378 = vmatprep.subr.mxu0 0.0
  %9379 = vmatpush1.msra.mxu0 %v9350
  %9380 = vmatprep.subr.mxu0 0.0
  %9381 = vmatpush1.msra.mxu0 %v9349
  %9382 = vmatprep.subr.mxu0 0.0
  %9383 = vmatpush1.msra.mxu0 %v9348
  %9384 = vmatprep.subr.mxu0 0.0
  %9385 = vmatpush1.msra.mxu0 %v9347
  %9386 = vmatprep.subr.mxu0 0.0
  %9387 = vmatpush1.msra.mxu0 %v9346
  %9388 = vmatprep.subr.mxu0 0.0
  %9389 = vmatpush1.msra.mxu0 %v9345
  %9390 = vmatprep.subr.mxu0 0.0
  %9391 = vmatpush2.msra.mxu0 0.0
  %9392 = vmatprep.subr.mxu0 0.0
  %9393 = vmatpush2.msra.mxu0 0.0
  %9394 = vmatprep.subr.mxu0 0.0
  %9395 = vmatpush2.msra.mxu0 0.0
  %9396 = vmatprep.subr.mxu0 0.0
  %9397 = vmatpush2.msra.mxu0 0.0
  %9398 = vmatprep.subr.mxu0 0.0
  %9399 = vmatpush2.msra.mxu0 0.0
  %9400 = vmatprep.subr.mxu0 0.0
  %9401 = vmatpush2.msra.mxu0 0.0
  %9402 = vmatprep.subr.mxu0 0.0
  %9403 = vmatpush2.msra.mxu0 0.0
  %9404 = vmatprep.subr.mxu0 0.0
  %9405 = vmatpush2.msra.mxu0 0.0
  %9406 = vmatprep.subr.mxu0 0.0
  %9407 = vmatpush2.msra.mxu0 0.0
  %9408 = vmatprep.subr.mxu0 0.0
  %9409 = vmatpush2.msra.mxu0 0.0
  %9410 = vmatprep.subr.mxu0 0.0
  %9411 = vmatpush2.msra.mxu0 0.0
  %9412 = vmatprep.subr.mxu0 0.0
  %9413 = vmatpush2.msra.mxu0 0.0
  %9414 = vmatprep.subr.mxu0 0.0
  %9415 = vmatpush2.msra.mxu0 0.0
  %9416 = vmatprep.subr.mxu0 0.0
  %9417 = vmatpush2.msra.mxu0 0.0
  %9418 = vmatprep.subr.mxu0 0.0
  %9419 = vmatpush2.msra.mxu0 0.0
  %9420 = vmatprep.subr.mxu0 0.0
  %9421 = vmatpush2.msra.mxu0 0.0
  %9422 = vmatprep.mubr.f32.mxu0 0.0
  %9423 = vmatmul.mubr.f32.gmra.mxu0 %v9356
  %v9424 = vpop.f32.mrf.mxu0
  %v9425 = vadd.f32 0.0, %v9424
  %v9426 = vpop.f32.mrf.mxu0
  %9427 = vdwg.mxu0
  %v9428 = vadd.f32 %v9343, %v9425
  %v9429 = vld [vmem:[#allocation4 + $0x8] sm:$0x3]
  %v9430 = vld [vmem:[%s8 + $0x140] sm:$0xff]
  %v9431 = vld [vmem:[%s8 + $0x148] sm:$0xff]
  %v9432 = vld [vmem:[%s8 + $0x150] sm:$0xff]
  %v9433 = vld [vmem:[%s8 + $0x158] sm:$0xff]
  %v9434 = vld [vmem:[%s8 + $0x160] sm:$0xff]
  %v9435 = vld [vmem:[%s8 + $0x168] sm:$0xff]
  %v9436 = vld [vmem:[%s8 + $0x170] sm:$0xff]
  %v9437 = vld [vmem:[%s8 + $0x178] sm:$0xff]
  %v9438 = vld [vmem:[%s8 + $0x180] sm:$0xff]
  %v9439 = vld [vmem:[%s8 + $0x188] sm:$0xff]
  %v9441 = vsel %vm4927, %v9429, 0
  %9443 = vmatprep.subr.mxu0 0.0
  %9444 = vmatpush1.msra.mxu0 0.0
  %9445 = vmatprep.subr.mxu0 0.0
  %9446 = vmatpush1.msra.mxu0 0.0
  %9447 = vmatprep.subr.mxu0 0.0
  %9448 = vmatpush1.msra.mxu0 0.0
  %9449 = vmatprep.subr.mxu0 0.0
  %9450 = vmatpush1.msra.mxu0 0.0
  %9451 = vmatprep.subr.mxu0 0.0
  %9452 = vmatpush1.msra.mxu0 0.0
  %9453 = vmatprep.subr.mxu0 0.0
  %9454 = vmatpush1.msra.mxu0 0.0
  %9455 = vmatprep.subr.mxu0 0.0
  %9456 = vmatpush1.msra.mxu0 %v9439
  %9457 = vmatprep.subr.mxu0 0.0
  %9458 = vmatpush1.msra.mxu0 %v9438
  %9459 = vmatprep.subr.mxu0 0.0
  %9460 = vmatpush1.msra.mxu0 %v9437
  %9461 = vmatprep.subr.mxu0 0.0
  %9462 = vmatpush1.msra.mxu0 %v9436
  %9463 = vmatprep.subr.mxu0 0.0
  %9464 = vmatpush1.msra.mxu0 %v9435
  %9465 = vmatprep.subr.mxu0 0.0
  %9466 = vmatpush1.msra.mxu0 %v9434
  %9467 = vmatprep.subr.mxu0 0.0
  %9468 = vmatpush1.msra.mxu0 %v9433
  %9469 = vmatprep.subr.mxu0 0.0
  %9470 = vmatpush1.msra.mxu0 %v9432
  %9471 = vmatprep.subr.mxu0 0.0
  %9472 = vmatpush1.msra.mxu0 %v9431
  %9473 = vmatprep.subr.mxu0 0.0
  %9474 = vmatpush1.msra.mxu0 %v9430
  %9475 = vmatprep.subr.mxu0 0.0
  %9476 = vmatpush2.msra.mxu0 0.0
  %9477 = vmatprep.subr.mxu0 0.0
  %9478 = vmatpush2.msra.mxu0 0.0
  %9479 = vmatprep.subr.mxu0 0.0
  %9480 = vmatpush2.msra.mxu0 0.0
  %9481 = vmatprep.subr.mxu0 0.0
  %9482 = vmatpush2.msra.mxu0 0.0
  %9483 = vmatprep.subr.mxu0 0.0
  %9484 = vmatpush2.msra.mxu0 0.0
  %9485 = vmatprep.subr.mxu0 0.0
  %9486 = vmatpush2.msra.mxu0 0.0
  %9487 = vmatprep.subr.mxu0 0.0
  %9488 = vmatpush2.msra.mxu0 0.0
  %9489 = vmatprep.subr.mxu0 0.0
  %9490 = vmatpush2.msra.mxu0 0.0
  %9491 = vmatprep.subr.mxu0 0.0
  %9492 = vmatpush2.msra.mxu0 0.0
  %9493 = vmatprep.subr.mxu0 0.0
  %9494 = vmatpush2.msra.mxu0 0.0
  %9495 = vmatprep.subr.mxu0 0.0
  %9496 = vmatpush2.msra.mxu0 0.0
  %9497 = vmatprep.subr.mxu0 0.0
  %9498 = vmatpush2.msra.mxu0 0.0
  %9499 = vmatprep.subr.mxu0 0.0
  %9500 = vmatpush2.msra.mxu0 0.0
  %9501 = vmatprep.subr.mxu0 0.0
  %9502 = vmatpush2.msra.mxu0 0.0
  %9503 = vmatprep.subr.mxu0 0.0
  %9504 = vmatpush2.msra.mxu0 0.0
  %9505 = vmatprep.subr.mxu0 0.0
  %9506 = vmatpush2.msra.mxu0 0.0
  %9507 = vmatprep.mubr.f32.mxu0 0.0
  %9508 = vmatmul.mubr.f32.gmra.mxu0 %v9441
  %v9509 = vpop.f32.mrf.mxu0
  %v9510 = vadd.f32 0.0, %v9509
  %v9511 = vpop.f32.mrf.mxu0
  %9512 = vdwg.mxu0
  %v9513 = vadd.f32 %v9428, %v9510
  %v9514 = vld [vmem:[#allocation4 + $0xa] sm:$0x3]
  %v9515 = vld [vmem:[%s8 + $0x190] sm:$0xff]
  %v9516 = vld [vmem:[%s8 + $0x198] sm:$0xff]
  %v9517 = vld [vmem:[%s8 + $0x1a0] sm:$0xff]
  %v9518 = vld [vmem:[%s8 + $0x1a8] sm:$0xff]
  %v9519 = vld [vmem:[%s8 + $0x1b0] sm:$0xff]
  %v9520 = vld [vmem:[%s8 + $0x1b8] sm:$0xff]
  %v9521 = vld [vmem:[%s8 + $0x1c0] sm:$0xff]
  %v9522 = vld [vmem:[%s8 + $0x1c8] sm:$0xff]
  %v9523 = vld [vmem:[%s8 + $0x1d0] sm:$0xff]
  %v9524 = vld [vmem:[%s8 + $0x1d8] sm:$0xff]
  %v9526 = vsel %vm4927, %v9514, 0
  %9528 = vmatprep.subr.mxu0 0.0
  %9529 = vmatpush1.msra.mxu0 0.0
  %9530 = vmatprep.subr.mxu0 0.0
  %9531 = vmatpush1.msra.mxu0 0.0
  %9532 = vmatprep.subr.mxu0 0.0
  %9533 = vmatpush1.msra.mxu0 0.0
  %9534 = vmatprep.subr.mxu0 0.0
  %9535 = vmatpush1.msra.mxu0 0.0
  %9536 = vmatprep.subr.mxu0 0.0
  %9537 = vmatpush1.msra.mxu0 0.0
  %9538 = vmatprep.subr.mxu0 0.0
  %9539 = vmatpush1.msra.mxu0 0.0
  %9540 = vmatprep.subr.mxu0 0.0
  %9541 = vmatpush1.msra.mxu0 %v9524
  %9542 = vmatprep.subr.mxu0 0.0
  %9543 = vmatpush1.msra.mxu0 %v9523
  %9544 = vmatprep.subr.mxu0 0.0
  %9545 = vmatpush1.msra.mxu0 %v9522
  %9546 = vmatprep.subr.mxu0 0.0
  %9547 = vmatpush1.msra.mxu0 %v9521
  %9548 = vmatprep.subr.mxu0 0.0
  %9549 = vmatpush1.msra.mxu0 %v9520
  %9550 = vmatprep.subr.mxu0 0.0
  %9551 = vmatpush1.msra.mxu0 %v9519
  %9552 = vmatprep.subr.mxu0 0.0
  %9553 = vmatpush1.msra.mxu0 %v9518
  %9554 = vmatprep.subr.mxu0 0.0
  %9555 = vmatpush1.msra.mxu0 %v9517
  %9556 = vmatprep.subr.mxu0 0.0
  %9557 = vmatpush1.msra.mxu0 %v9516
  %9558 = vmatprep.subr.mxu0 0.0
  %9559 = vmatpush1.msra.mxu0 %v9515
  %9560 = vmatprep.subr.mxu0 0.0
  %9561 = vmatpush2.msra.mxu0 0.0
  %9562 = vmatprep.subr.mxu0 0.0
  %9563 = vmatpush2.msra.mxu0 0.0
  %9564 = vmatprep.subr.mxu0 0.0
  %9565 = vmatpush2.msra.mxu0 0.0
  %9566 = vmatprep.subr.mxu0 0.0
  %9567 = vmatpush2.msra.mxu0 0.0
  %9568 = vmatprep.subr.mxu0 0.0
  %9569 = vmatpush2.msra.mxu0 0.0
  %9570 = vmatprep.subr.mxu0 0.0
  %9571 = vmatpush2.msra.mxu0 0.0
  %9572 = vmatprep.subr.mxu0 0.0
  %9573 = vmatpush2.msra.mxu0 0.0
  %9574 = vmatprep.subr.mxu0 0.0
  %9575 = vmatpush2.msra.mxu0 0.0
  %9576 = vmatprep.subr.mxu0 0.0
  %9577 = vmatpush2.msra.mxu0 0.0
  %9578 = vmatprep.subr.mxu0 0.0
  %9579 = vmatpush2.msra.mxu0 0.0
  %9580 = vmatprep.subr.mxu0 0.0
  %9581 = vmatpush2.msra.mxu0 0.0
  %9582 = vmatprep.subr.mxu0 0.0
  %9583 = vmatpush2.msra.mxu0 0.0
  %9584 = vmatprep.subr.mxu0 0.0
  %9585 = vmatpush2.msra.mxu0 0.0
  %9586 = vmatprep.subr.mxu0 0.0
  %9587 = vmatpush2.msra.mxu0 0.0
  %9588 = vmatprep.subr.mxu0 0.0
  %9589 = vmatpush2.msra.mxu0 0.0
  %9590 = vmatprep.subr.mxu0 0.0
  %9591 = vmatpush2.msra.mxu0 0.0
  %9592 = vmatprep.mubr.f32.mxu0 0.0
  %9593 = vmatmul.mubr.f32.gmra.mxu0 %v9526
  %v9594 = vpop.f32.mrf.mxu0
  %v9595 = vadd.f32 0.0, %v9594
  %v9596 = vpop.f32.mrf.mxu0
  %9597 = vdwg.mxu0
  %v9598 = vadd.f32 %v9513, %v9595
  %v9599 = vld [vmem:[#allocation4 + $0xc] sm:$0x3]
  %v9600 = vld [vmem:[%s8 + $0x1e0] sm:$0xff]
  %v9601 = vld [vmem:[%s8 + $0x1e8] sm:$0xff]
  %v9602 = vld [vmem:[%s8 + $0x1f0] sm:$0xff]
  %v9603 = vld [vmem:[%s8 + $0x1f8] sm:$0xff]
  %v9604 = vld [vmem:[%s8 + $0x200] sm:$0xff]
  %v9605 = vld [vmem:[%s8 + $0x208] sm:$0xff]
  %v9606 = vld [vmem:[%s8 + $0x210] sm:$0xff]
  %v9607 = vld [vmem:[%s8 + $0x218] sm:$0xff]
  %v9608 = vld [vmem:[%s8 + $0x220] sm:$0xff]
  %v9609 = vld [vmem:[%s8 + $0x228] sm:$0xff]
  %v9611 = vsel %vm4927, %v9599, 0
  %9613 = vmatprep.subr.mxu0 0.0
  %9614 = vmatpush1.msra.mxu0 0.0
  %9615 = vmatprep.subr.mxu0 0.0
  %9616 = vmatpush1.msra.mxu0 0.0
  %9617 = vmatprep.subr.mxu0 0.0
  %9618 = vmatpush1.msra.mxu0 0.0
  %9619 = vmatprep.subr.mxu0 0.0
  %9620 = vmatpush1.msra.mxu0 0.0
  %9621 = vmatprep.subr.mxu0 0.0
  %9622 = vmatpush1.msra.mxu0 0.0
  %9623 = vmatprep.subr.mxu0 0.0
  %9624 = vmatpush1.msra.mxu0 0.0
  %9625 = vmatprep.subr.mxu0 0.0
  %9626 = vmatpush1.msra.mxu0 %v9609
  %9627 = vmatprep.subr.mxu0 0.0
  %9628 = vmatpush1.msra.mxu0 %v9608
  %9629 = vmatprep.subr.mxu0 0.0
  %9630 = vmatpush1.msra.mxu0 %v9607
  %9631 = vmatprep.subr.mxu0 0.0
  %9632 = vmatpush1.msra.mxu0 %v9606
  %9633 = vmatprep.subr.mxu0 0.0
  %9634 = vmatpush1.msra.mxu0 %v9605
  %9635 = vmatprep.subr.mxu0 0.0
  %9636 = vmatpush1.msra.mxu0 %v9604
  %9637 = vmatprep.subr.mxu0 0.0
  %9638 = vmatpush1.msra.mxu0 %v9603
  %9639 = vmatprep.subr.mxu0 0.0
  %9640 = vmatpush1.msra.mxu0 %v9602
  %9641 = vmatprep.subr.mxu0 0.0
  %9642 = vmatpush1.msra.mxu0 %v9601
  %9643 = vmatprep.subr.mxu0 0.0
  %9644 = vmatpush1.msra.mxu0 %v9600
  %9645 = vmatprep.subr.mxu0 0.0
  %9646 = vmatpush2.msra.mxu0 0.0
  %9647 = vmatprep.subr.mxu0 0.0
  %9648 = vmatpush2.msra.mxu0 0.0
  %9649 = vmatprep.subr.mxu0 0.0
  %9650 = vmatpush2.msra.mxu0 0.0
  %9651 = vmatprep.subr.mxu0 0.0
  %9652 = vmatpush2.msra.mxu0 0.0
  %9653 = vmatprep.subr.mxu0 0.0
  %9654 = vmatpush2.msra.mxu0 0.0
  %9655 = vmatprep.subr.mxu0 0.0
  %9656 = vmatpush2.msra.mxu0 0.0
  %9657 = vmatprep.subr.mxu0 0.0
  %9658 = vmatpush2.msra.mxu0 0.0
  %9659 = vmatprep.subr.mxu0 0.0
  %9660 = vmatpush2.msra.mxu0 0.0
  %9661 = vmatprep.subr.mxu0 0.0
  %9662 = vmatpush2.msra.mxu0 0.0
  %9663 = vmatprep.subr.mxu0 0.0
  %9664 = vmatpush2.msra.mxu0 0.0
  %9665 = vmatprep.subr.mxu0 0.0
  %9666 = vmatpush2.msra.mxu0 0.0
  %9667 = vmatprep.subr.mxu0 0.0
  %9668 = vmatpush2.msra.mxu0 0.0
  %9669 = vmatprep.subr.mxu0 0.0
  %9670 = vmatpush2.msra.mxu0 0.0
  %9671 = vmatprep.subr.mxu0 0.0
  %9672 = vmatpush2.msra.mxu0 0.0
  %9673 = vmatprep.subr.mxu0 0.0
  %9674 = vmatpush2.msra.mxu0 0.0
  %9675 = vmatprep.subr.mxu0 0.0
  %9676 = vmatpush2.msra.mxu0 0.0
  %9677 = vmatprep.mubr.f32.mxu0 0.0
  %9678 = vmatmul.mubr.f32.gmra.mxu0 %v9611
  %v9679 = vpop.f32.mrf.mxu0
  %v9680 = vadd.f32 0.0, %v9679
  %v9681 = vpop.f32.mrf.mxu0
  %9682 = vdwg.mxu0
  %v9683 = vadd.f32 %v9598, %v9680
  %v9684 = vld [vmem:[#allocation4 + $0xe] sm:$0x3]
  %v9685 = vld [vmem:[%s8 + $0x230] sm:$0xff]
  %v9686 = vld [vmem:[%s8 + $0x238] sm:$0xff]
  %v9687 = vld [vmem:[%s8 + $0x240] sm:$0xff]
  %v9688 = vld [vmem:[%s8 + $0x248] sm:$0xff]
  %v9689 = vld [vmem:[%s8 + $0x250] sm:$0xff]
  %v9690 = vld [vmem:[%s8 + $0x258] sm:$0xff]
  %v9691 = vld [vmem:[%s8 + $0x260] sm:$0xff]
  %v9692 = vld [vmem:[%s8 + $0x268] sm:$0xff]
  %v9693 = vld [vmem:[%s8 + $0x270] sm:$0xff]
  %v9694 = vld [vmem:[%s8 + $0x278] sm:$0xff]
  %v9696 = vsel %vm4927, %v9684, 0
  %9698 = vmatprep.subr.mxu0 0.0
  %9699 = vmatpush1.msra.mxu0 0.0
  %9700 = vmatprep.subr.mxu0 0.0
  %9701 = vmatpush1.msra.mxu0 0.0
  %9702 = vmatprep.subr.mxu0 0.0
  %9703 = vmatpush1.msra.mxu0 0.0
  %9704 = vmatprep.subr.mxu0 0.0
  %9705 = vmatpush1.msra.mxu0 0.0
  %9706 = vmatprep.subr.mxu0 0.0
  %9707 = vmatpush1.msra.mxu0 0.0
  %9708 = vmatprep.subr.mxu0 0.0
  %9709 = vmatpush1.msra.mxu0 0.0
  %9710 = vmatprep.subr.mxu0 0.0
  %9711 = vmatpush1.msra.mxu0 %v9694
  %9712 = vmatprep.subr.mxu0 0.0
  %9713 = vmatpush1.msra.mxu0 %v9693
  %9714 = vmatprep.subr.mxu0 0.0
  %9715 = vmatpush1.msra.mxu0 %v9692
  %9716 = vmatprep.subr.mxu0 0.0
  %9717 = vmatpush1.msra.mxu0 %v9691
  %9718 = vmatprep.subr.mxu0 0.0
  %9719 = vmatpush1.msra.mxu0 %v9690
  %9720 = vmatprep.subr.mxu0 0.0
  %9721 = vmatpush1.msra.mxu0 %v9689
  %9722 = vmatprep.subr.mxu0 0.0
  %9723 = vmatpush1.msra.mxu0 %v9688
  %9724 = vmatprep.subr.mxu0 0.0
  %9725 = vmatpush1.msra.mxu0 %v9687
  %9726 = vmatprep.subr.mxu0 0.0
  %9727 = vmatpush1.msra.mxu0 %v9686
  %9728 = vmatprep.subr.mxu0 0.0
  %9729 = vmatpush1.msra.mxu0 %v9685
  %9730 = vmatprep.subr.mxu0 0.0
  %9731 = vmatpush2.msra.mxu0 0.0
  %9732 = vmatprep.subr.mxu0 0.0
  %9733 = vmatpush2.msra.mxu0 0.0
  %9734 = vmatprep.subr.mxu0 0.0
  %9735 = vmatpush2.msra.mxu0 0.0
  %9736 = vmatprep.subr.mxu0 0.0
  %9737 = vmatpush2.msra.mxu0 0.0
  %9738 = vmatprep.subr.mxu0 0.0
  %9739 = vmatpush2.msra.mxu0 0.0
  %9740 = vmatprep.subr.mxu0 0.0
  %9741 = vmatpush2.msra.mxu0 0.0
  %9742 = vmatprep.subr.mxu0 0.0
  %9743 = vmatpush2.msra.mxu0 0.0
  %9744 = vmatprep.subr.mxu0 0.0
  %9745 = vmatpush2.msra.mxu0 0.0
  %9746 = vmatprep.subr.mxu0 0.0
  %9747 = vmatpush2.msra.mxu0 0.0
  %9748 = vmatprep.subr.mxu0 0.0
  %9749 = vmatpush2.msra.mxu0 0.0
  %9750 = vmatprep.subr.mxu0 0.0
  %9751 = vmatpush2.msra.mxu0 0.0
  %9752 = vmatprep.subr.mxu0 0.0
  %9753 = vmatpush2.msra.mxu0 0.0
  %9754 = vmatprep.subr.mxu0 0.0
  %9755 = vmatpush2.msra.mxu0 0.0
  %9756 = vmatprep.subr.mxu0 0.0
  %9757 = vmatpush2.msra.mxu0 0.0
  %9758 = vmatprep.subr.mxu0 0.0
  %9759 = vmatpush2.msra.mxu0 0.0
  %9760 = vmatprep.subr.mxu0 0.0
  %9761 = vmatpush2.msra.mxu0 0.0
  %9762 = vmatprep.mubr.f32.mxu0 0.0
  %9763 = vmatmul.mubr.f32.gmra.mxu0 %v9696
  %v9764 = vpop.f32.mrf.mxu0
  %v9765 = vadd.f32 0.0, %v9764
  %v9766 = vpop.f32.mrf.mxu0
  %9767 = vdwg.mxu0
  %v9768 = vadd.f32 %v9683, %v9765
  %v9769 = vld [vmem:[#allocation4 + $0x10] sm:$0x3]
  %v9770 = vld [vmem:[%s8 + $0x280] sm:$0xff]
  %v9771 = vld [vmem:[%s8 + $0x288] sm:$0xff]
  %v9772 = vld [vmem:[%s8 + $0x290] sm:$0xff]
  %v9773 = vld [vmem:[%s8 + $0x298] sm:$0xff]
  %v9774 = vld [vmem:[%s8 + $0x2a0] sm:$0xff]
  %v9775 = vld [vmem:[%s8 + $0x2a8] sm:$0xff]
  %v9776 = vld [vmem:[%s8 + $0x2b0] sm:$0xff]
  %v9777 = vld [vmem:[%s8 + $0x2b8] sm:$0xff]
  %v9778 = vld [vmem:[%s8 + $0x2c0] sm:$0xff]
  %v9779 = vld [vmem:[%s8 + $0x2c8] sm:$0xff]
  %v9781 = vsel %vm4927, %v9769, 0
  %9783 = vmatprep.subr.mxu0 0.0
  %9784 = vmatpush1.msra.mxu0 0.0
  %9785 = vmatprep.subr.mxu0 0.0
  %9786 = vmatpush1.msra.mxu0 0.0
  %9787 = vmatprep.subr.mxu0 0.0
  %9788 = vmatpush1.msra.mxu0 0.0
  %9789 = vmatprep.subr.mxu0 0.0
  %9790 = vmatpush1.msra.mxu0 0.0
  %9791 = vmatprep.subr.mxu0 0.0
  %9792 = vmatpush1.msra.mxu0 0.0
  %9793 = vmatprep.subr.mxu0 0.0
  %9794 = vmatpush1.msra.mxu0 0.0
  %9795 = vmatprep.subr.mxu0 0.0
  %9796 = vmatpush1.msra.mxu0 %v9779
  %9797 = vmatprep.subr.mxu0 0.0
  %9798 = vmatpush1.msra.mxu0 %v9778
  %9799 = vmatprep.subr.mxu0 0.0
  %9800 = vmatpush1.msra.mxu0 %v9777
  %9801 = vmatprep.subr.mxu0 0.0
  %9802 = vmatpush1.msra.mxu0 %v9776
  %9803 = vmatprep.subr.mxu0 0.0
  %9804 = vmatpush1.msra.mxu0 %v9775
  %9805 = vmatprep.subr.mxu0 0.0
  %9806 = vmatpush1.msra.mxu0 %v9774
  %9807 = vmatprep.subr.mxu0 0.0
  %9808 = vmatpush1.msra.mxu0 %v9773
  %9809 = vmatprep.subr.mxu0 0.0
  %9810 = vmatpush1.msra.mxu0 %v9772
  %9811 = vmatprep.subr.mxu0 0.0
  %9812 = vmatpush1.msra.mxu0 %v9771
  %9813 = vmatprep.subr.mxu0 0.0
  %9814 = vmatpush1.msra.mxu0 %v9770
  %9815 = vmatprep.subr.mxu0 0.0
  %9816 = vmatpush2.msra.mxu0 0.0
  %9817 = vmatprep.subr.mxu0 0.0
  %9818 = vmatpush2.msra.mxu0 0.0
  %9819 = vmatprep.subr.mxu0 0.0
  %9820 = vmatpush2.msra.mxu0 0.0
  %9821 = vmatprep.subr.mxu0 0.0
  %9822 = vmatpush2.msra.mxu0 0.0
  %9823 = vmatprep.subr.mxu0 0.0
  %9824 = vmatpush2.msra.mxu0 0.0
  %9825 = vmatprep.subr.mxu0 0.0
  %9826 = vmatpush2.msra.mxu0 0.0
  %9827 = vmatprep.subr.mxu0 0.0
  %9828 = vmatpush2.msra.mxu0 0.0
  %9829 = vmatprep.subr.mxu0 0.0
  %9830 = vmatpush2.msra.mxu0 0.0
  %9831 = vmatprep.subr.mxu0 0.0
  %9832 = vmatpush2.msra.mxu0 0.0
  %9833 = vmatprep.subr.mxu0 0.0
  %9834 = vmatpush2.msra.mxu0 0.0
  %9835 = vmatprep.subr.mxu0 0.0
  %9836 = vmatpush2.msra.mxu0 0.0
  %9837 = vmatprep.subr.mxu0 0.0
  %9838 = vmatpush2.msra.mxu0 0.0
  %9839 = vmatprep.subr.mxu0 0.0
  %9840 = vmatpush2.msra.mxu0 0.0
  %9841 = vmatprep.subr.mxu0 0.0
  %9842 = vmatpush2.msra.mxu0 0.0
  %9843 = vmatprep.subr.mxu0 0.0
  %9844 = vmatpush2.msra.mxu0 0.0
  %9845 = vmatprep.subr.mxu0 0.0
  %9846 = vmatpush2.msra.mxu0 0.0
  %9847 = vmatprep.mubr.f32.mxu0 0.0
  %9848 = vmatmul.mubr.f32.gmra.mxu0 %v9781
  %v9849 = vpop.f32.mrf.mxu0
  %v9850 = vadd.f32 0.0, %v9849
  %v9851 = vpop.f32.mrf.mxu0
  %9852 = vdwg.mxu0
  %v9853 = vadd.f32 %v9768, %v9850
  %v9854 = vld [vmem:[#allocation4 + $0x12] sm:$0x3]
  %v9855 = vld [vmem:[%s8 + $0x2d0] sm:$0xff]
  %v9856 = vld [vmem:[%s8 + $0x2d8] sm:$0xff]
  %v9857 = vld [vmem:[%s8 + $0x2e0] sm:$0xff]
  %v9858 = vld [vmem:[%s8 + $0x2e8] sm:$0xff]
  %v9859 = vld [vmem:[%s8 + $0x2f0] sm:$0xff]
  %v9860 = vld [vmem:[%s8 + $0x2f8] sm:$0xff]
  %v9861 = vld [vmem:[%s8 + $0x300] sm:$0xff]
  %v9862 = vld [vmem:[%s8 + $0x308] sm:$0xff]
  %v9863 = vld [vmem:[%s8 + $0x310] sm:$0xff]
  %v9864 = vld [vmem:[%s8 + $0x318] sm:$0xff]
  %v9866 = vsel %vm4927, %v9854, 0
  %9868 = vmatprep.subr.mxu0 0.0
  %9869 = vmatpush1.msra.mxu0 0.0
  %9870 = vmatprep.subr.mxu0 0.0
  %9871 = vmatpush1.msra.mxu0 0.0
  %9872 = vmatprep.subr.mxu0 0.0
  %9873 = vmatpush1.msra.mxu0 0.0
  %9874 = vmatprep.subr.mxu0 0.0
  %9875 = vmatpush1.msra.mxu0 0.0
  %9876 = vmatprep.subr.mxu0 0.0
  %9877 = vmatpush1.msra.mxu0 0.0
  %9878 = vmatprep.subr.mxu0 0.0
  %9879 = vmatpush1.msra.mxu0 0.0
  %9880 = vmatprep.subr.mxu0 0.0
  %9881 = vmatpush1.msra.mxu0 %v9864
  %9882 = vmatprep.subr.mxu0 0.0
  %9883 = vmatpush1.msra.mxu0 %v9863
  %9884 = vmatprep.subr.mxu0 0.0
  %9885 = vmatpush1.msra.mxu0 %v9862
  %9886 = vmatprep.subr.mxu0 0.0
  %9887 = vmatpush1.msra.mxu0 %v9861
  %9888 = vmatprep.subr.mxu0 0.0
  %9889 = vmatpush1.msra.mxu0 %v9860
  %9890 = vmatprep.subr.mxu0 0.0
  %9891 = vmatpush1.msra.mxu0 %v9859
  %9892 = vmatprep.subr.mxu0 0.0
  %9893 = vmatpush1.msra.mxu0 %v9858
  %9894 = vmatprep.subr.mxu0 0.0
  %9895 = vmatpush1.msra.mxu0 %v9857
  %9896 = vmatprep.subr.mxu0 0.0
  %9897 = vmatpush1.msra.mxu0 %v9856
  %9898 = vmatprep.subr.mxu0 0.0
  %9899 = vmatpush1.msra.mxu0 %v9855
  %9900 = vmatprep.subr.mxu0 0.0
  %9901 = vmatpush2.msra.mxu0 0.0
  %9902 = vmatprep.subr.mxu0 0.0
  %9903 = vmatpush2.msra.mxu0 0.0
  %9904 = vmatprep.subr.mxu0 0.0
  %9905 = vmatpush2.msra.mxu0 0.0
  %9906 = vmatprep.subr.mxu0 0.0
  %9907 = vmatpush2.msra.mxu0 0.0
  %9908 = vmatprep.subr.mxu0 0.0
  %9909 = vmatpush2.msra.mxu0 0.0
  %9910 = vmatprep.subr.mxu0 0.0
  %9911 = vmatpush2.msra.mxu0 0.0
  %9912 = vmatprep.subr.mxu0 0.0
  %9913 = vmatpush2.msra.mxu0 0.0
  %9914 = vmatprep.subr.mxu0 0.0
  %9915 = vmatpush2.msra.mxu0 0.0
  %9916 = vmatprep.subr.mxu0 0.0
  %9917 = vmatpush2.msra.mxu0 0.0
  %9918 = vmatprep.subr.mxu0 0.0
  %9919 = vmatpush2.msra.mxu0 0.0
  %9920 = vmatprep.subr.mxu0 0.0
  %9921 = vmatpush2.msra.mxu0 0.0
  %9922 = vmatprep.subr.mxu0 0.0
  %9923 = vmatpush2.msra.mxu0 0.0
  %9924 = vmatprep.subr.mxu0 0.0
  %9925 = vmatpush2.msra.mxu0 0.0
  %9926 = vmatprep.subr.mxu0 0.0
  %9927 = vmatpush2.msra.mxu0 0.0
  %9928 = vmatprep.subr.mxu0 0.0
  %9929 = vmatpush2.msra.mxu0 0.0
  %9930 = vmatprep.subr.mxu0 0.0
  %9931 = vmatpush2.msra.mxu0 0.0
  %9932 = vmatprep.mubr.f32.mxu0 0.0
  %9933 = vmatmul.mubr.f32.gmra.mxu0 %v9866
  %v9934 = vpop.f32.mrf.mxu0
  %v9935 = vadd.f32 0.0, %v9934
  %v9936 = vpop.f32.mrf.mxu0
  %9937 = vdwg.mxu0
  %v9938 = vadd.f32 %v9853, %v9935
  %v9939 = vld [vmem:[#allocation4 + $0x14] sm:$0x3]
  %v9940 = vld [vmem:[%s8 + $0x320] sm:$0xff]
  %v9941 = vld [vmem:[%s8 + $0x328] sm:$0xff]
  %v9942 = vld [vmem:[%s8 + $0x330] sm:$0xff]
  %v9943 = vld [vmem:[%s8 + $0x338] sm:$0xff]
  %v9944 = vld [vmem:[%s8 + $0x340] sm:$0xff]
  %v9945 = vld [vmem:[%s8 + $0x348] sm:$0xff]
  %v9946 = vld [vmem:[%s8 + $0x350] sm:$0xff]
  %v9947 = vld [vmem:[%s8 + $0x358] sm:$0xff]
  %v9948 = vld [vmem:[%s8 + $0x360] sm:$0xff]
  %v9949 = vld [vmem:[%s8 + $0x368] sm:$0xff]
  %v9951 = vsel %vm4927, %v9939, 0
  %9953 = vmatprep.subr.mxu0 0.0
  %9954 = vmatpush1.msra.mxu0 0.0
  %9955 = vmatprep.subr.mxu0 0.0
  %9956 = vmatpush1.msra.mxu0 0.0
  %9957 = vmatprep.subr.mxu0 0.0
  %9958 = vmatpush1.msra.mxu0 0.0
  %9959 = vmatprep.subr.mxu0 0.0
  %9960 = vmatpush1.msra.mxu0 0.0
  %9961 = vmatprep.subr.mxu0 0.0
  %9962 = vmatpush1.msra.mxu0 0.0
  %9963 = vmatprep.subr.mxu0 0.0
  %9964 = vmatpush1.msra.mxu0 0.0
  %9965 = vmatprep.subr.mxu0 0.0
  %9966 = vmatpush1.msra.mxu0 %v9949
  %9967 = vmatprep.subr.mxu0 0.0
  %9968 = vmatpush1.msra.mxu0 %v9948
  %9969 = vmatprep.subr.mxu0 0.0
  %9970 = vmatpush1.msra.mxu0 %v9947
  %9971 = vmatprep.subr.mxu0 0.0
  %9972 = vmatpush1.msra.mxu0 %v9946
  %9973 = vmatprep.subr.mxu0 0.0
  %9974 = vmatpush1.msra.mxu0 %v9945
  %9975 = vmatprep.subr.mxu0 0.0
  %9976 = vmatpush1.msra.mxu0 %v9944
  %9977 = vmatprep.subr.mxu0 0.0
  %9978 = vmatpush1.msra.mxu0 %v9943
  %9979 = vmatprep.subr.mxu0 0.0
  %9980 = vmatpush1.msra.mxu0 %v9942
  %9981 = vmatprep.subr.mxu0 0.0
  %9982 = vmatpush1.msra.mxu0 %v9941
  %9983 = vmatprep.subr.mxu0 0.0
  %9984 = vmatpush1.msra.mxu0 %v9940
  %9985 = vmatprep.subr.mxu0 0.0
  %9986 = vmatpush2.msra.mxu0 0.0
  %9987 = vmatprep.subr.mxu0 0.0
  %9988 = vmatpush2.msra.mxu0 0.0
  %9989 = vmatprep.subr.mxu0 0.0
  %9990 = vmatpush2.msra.mxu0 0.0
  %9991 = vmatprep.subr.mxu0 0.0
  %9992 = vmatpush2.msra.mxu0 0.0
  %9993 = vmatprep.subr.mxu0 0.0
  %9994 = vmatpush2.msra.mxu0 0.0
  %9995 = vmatprep.subr.mxu0 0.0
  %9996 = vmatpush2.msra.mxu0 0.0
  %9997 = vmatprep.subr.mxu0 0.0
  %9998 = vmatpush2.msra.mxu0 0.0
  %9999 = vmatprep.subr.mxu0 0.0
  %10000 = vmatpush2.msra.mxu0 0.0
  %10001 = vmatprep.subr.mxu0 0.0
  %10002 = vmatpush2.msra.mxu0 0.0
  %10003 = vmatprep.subr.mxu0 0.0
  %10004 = vmatpush2.msra.mxu0 0.0
  %10005 = vmatprep.subr.mxu0 0.0
  %10006 = vmatpush2.msra.mxu0 0.0
  %10007 = vmatprep.subr.mxu0 0.0
  %10008 = vmatpush2.msra.mxu0 0.0
  %10009 = vmatprep.subr.mxu0 0.0
  %10010 = vmatpush2.msra.mxu0 0.0
  %10011 = vmatprep.subr.mxu0 0.0
  %10012 = vmatpush2.msra.mxu0 0.0
  %10013 = vmatprep.subr.mxu0 0.0
  %10014 = vmatpush2.msra.mxu0 0.0
  %10015 = vmatprep.subr.mxu0 0.0
  %10016 = vmatpush2.msra.mxu0 0.0
  %10017 = vmatprep.mubr.f32.mxu0 0.0
  %10018 = vmatmul.mubr.f32.gmra.mxu0 %v9951
  %v10019 = vpop.f32.mrf.mxu0
  %v10020 = vadd.f32 0.0, %v10019
  %v10021 = vpop.f32.mrf.mxu0
  %10022 = vdwg.mxu0
  %v10023 = vadd.f32 %v9938, %v10020
  %v10024 = vld [vmem:[#allocation4 + $0x16] sm:$0x3]
  %v10025 = vld [vmem:[%s8 + $0x370] sm:$0xff]
  %v10026 = vld [vmem:[%s8 + $0x378] sm:$0xff]
  %v10027 = vld [vmem:[%s8 + $0x380] sm:$0xff]
  %v10028 = vld [vmem:[%s8 + $0x388] sm:$0xff]
  %v10029 = vld [vmem:[%s8 + $0x390] sm:$0xff]
  %v10030 = vld [vmem:[%s8 + $0x398] sm:$0xff]
  %v10031 = vld [vmem:[%s8 + $0x3a0] sm:$0xff]
  %v10032 = vld [vmem:[%s8 + $0x3a8] sm:$0xff]
  %v10033 = vld [vmem:[%s8 + $0x3b0] sm:$0xff]
  %v10034 = vld [vmem:[%s8 + $0x3b8] sm:$0xff]
  %v10036 = vsel %vm4927, %v10024, 0
  %10038 = vmatprep.subr.mxu0 0.0
  %10039 = vmatpush1.msra.mxu0 0.0
  %10040 = vmatprep.subr.mxu0 0.0
  %10041 = vmatpush1.msra.mxu0 0.0
  %10042 = vmatprep.subr.mxu0 0.0
  %10043 = vmatpush1.msra.mxu0 0.0
  %10044 = vmatprep.subr.mxu0 0.0
  %10045 = vmatpush1.msra.mxu0 0.0
  %10046 = vmatprep.subr.mxu0 0.0
  %10047 = vmatpush1.msra.mxu0 0.0
  %10048 = vmatprep.subr.mxu0 0.0
  %10049 = vmatpush1.msra.mxu0 0.0
  %10050 = vmatprep.subr.mxu0 0.0
  %10051 = vmatpush1.msra.mxu0 %v10034
  %10052 = vmatprep.subr.mxu0 0.0
  %10053 = vmatpush1.msra.mxu0 %v10033
  %10054 = vmatprep.subr.mxu0 0.0
  %10055 = vmatpush1.msra.mxu0 %v10032
  %10056 = vmatprep.subr.mxu0 0.0
  %10057 = vmatpush1.msra.mxu0 %v10031
  %10058 = vmatprep.subr.mxu0 0.0
  %10059 = vmatpush1.msra.mxu0 %v10030
  %10060 = vmatprep.subr.mxu0 0.0
  %10061 = vmatpush1.msra.mxu0 %v10029
  %10062 = vmatprep.subr.mxu0 0.0
  %10063 = vmatpush1.msra.mxu0 %v10028
  %10064 = vmatprep.subr.mxu0 0.0
  %10065 = vmatpush1.msra.mxu0 %v10027
  %10066 = vmatprep.subr.mxu0 0.0
  %10067 = vmatpush1.msra.mxu0 %v10026
  %10068 = vmatprep.subr.mxu0 0.0
  %10069 = vmatpush1.msra.mxu0 %v10025
  %10070 = vmatprep.subr.mxu0 0.0
  %10071 = vmatpush2.msra.mxu0 0.0
  %10072 = vmatprep.subr.mxu0 0.0
  %10073 = vmatpush2.msra.mxu0 0.0
  %10074 = vmatprep.subr.mxu0 0.0
  %10075 = vmatpush2.msra.mxu0 0.0
  %10076 = vmatprep.subr.mxu0 0.0
  %10077 = vmatpush2.msra.mxu0 0.0
  %10078 = vmatprep.subr.mxu0 0.0
  %10079 = vmatpush2.msra.mxu0 0.0
  %10080 = vmatprep.subr.mxu0 0.0
  %10081 = vmatpush2.msra.mxu0 0.0
  %10082 = vmatprep.subr.mxu0 0.0
  %10083 = vmatpush2.msra.mxu0 0.0
  %10084 = vmatprep.subr.mxu0 0.0
  %10085 = vmatpush2.msra.mxu0 0.0
  %10086 = vmatprep.subr.mxu0 0.0
  %10087 = vmatpush2.msra.mxu0 0.0
  %10088 = vmatprep.subr.mxu0 0.0
  %10089 = vmatpush2.msra.mxu0 0.0
  %10090 = vmatprep.subr.mxu0 0.0
  %10091 = vmatpush2.msra.mxu0 0.0
  %10092 = vmatprep.subr.mxu0 0.0
  %10093 = vmatpush2.msra.mxu0 0.0
  %10094 = vmatprep.subr.mxu0 0.0
  %10095 = vmatpush2.msra.mxu0 0.0
  %10096 = vmatprep.subr.mxu0 0.0
  %10097 = vmatpush2.msra.mxu0 0.0
  %10098 = vmatprep.subr.mxu0 0.0
  %10099 = vmatpush2.msra.mxu0 0.0
  %10100 = vmatprep.subr.mxu0 0.0
  %10101 = vmatpush2.msra.mxu0 0.0
  %10102 = vmatprep.mubr.f32.mxu0 0.0
  %10103 = vmatmul.mubr.f32.gmra.mxu0 %v10036
  %v10104 = vpop.f32.mrf.mxu0
  %v10105 = vadd.f32 0.0, %v10104
  %v10106 = vpop.f32.mrf.mxu0
  %10107 = vdwg.mxu0
  %v10108 = vadd.f32 %v10023, %v10105
  %v10109 = vld [vmem:[#allocation4 + $0x18] sm:$0x3]
  %v10110 = vld [vmem:[%s8 + $0x3c0] sm:$0xff]
  %v10111 = vld [vmem:[%s8 + $0x3c8] sm:$0xff]
  %v10112 = vld [vmem:[%s8 + $0x3d0] sm:$0xff]
  %v10113 = vld [vmem:[%s8 + $0x3d8] sm:$0xff]
  %v10114 = vld [vmem:[%s8 + $0x3e0] sm:$0xff]
  %v10115 = vld [vmem:[%s8 + $0x3e8] sm:$0xff]
  %v10116 = vld [vmem:[%s8 + $0x3f0] sm:$0xff]
  %v10117 = vld [vmem:[%s8 + $0x3f8] sm:$0xff]
  %v10118 = vld [vmem:[%s8 + $0x400] sm:$0xff]
  %v10119 = vld [vmem:[%s8 + $0x408] sm:$0xff]
  %v10121 = vsel %vm4927, %v10109, 0
  %10123 = vmatprep.subr.mxu0 0.0
  %10124 = vmatpush1.msra.mxu0 0.0
  %10125 = vmatprep.subr.mxu0 0.0
  %10126 = vmatpush1.msra.mxu0 0.0
  %10127 = vmatprep.subr.mxu0 0.0
  %10128 = vmatpush1.msra.mxu0 0.0
  %10129 = vmatprep.subr.mxu0 0.0
  %10130 = vmatpush1.msra.mxu0 0.0
  %10131 = vmatprep.subr.mxu0 0.0
  %10132 = vmatpush1.msra.mxu0 0.0
  %10133 = vmatprep.subr.mxu0 0.0
  %10134 = vmatpush1.msra.mxu0 0.0
  %10135 = vmatprep.subr.mxu0 0.0
  %10136 = vmatpush1.msra.mxu0 %v10119
  %10137 = vmatprep.subr.mxu0 0.0
  %10138 = vmatpush1.msra.mxu0 %v10118
  %10139 = vmatprep.subr.mxu0 0.0
  %10140 = vmatpush1.msra.mxu0 %v10117
  %10141 = vmatprep.subr.mxu0 0.0
  %10142 = vmatpush1.msra.mxu0 %v10116
  %10143 = vmatprep.subr.mxu0 0.0
  %10144 = vmatpush1.msra.mxu0 %v10115
  %10145 = vmatprep.subr.mxu0 0.0
  %10146 = vmatpush1.msra.mxu0 %v10114
  %10147 = vmatprep.subr.mxu0 0.0
  %10148 = vmatpush1.msra.mxu0 %v10113
  %10149 = vmatprep.subr.mxu0 0.0
  %10150 = vmatpush1.msra.mxu0 %v10112
  %10151 = vmatprep.subr.mxu0 0.0
  %10152 = vmatpush1.msra.mxu0 %v10111
  %10153 = vmatprep.subr.mxu0 0.0
  %10154 = vmatpush1.msra.mxu0 %v10110
  %10155 = vmatprep.subr.mxu0 0.0
  %10156 = vmatpush2.msra.mxu0 0.0
  %10157 = vmatprep.subr.mxu0 0.0
  %10158 = vmatpush2.msra.mxu0 0.0
  %10159 = vmatprep.subr.mxu0 0.0
  %10160 = vmatpush2.msra.mxu0 0.0
  %10161 = vmatprep.subr.mxu0 0.0
  %10162 = vmatpush2.msra.mxu0 0.0
  %10163 = vmatprep.subr.mxu0 0.0
  %10164 = vmatpush2.msra.mxu0 0.0
  %10165 = vmatprep.subr.mxu0 0.0
  %10166 = vmatpush2.msra.mxu0 0.0
  %10167 = vmatprep.subr.mxu0 0.0
  %10168 = vmatpush2.msra.mxu0 0.0
  %10169 = vmatprep.subr.mxu0 0.0
  %10170 = vmatpush2.msra.mxu0 0.0
  %10171 = vmatprep.subr.mxu0 0.0
  %10172 = vmatpush2.msra.mxu0 0.0
  %10173 = vmatprep.subr.mxu0 0.0
  %10174 = vmatpush2.msra.mxu0 0.0
  %10175 = vmatprep.subr.mxu0 0.0
  %10176 = vmatpush2.msra.mxu0 0.0
  %10177 = vmatprep.subr.mxu0 0.0
  %10178 = vmatpush2.msra.mxu0 0.0
  %10179 = vmatprep.subr.mxu0 0.0
  %10180 = vmatpush2.msra.mxu0 0.0
  %10181 = vmatprep.subr.mxu0 0.0
  %10182 = vmatpush2.msra.mxu0 0.0
  %10183 = vmatprep.subr.mxu0 0.0
  %10184 = vmatpush2.msra.mxu0 0.0
  %10185 = vmatprep.subr.mxu0 0.0
  %10186 = vmatpush2.msra.mxu0 0.0
  %10187 = vmatprep.mubr.f32.mxu0 0.0
  %10188 = vmatmul.mubr.f32.gmra.mxu0 %v10121
  %v10189 = vpop.f32.mrf.mxu0
  %v10190 = vadd.f32 0.0, %v10189
  %v10191 = vpop.f32.mrf.mxu0
  %10192 = vdwg.mxu0
  %v10193 = vadd.f32 %v10108, %v10190
  %v10194 = vld [vmem:[#allocation4 + $0x1a] sm:$0x3]
  %v10195 = vld [vmem:[%s8 + $0x410] sm:$0xff]
  %v10196 = vld [vmem:[%s8 + $0x418] sm:$0xff]
  %v10197 = vld [vmem:[%s8 + $0x420] sm:$0xff]
  %v10198 = vld [vmem:[%s8 + $0x428] sm:$0xff]
  %v10199 = vld [vmem:[%s8 + $0x430] sm:$0xff]
  %v10200 = vld [vmem:[%s8 + $0x438] sm:$0xff]
  %v10201 = vld [vmem:[%s8 + $0x440] sm:$0xff]
  %v10202 = vld [vmem:[%s8 + $0x448] sm:$0xff]
  %v10203 = vld [vmem:[%s8 + $0x450] sm:$0xff]
  %v10204 = vld [vmem:[%s8 + $0x458] sm:$0xff]
  %v10206 = vsel %vm4927, %v10194, 0
  %10208 = vmatprep.subr.mxu0 0.0
  %10209 = vmatpush1.msra.mxu0 0.0
  %10210 = vmatprep.subr.mxu0 0.0
  %10211 = vmatpush1.msra.mxu0 0.0
  %10212 = vmatprep.subr.mxu0 0.0
  %10213 = vmatpush1.msra.mxu0 0.0
  %10214 = vmatprep.subr.mxu0 0.0
  %10215 = vmatpush1.msra.mxu0 0.0
  %10216 = vmatprep.subr.mxu0 0.0
  %10217 = vmatpush1.msra.mxu0 0.0
  %10218 = vmatprep.subr.mxu0 0.0
  %10219 = vmatpush1.msra.mxu0 0.0
  %10220 = vmatprep.subr.mxu0 0.0
  %10221 = vmatpush1.msra.mxu0 %v10204
  %10222 = vmatprep.subr.mxu0 0.0
  %10223 = vmatpush1.msra.mxu0 %v10203
  %10224 = vmatprep.subr.mxu0 0.0
  %10225 = vmatpush1.msra.mxu0 %v10202
  %10226 = vmatprep.subr.mxu0 0.0
  %10227 = vmatpush1.msra.mxu0 %v10201
  %10228 = vmatprep.subr.mxu0 0.0
  %10229 = vmatpush1.msra.mxu0 %v10200
  %10230 = vmatprep.subr.mxu0 0.0
  %10231 = vmatpush1.msra.mxu0 %v10199
  %10232 = vmatprep.subr.mxu0 0.0
  %10233 = vmatpush1.msra.mxu0 %v10198
  %10234 = vmatprep.subr.mxu0 0.0
  %10235 = vmatpush1.msra.mxu0 %v10197
  %10236 = vmatprep.subr.mxu0 0.0
  %10237 = vmatpush1.msra.mxu0 %v10196
  %10238 = vmatprep.subr.mxu0 0.0
  %10239 = vmatpush1.msra.mxu0 %v10195
  %10240 = vmatprep.subr.mxu0 0.0
  %10241 = vmatpush2.msra.mxu0 0.0
  %10242 = vmatprep.subr.mxu0 0.0
  %10243 = vmatpush2.msra.mxu0 0.0
  %10244 = vmatprep.subr.mxu0 0.0
  %10245 = vmatpush2.msra.mxu0 0.0
  %10246 = vmatprep.subr.mxu0 0.0
  %10247 = vmatpush2.msra.mxu0 0.0
  %10248 = vmatprep.subr.mxu0 0.0
  %10249 = vmatpush2.msra.mxu0 0.0
  %10250 = vmatprep.subr.mxu0 0.0
  %10251 = vmatpush2.msra.mxu0 0.0
  %10252 = vmatprep.subr.mxu0 0.0
  %10253 = vmatpush2.msra.mxu0 0.0
  %10254 = vmatprep.subr.mxu0 0.0
  %10255 = vmatpush2.msra.mxu0 0.0
  %10256 = vmatprep.subr.mxu0 0.0
  %10257 = vmatpush2.msra.mxu0 0.0
  %10258 = vmatprep.subr.mxu0 0.0
  %10259 = vmatpush2.msra.mxu0 0.0
  %10260 = vmatprep.subr.mxu0 0.0
  %10261 = vmatpush2.msra.mxu0 0.0
  %10262 = vmatprep.subr.mxu0 0.0
  %10263 = vmatpush2.msra.mxu0 0.0
  %10264 = vmatprep.subr.mxu0 0.0
  %10265 = vmatpush2.msra.mxu0 0.0
  %10266 = vmatprep.subr.mxu0 0.0
  %10267 = vmatpush2.msra.mxu0 0.0
  %10268 = vmatprep.subr.mxu0 0.0
  %10269 = vmatpush2.msra.mxu0 0.0
  %10270 = vmatprep.subr.mxu0 0.0
  %10271 = vmatpush2.msra.mxu0 0.0
  %10272 = vmatprep.mubr.f32.mxu0 0.0
  %10273 = vmatmul.mubr.f32.gmra.mxu0 %v10206
  %v10274 = vpop.f32.mrf.mxu0
  %v10275 = vadd.f32 0.0, %v10274
  %v10276 = vpop.f32.mrf.mxu0
  %10277 = vdwg.mxu0
  %v10278 = vadd.f32 %v10193, %v10275
  %v10279 = vld [vmem:[#allocation4 + $0x1c] sm:$0x3]
  %v10280 = vld [vmem:[%s8 + $0x460] sm:$0xff]
  %v10281 = vld [vmem:[%s8 + $0x468] sm:$0xff]
  %v10282 = vld [vmem:[%s8 + $0x470] sm:$0xff]
  %v10283 = vld [vmem:[%s8 + $0x478] sm:$0xff]
  %v10284 = vld [vmem:[%s8 + $0x480] sm:$0xff]
  %v10285 = vld [vmem:[%s8 + $0x488] sm:$0xff]
  %v10286 = vld [vmem:[%s8 + $0x490] sm:$0xff]
  %v10287 = vld [vmem:[%s8 + $0x498] sm:$0xff]
  %v10288 = vld [vmem:[%s8 + $0x4a0] sm:$0xff]
  %v10289 = vld [vmem:[%s8 + $0x4a8] sm:$0xff]
  %v10291 = vsel %vm4927, %v10279, 0
  %10293 = vmatprep.subr.mxu0 0.0
  %10294 = vmatpush1.msra.mxu0 0.0
  %10295 = vmatprep.subr.mxu0 0.0
  %10296 = vmatpush1.msra.mxu0 0.0
  %10297 = vmatprep.subr.mxu0 0.0
  %10298 = vmatpush1.msra.mxu0 0.0
  %10299 = vmatprep.subr.mxu0 0.0
  %10300 = vmatpush1.msra.mxu0 0.0
  %10301 = vmatprep.subr.mxu0 0.0
  %10302 = vmatpush1.msra.mxu0 0.0
  %10303 = vmatprep.subr.mxu0 0.0
  %10304 = vmatpush1.msra.mxu0 0.0
  %10305 = vmatprep.subr.mxu0 0.0
  %10306 = vmatpush1.msra.mxu0 %v10289
  %10307 = vmatprep.subr.mxu0 0.0
  %10308 = vmatpush1.msra.mxu0 %v10288
  %10309 = vmatprep.subr.mxu0 0.0
  %10310 = vmatpush1.msra.mxu0 %v10287
  %10311 = vmatprep.subr.mxu0 0.0
  %10312 = vmatpush1.msra.mxu0 %v10286
  %10313 = vmatprep.subr.mxu0 0.0
  %10314 = vmatpush1.msra.mxu0 %v10285
  %10315 = vmatprep.subr.mxu0 0.0
  %10316 = vmatpush1.msra.mxu0 %v10284
  %10317 = vmatprep.subr.mxu0 0.0
  %10318 = vmatpush1.msra.mxu0 %v10283
  %10319 = vmatprep.subr.mxu0 0.0
  %10320 = vmatpush1.msra.mxu0 %v10282
  %10321 = vmatprep.subr.mxu0 0.0
  %10322 = vmatpush1.msra.mxu0 %v10281
  %10323 = vmatprep.subr.mxu0 0.0
  %10324 = vmatpush1.msra.mxu0 %v10280
  %10325 = vmatprep.subr.mxu0 0.0
  %10326 = vmatpush2.msra.mxu0 0.0
  %10327 = vmatprep.subr.mxu0 0.0
  %10328 = vmatpush2.msra.mxu0 0.0
  %10329 = vmatprep.subr.mxu0 0.0
  %10330 = vmatpush2.msra.mxu0 0.0
  %10331 = vmatprep.subr.mxu0 0.0
  %10332 = vmatpush2.msra.mxu0 0.0
  %10333 = vmatprep.subr.mxu0 0.0
  %10334 = vmatpush2.msra.mxu0 0.0
  %10335 = vmatprep.subr.mxu0 0.0
  %10336 = vmatpush2.msra.mxu0 0.0
  %10337 = vmatprep.subr.mxu0 0.0
  %10338 = vmatpush2.msra.mxu0 0.0
  %10339 = vmatprep.subr.mxu0 0.0
  %10340 = vmatpush2.msra.mxu0 0.0
  %10341 = vmatprep.subr.mxu0 0.0
  %10342 = vmatpush2.msra.mxu0 0.0
  %10343 = vmatprep.subr.mxu0 0.0
  %10344 = vmatpush2.msra.mxu0 0.0
  %10345 = vmatprep.subr.mxu0 0.0
  %10346 = vmatpush2.msra.mxu0 0.0
  %10347 = vmatprep.subr.mxu0 0.0
  %10348 = vmatpush2.msra.mxu0 0.0
  %10349 = vmatprep.subr.mxu0 0.0
  %10350 = vmatpush2.msra.mxu0 0.0
  %10351 = vmatprep.subr.mxu0 0.0
  %10352 = vmatpush2.msra.mxu0 0.0
  %10353 = vmatprep.subr.mxu0 0.0
  %10354 = vmatpush2.msra.mxu0 0.0
  %10355 = vmatprep.subr.mxu0 0.0
  %10356 = vmatpush2.msra.mxu0 0.0
  %10357 = vmatprep.mubr.f32.mxu0 0.0
  %10358 = vmatmul.mubr.f32.gmra.mxu0 %v10291
  %v10359 = vpop.f32.mrf.mxu0
  %v10360 = vadd.f32 0.0, %v10359
  %v10361 = vpop.f32.mrf.mxu0
  %10362 = vdwg.mxu0
  %v10363 = vadd.f32 %v10278, %v10360
  %v10364 = vld [vmem:[#allocation4 + $0x1e] sm:$0x3]
  %v10365 = vld [vmem:[%s8 + $0x4b0] sm:$0xff]
  %v10366 = vld [vmem:[%s8 + $0x4b8] sm:$0xff]
  %v10367 = vld [vmem:[%s8 + $0x4c0] sm:$0xff]
  %v10368 = vld [vmem:[%s8 + $0x4c8] sm:$0xff]
  %v10369 = vld [vmem:[%s8 + $0x4d0] sm:$0xff]
  %v10370 = vld [vmem:[%s8 + $0x4d8] sm:$0xff]
  %v10371 = vld [vmem:[%s8 + $0x4e0] sm:$0xff]
  %v10372 = vld [vmem:[%s8 + $0x4e8] sm:$0xff]
  %v10373 = vld [vmem:[%s8 + $0x4f0] sm:$0xff]
  %v10374 = vld [vmem:[%s8 + $0x4f8] sm:$0xff]
  %v10376 = vsel %vm4927, %v10364, 0
  %10378 = vmatprep.subr.mxu0 0.0
  %10379 = vmatpush1.msra.mxu0 0.0
  %10380 = vmatprep.subr.mxu0 0.0
  %10381 = vmatpush1.msra.mxu0 0.0
  %10382 = vmatprep.subr.mxu0 0.0
  %10383 = vmatpush1.msra.mxu0 0.0
  %10384 = vmatprep.subr.mxu0 0.0
  %10385 = vmatpush1.msra.mxu0 0.0
  %10386 = vmatprep.subr.mxu0 0.0
  %10387 = vmatpush1.msra.mxu0 0.0
  %10388 = vmatprep.subr.mxu0 0.0
  %10389 = vmatpush1.msra.mxu0 0.0
  %10390 = vmatprep.subr.mxu0 0.0
  %10391 = vmatpush1.msra.mxu0 %v10374
  %10392 = vmatprep.subr.mxu0 0.0
  %10393 = vmatpush1.msra.mxu0 %v10373
  %10394 = vmatprep.subr.mxu0 0.0
  %10395 = vmatpush1.msra.mxu0 %v10372
  %10396 = vmatprep.subr.mxu0 0.0
  %10397 = vmatpush1.msra.mxu0 %v10371
  %10398 = vmatprep.subr.mxu0 0.0
  %10399 = vmatpush1.msra.mxu0 %v10370
  %10400 = vmatprep.subr.mxu0 0.0
  %10401 = vmatpush1.msra.mxu0 %v10369
  %10402 = vmatprep.subr.mxu0 0.0
  %10403 = vmatpush1.msra.mxu0 %v10368
  %10404 = vmatprep.subr.mxu0 0.0
  %10405 = vmatpush1.msra.mxu0 %v10367
  %10406 = vmatprep.subr.mxu0 0.0
  %10407 = vmatpush1.msra.mxu0 %v10366
  %10408 = vmatprep.subr.mxu0 0.0
  %10409 = vmatpush1.msra.mxu0 %v10365
  %10410 = vmatprep.subr.mxu0 0.0
  %10411 = vmatpush2.msra.mxu0 0.0
  %10412 = vmatprep.subr.mxu0 0.0
  %10413 = vmatpush2.msra.mxu0 0.0
  %10414 = vmatprep.subr.mxu0 0.0
  %10415 = vmatpush2.msra.mxu0 0.0
  %10416 = vmatprep.subr.mxu0 0.0
  %10417 = vmatpush2.msra.mxu0 0.0
  %10418 = vmatprep.subr.mxu0 0.0
  %10419 = vmatpush2.msra.mxu0 0.0
  %10420 = vmatprep.subr.mxu0 0.0
  %10421 = vmatpush2.msra.mxu0 0.0
  %10422 = vmatprep.subr.mxu0 0.0
  %10423 = vmatpush2.msra.mxu0 0.0
  %10424 = vmatprep.subr.mxu0 0.0
  %10425 = vmatpush2.msra.mxu0 0.0
  %10426 = vmatprep.subr.mxu0 0.0
  %10427 = vmatpush2.msra.mxu0 0.0
  %10428 = vmatprep.subr.mxu0 0.0
  %10429 = vmatpush2.msra.mxu0 0.0
  %10430 = vmatprep.subr.mxu0 0.0
  %10431 = vmatpush2.msra.mxu0 0.0
  %10432 = vmatprep.subr.mxu0 0.0
  %10433 = vmatpush2.msra.mxu0 0.0
  %10434 = vmatprep.subr.mxu0 0.0
  %10435 = vmatpush2.msra.mxu0 0.0
  %10436 = vmatprep.subr.mxu0 0.0
  %10437 = vmatpush2.msra.mxu0 0.0
  %10438 = vmatprep.subr.mxu0 0.0
  %10439 = vmatpush2.msra.mxu0 0.0
  %10440 = vmatprep.subr.mxu0 0.0
  %10441 = vmatpush2.msra.mxu0 0.0
  %10442 = vmatprep.mubr.f32.mxu0 0.0
  %10443 = vmatmul.mubr.f32.gmra.mxu0 %v10376
  %v10444 = vpop.f32.mrf.mxu0
  %v10445 = vadd.f32 0.0, %v10444
  %v10446 = vpop.f32.mrf.mxu0
  %10447 = vdwg.mxu0
  %v10448 = vadd.f32 %v10363, %v10445
  %v10449 = vld [vmem:[%s9] sm:$0x1]
  %v10451 = vlaneseq
  %v10452 = vshrl.u32 %v10451, 7
  %v10453 = vsub.s32 0, %v10452
  %v10454 = vrot.slane %v10449, %v10453
  %v10456 = vadd.f32 %v10448, %v10454
  %v10457 = vmax.f32 %v10456, 0.0
  %v10458 = vld [vmem:[%s10] sm:$0x1]
  %v10460 = vlaneseq
  %v10461 = vshrl.u32 %v10460, 7
  %v10462 = vsub.s32 0, %v10461
  %v10463 = vrot.slane %v10458, %v10462
  %v10465 = vmul.f32 %v10457, %v10463
  %vm10466 = vcmask 517120
  %v10467 = vsel %vm10466, %v10465, 0.0
  %10468 = vadd.xlane.f32.xlu0 %v10467
  %v10469 = vpop.xlane.xlu0 %10468
  %v10470 = vld [vmem:[#allocation5] sm:$0x1]
  %v10472 = vlaneseq
  %v10473 = vshrl.u32 %v10472, 7
  %v10474 = vsub.s32 0, %v10473
  %v10475 = vrot.slane %v10470, %v10474
  %v10477 = vadd.f32 %v10469, %v10475
  %vm10478 = vcmask 1024
  %10479 = vst.msk [vmem:[%s12] sm:$0x3] %vm10478, %v10477
  // Predicated region
  $region50: #{densenucy_forward.1} parent=0 // pred_check
    _
  $region51: #{densenucy_forward.1} parent=0 // pred_check_branch
    %10481 = sbr.rel (0) target = $region53
  $region52: #{densenucy_forward.1} parent=0 // pred_region
    _
  $region53: #{densenucy_forward.1} parent=0 // pred_fallthru
    _
  // Predicated region
  $region54: #{densenucy_forward.1} parent=0 // pred_check
    _
  $region55: #{densenucy_forward.1} parent=0 // pred_check_branch
    %10483 = sbr.rel (0) target = $region57
  $region56: #{densenucy_forward.1} parent=0 // pred_region
    _
  $region57: #{densenucy_forward.1} parent=0 // pred_fallthru
    _

</llo_original>
